<compile_context>
chip_gen: v7x
topology: tpu7x:2x2x1
jax: 0.10.0
libtpu: 0.0.40
codegen_flags: <defaults>
</compile_context>

<pallas_src>
import functools

import jax
import jax.numpy as jnp
from jax import lax
from jax.experimental import pallas as pl
from jax.experimental.pallas import tpu as pltpu


def _pick_tile(count, rows_per_item, *, sublane=1, target_rows=256):
    """Pick a tile size dividing `count`: keep >=2 grid steps when possible
    (v7x megacore), keep the tile sublane-aligned, and aim for >=target_rows
    matmul rows per step to fill the MXU."""
    divs = [d for d in range(1, count + 1)
            if count % d == 0 and (d % sublane == 0 or d == count)]
    multi = [d for d in divs if count // d >= 2]
    cands = multi if multi else divs
    for d in cands:
        if d * rows_per_item >= target_rows:
            return d
    return cands[-1]


# ---------------------------------------------------------------------------
# Fused BERT encoder layer + mean-pool kernel. One grid step = TB sequences.
# ---------------------------------------------------------------------------
def _bert_layer_kernel(h_ref, kbias_ref,
                       ln0_g_ref, ln0_b_ref,
                       wqkv_ref, bqkv_ref, wo_ref, bo_ref,
                       ln1_g_ref, ln1_b_ref,
                       w1_ref, b1_ref, w2_ref, b2_ref,
                       ln2_g_ref, ln2_b_ref,
                       o_ref, ctx_ref, *, n_heads, eps):
    TB, S, H = h_ref.shape
    D = H // n_heads
    R = TB * S
    scale = 1.0 / float(D) ** 0.5

    def ln(x, g_ref, b_ref):
        mu = jnp.mean(x, axis=-1, keepdims=True)
        var = jnp.mean((x - mu) ** 2, axis=-1, keepdims=True)
        return (x - mu) * lax.rsqrt(var + eps) * g_ref[...] + b_ref[...]

    # bf16 activations in HBM/VMEM; f32 for LayerNorm math.
    h = h_ref[...].reshape(R, H).astype(jnp.float32)
    h0 = ln(h, ln0_g_ref, ln0_b_ref)
    h0_bf = h0.astype(jnp.bfloat16)

    # Packed QKV projection: single [R, H] x [H, 3H] matmul, f32 accumulation.
    qkv = jnp.dot(h0_bf, wqkv_ref[...],
                  preferred_element_type=jnp.float32) + bqkv_ref[...]
    qkv_bf = qkv.astype(jnp.bfloat16)            # single upfront cast

    kbias = kbias_ref[...]                        # [TB, 1, S], 0 keep / -1e9 pad

    # Heads: static unrolled loop; each head's [TB, S, D] context is written
    # into its lane slice of one VMEM scratch (no concatenate, only one head's
    # intermediates live at a time). Attention is batched over TB sequences.
    for hd in range(n_heads):
        q = qkv_bf[:, hd * D:(hd + 1) * D].reshape(TB, S, D)
        k = qkv_bf[:, H + hd * D:H + (hd + 1) * D].reshape(TB, S, D)
        v = qkv_bf[:, 2 * H + hd * D:2 * H + (hd + 1) * D].reshape(TB, S, D)
        s = jnp.einsum("bqd,bkd->bqk", q, k,
                       preferred_element_type=jnp.float32) * scale + kbias
        s = s - jnp.max(s, axis=-1, keepdims=True)
        p = jnp.exp(s)
        p = p * pl.reciprocal(jnp.sum(p, axis=-1, keepdims=True), approx=True)
        c = jnp.einsum("bqk,bkd->bqd", p.astype(jnp.bfloat16), v,
                       preferred_element_type=jnp.float32)       # [TB, S, D]
        ctx_ref[:, hd * D:(hd + 1) * D] = c.reshape(R, D)

    attn = jnp.dot(ctx_ref[...].astype(jnp.bfloat16), wo_ref[...],
                   preferred_element_type=jnp.float32) + bo_ref[...]
    h1 = ln(h0 + attn, ln1_g_ref, ln1_b_ref)

    # FFN.
    # TODO(synk): PyTorch nn.GELU default is exact erf; tanh approximation used.
    # TODO(synk): tile over F (extra 'arbitrary' axis / in-kernel loop) at
    # BERT-base sizes so the [R, F] intermediate never lives whole in v7x VMEM.
    f = jnp.dot(h1.astype(jnp.bfloat16), w1_ref[...],
                preferred_element_type=jnp.float32) + b1_ref[...]
    f = jax.nn.gelu(f, approximate=True)
    ff = jnp.dot(f.astype(jnp.bfloat16), w2_ref[...],
                 preferred_element_type=jnp.float32) + b2_ref[...]
    h2 = ln(h1 + ff, ln2_g_ref, ln2_b_ref)

    # fused torch.mean(x, dim=1) over the sequence axis
    o_ref[...] = jnp.mean(h2.reshape(TB, S, H), axis=1, keepdims=True)


def bert_layer_meanpool(p, h, kbias):
    """h: [B, S, H] bf16 embeddings, kbias: [B, 1, S] f32 -> [B, H] mean-pooled."""
    B, S, H = h.shape
    nH = p["n_heads"]
    F = p["w1"].shape[1]
    TB = _pick_tile(B, S)

    def full(shape):
        return pl.BlockSpec(shape, lambda b: (0,) * len(shape))

    out = pl.pallas_call(
        functools.partial(_bert_layer_kernel, n_heads=nH, eps=1e-12),
        out_shape=jax.ShapeDtypeStruct((B, 1, H), jnp.float32),
        grid=(B // TB,),
        in_specs=[
            pl.BlockSpec((TB, S, H), lambda b: (b, 0, 0)),
            pl.BlockSpec((TB, 1, S), lambda b: (b, 0, 0)),
            full((1, H)), full((1, H)),           # ln0
            full((H, 3 * H)), full((1, 3 * H)),   # packed qkv
            full((H, H)), full((1, H)),           # out proj
            full((1, H)), full((1, H)),           # ln1
            full((H, F)), full((1, F)),           # ffn in
            full((F, H)), full((1, H)),           # ffn out
            full((1, H)), full((1, H)),           # ln2
        ],
        out_specs=pl.BlockSpec((TB, 1, H), lambda b: (b, 0, 0)),
        scratch_shapes=[pltpu.VMEM((TB * S, H), jnp.float32)],
        compiler_params=pltpu.CompilerParams(
            dimension_semantics=("parallel",),
            vmem_limit_bytes=48 * 1024 * 1024),
    )(h, kbias,
      p["ln0_g"], p["ln0_b"],
      p["w_qkv"], p["b_qkv"], p["wo"], p["bo"],
      p["ln1_g"], p["ln1_b"],
      p["w1"], p["b1"], p["w2"], p["b2"],
      p["ln2_g"], p["ln2_b"])
    return out.reshape(B, H)


# ---------------------------------------------------------------------------
# Fused News_Representation kernel: per tile of TM news items does
# packed QKV -> word self-attention (no mask) -> out-proj -> additive pooling.
# ---------------------------------------------------------------------------
def _news_encoder_kernel(e_ref,
                         wqkv_ref, bqkv_ref, wo_ref, bo_ref,
                         wa_ref, ba_ref, va_ref,
                         o_ref, ctx_ref, *, n_heads):
    TM, L, H = e_ref.shape
    D = H // n_heads
    R = TM * L
    scale = 1.0 / float(D) ** 0.5

    e2 = e_ref[...].reshape(R, H)                 # bf16
    qkv = jnp.dot(e2, wqkv_ref[...],
                  preferred_element_type=jnp.float32) + bqkv_ref[...]
    qkv_bf = qkv.astype(jnp.bfloat16)             # single upfront cast

    for hd in range(n_heads):
        q = qkv_bf[:, hd * D:(hd + 1) * D].reshape(TM, L, D)
        k = qkv_bf[:, H + hd * D:H + (hd + 1) * D].reshape(TM, L, D)
        v = qkv_bf[:, 2 * H + hd * D:2 * H + (hd + 1) * D].reshape(TM, L, D)
        s = jnp.einsum("bqd,bkd->bqk", q, k,
                       preferred_element_type=jnp.float32) * scale
        s = s - jnp.max(s, axis=-1, keepdims=True)
        p = jnp.exp(s)
        p = p * pl.reciprocal(jnp.sum(p, axis=-1, keepdims=True), approx=True)
        c = jnp.einsum("bqk,bkd->bqd", p.astype(jnp.bfloat16), v,
                       preferred_element_type=jnp.float32)        # [TM, L, D]
        ctx_ref[:, hd * D:(hd + 1) * D] = c.reshape(R, D)

    words = jnp.dot(ctx_ref[...].astype(jnp.bfloat16), wo_ref[...],
                    preferred_element_type=jnp.float32) + bo_ref[...]   # [R, H]

    # additive attention pooling over the L words of each news item
    proj = jnp.tanh(jnp.dot(words.astype(jnp.bfloat16), wa_ref[...],
                            preferred_element_type=jnp.float32) + ba_ref[...])
    A = proj.shape[-1]
    sc = jnp.sum(proj.reshape(TM, L, A) * va_ref[...].reshape(1, 1, A),
                 axis=-1)                                               # [TM, L]
    sc = sc - jnp.max(sc, axis=-1, keepdims=True)
    w = jnp.exp(sc)
    w = w * pl.reciprocal(jnp.sum(w, axis=-1, keepdims=True), approx=True)
    o_ref[...] = jnp.sum(w[:, :, None] * words.reshape(TM, L, H), axis=1)  # [TM, H]


def news_representation(p, y_ids):
    """TimeDistributed(News_Representation): [B, T, L] ids -> [B, T, H]."""
    B, T, L = y_ids.shape
    H = p["nr_emb"].shape[1]
    A = p["nr_wa"].shape[1]
    nH = p["n_heads"]
    M = B * T

    # TODO(synk): move the embedding gather in-kernel (scalar-prefetch ids +
    # pl.Element row gather); for now XLA gathers, but directly in bf16.
    emb = p["nr_emb"][y_ids.reshape(M, L)]         # [M, L, H] bf16

    TM = _pick_tile(M, L, sublane=8)               # sublane-aligned output tile

    def full(shape):
        return pl.BlockSpec(shape, lambda m: (0,) * len(shape))

    out = pl.pallas_call(
        functools.partial(_news_encoder_kernel, n_heads=nH),
        out_shape=jax.ShapeDtypeStruct((M, H), jnp.float32),
        grid=(M // TM,),
        in_specs=[
            pl.BlockSpec((TM, L, H), lambda m: (m, 0, 0)),
            full((H, 3 * H)), full((1, 3 * H)),
            full((H, H)), full((1, H)),
            full((H, A)), full((1, A)), full((1, A)),
        ],
        out_specs=pl.BlockSpec((TM, H), lambda m: (m, 0)),
        scratch_shapes=[pltpu.VMEM((TM * L, H), jnp.float32)],
        compiler_params=pltpu.CompilerParams(
            dimension_semantics=("parallel",),
            vmem_limit_bytes=48 * 1024 * 1024),
    )(emb, p["nr_w_qkv"], p["nr_b_qkv"], p["nr_wo"], p["nr_bo"],
      p["nr_wa"], p["nr_ba"], p["nr_va"])
    return out.reshape(B, T, H)


# ---------------------------------------------------------------------------
# parameters & forward
# ---------------------------------------------------------------------------
def init_params(key, *, vocab=64, H=32, n_heads=4, ffn=64, max_pos=64,
                news_vocab=64, attn_dim=16):
    ks = iter(jax.random.split(key, 32))
    nrm = lambda shape, s=0.02: (s * jax.random.normal(next(ks), shape)).astype(jnp.float32)
    z = lambda shape: jnp.zeros(shape, jnp.float32)
    o = lambda shape: jnp.ones(shape, jnp.float32)
    bf = lambda x: x.astype(jnp.bfloat16)
    qkv = lambda: bf(jnp.concatenate([nrm((H, H)), nrm((H, H)), nrm((H, H))], axis=1))
    p = {
        # frozen "model_bert" (1 transformer layer, synthetic weights)
        "word_emb": bf(nrm((vocab, H))), "pos_emb": bf(nrm((max_pos, H))),
        "ln0_g": o((1, H)), "ln0_b": z((1, H)),
        "w_qkv": qkv(), "b_qkv": z((1, 3 * H)),
        "wo": bf(nrm((H, H))), "bo": z((1, H)),
        "ln1_g": o((1, H)), "ln1_b": z((1, H)),
        "w1": bf(nrm((H, ffn))), "b1": z((1, ffn)),
        "w2": bf(nrm((ffn, H))), "b2": z((1, H)),
        "ln2_g": o((1, H)), "ln2_b": z((1, H)),
        # News_Representation (word emb + self-attn + additive attention)
        "nr_emb": bf(nrm((news_vocab, H))),
        "nr_w_qkv": qkv(), "nr_b_qkv": z((1, 3 * H)),
        "nr_wo": bf(nrm((H, H))), "nr_bo": z((1, H)),
        "nr_wa": bf(nrm((H, attn_dim))), "nr_ba": z((1, attn_dim)),
        "nr_va": nrm((1, attn_dim)),
        "n_heads": n_heads,
    }
    return p


def bert_model_forward(p, x_ids, mask, y_ids):
    B, S = x_ids.shape
    # TODO(synk): token/position embedding gather stays in XLA (bf16 output);
    # the encoder itself runs fully in Pallas.
    h = p["word_emb"][x_ids] + p["pos_emb"][:S][None, :, :]          # bf16 [B,S,H]
    # additive attention bias precomputed in the wrapper (0 keep / -1e9 pad)
    kbias = ((mask.astype(jnp.float32) - 1.0) * 1e9).reshape(B, 1, S)
    # matches: with torch.no_grad(): x = model_bert(x, mask); x = torch.mean(x, dim=1)
    x_mean = lax.stop_gradient(bert_layer_meanpool(p, h, kbias))
    # y = self.TD2(y)
    y_rep = news_representation(p, y_ids)
    return x_mean, y_rep


# ---------------------------------------------------------------------------
if __name__ == "__main__":
    B, S, T, L = 2, 8, 4, 8
    VOCAB, H = 64, 32

    key = jax.random.PRNGKey(0)
    k_param, k_x, k_y, _ = jax.random.split(key, 4)

    params = init_params(k_param, vocab=VOCAB, H=H)

    x_ids = jax.random.randint(k_x, (B, S), 0, VOCAB, dtype=jnp.int32)
    y_ids = jax.random.randint(k_y, (B, T, L), 0, VOCAB, dtype=jnp.int32)
    # attention mask: batch 0 fully valid, batch 1 has last two tokens padded
    lens = jnp.array([[S], [S - 2]], dtype=jnp.int32)
    mask = (jnp.arange(S)[None, :] < lens).astype(jnp.float32)

    fwd = jax.jit(functools.partial(bert_model_forward, params))
    x_out, y_out = fwd(x_ids, mask, y_ids)
    jax.block_until_ready((x_out, y_out))

    assert x_out.shape == (B, H), x_out.shape
    assert y_out.shape == (B, T, H), y_out.shape
    assert jnp.all(jnp.isfinite(x_out)) and jnp.all(jnp.isfinite(y_out))
    print("KERNEL_OK")
</pallas_src>

<mosaic_0001>
module attributes {stable_mosaic.version = 11 : i64} {
  func.func @_bert_layer_kernel(%arg0: i32, %arg1: memref<1x8x32xbf16, #tpu.memory_space<vmem>>, %arg2: memref<1x1x8xf32, #tpu.memory_space<vmem>>, %arg3: memref<1x32xf32, #tpu.memory_space<vmem>>, %arg4: memref<1x32xf32, #tpu.memory_space<vmem>>, %arg5: memref<32x96xbf16, #tpu.memory_space<vmem>>, %arg6: memref<1x96xf32, #tpu.memory_space<vmem>>, %arg7: memref<32x32xbf16, #tpu.memory_space<vmem>>, %arg8: memref<1x32xf32, #tpu.memory_space<vmem>>, %arg9: memref<1x32xf32, #tpu.memory_space<vmem>>, %arg10: memref<1x32xf32, #tpu.memory_space<vmem>>, %arg11: memref<32x64xbf16, #tpu.memory_space<vmem>>, %arg12: memref<1x64xf32, #tpu.memory_space<vmem>>, %arg13: memref<64x32xbf16, #tpu.memory_space<vmem>>, %arg14: memref<1x32xf32, #tpu.memory_space<vmem>>, %arg15: memref<1x32xf32, #tpu.memory_space<vmem>>, %arg16: memref<1x32xf32, #tpu.memory_space<vmem>>, %arg17: memref<1x1x32xf32, #tpu.memory_space<vmem>>, %arg18: memref<8x32xf32, #tpu.memory_space<vmem>>) attributes {dimension_semantics = [#tpu.dimension_semantics<parallel>], iteration_bounds = array<i64: 2>, scalar_prefetch = 0 : i64, scratch_operands = 1 : i64, tpu.core_type = #tpu.core_type<tc>, window_params = [{transform_indices = @transform_0, window_bounds = array<i64: 1, 8, 32>}, {transform_indices = @transform_1, window_bounds = array<i64: 1, 1, 8>}, {pipeline_mode = #tpu.pipeline_mode<synchronous>, transform_indices = @transform_2, window_bounds = array<i64: 1, 32>}, {pipeline_mode = #tpu.pipeline_mode<synchronous>, transform_indices = @transform_3, window_bounds = array<i64: 1, 32>}, {pipeline_mode = #tpu.pipeline_mode<synchronous>, transform_indices = @transform_4, window_bounds = array<i64: 32, 96>}, {pipeline_mode = #tpu.pipeline_mode<synchronous>, transform_indices = @transform_5, window_bounds = array<i64: 1, 96>}, {pipeline_mode = #tpu.pipeline_mode<synchronous>, transform_indices = @transform_6, window_bounds = array<i64: 32, 32>}, {pipeline_mode = #tpu.pipeline_mode<synchronous>, transform_indices = @transform_7, window_bounds = array<i64: 1, 32>}, {pipeline_mode = #tpu.pipeline_mode<synchronous>, transform_indices = @transform_8, window_bounds = array<i64: 1, 32>}, {pipeline_mode = #tpu.pipeline_mode<synchronous>, transform_indices = @transform_9, window_bounds = array<i64: 1, 32>}, {pipeline_mode = #tpu.pipeline_mode<synchronous>, transform_indices = @transform_10, window_bounds = array<i64: 32, 64>}, {pipeline_mode = #tpu.pipeline_mode<synchronous>, transform_indices = @transform_11, window_bounds = array<i64: 1, 64>}, {pipeline_mode = #tpu.pipeline_mode<synchronous>, transform_indices = @transform_12, window_bounds = array<i64: 64, 32>}, {pipeline_mode = #tpu.pipeline_mode<synchronous>, transform_indices = @transform_13, window_bounds = array<i64: 1, 32>}, {pipeline_mode = #tpu.pipeline_mode<synchronous>, transform_indices = @transform_14, window_bounds = array<i64: 1, 32>}, {pipeline_mode = #tpu.pipeline_mode<synchronous>, transform_indices = @transform_15, window_bounds = array<i64: 1, 32>}, {transform_indices = @transform_16, window_bounds = array<i64: 1, 1, 32>}]} {
    %c0 = arith.constant 0 : index
    %c0_0 = arith.constant 0 : index
    %c0_1 = arith.constant 0 : index
    %0 = vector.load %arg1[%c0, %c0_0, %c0_1] : memref<1x8x32xbf16, #tpu.memory_space<vmem>>, vector<1x8x32xbf16>
    %1 = vector.shape_cast %0 : vector<1x8x32xbf16> to vector<8x32xbf16>
    %2 = arith.extf %1 : vector<8x32xbf16> to vector<8x32xf32>
    %cst = arith.constant dense<0.000000e+00> : vector<8xf32>
    %3 = vector.multi_reduction <add>, %2, %cst [1] : vector<8x32xf32> to vector<8xf32>
    %4 = vector.shape_cast %3 : vector<8xf32> to vector<8x1xf32>
    %cst_2 = arith.constant 3.200000e+01 : f32
    %5 = vector.broadcast %cst_2 : f32 to vector<8x1xf32>
    %6 = arith.divf %4, %5 : vector<8x1xf32>
    %7 = vector.broadcast %6 : vector<8x1xf32> to vector<8x32xf32>
    %8 = arith.subf %2, %7 : vector<8x32xf32>
    %9 = arith.mulf %8, %8 : vector<8x32xf32>
    %cst_3 = arith.constant dense<0.000000e+00> : vector<8xf32>
    %10 = vector.multi_reduction <add>, %9, %cst_3 [1] : vector<8x32xf32> to vector<8xf32>
    %11 = vector.shape_cast %10 : vector<8xf32> to vector<8x1xf32>
    %cst_4 = arith.constant 3.200000e+01 : f32
    %12 = vector.broadcast %cst_4 : f32 to vector<8x1xf32>
    %13 = arith.divf %11, %12 : vector<8x1xf32>
    %14 = vector.broadcast %6 : vector<8x1xf32> to vector<8x32xf32>
    %15 = arith.subf %2, %14 : vector<8x32xf32>
    %cst_5 = arith.constant 9.99999996E-13 : f32
    %16 = vector.broadcast %cst_5 : f32 to vector<8x1xf32>
    %17 = arith.addf %13, %16 : vector<8x1xf32>
    %18 = math.rsqrt %17 : vector<8x1xf32>
    %19 = vector.broadcast %18 : vector<8x1xf32> to vector<8x32xf32>
    %20 = arith.mulf %15, %19 : vector<8x32xf32>
    %c0_6 = arith.constant 0 : index
    %c0_7 = arith.constant 0 : index
    %21 = vector.load %arg3[%c0_6, %c0_7] : memref<1x32xf32, #tpu.memory_space<vmem>>, vector<1x32xf32>
    %22 = vector.broadcast %21 : vector<1x32xf32> to vector<8x32xf32>
    %23 = arith.mulf %20, %22 : vector<8x32xf32>
    %c0_8 = arith.constant 0 : index
    %c0_9 = arith.constant 0 : index
    %24 = vector.load %arg4[%c0_8, %c0_9] : memref<1x32xf32, #tpu.memory_space<vmem>>, vector<1x32xf32>
    %25 = vector.broadcast %24 : vector<1x32xf32> to vector<8x32xf32>
    %26 = arith.addf %23, %25 : vector<8x32xf32>
    %27 = arith.truncf %26 : vector<8x32xf32> to vector<8x32xbf16>
    %c0_10 = arith.constant 0 : index
    %c0_11 = arith.constant 0 : index
    %28 = vector.load %arg5[%c0_10, %c0_11] : memref<32x96xbf16, #tpu.memory_space<vmem>>, vector<32x96xbf16>
    %cst_12 = arith.constant dense<0.000000e+00> : vector<8x96xf32>
    %29 = tpu.matmul %27, %28, %cst_12 {dimension_numbers = #tpu.dot_dimension_numbers<[1], [0], [0], [1], [0, 0, 1, 1], [], []>} : vector<8x32xbf16>, vector<32x96xbf16>, vector<8x96xf32> -> vector<8x96xf32>
    %c0_13 = arith.constant 0 : index
    %c0_14 = arith.constant 0 : index
    %30 = vector.load %arg6[%c0_13, %c0_14] : memref<1x96xf32, #tpu.memory_space<vmem>>, vector<1x96xf32>
    %31 = vector.broadcast %30 : vector<1x96xf32> to vector<8x96xf32>
    %32 = arith.addf %29, %31 : vector<8x96xf32>
    %33 = arith.truncf %32 : vector<8x96xf32> to vector<8x96xbf16>
    %c0_15 = arith.constant 0 : index
    %c0_16 = arith.constant 0 : index
    %c0_17 = arith.constant 0 : index
    %34 = vector.load %arg2[%c0_15, %c0_16, %c0_17] : memref<1x1x8xf32, #tpu.memory_space<vmem>>, vector<1x1x8xf32>
    %35 = vector.extract_strided_slice %33 {offsets = [0, 0], sizes = [8, 8], strides = [1, 1]} : vector<8x96xbf16> to vector<8x8xbf16>
    %36 = vector.shape_cast %35 : vector<8x8xbf16> to vector<1x8x8xbf16>
    %37 = vector.extract_strided_slice %33 {offsets = [0, 32], sizes = [8, 8], strides = [1, 1]} : vector<8x96xbf16> to vector<8x8xbf16>
    %38 = vector.shape_cast %37 : vector<8x8xbf16> to vector<1x8x8xbf16>
    %39 = vector.extract_strided_slice %33 {offsets = [0, 64], sizes = [8, 8], strides = [1, 1]} : vector<8x96xbf16> to vector<8x8xbf16>
    %40 = vector.shape_cast %39 : vector<8x8xbf16> to vector<1x8x8xbf16>
    "tpu.trace_start"() <{level = 10 : i32, message = "bqd,bkd->bqk"}> : () -> ()
    %cst_18 = arith.constant dense<0.000000e+00> : vector<1x8x8xf32>
    %41 = tpu.matmul %36, %38, %cst_18 {dimension_numbers = #tpu.dot_dimension_numbers<[2], [2], [1], [1], [0, 0, 0, 1, 1, 1], [0], [0]>} : vector<1x8x8xbf16>, vector<1x8x8xbf16>, vector<1x8x8xf32> -> vector<1x8x8xf32>
    "tpu.trace_stop"() : () -> ()
    %cst_19 = arith.constant 0.353553385 : f32
    %42 = vector.broadcast %cst_19 : f32 to vector<1x8x8xf32>
    %43 = arith.mulf %41, %42 : vector<1x8x8xf32>
    %44 = vector.broadcast %34 : vector<1x1x8xf32> to vector<1x8x8xf32>
    %45 = arith.addf %43, %44 : vector<1x8x8xf32>
    %cst_20 = arith.constant dense<0xFF800000> : vector<1x8xf32>
    %46 = vector.multi_reduction <maximumf>, %45, %cst_20 [2] : vector<1x8x8xf32> to vector<1x8xf32>
    %47 = vector.shape_cast %46 : vector<1x8xf32> to vector<1x8x1xf32>
    %48 = vector.broadcast %47 : vector<1x8x1xf32> to vector<1x8x8xf32>
    %49 = arith.subf %45, %48 : vector<1x8x8xf32>
    %50 = math.exp %49 : vector<1x8x8xf32>
    %cst_21 = arith.constant dense<0.000000e+00> : vector<1x8xf32>
    %51 = vector.multi_reduction <add>, %50, %cst_21 [2] : vector<1x8x8xf32> to vector<1x8xf32>
    %52 = vector.shape_cast %51 : vector<1x8xf32> to vector<1x8x1xf32>
    %53 = tpu.reciprocal %52 {approx = true} : vector<1x8x1xf32> -> vector<1x8x1xf32>
    %54 = vector.broadcast %53 : vector<1x8x1xf32> to vector<1x8x8xf32>
    %55 = arith.mulf %50, %54 : vector<1x8x8xf32>
    %56 = arith.truncf %55 : vector<1x8x8xf32> to vector<1x8x8xbf16>
    "tpu.trace_start"() <{level = 10 : i32, message = "bqk,bkd->bqd"}> : () -> ()
    %cst_22 = arith.constant dense<0.000000e+00> : vector<1x8x8xf32>
    %57 = tpu.matmul %56, %40, %cst_22 {dimension_numbers = #tpu.dot_dimension_numbers<[2], [1], [1], [2], [0, 0, 0, 1, 1, 2], [0], [0]>} : vector<1x8x8xbf16>, vector<1x8x8xbf16>, vector<1x8x8xf32> -> vector<1x8x8xf32>
    "tpu.trace_stop"() : () -> ()
    %58 = vector.shape_cast %57 : vector<1x8x8xf32> to vector<8x8xf32>
    %c0_23 = arith.constant 0 : index
    %c0_24 = arith.constant 0 : index
    %59 = vector.load %arg18[%c0_23, %c0_24] : memref<8x32xf32, #tpu.memory_space<vmem>>, vector<8x8xf32>
    tpu.vector_store %arg18[%c0_23, %c0_24], %58 {strides = array<i32>} : memref<8x32xf32, #tpu.memory_space<vmem>>, vector<8x8xf32>,
    %60 = vector.extract_strided_slice %33 {offsets = [0, 8], sizes = [8, 8], strides = [1, 1]} : vector<8x96xbf16> to vector<8x8xbf16>
    %61 = vector.shape_cast %60 : vector<8x8xbf16> to vector<1x8x8xbf16>
    %62 = vector.extract_strided_slice %33 {offsets = [0, 40], sizes = [8, 8], strides = [1, 1]} : vector<8x96xbf16> to vector<8x8xbf16>
    %63 = vector.shape_cast %62 : vector<8x8xbf16> to vector<1x8x8xbf16>
    %64 = vector.extract_strided_slice %33 {offsets = [0, 72], sizes = [8, 8], strides = [1, 1]} : vector<8x96xbf16> to vector<8x8xbf16>
    %65 = vector.shape_cast %64 : vector<8x8xbf16> to vector<1x8x8xbf16>
    "tpu.trace_start"() <{level = 10 : i32, message = "bqd,bkd->bqk"}> : () -> ()
    %cst_25 = arith.constant dense<0.000000e+00> : vector<1x8x8xf32>
    %66 = tpu.matmul %61, %63, %cst_25 {dimension_numbers = #tpu.dot_dimension_numbers<[2], [2], [1], [1], [0, 0, 0, 1, 1, 1], [0], [0]>} : vector<1x8x8xbf16>, vector<1x8x8xbf16>, vector<1x8x8xf32> -> vector<1x8x8xf32>
    "tpu.trace_stop"() : () -> ()
    %cst_26 = arith.constant 0.353553385 : f32
    %67 = vector.broadcast %cst_26 : f32 to vector<1x8x8xf32>
    %68 = arith.mulf %66, %67 : vector<1x8x8xf32>
    %69 = vector.broadcast %34 : vector<1x1x8xf32> to vector<1x8x8xf32>
    %70 = arith.addf %68, %69 : vector<1x8x8xf32>
    %cst_27 = arith.constant dense<0xFF800000> : vector<1x8xf32>
    %71 = vector.multi_reduction <maximumf>, %70, %cst_27 [2] : vector<1x8x8xf32> to vector<1x8xf32>
    %72 = vector.shape_cast %71 : vector<1x8xf32> to vector<1x8x1xf32>
    %73 = vector.broadcast %72 : vector<1x8x1xf32> to vector<1x8x8xf32>
    %74 = arith.subf %70, %73 : vector<1x8x8xf32>
    %75 = math.exp %74 : vector<1x8x8xf32>
    %cst_28 = arith.constant dense<0.000000e+00> : vector<1x8xf32>
    %76 = vector.multi_reduction <add>, %75, %cst_28 [2] : vector<1x8x8xf32> to vector<1x8xf32>
    %77 = vector.shape_cast %76 : vector<1x8xf32> to vector<1x8x1xf32>
    %78 = tpu.reciprocal %77 {approx = true} : vector<1x8x1xf32> -> vector<1x8x1xf32>
    %79 = vector.broadcast %78 : vector<1x8x1xf32> to vector<1x8x8xf32>
    %80 = arith.mulf %75, %79 : vector<1x8x8xf32>
    %81 = arith.truncf %80 : vector<1x8x8xf32> to vector<1x8x8xbf16>
    "tpu.trace_start"() <{level = 10 : i32, message = "bqk,bkd->bqd"}> : () -> ()
    %cst_29 = arith.constant dense<0.000000e+00> : vector<1x8x8xf32>
    %82 = tpu.matmul %81, %65, %cst_29 {dimension_numbers = #tpu.dot_dimension_numbers<[2], [1], [1], [2], [0, 0, 0, 1, 1, 2], [0], [0]>} : vector<1x8x8xbf16>, vector<1x8x8xbf16>, vector<1x8x8xf32> -> vector<1x8x8xf32>
    "tpu.trace_stop"() : () -> ()
    %83 = vector.shape_cast %82 : vector<1x8x8xf32> to vector<8x8xf32>
    %c0_30 = arith.constant 0 : index
    %c8 = arith.constant 8 : index
    %84 = vector.load %arg18[%c0_30, %c8] : memref<8x32xf32, #tpu.memory_space<vmem>>, vector<8x8xf32>
    tpu.vector_store %arg18[%c0_30, %c8], %83 {strides = array<i32>} : memref<8x32xf32, #tpu.memory_space<vmem>>, vector<8x8xf32>,
    %85 = vector.extract_strided_slice %33 {offsets = [0, 16], sizes = [8, 8], strides = [1, 1]} : vector<8x96xbf16> to vector<8x8xbf16>
    %86 = vector.shape_cast %85 : vector<8x8xbf16> to vector<1x8x8xbf16>
    %87 = vector.extract_strided_slice %33 {offsets = [0, 48], sizes = [8, 8], strides = [1, 1]} : vector<8x96xbf16> to vector<8x8xbf16>
    %88 = vector.shape_cast %87 : vector<8x8xbf16> to vector<1x8x8xbf16>
    %89 = vector.extract_strided_slice %33 {offsets = [0, 80], sizes = [8, 8], strides = [1, 1]} : vector<8x96xbf16> to vector<8x8xbf16>
    %90 = vector.shape_cast %89 : vector<8x8xbf16> to vector<1x8x8xbf16>
    "tpu.trace_start"() <{level = 10 : i32, message = "bqd,bkd->bqk"}> : () -> ()
    %cst_31 = arith.constant dense<0.000000e+00> : vector<1x8x8xf32>
    %91 = tpu.matmul %86, %88, %cst_31 {dimension_numbers = #tpu.dot_dimension_numbers<[2], [2], [1], [1], [0, 0, 0, 1, 1, 1], [0], [0]>} : vector<1x8x8xbf16>, vector<1x8x8xbf16>, vector<1x8x8xf32> -> vector<1x8x8xf32>
    "tpu.trace_stop"() : () -> ()
    %cst_32 = arith.constant 0.353553385 : f32
    %92 = vector.broadcast %cst_32 : f32 to vector<1x8x8xf32>
    %93 = arith.mulf %91, %92 : vector<1x8x8xf32>
    %94 = vector.broadcast %34 : vector<1x1x8xf32> to vector<1x8x8xf32>
    %95 = arith.addf %93, %94 : vector<1x8x8xf32>
    %cst_33 = arith.constant dense<0xFF800000> : vector<1x8xf32>
    %96 = vector.multi_reduction <maximumf>, %95, %cst_33 [2] : vector<1x8x8xf32> to vector<1x8xf32>
    %97 = vector.shape_cast %96 : vector<1x8xf32> to vector<1x8x1xf32>
    %98 = vector.broadcast %97 : vector<1x8x1xf32> to vector<1x8x8xf32>
    %99 = arith.subf %95, %98 : vector<1x8x8xf32>
    %100 = math.exp %99 : vector<1x8x8xf32>
    %cst_34 = arith.constant dense<0.000000e+00> : vector<1x8xf32>
    %101 = vector.multi_reduction <add>, %100, %cst_34 [2] : vector<1x8x8xf32> to vector<1x8xf32>
    %102 = vector.shape_cast %101 : vector<1x8xf32> to vector<1x8x1xf32>
    %103 = tpu.reciprocal %102 {approx = true} : vector<1x8x1xf32> -> vector<1x8x1xf32>
    %104 = vector.broadcast %103 : vector<1x8x1xf32> to vector<1x8x8xf32>
    %105 = arith.mulf %100, %104 : vector<1x8x8xf32>
    %106 = arith.truncf %105 : vector<1x8x8xf32> to vector<1x8x8xbf16>
    "tpu.trace_start"() <{level = 10 : i32, message = "bqk,bkd->bqd"}> : () -> ()
    %cst_35 = arith.constant dense<0.000000e+00> : vector<1x8x8xf32>
    %107 = tpu.matmul %106, %90, %cst_35 {dimension_numbers = #tpu.dot_dimension_numbers<[2], [1], [1], [2], [0, 0, 0, 1, 1, 2], [0], [0]>} : vector<1x8x8xbf16>, vector<1x8x8xbf16>, vector<1x8x8xf32> -> vector<1x8x8xf32>
    "tpu.trace_stop"() : () -> ()
    %108 = vector.shape_cast %107 : vector<1x8x8xf32> to vector<8x8xf32>
    %c0_36 = arith.constant 0 : index
    %c16 = arith.constant 16 : index
    %109 = vector.load %arg18[%c0_36, %c16] : memref<8x32xf32, #tpu.memory_space<vmem>>, vector<8x8xf32>
    tpu.vector_store %arg18[%c0_36, %c16], %108 {strides = array<i32>} : memref<8x32xf32, #tpu.memory_space<vmem>>, vector<8x8xf32>,
    %110 = vector.extract_strided_slice %33 {offsets = [0, 24], sizes = [8, 8], strides = [1, 1]} : vector<8x96xbf16> to vector<8x8xbf16>
    %111 = vector.shape_cast %110 : vector<8x8xbf16> to vector<1x8x8xbf16>
    %112 = vector.extract_strided_slice %33 {offsets = [0, 56], sizes = [8, 8], strides = [1, 1]} : vector<8x96xbf16> to vector<8x8xbf16>
    %113 = vector.shape_cast %112 : vector<8x8xbf16> to vector<1x8x8xbf16>
    %114 = vector.extract_strided_slice %33 {offsets = [0, 88], sizes = [8, 8], strides = [1, 1]} : vector<8x96xbf16> to vector<8x8xbf16>
    %115 = vector.shape_cast %114 : vector<8x8xbf16> to vector<1x8x8xbf16>
    "tpu.trace_start"() <{level = 10 : i32, message = "bqd,bkd->bqk"}> : () -> ()
    %cst_37 = arith.constant dense<0.000000e+00> : vector<1x8x8xf32>
    %116 = tpu.matmul %111, %113, %cst_37 {dimension_numbers = #tpu.dot_dimension_numbers<[2], [2], [1], [1], [0, 0, 0, 1, 1, 1], [0], [0]>} : vector<1x8x8xbf16>, vector<1x8x8xbf16>, vector<1x8x8xf32> -> vector<1x8x8xf32>
    "tpu.trace_stop"() : () -> ()
    %cst_38 = arith.constant 0.353553385 : f32
    %117 = vector.broadcast %cst_38 : f32 to vector<1x8x8xf32>
    %118 = arith.mulf %116, %117 : vector<1x8x8xf32>
    %119 = vector.broadcast %34 : vector<1x1x8xf32> to vector<1x8x8xf32>
    %120 = arith.addf %118, %119 : vector<1x8x8xf32>
    %cst_39 = arith.constant dense<0xFF800000> : vector<1x8xf32>
    %121 = vector.multi_reduction <maximumf>, %120, %cst_39 [2] : vector<1x8x8xf32> to vector<1x8xf32>
    %122 = vector.shape_cast %121 : vector<1x8xf32> to vector<1x8x1xf32>
    %123 = vector.broadcast %122 : vector<1x8x1xf32> to vector<1x8x8xf32>
    %124 = arith.subf %120, %123 : vector<1x8x8xf32>
    %125 = math.exp %124 : vector<1x8x8xf32>
    %cst_40 = arith.constant dense<0.000000e+00> : vector<1x8xf32>
    %126 = vector.multi_reduction <add>, %125, %cst_40 [2] : vector<1x8x8xf32> to vector<1x8xf32>
    %127 = vector.shape_cast %126 : vector<1x8xf32> to vector<1x8x1xf32>
    %128 = tpu.reciprocal %127 {approx = true} : vector<1x8x1xf32> -> vector<1x8x1xf32>
    %129 = vector.broadcast %128 : vector<1x8x1xf32> to vector<1x8x8xf32>
    %130 = arith.mulf %125, %129 : vector<1x8x8xf32>
    %131 = arith.truncf %130 : vector<1x8x8xf32> to vector<1x8x8xbf16>
    "tpu.trace_start"() <{level = 10 : i32, message = "bqk,bkd->bqd"}> : () -> ()
    %cst_41 = arith.constant dense<0.000000e+00> : vector<1x8x8xf32>
    %132 = tpu.matmul %131, %115, %cst_41 {dimension_numbers = #tpu.dot_dimension_numbers<[2], [1], [1], [2], [0, 0, 0, 1, 1, 2], [0], [0]>} : vector<1x8x8xbf16>, vector<1x8x8xbf16>, vector<1x8x8xf32> -> vector<1x8x8xf32>
    "tpu.trace_stop"() : () -> ()
    %133 = vector.shape_cast %132 : vector<1x8x8xf32> to vector<8x8xf32>
    %c0_42 = arith.constant 0 : index
    %c24 = arith.constant 24 : index
    %134 = vector.load %arg18[%c0_42, %c24] : memref<8x32xf32, #tpu.memory_space<vmem>>, vector<8x8xf32>
    tpu.vector_store %arg18[%c0_42, %c24], %133 {strides = array<i32>} : memref<8x32xf32, #tpu.memory_space<vmem>>, vector<8x8xf32>,
    %c0_43 = arith.constant 0 : index
    %c0_44 = arith.constant 0 : index
    %135 = vector.load %arg18[%c0_43, %c0_44] : memref<8x32xf32, #tpu.memory_space<vmem>>, vector<8x32xf32>
    %136 = arith.truncf %135 : vector<8x32xf32> to vector<8x32xbf16>
    %c0_45 = arith.constant 0 : index
    %c0_46 = arith.constant 0 : index
    %137 = vector.load %arg7[%c0_45, %c0_46] : memref<32x32xbf16, #tpu.memory_space<vmem>>, vector<32x32xbf16>
    %cst_47 = arith.constant dense<0.000000e+00> : vector<8x32xf32>
    %138 = tpu.matmul %136, %137, %cst_47 {dimension_numbers = #tpu.dot_dimension_numbers<[1], [0], [0], [1], [0, 0, 1, 1], [], []>} : vector<8x32xbf16>, vector<32x32xbf16>, vector<8x32xf32> -> vector<8x32xf32>
    %c0_48 = arith.constant 0 : index
    %c0_49 = arith.constant 0 : index
    %139 = vector.load %arg8[%c0_48, %c0_49] : memref<1x32xf32, #tpu.memory_space<vmem>>, vector<1x32xf32>
    %140 = vector.broadcast %139 : vector<1x32xf32> to vector<8x32xf32>
    %141 = arith.addf %138, %140 : vector<8x32xf32>
    %142 = arith.addf %26, %141 : vector<8x32xf32>
    %cst_50 = arith.constant dense<0.000000e+00> : vector<8xf32>
    %143 = vector.multi_reduction <add>, %142, %cst_50 [1] : vector<8x32xf32> to vector<8xf32>
    %144 = vector.shape_cast %143 : vector<8xf32> to vector<8x1xf32>
    %cst_51 = arith.constant 3.200000e+01 : f32
    %145 = vector.broadcast %cst_51 : f32 to vector<8x1xf32>
    %146 = arith.divf %144, %145 : vector<8x1xf32>
    %147 = vector.broadcast %146 : vector<8x1xf32> to vector<8x32xf32>
    %148 = arith.subf %142, %147 : vector<8x32xf32>
    %149 = arith.mulf %148, %148 : vector<8x32xf32>
    %cst_52 = arith.constant dense<0.000000e+00> : vector<8xf32>
    %150 = vector.multi_reduction <add>, %149, %cst_52 [1] : vector<8x32xf32> to vector<8xf32>
    %151 = vector.shape_cast %150 : vector<8xf32> to vector<8x1xf32>
    %cst_53 = arith.constant 3.200000e+01 : f32
    %152 = vector.broadcast %cst_53 : f32 to vector<8x1xf32>
    %153 = arith.divf %151, %152 : vector<8x1xf32>
    %154 = vector.broadcast %146 : vector<8x1xf32> to vector<8x32xf32>
    %155 = arith.subf %142, %154 : vector<8x32xf32>
    %cst_54 = arith.constant 9.99999996E-13 : f32
    %156 = vector.broadcast %cst_54 : f32 to vector<8x1xf32>
    %157 = arith.addf %153, %156 : vector<8x1xf32>
    %158 = math.rsqrt %157 : vector<8x1xf32>
    %159 = vector.broadcast %158 : vector<8x1xf32> to vector<8x32xf32>
    %160 = arith.mulf %155, %159 : vector<8x32xf32>
    %c0_55 = arith.constant 0 : index
    %c0_56 = arith.constant 0 : index
    %161 = vector.load %arg9[%c0_55, %c0_56] : memref<1x32xf32, #tpu.memory_space<vmem>>, vector<1x32xf32>
    %162 = vector.broadcast %161 : vector<1x32xf32> to vector<8x32xf32>
    %163 = arith.mulf %160, %162 : vector<8x32xf32>
    %c0_57 = arith.constant 0 : index
    %c0_58 = arith.constant 0 : index
    %164 = vector.load %arg10[%c0_57, %c0_58] : memref<1x32xf32, #tpu.memory_space<vmem>>, vector<1x32xf32>
    %165 = vector.broadcast %164 : vector<1x32xf32> to vector<8x32xf32>
    %166 = arith.addf %163, %165 : vector<8x32xf32>
    %167 = arith.truncf %166 : vector<8x32xf32> to vector<8x32xbf16>
    %c0_59 = arith.constant 0 : index
    %c0_60 = arith.constant 0 : index
    %168 = vector.load %arg11[%c0_59, %c0_60] : memref<32x64xbf16, #tpu.memory_space<vmem>>, vector<32x64xbf16>
    %cst_61 = arith.constant dense<0.000000e+00> : vector<8x64xf32>
    %169 = tpu.matmul %167, %168, %cst_61 {dimension_numbers = #tpu.dot_dimension_numbers<[1], [0], [0], [1], [0, 0, 1, 1], [], []>} : vector<8x32xbf16>, vector<32x64xbf16>, vector<8x64xf32> -> vector<8x64xf32>
    %c0_62 = arith.constant 0 : index
    %c0_63 = arith.constant 0 : index
    %170 = vector.load %arg12[%c0_62, %c0_63] : memref<1x64xf32, #tpu.memory_space<vmem>>, vector<1x64xf32>
    %171 = vector.broadcast %170 : vector<1x64xf32> to vector<8x64xf32>
    %172 = arith.addf %169, %171 : vector<8x64xf32>
    %173 = arith.mulf %172, %172 : vector<8x64xf32>
    %174 = arith.mulf %172, %173 : vector<8x64xf32>
    %cst_64 = arith.constant 4.471500e-02 : f32
    %175 = vector.broadcast %cst_64 : f32 to vector<8x64xf32>
    %176 = arith.mulf %175, %174 : vector<8x64xf32>
    %177 = arith.addf %172, %176 : vector<8x64xf32>
    %cst_65 = arith.constant 0.797884583 : f32
    %178 = vector.broadcast %cst_65 : f32 to vector<8x64xf32>
    %179 = arith.mulf %178, %177 : vector<8x64xf32>
    %180 = math.tanh %179 : vector<8x64xf32>
    %cst_66 = arith.constant 1.000000e+00 : f32
    %181 = vector.broadcast %cst_66 : f32 to vector<8x64xf32>
    %182 = arith.addf %181, %180 : vector<8x64xf32>
    %cst_67 = arith.constant 5.000000e-01 : f32
    %183 = vector.broadcast %cst_67 : f32 to vector<8x64xf32>
    %184 = arith.mulf %183, %182 : vector<8x64xf32>
    %185 = arith.mulf %172, %184 : vector<8x64xf32>
    %186 = arith.truncf %185 : vector<8x64xf32> to vector<8x64xbf16>
    %c0_68 = arith.constant 0 : index
    %c0_69 = arith.constant 0 : index
    %187 = vector.load %arg13[%c0_68, %c0_69] : memref<64x32xbf16, #tpu.memory_space<vmem>>, vector<64x32xbf16>
    %cst_70 = arith.constant dense<0.000000e+00> : vector<8x32xf32>
    %188 = tpu.matmul %186, %187, %cst_70 {dimension_numbers = #tpu.dot_dimension_numbers<[1], [0], [0], [1], [0, 0, 1, 1], [], []>} : vector<8x64xbf16>, vector<64x32xbf16>, vector<8x32xf32> -> vector<8x32xf32>
    %c0_71 = arith.constant 0 : index
    %c0_72 = arith.constant 0 : index
    %189 = vector.load %arg14[%c0_71, %c0_72] : memref<1x32xf32, #tpu.memory_space<vmem>>, vector<1x32xf32>
    %190 = vector.broadcast %189 : vector<1x32xf32> to vector<8x32xf32>
    %191 = arith.addf %188, %190 : vector<8x32xf32>
    %192 = arith.addf %166, %191 : vector<8x32xf32>
    %cst_73 = arith.constant dense<0.000000e+00> : vector<8xf32>
    %193 = vector.multi_reduction <add>, %192, %cst_73 [1] : vector<8x32xf32> to vector<8xf32>
    %194 = vector.shape_cast %193 : vector<8xf32> to vector<8x1xf32>
    %cst_74 = arith.constant 3.200000e+01 : f32
    %195 = vector.broadcast %cst_74 : f32 to vector<8x1xf32>
    %196 = arith.divf %194, %195 : vector<8x1xf32>
    %197 = vector.broadcast %196 : vector<8x1xf32> to vector<8x32xf32>
    %198 = arith.subf %192, %197 : vector<8x32xf32>
    %199 = arith.mulf %198, %198 : vector<8x32xf32>
    %cst_75 = arith.constant dense<0.000000e+00> : vector<8xf32>
    %200 = vector.multi_reduction <add>, %199, %cst_75 [1] : vector<8x32xf32> to vector<8xf32>
    %201 = vector.shape_cast %200 : vector<8xf32> to vector<8x1xf32>
    %cst_76 = arith.constant 3.200000e+01 : f32
    %202 = vector.broadcast %cst_76 : f32 to vector<8x1xf32>
    %203 = arith.divf %201, %202 : vector<8x1xf32>
    %204 = vector.broadcast %196 : vector<8x1xf32> to vector<8x32xf32>
    %205 = arith.subf %192, %204 : vector<8x32xf32>
    %cst_77 = arith.constant 9.99999996E-13 : f32
    %206 = vector.broadcast %cst_77 : f32 to vector<8x1xf32>
    %207 = arith.addf %203, %206 : vector<8x1xf32>
    %208 = math.rsqrt %207 : vector<8x1xf32>
    %209 = vector.broadcast %208 : vector<8x1xf32> to vector<8x32xf32>
    %210 = arith.mulf %205, %209 : vector<8x32xf32>
    %c0_78 = arith.constant 0 : index
    %c0_79 = arith.constant 0 : index
    %211 = vector.load %arg15[%c0_78, %c0_79] : memref<1x32xf32, #tpu.memory_space<vmem>>, vector<1x32xf32>
    %212 = vector.broadcast %211 : vector<1x32xf32> to vector<8x32xf32>
    %213 = arith.mulf %210, %212 : vector<8x32xf32>
    %c0_80 = arith.constant 0 : index
    %c0_81 = arith.constant 0 : index
    %214 = vector.load %arg16[%c0_80, %c0_81] : memref<1x32xf32, #tpu.memory_space<vmem>>, vector<1x32xf32>
    %215 = vector.broadcast %214 : vector<1x32xf32> to vector<8x32xf32>
    %216 = arith.addf %213, %215 : vector<8x32xf32>
    %217 = vector.shape_cast %216 : vector<8x32xf32> to vector<1x8x32xf32>
    %cst_82 = arith.constant dense<0.000000e+00> : vector<1x32xf32>
    %218 = vector.multi_reduction <add>, %217, %cst_82 [1] : vector<1x8x32xf32> to vector<1x32xf32>
    %219 = vector.shape_cast %218 : vector<1x32xf32> to vector<1x1x32xf32>
    %cst_83 = arith.constant 8.000000e+00 : f32
    %220 = vector.broadcast %cst_83 : f32 to vector<1x1x32xf32>
    %221 = arith.divf %219, %220 : vector<1x1x32xf32>
    %c0_84 = arith.constant 0 : index
    %c0_85 = arith.constant 0 : index
    %c0_86 = arith.constant 0 : index
    %222 = vector.load %arg17[%c0_84, %c0_85, %c0_86] : memref<1x1x32xf32, #tpu.memory_space<vmem>>, vector<1x1x32xf32>
    tpu.vector_store %arg17[%c0_84, %c0_85, %c0_86], %221 {strides = array<i32>} : memref<1x1x32xf32, #tpu.memory_space<vmem>>, vector<1x1x32xf32>,
    return
  }
  func.func @transform_0(%arg0: i32) -> (i32, i32, i32) {
    %c0_i32 = arith.constant 0 : i32
    %c0_i32_0 = arith.constant 0 : i32
    %c0_i32_1 = arith.constant 0 : i32
    return %arg0, %c0_i32, %c0_i32_0 : i32, i32, i32
  }
  func.func @transform_1(%arg0: i32) -> (i32, i32, i32) {
    %c0_i32 = arith.constant 0 : i32
    %c0_i32_0 = arith.constant 0 : i32
    %c0_i32_1 = arith.constant 0 : i32
    return %arg0, %c0_i32, %c0_i32_0 : i32, i32, i32
  }
  func.func @transform_2(%arg0: i32) -> (i32, i32) {
    %c0_i32 = arith.constant 0 : i32
    %c0_i32_0 = arith.constant 0 : i32
    %c0_i32_1 = arith.constant 0 : i32
    return %c0_i32, %c0_i32_0 : i32, i32
  }
  func.func @transform_3(%arg0: i32) -> (i32, i32) {
    %c0_i32 = arith.constant 0 : i32
    %c0_i32_0 = arith.constant 0 : i32
    %c0_i32_1 = arith.constant 0 : i32
    return %c0_i32, %c0_i32_0 : i32, i32
  }
  func.func @transform_4(%arg0: i32) -> (i32, i32) {
    %c0_i32 = arith.constant 0 : i32
    %c0_i32_0 = arith.constant 0 : i32
    %c0_i32_1 = arith.constant 0 : i32
    return %c0_i32, %c0_i32_0 : i32, i32
  }
  func.func @transform_5(%arg0: i32) -> (i32, i32) {
    %c0_i32 = arith.constant 0 : i32
    %c0_i32_0 = arith.constant 0 : i32
    %c0_i32_1 = arith.constant 0 : i32
    return %c0_i32, %c0_i32_0 : i32, i32
  }
  func.func @transform_6(%arg0: i32) -> (i32, i32) {
    %c0_i32 = arith.constant 0 : i32
    %c0_i32_0 = arith.constant 0 : i32
    %c0_i32_1 = arith.constant 0 : i32
    return %c0_i32, %c0_i32_0 : i32, i32
  }
  func.func @transform_7(%arg0: i32) -> (i32, i32) {
    %c0_i32 = arith.constant 0 : i32
    %c0_i32_0 = arith.constant 0 : i32
    %c0_i32_1 = arith.constant 0 : i32
    return %c0_i32, %c0_i32_0 : i32, i32
  }
  func.func @transform_8(%arg0: i32) -> (i32, i32) {
    %c0_i32 = arith.constant 0 : i32
    %c0_i32_0 = arith.constant 0 : i32
    %c0_i32_1 = arith.constant 0 : i32
    return %c0_i32, %c0_i32_0 : i32, i32
  }
  func.func @transform_9(%arg0: i32) -> (i32, i32) {
    %c0_i32 = arith.constant 0 : i32
    %c0_i32_0 = arith.constant 0 : i32
    %c0_i32_1 = arith.constant 0 : i32
    return %c0_i32, %c0_i32_0 : i32, i32
  }
  func.func @transform_10(%arg0: i32) -> (i32, i32) {
    %c0_i32 = arith.constant 0 : i32
    %c0_i32_0 = arith.constant 0 : i32
    %c0_i32_1 = arith.constant 0 : i32
    return %c0_i32, %c0_i32_0 : i32, i32
  }
  func.func @transform_11(%arg0: i32) -> (i32, i32) {
    %c0_i32 = arith.constant 0 : i32
    %c0_i32_0 = arith.constant 0 : i32
    %c0_i32_1 = arith.constant 0 : i32
    return %c0_i32, %c0_i32_0 : i32, i32
  }
  func.func @transform_12(%arg0: i32) -> (i32, i32) {
    %c0_i32 = arith.constant 0 : i32
    %c0_i32_0 = arith.constant 0 : i32
    %c0_i32_1 = arith.constant 0 : i32
    return %c0_i32, %c0_i32_0 : i32, i32
  }
  func.func @transform_13(%arg0: i32) -> (i32, i32) {
    %c0_i32 = arith.constant 0 : i32
    %c0_i32_0 = arith.constant 0 : i32
    %c0_i32_1 = arith.constant 0 : i32
    return %c0_i32, %c0_i32_0 : i32, i32
  }
  func.func @transform_14(%arg0: i32) -> (i32, i32) {
    %c0_i32 = arith.constant 0 : i32
    %c0_i32_0 = arith.constant 0 : i32
    %c0_i32_1 = arith.constant 0 : i32
    return %c0_i32, %c0_i32_0 : i32, i32
  }
  func.func @transform_15(%arg0: i32) -> (i32, i32) {
    %c0_i32 = arith.constant 0 : i32
    %c0_i32_0 = arith.constant 0 : i32
    %c0_i32_1 = arith.constant 0 : i32
    return %c0_i32, %c0_i32_0 : i32, i32
  }
  func.func @transform_16(%arg0: i32) -> (i32, i32, i32) {
    %c0_i32 = arith.constant 0 : i32
    %c0_i32_0 = arith.constant 0 : i32
    %c0_i32_1 = arith.constant 0 : i32
    return %arg0, %c0_i32, %c0_i32_0 : i32, i32, i32
  }
}

module attributes {stable_mosaic.version = 11 : i64} {
  func.func @_news_encoder_kernel(%arg0: i32, %arg1: memref<8x8x32xbf16, #tpu.memory_space<vmem>>, %arg2: memref<32x96xbf16, #tpu.memory_space<vmem>>, %arg3: memref<1x96xf32, #tpu.memory_space<vmem>>, %arg4: memref<32x32xbf16, #tpu.memory_space<vmem>>, %arg5: memref<1x32xf32, #tpu.memory_space<vmem>>, %arg6: memref<32x16xbf16, #tpu.memory_space<vmem>>, %arg7: memref<1x16xf32, #tpu.memory_space<vmem>>, %arg8: memref<1x16xf32, #tpu.memory_space<vmem>>, %arg9: memref<8x32xf32, #tpu.memory_space<vmem>>, %arg10: memref<64x32xf32, #tpu.memory_space<vmem>>) attributes {dimension_semantics = [#tpu.dimension_semantics<parallel>], iteration_bounds = array<i64: 1>, scalar_prefetch = 0 : i64, scratch_operands = 1 : i64, tpu.core_type = #tpu.core_type<tc>, window_params = [{transform_indices = @transform_0, window_bounds = array<i64: 8, 8, 32>}, {pipeline_mode = #tpu.pipeline_mode<synchronous>, transform_indices = @transform_1, window_bounds = array<i64: 32, 96>}, {pipeline_mode = #tpu.pipeline_mode<synchronous>, transform_indices = @transform_2, window_bounds = array<i64: 1, 96>}, {pipeline_mode = #tpu.pipeline_mode<synchronous>, transform_indices = @transform_3, window_bounds = array<i64: 32, 32>}, {pipeline_mode = #tpu.pipeline_mode<synchronous>, transform_indices = @transform_4, window_bounds = array<i64: 1, 32>}, {pipeline_mode = #tpu.pipeline_mode<synchronous>, transform_indices = @transform_5, window_bounds = array<i64: 32, 16>}, {pipeline_mode = #tpu.pipeline_mode<synchronous>, transform_indices = @transform_6, window_bounds = array<i64: 1, 16>}, {pipeline_mode = #tpu.pipeline_mode<synchronous>, transform_indices = @transform_7, window_bounds = array<i64: 1, 16>}, {transform_indices = @transform_8, window_bounds = array<i64: 8, 32>}]} {
    %c0 = arith.constant 0 : index
    %c0_0 = arith.constant 0 : index
    %c0_1 = arith.constant 0 : index
    %0 = vector.load %arg1[%c0, %c0_0, %c0_1] : memref<8x8x32xbf16, #tpu.memory_space<vmem>>, vector<8x8x32xbf16>
    %1 = vector.shape_cast %0 : vector<8x8x32xbf16> to vector<64x32xbf16>
    %c0_2 = arith.constant 0 : index
    %c0_3 = arith.constant 0 : index
    %2 = vector.load %arg2[%c0_2, %c0_3] : memref<32x96xbf16, #tpu.memory_space<vmem>>, vector<32x96xbf16>
    %cst = arith.constant dense<0.000000e+00> : vector<64x96xf32>
    %3 = tpu.matmul %1, %2, %cst {dimension_numbers = #tpu.dot_dimension_numbers<[1], [0], [0], [1], [0, 0, 1, 1], [], []>} : vector<64x32xbf16>, vector<32x96xbf16>, vector<64x96xf32> -> vector<64x96xf32>
    %c0_4 = arith.constant 0 : index
    %c0_5 = arith.constant 0 : index
    %4 = vector.load %arg3[%c0_4, %c0_5] : memref<1x96xf32, #tpu.memory_space<vmem>>, vector<1x96xf32>
    %5 = vector.broadcast %4 : vector<1x96xf32> to vector<64x96xf32>
    %6 = arith.addf %3, %5 : vector<64x96xf32>
    %7 = arith.truncf %6 : vector<64x96xf32> to vector<64x96xbf16>
    %8 = vector.extract_strided_slice %7 {offsets = [0, 0], sizes = [64, 8], strides = [1, 1]} : vector<64x96xbf16> to vector<64x8xbf16>
    %9 = vector.shape_cast %8 : vector<64x8xbf16> to vector<8x8x8xbf16>
    %10 = vector.extract_strided_slice %7 {offsets = [0, 32], sizes = [64, 8], strides = [1, 1]} : vector<64x96xbf16> to vector<64x8xbf16>
    %11 = vector.shape_cast %10 : vector<64x8xbf16> to vector<8x8x8xbf16>
    %12 = vector.extract_strided_slice %7 {offsets = [0, 64], sizes = [64, 8], strides = [1, 1]} : vector<64x96xbf16> to vector<64x8xbf16>
    %13 = vector.shape_cast %12 : vector<64x8xbf16> to vector<8x8x8xbf16>
    "tpu.trace_start"() <{level = 10 : i32, message = "bqd,bkd->bqk"}> : () -> ()
    %cst_6 = arith.constant dense<0.000000e+00> : vector<8x8x8xf32>
    %14 = tpu.matmul %9, %11, %cst_6 {dimension_numbers = #tpu.dot_dimension_numbers<[2], [2], [1], [1], [0, 0, 0, 1, 1, 1], [0], [0]>} : vector<8x8x8xbf16>, vector<8x8x8xbf16>, vector<8x8x8xf32> -> vector<8x8x8xf32>
    "tpu.trace_stop"() : () -> ()
    %cst_7 = arith.constant 0.353553385 : f32
    %15 = vector.broadcast %cst_7 : f32 to vector<8x8x8xf32>
    %16 = arith.mulf %14, %15 : vector<8x8x8xf32>
    %cst_8 = arith.constant dense<0xFF800000> : vector<8x8xf32>
    %17 = vector.multi_reduction <maximumf>, %16, %cst_8 [2] : vector<8x8x8xf32> to vector<8x8xf32>
    %18 = vector.shape_cast %17 : vector<8x8xf32> to vector<8x8x1xf32>
    %19 = vector.broadcast %18 : vector<8x8x1xf32> to vector<8x8x8xf32>
    %20 = arith.subf %16, %19 : vector<8x8x8xf32>
    %21 = math.exp %20 : vector<8x8x8xf32>
    %cst_9 = arith.constant dense<0.000000e+00> : vector<8x8xf32>
    %22 = vector.multi_reduction <add>, %21, %cst_9 [2] : vector<8x8x8xf32> to vector<8x8xf32>
    %23 = vector.shape_cast %22 : vector<8x8xf32> to vector<8x8x1xf32>
    %24 = tpu.reciprocal %23 {approx = true} : vector<8x8x1xf32> -> vector<8x8x1xf32>
    %25 = vector.broadcast %24 : vector<8x8x1xf32> to vector<8x8x8xf32>
    %26 = arith.mulf %21, %25 : vector<8x8x8xf32>
    %27 = arith.truncf %26 : vector<8x8x8xf32> to vector<8x8x8xbf16>
    "tpu.trace_start"() <{level = 10 : i32, message = "bqk,bkd->bqd"}> : () -> ()
    %cst_10 = arith.constant dense<0.000000e+00> : vector<8x8x8xf32>
    %28 = tpu.matmul %27, %13, %cst_10 {dimension_numbers = #tpu.dot_dimension_numbers<[2], [1], [1], [2], [0, 0, 0, 1, 1, 2], [0], [0]>} : vector<8x8x8xbf16>, vector<8x8x8xbf16>, vector<8x8x8xf32> -> vector<8x8x8xf32>
    "tpu.trace_stop"() : () -> ()
    %29 = vector.shape_cast %28 : vector<8x8x8xf32> to vector<64x8xf32>
    %c0_11 = arith.constant 0 : index
    %c0_12 = arith.constant 0 : index
    %30 = vector.load %arg10[%c0_11, %c0_12] : memref<64x32xf32, #tpu.memory_space<vmem>>, vector<64x8xf32>
    tpu.vector_store %arg10[%c0_11, %c0_12], %29 {strides = array<i32>} : memref<64x32xf32, #tpu.memory_space<vmem>>, vector<64x8xf32>,
    %31 = vector.extract_strided_slice %7 {offsets = [0, 8], sizes = [64, 8], strides = [1, 1]} : vector<64x96xbf16> to vector<64x8xbf16>
    %32 = vector.shape_cast %31 : vector<64x8xbf16> to vector<8x8x8xbf16>
    %33 = vector.extract_strided_slice %7 {offsets = [0, 40], sizes = [64, 8], strides = [1, 1]} : vector<64x96xbf16> to vector<64x8xbf16>
    %34 = vector.shape_cast %33 : vector<64x8xbf16> to vector<8x8x8xbf16>
    %35 = vector.extract_strided_slice %7 {offsets = [0, 72], sizes = [64, 8], strides = [1, 1]} : vector<64x96xbf16> to vector<64x8xbf16>
    %36 = vector.shape_cast %35 : vector<64x8xbf16> to vector<8x8x8xbf16>
    "tpu.trace_start"() <{level = 10 : i32, message = "bqd,bkd->bqk"}> : () -> ()
    %cst_13 = arith.constant dense<0.000000e+00> : vector<8x8x8xf32>
    %37 = tpu.matmul %32, %34, %cst_13 {dimension_numbers = #tpu.dot_dimension_numbers<[2], [2], [1], [1], [0, 0, 0, 1, 1, 1], [0], [0]>} : vector<8x8x8xbf16>, vector<8x8x8xbf16>, vector<8x8x8xf32> -> vector<8x8x8xf32>
    "tpu.trace_stop"() : () -> ()
    %cst_14 = arith.constant 0.353553385 : f32
    %38 = vector.broadcast %cst_14 : f32 to vector<8x8x8xf32>
    %39 = arith.mulf %37, %38 : vector<8x8x8xf32>
    %cst_15 = arith.constant dense<0xFF800000> : vector<8x8xf32>
    %40 = vector.multi_reduction <maximumf>, %39, %cst_15 [2] : vector<8x8x8xf32> to vector<8x8xf32>
    %41 = vector.shape_cast %40 : vector<8x8xf32> to vector<8x8x1xf32>
    %42 = vector.broadcast %41 : vector<8x8x1xf32> to vector<8x8x8xf32>
    %43 = arith.subf %39, %42 : vector<8x8x8xf32>
    %44 = math.exp %43 : vector<8x8x8xf32>
    %cst_16 = arith.constant dense<0.000000e+00> : vector<8x8xf32>
    %45 = vector.multi_reduction <add>, %44, %cst_16 [2] : vector<8x8x8xf32> to vector<8x8xf32>
    %46 = vector.shape_cast %45 : vector<8x8xf32> to vector<8x8x1xf32>
    %47 = tpu.reciprocal %46 {approx = true} : vector<8x8x1xf32> -> vector<8x8x1xf32>
    %48 = vector.broadcast %47 : vector<8x8x1xf32> to vector<8x8x8xf32>
    %49 = arith.mulf %44, %48 : vector<8x8x8xf32>
    %50 = arith.truncf %49 : vector<8x8x8xf32> to vector<8x8x8xbf16>
    "tpu.trace_start"() <{level = 10 : i32, message = "bqk,bkd->bqd"}> : () -> ()
    %cst_17 = arith.constant dense<0.000000e+00> : vector<8x8x8xf32>
    %51 = tpu.matmul %50, %36, %cst_17 {dimension_numbers = #tpu.dot_dimension_numbers<[2], [1], [1], [2], [0, 0, 0, 1, 1, 2], [0], [0]>} : vector<8x8x8xbf16>, vector<8x8x8xbf16>, vector<8x8x8xf32> -> vector<8x8x8xf32>
    "tpu.trace_stop"() : () -> ()
    %52 = vector.shape_cast %51 : vector<8x8x8xf32> to vector<64x8xf32>
    %c0_18 = arith.constant 0 : index
    %c8 = arith.constant 8 : index
    %53 = vector.load %arg10[%c0_18, %c8] : memref<64x32xf32, #tpu.memory_space<vmem>>, vector<64x8xf32>
    tpu.vector_store %arg10[%c0_18, %c8], %52 {strides = array<i32>} : memref<64x32xf32, #tpu.memory_space<vmem>>, vector<64x8xf32>,
    %54 = vector.extract_strided_slice %7 {offsets = [0, 16], sizes = [64, 8], strides = [1, 1]} : vector<64x96xbf16> to vector<64x8xbf16>
    %55 = vector.shape_cast %54 : vector<64x8xbf16> to vector<8x8x8xbf16>
    %56 = vector.extract_strided_slice %7 {offsets = [0, 48], sizes = [64, 8], strides = [1, 1]} : vector<64x96xbf16> to vector<64x8xbf16>
    %57 = vector.shape_cast %56 : vector<64x8xbf16> to vector<8x8x8xbf16>
    %58 = vector.extract_strided_slice %7 {offsets = [0, 80], sizes = [64, 8], strides = [1, 1]} : vector<64x96xbf16> to vector<64x8xbf16>
    %59 = vector.shape_cast %58 : vector<64x8xbf16> to vector<8x8x8xbf16>
    "tpu.trace_start"() <{level = 10 : i32, message = "bqd,bkd->bqk"}> : () -> ()
    %cst_19 = arith.constant dense<0.000000e+00> : vector<8x8x8xf32>
    %60 = tpu.matmul %55, %57, %cst_19 {dimension_numbers = #tpu.dot_dimension_numbers<[2], [2], [1], [1], [0, 0, 0, 1, 1, 1], [0], [0]>} : vector<8x8x8xbf16>, vector<8x8x8xbf16>, vector<8x8x8xf32> -> vector<8x8x8xf32>
    "tpu.trace_stop"() : () -> ()
    %cst_20 = arith.constant 0.353553385 : f32
    %61 = vector.broadcast %cst_20 : f32 to vector<8x8x8xf32>
    %62 = arith.mulf %60, %61 : vector<8x8x8xf32>
    %cst_21 = arith.constant dense<0xFF800000> : vector<8x8xf32>
    %63 = vector.multi_reduction <maximumf>, %62, %cst_21 [2] : vector<8x8x8xf32> to vector<8x8xf32>
    %64 = vector.shape_cast %63 : vector<8x8xf32> to vector<8x8x1xf32>
    %65 = vector.broadcast %64 : vector<8x8x1xf32> to vector<8x8x8xf32>
    %66 = arith.subf %62, %65 : vector<8x8x8xf32>
    %67 = math.exp %66 : vector<8x8x8xf32>
    %cst_22 = arith.constant dense<0.000000e+00> : vector<8x8xf32>
    %68 = vector.multi_reduction <add>, %67, %cst_22 [2] : vector<8x8x8xf32> to vector<8x8xf32>
    %69 = vector.shape_cast %68 : vector<8x8xf32> to vector<8x8x1xf32>
    %70 = tpu.reciprocal %69 {approx = true} : vector<8x8x1xf32> -> vector<8x8x1xf32>
    %71 = vector.broadcast %70 : vector<8x8x1xf32> to vector<8x8x8xf32>
    %72 = arith.mulf %67, %71 : vector<8x8x8xf32>
    %73 = arith.truncf %72 : vector<8x8x8xf32> to vector<8x8x8xbf16>
    "tpu.trace_start"() <{level = 10 : i32, message = "bqk,bkd->bqd"}> : () -> ()
    %cst_23 = arith.constant dense<0.000000e+00> : vector<8x8x8xf32>
    %74 = tpu.matmul %73, %59, %cst_23 {dimension_numbers = #tpu.dot_dimension_numbers<[2], [1], [1], [2], [0, 0, 0, 1, 1, 2], [0], [0]>} : vector<8x8x8xbf16>, vector<8x8x8xbf16>, vector<8x8x8xf32> -> vector<8x8x8xf32>
    "tpu.trace_stop"() : () -> ()
    %75 = vector.shape_cast %74 : vector<8x8x8xf32> to vector<64x8xf32>
    %c0_24 = arith.constant 0 : index
    %c16 = arith.constant 16 : index
    %76 = vector.load %arg10[%c0_24, %c16] : memref<64x32xf32, #tpu.memory_space<vmem>>, vector<64x8xf32>
    tpu.vector_store %arg10[%c0_24, %c16], %75 {strides = array<i32>} : memref<64x32xf32, #tpu.memory_space<vmem>>, vector<64x8xf32>,
    %77 = vector.extract_strided_slice %7 {offsets = [0, 24], sizes = [64, 8], strides = [1, 1]} : vector<64x96xbf16> to vector<64x8xbf16>
    %78 = vector.shape_cast %77 : vector<64x8xbf16> to vector<8x8x8xbf16>
    %79 = vector.extract_strided_slice %7 {offsets = [0, 56], sizes = [64, 8], strides = [1, 1]} : vector<64x96xbf16> to vector<64x8xbf16>
    %80 = vector.shape_cast %79 : vector<64x8xbf16> to vector<8x8x8xbf16>
    %81 = vector.extract_strided_slice %7 {offsets = [0, 88], sizes = [64, 8], strides = [1, 1]} : vector<64x96xbf16> to vector<64x8xbf16>
    %82 = vector.shape_cast %81 : vector<64x8xbf16> to vector<8x8x8xbf16>
    "tpu.trace_start"() <{level = 10 : i32, message = "bqd,bkd->bqk"}> : () -> ()
    %cst_25 = arith.constant dense<0.000000e+00> : vector<8x8x8xf32>
    %83 = tpu.matmul %78, %80, %cst_25 {dimension_numbers = #tpu.dot_dimension_numbers<[2], [2], [1], [1], [0, 0, 0, 1, 1, 1], [0], [0]>} : vector<8x8x8xbf16>, vector<8x8x8xbf16>, vector<8x8x8xf32> -> vector<8x8x8xf32>
    "tpu.trace_stop"() : () -> ()
    %cst_26 = arith.constant 0.353553385 : f32
    %84 = vector.broadcast %cst_26 : f32 to vector<8x8x8xf32>
    %85 = arith.mulf %83, %84 : vector<8x8x8xf32>
    %cst_27 = arith.constant dense<0xFF800000> : vector<8x8xf32>
    %86 = vector.multi_reduction <maximumf>, %85, %cst_27 [2] : vector<8x8x8xf32> to vector<8x8xf32>
    %87 = vector.shape_cast %86 : vector<8x8xf32> to vector<8x8x1xf32>
    %88 = vector.broadcast %87 : vector<8x8x1xf32> to vector<8x8x8xf32>
    %89 = arith.subf %85, %88 : vector<8x8x8xf32>
    %90 = math.exp %89 : vector<8x8x8xf32>
    %cst_28 = arith.constant dense<0.000000e+00> : vector<8x8xf32>
    %91 = vector.multi_reduction <add>, %90, %cst_28 [2] : vector<8x8x8xf32> to vector<8x8xf32>
    %92 = vector.shape_cast %91 : vector<8x8xf32> to vector<8x8x1xf32>
    %93 = tpu.reciprocal %92 {approx = true} : vector<8x8x1xf32> -> vector<8x8x1xf32>
    %94 = vector.broadcast %93 : vector<8x8x1xf32> to vector<8x8x8xf32>
    %95 = arith.mulf %90, %94 : vector<8x8x8xf32>
    %96 = arith.truncf %95 : vector<8x8x8xf32> to vector<8x8x8xbf16>
    "tpu.trace_start"() <{level = 10 : i32, message = "bqk,bkd->bqd"}> : () -> ()
    %cst_29 = arith.constant dense<0.000000e+00> : vector<8x8x8xf32>
    %97 = tpu.matmul %96, %82, %cst_29 {dimension_numbers = #tpu.dot_dimension_numbers<[2], [1], [1], [2], [0, 0, 0, 1, 1, 2], [0], [0]>} : vector<8x8x8xbf16>, vector<8x8x8xbf16>, vector<8x8x8xf32> -> vector<8x8x8xf32>
    "tpu.trace_stop"() : () -> ()
    %98 = vector.shape_cast %97 : vector<8x8x8xf32> to vector<64x8xf32>
    %c0_30 = arith.constant 0 : index
    %c24 = arith.constant 24 : index
    %99 = vector.load %arg10[%c0_30, %c24] : memref<64x32xf32, #tpu.memory_space<vmem>>, vector<64x8xf32>
    tpu.vector_store %arg10[%c0_30, %c24], %98 {strides = array<i32>} : memref<64x32xf32, #tpu.memory_space<vmem>>, vector<64x8xf32>,
    %c0_31 = arith.constant 0 : index
    %c0_32 = arith.constant 0 : index
    %100 = vector.load %arg10[%c0_31, %c0_32] : memref<64x32xf32, #tpu.memory_space<vmem>>, vector<64x32xf32>
    %101 = arith.truncf %100 : vector<64x32xf32> to vector<64x32xbf16>
    %c0_33 = arith.constant 0 : index
    %c0_34 = arith.constant 0 : index
    %102 = vector.load %arg4[%c0_33, %c0_34] : memref<32x32xbf16, #tpu.memory_space<vmem>>, vector<32x32xbf16>
    %cst_35 = arith.constant dense<0.000000e+00> : vector<64x32xf32>
    %103 = tpu.matmul %101, %102, %cst_35 {dimension_numbers = #tpu.dot_dimension_numbers<[1], [0], [0], [1], [0, 0, 1, 1], [], []>} : vector<64x32xbf16>, vector<32x32xbf16>, vector<64x32xf32> -> vector<64x32xf32>
    %c0_36 = arith.constant 0 : index
    %c0_37 = arith.constant 0 : index
    %104 = vector.load %arg5[%c0_36, %c0_37] : memref<1x32xf32, #tpu.memory_space<vmem>>, vector<1x32xf32>
    %105 = vector.broadcast %104 : vector<1x32xf32> to vector<64x32xf32>
    %106 = arith.addf %103, %105 : vector<64x32xf32>
    %107 = arith.truncf %106 : vector<64x32xf32> to vector<64x32xbf16>
    %c0_38 = arith.constant 0 : index
    %c0_39 = arith.constant 0 : index
    %108 = vector.load %arg6[%c0_38, %c0_39] : memref<32x16xbf16, #tpu.memory_space<vmem>>, vector<32x16xbf16>
    %cst_40 = arith.constant dense<0.000000e+00> : vector<64x16xf32>
    %109 = tpu.matmul %107, %108, %cst_40 {dimension_numbers = #tpu.dot_dimension_numbers<[1], [0], [0], [1], [0, 0, 1, 1], [], []>} : vector<64x32xbf16>, vector<32x16xbf16>, vector<64x16xf32> -> vector<64x16xf32>
    %c0_41 = arith.constant 0 : index
    %c0_42 = arith.constant 0 : index
    %110 = vector.load %arg7[%c0_41, %c0_42] : memref<1x16xf32, #tpu.memory_space<vmem>>, vector<1x16xf32>
    %111 = vector.broadcast %110 : vector<1x16xf32> to vector<64x16xf32>
    %112 = arith.addf %109, %111 : vector<64x16xf32>
    %113 = math.tanh %112 : vector<64x16xf32>
    %114 = vector.shape_cast %113 : vector<64x16xf32> to vector<8x8x16xf32>
    %c0_43 = arith.constant 0 : index
    %c0_44 = arith.constant 0 : index
    %115 = vector.load %arg8[%c0_43, %c0_44] : memref<1x16xf32, #tpu.memory_space<vmem>>, vector<1x16xf32>
    %116 = vector.shape_cast %115 : vector<1x16xf32> to vector<1x1x16xf32>
    %117 = vector.broadcast %116 : vector<1x1x16xf32> to vector<8x8x16xf32>
    %118 = arith.mulf %114, %117 : vector<8x8x16xf32>
    %cst_45 = arith.constant dense<0.000000e+00> : vector<8x8xf32>
    %119 = vector.multi_reduction <add>, %118, %cst_45 [2] : vector<8x8x16xf32> to vector<8x8xf32>
    %cst_46 = arith.constant dense<0xFF800000> : vector<8xf32>
    %120 = vector.multi_reduction <maximumf>, %119, %cst_46 [1] : vector<8x8xf32> to vector<8xf32>
    %121 = vector.shape_cast %120 : vector<8xf32> to vector<8x1xf32>
    %122 = vector.broadcast %121 : vector<8x1xf32> to vector<8x8xf32>
    %123 = arith.subf %119, %122 : vector<8x8xf32>
    %124 = math.exp %123 : vector<8x8xf32>
    %cst_47 = arith.constant dense<0.000000e+00> : vector<8xf32>
    %125 = vector.multi_reduction <add>, %124, %cst_47 [1] : vector<8x8xf32> to vector<8xf32>
    %126 = vector.shape_cast %125 : vector<8xf32> to vector<8x1xf32>
    %127 = tpu.reciprocal %126 {approx = true} : vector<8x1xf32> -> vector<8x1xf32>
    %128 = vector.broadcast %127 : vector<8x1xf32> to vector<8x8xf32>
    %129 = arith.mulf %124, %128 : vector<8x8xf32>
    %130 = vector.shape_cast %129 : vector<8x8xf32> to vector<8x8x1xf32>
    %131 = vector.shape_cast %106 : vector<64x32xf32> to vector<8x8x32xf32>
    %132 = vector.broadcast %130 : vector<8x8x1xf32> to vector<8x8x32xf32>
    %133 = arith.mulf %132, %131 : vector<8x8x32xf32>
    %cst_48 = arith.constant dense<0.000000e+00> : vector<8x32xf32>
    %134 = vector.multi_reduction <add>, %133, %cst_48 [1] : vector<8x8x32xf32> to vector<8x32xf32>
    %c0_49 = arith.constant 0 : index
    %c0_50 = arith.constant 0 : index
    %135 = vector.load %arg9[%c0_49, %c0_50] : memref<8x32xf32, #tpu.memory_space<vmem>>, vector<8x32xf32>
    tpu.vector_store %arg9[%c0_49, %c0_50], %134 {strides = array<i32>} : memref<8x32xf32, #tpu.memory_space<vmem>>, vector<8x32xf32>,
    return
  }
  func.func @transform_0(%arg0: i32) -> (i32, i32, i32) {
    %c0_i32 = arith.constant 0 : i32
    %c0_i32_0 = arith.constant 0 : i32
    %c0_i32_1 = arith.constant 0 : i32
    return %arg0, %c0_i32, %c0_i32_0 : i32, i32, i32
  }
  func.func @transform_1(%arg0: i32) -> (i32, i32) {
    %c0_i32 = arith.constant 0 : i32
    %c0_i32_0 = arith.constant 0 : i32
    %c0_i32_1 = arith.constant 0 : i32
    return %c0_i32, %c0_i32_0 : i32, i32
  }
  func.func @transform_2(%arg0: i32) -> (i32, i32) {
    %c0_i32 = arith.constant 0 : i32
    %c0_i32_0 = arith.constant 0 : i32
    %c0_i32_1 = arith.constant 0 : i32
    return %c0_i32, %c0_i32_0 : i32, i32
  }
  func.func @transform_3(%arg0: i32) -> (i32, i32) {
    %c0_i32 = arith.constant 0 : i32
    %c0_i32_0 = arith.constant 0 : i32
    %c0_i32_1 = arith.constant 0 : i32
    return %c0_i32, %c0_i32_0 : i32, i32
  }
  func.func @transform_4(%arg0: i32) -> (i32, i32) {
    %c0_i32 = arith.constant 0 : i32
    %c0_i32_0 = arith.constant 0 : i32
    %c0_i32_1 = arith.constant 0 : i32
    return %c0_i32, %c0_i32_0 : i32, i32
  }
  func.func @transform_5(%arg0: i32) -> (i32, i32) {
    %c0_i32 = arith.constant 0 : i32
    %c0_i32_0 = arith.constant 0 : i32
    %c0_i32_1 = arith.constant 0 : i32
    return %c0_i32, %c0_i32_0 : i32, i32
  }
  func.func @transform_6(%arg0: i32) -> (i32, i32) {
    %c0_i32 = arith.constant 0 : i32
    %c0_i32_0 = arith.constant 0 : i32
    %c0_i32_1 = arith.constant 0 : i32
    return %c0_i32, %c0_i32_0 : i32, i32
  }
  func.func @transform_7(%arg0: i32) -> (i32, i32) {
    %c0_i32 = arith.constant 0 : i32
    %c0_i32_0 = arith.constant 0 : i32
    %c0_i32_1 = arith.constant 0 : i32
    return %c0_i32, %c0_i32_0 : i32, i32
  }
  func.func @transform_8(%arg0: i32) -> (i32, i32) {
    %c0_i32 = arith.constant 0 : i32
    %c0_i32_0 = arith.constant 0 : i32
    return %arg0, %c0_i32 : i32, i32
  }
}

</mosaic_0001>

<llo_original>
// kernel: bert_model_forward.2
$region0: #{bert_model_forward.2}
  #allocation0 [shape = 'u32[]', space=smem, size = 0x4, offset = 0x4, fixed_abs, tag = 'smem constant byte address 0x4 - core index']
  #allocation1 [shape = 'u32[144,128]{1,0:T(1,128)}', space=vmem, size = 0x12000, scoped, tag = 'internal scratch']
  #allocation2 [shape = 'f32[8,32]{1,0:T(8,128)}', space=vmem, size = 0x1000, scoped, tag = 'scratch operand']
  %s0 = inlined_call_operand.vmem [shape: bf16[2,8,32], index: 0, kind: input, shape index: {}]
  %s1 = inlined_call_operand.vmem [shape: f32[2,1,8], index: 1, kind: input, shape index: {}]
  %s2 = inlined_call_operand.vmem [shape: f32[1,32], index: 2, kind: input, shape index: {}, may-alias: {2,8,14}]
  %s3 = inlined_call_operand.vmem [shape: f32[1,32], index: 3, kind: input, shape index: {}, may-alias: {3,7,9,13,15}]
  %s4 = inlined_call_operand.vmem [shape: bf16[32,96], index: 4, kind: input, shape index: {}]
  %s5 = inlined_call_operand.vmem [shape: f32[1,96], index: 5, kind: input, shape index: {}]
  %s6 = inlined_call_operand.vmem [shape: bf16[32,32], index: 6, kind: input, shape index: {}]
  %s7 = inlined_call_operand.vmem [shape: f32[1,32], index: 7, kind: input, shape index: {}, may-alias: {3,7,9,13,15}]
  %s8 = inlined_call_operand.vmem [shape: f32[1,32], index: 8, kind: input, shape index: {}, may-alias: {2,8,14}]
  %s9 = inlined_call_operand.vmem [shape: f32[1,32], index: 9, kind: input, shape index: {}, may-alias: {3,7,9,13,15}]
  %s10 = inlined_call_operand.vmem [shape: bf16[32,64], index: 10, kind: input, shape index: {}]
  %s11 = inlined_call_operand.vmem [shape: f32[1,64], index: 11, kind: input, shape index: {}]
  %s12 = inlined_call_operand.vmem [shape: bf16[64,32], index: 12, kind: input, shape index: {}]
  %s13 = inlined_call_operand.vmem [shape: f32[1,32], index: 13, kind: input, shape index: {}, may-alias: {3,7,9,13,15}]
  %s14 = inlined_call_operand.vmem [shape: f32[1,32], index: 14, kind: input, shape index: {}, may-alias: {2,8,14}]
  %s15 = inlined_call_operand.vmem [shape: f32[1,32], index: 15, kind: input, shape index: {}, may-alias: {3,7,9,13,15}]
  %s16 = inlined_call_operand.hbm [shape: f32[2,1,32], index: 16, kind: output, shape index: {}]
  %s17 = sld [smem:[#allocation0]]
  $region97: #{bert_model_forward.2} parent=0
    _
  %s19 = ssub.s32 1, %s17
  %s20 = scalar_select 0, %s19, %s17
  $region1: #{bert_model_forward.2} parent=0
    #allocation3 [shape = 'u8[1024]{0}', space=vmem, size = 0x400, scoped, tag = 'output window, operand 0']
    #allocation4 [shape = 's32[2]{0}', space=sflag, size = 0x8, scoped, tag = 'scoped memory for bert_model_forward.2']
    %21 = vsyncpa [#allocation4], 0
    %s22 = scalar_lea.sflag [#allocation4], 1
    %23 = vsyncpa %s22, 0
    loop: start=0, step=1, limit=4
    $region2: #{bert_model_forward.2} parent=1 // loop_pre_header
      _
    $region3: #{bert_model_forward.2} parent=1 // loop_header
      %s25 = sphi 0, %s29
      %p26 = scmp.ge.s32.totalorder %s25, 4
      %s35 = sphi 0, %s37
      %s38 = sphi 0, %s35
      %s39 = sphi 0, %s38
      %s55 = sphi 0, %s39
      %s61 = sphi 0, %s63
      %s64 = sphi 0, %s61
      %s65 = sphi 0, %s64
      %s81 = sphi 0, %s65
      %s85 = sphi 0, %s85
      %s87 = sphi 0, %s85
      %s88 = sphi 0, %s87
      %s102 = sphi 0, %s88
      %s106 = sphi 0, %s106
      %s108 = sphi 0, %s106
      %s109 = sphi 0, %s108
      %s123 = sphi 0, %s109
      %s127 = sphi 0, %s127
      %s129 = sphi 0, %s127
      %s130 = sphi 0, %s129
      %s144 = sphi 0, %s130
      %s148 = sphi 0, %s148
      %s150 = sphi 0, %s148
      %s151 = sphi 0, %s150
      %s165 = sphi 0, %s151
      %s169 = sphi 0, %s169
      %s171 = sphi 0, %s169
      %s172 = sphi 0, %s171
      %s186 = sphi 0, %s172
      %s190 = sphi 0, %s190
      %s192 = sphi 0, %s190
      %s193 = sphi 0, %s192
      %s207 = sphi 0, %s193
      %s211 = sphi 0, %s211
      %s213 = sphi 0, %s211
      %s214 = sphi 0, %s213
      %s228 = sphi 0, %s214
      %s232 = sphi 0, %s232
      %s234 = sphi 0, %s232
      %s235 = sphi 0, %s234
      %s249 = sphi 0, %s235
      %s253 = sphi 0, %s253
      %s255 = sphi 0, %s253
      %s256 = sphi 0, %s255
      %s270 = sphi 0, %s256
      %s274 = sphi 0, %s274
      %s276 = sphi 0, %s274
      %s277 = sphi 0, %s276
      %s291 = sphi 0, %s277
      %s295 = sphi 0, %s295
      %s297 = sphi 0, %s295
      %s298 = sphi 0, %s297
      %s312 = sphi 0, %s298
      %s316 = sphi 0, %s316
      %s318 = sphi 0, %s316
      %s319 = sphi 0, %s318
      %s333 = sphi 0, %s319
      %s337 = sphi 0, %s337
      %s339 = sphi 0, %s337
      %s340 = sphi 0, %s339
      %s354 = sphi 0, %s340
      %s358 = sphi 0, %s358
      %s360 = sphi 0, %s358
      %s361 = sphi 0, %s360
      %s375 = sphi 0, %s361
      %s381 = sphi 0, %s383
      %s384 = sphi 0, %s381
      %s385 = sphi 0, %s384
      %s401 = sphi 0, %s385
    $region4: #{bert_model_forward.2} parent=1 // loop_header_branch
      %28 = sbr.rel (%p26) target = $region8
    $region5: #{bert_model_forward.2} parent=1 // loop_body
      %s30 = ssub.s32 %s25, 1
      %s31 = ssub.s32 %s25, 2
      %s32 = sadd.s32 %s25, 1
      %s33 = ssub.s32 %s25, %s32
      %p34 = scmp.eq.s32.totalorder %s33, 0
      %s36 = sadd.s32 %s35, 1
      %s37 = scalar_select %p34, %s35, %s36
      %p40 = pneg %p34
      %p41 = scmp.eq.s32.totalorder %s25, 1
      %p42 = por %p40, %p41
      %p43 = scmp.ne.s32.totalorder %s35, %s38
      %p44 = scmp.eq.s32.totalorder %s25, 0
      %p45 = por %p43, %p44
      %p46 = scmp.ne.s32.totalorder %s35, %s38
      %p47 = scmp.eq.s32.totalorder %s30, 1
      %p48 = por %p46, %p47
      %p49 = scmp.ne.s32.totalorder %s38, %s39
      %p50 = scmp.eq.s32.totalorder %s30, 0
      %p51 = por %p49, %p50
      %p52 = scmp.ne.s32.totalorder %s38, %s39
      %p53 = scmp.eq.s32.totalorder %s31, 1
      %p54 = por %p52, %p53
      %p56 = scmp.ne.s32.totalorder %s39, %s55
      %p57 = scmp.eq.s32.totalorder %s31, 0
      %p58 = por %p56, %p57
      %s59 = ssub.s32 %s25, %s32
      %p60 = scmp.eq.s32.totalorder %s59, 0
      %s62 = sadd.s32 %s61, 1
      %s63 = scalar_select %p60, %s61, %s62
      %p66 = pneg %p60
      %p67 = scmp.eq.s32.totalorder %s25, 1
      %p68 = por %p66, %p67
      %p69 = scmp.ne.s32.totalorder %s61, %s64
      %p70 = scmp.eq.s32.totalorder %s25, 0
      %p71 = por %p69, %p70
      %p72 = scmp.ne.s32.totalorder %s61, %s64
      %p73 = scmp.eq.s32.totalorder %s30, 1
      %p74 = por %p72, %p73
      %p75 = scmp.ne.s32.totalorder %s64, %s65
      %p76 = scmp.eq.s32.totalorder %s30, 0
      %p77 = por %p75, %p76
      %p78 = scmp.ne.s32.totalorder %s64, %s65
      %p79 = scmp.eq.s32.totalorder %s31, 1
      %p80 = por %p78, %p79
      %p82 = scmp.ne.s32.totalorder %s65, %s81
      %p83 = scmp.eq.s32.totalorder %s31, 0
      %p84 = por %p82, %p83
      %s86 = sadd.s32 %s85, 1
      %p89 = scmp.eq.s32.totalorder %s25, 1
      %p90 = scmp.ne.s32.totalorder %s85, %s87
      %p91 = scmp.eq.s32.totalorder %s25, 0
      %p92 = por %p90, %p91
      %p93 = scmp.ne.s32.totalorder %s85, %s87
      %p94 = scmp.eq.s32.totalorder %s30, 1
      %p95 = por %p93, %p94
      %p96 = scmp.ne.s32.totalorder %s87, %s88
      %p97 = scmp.eq.s32.totalorder %s30, 0
      %p98 = por %p96, %p97
      %p99 = scmp.ne.s32.totalorder %s87, %s88
      %p100 = scmp.eq.s32.totalorder %s31, 1
      %p101 = por %p99, %p100
      %p103 = scmp.ne.s32.totalorder %s88, %s102
      %p104 = scmp.eq.s32.totalorder %s31, 0
      %p105 = por %p103, %p104
      %s107 = sadd.s32 %s106, 1
      %p110 = scmp.eq.s32.totalorder %s25, 1
      %p111 = scmp.ne.s32.totalorder %s106, %s108
      %p112 = scmp.eq.s32.totalorder %s25, 0
      %p113 = por %p111, %p112
      %p114 = scmp.ne.s32.totalorder %s106, %s108
      %p115 = scmp.eq.s32.totalorder %s30, 1
      %p116 = por %p114, %p115
      %p117 = scmp.ne.s32.totalorder %s108, %s109
      %p118 = scmp.eq.s32.totalorder %s30, 0
      %p119 = por %p117, %p118
      %p120 = scmp.ne.s32.totalorder %s108, %s109
      %p121 = scmp.eq.s32.totalorder %s31, 1
      %p122 = por %p120, %p121
      %p124 = scmp.ne.s32.totalorder %s109, %s123
      %p125 = scmp.eq.s32.totalorder %s31, 0
      %p126 = por %p124, %p125
      %s128 = sadd.s32 %s127, 1
      %p131 = scmp.eq.s32.totalorder %s25, 1
      %p132 = scmp.ne.s32.totalorder %s127, %s129
      %p133 = scmp.eq.s32.totalorder %s25, 0
      %p134 = por %p132, %p133
      %p135 = scmp.ne.s32.totalorder %s127, %s129
      %p136 = scmp.eq.s32.totalorder %s30, 1
      %p137 = por %p135, %p136
      %p138 = scmp.ne.s32.totalorder %s129, %s130
      %p139 = scmp.eq.s32.totalorder %s30, 0
      %p140 = por %p138, %p139
      %p141 = scmp.ne.s32.totalorder %s129, %s130
      %p142 = scmp.eq.s32.totalorder %s31, 1
      %p143 = por %p141, %p142
      %p145 = scmp.ne.s32.totalorder %s130, %s144
      %p146 = scmp.eq.s32.totalorder %s31, 0
      %p147 = por %p145, %p146
      %s149 = sadd.s32 %s148, 1
      %p152 = scmp.eq.s32.totalorder %s25, 1
      %p153 = scmp.ne.s32.totalorder %s148, %s150
      %p154 = scmp.eq.s32.totalorder %s25, 0
      %p155 = por %p153, %p154
      %p156 = scmp.ne.s32.totalorder %s148, %s150
      %p157 = scmp.eq.s32.totalorder %s30, 1
      %p158 = por %p156, %p157
      %p159 = scmp.ne.s32.totalorder %s150, %s151
      %p160 = scmp.eq.s32.totalorder %s30, 0
      %p161 = por %p159, %p160
      %p162 = scmp.ne.s32.totalorder %s150, %s151
      %p163 = scmp.eq.s32.totalorder %s31, 1
      %p164 = por %p162, %p163
      %p166 = scmp.ne.s32.totalorder %s151, %s165
      %p167 = scmp.eq.s32.totalorder %s31, 0
      %p168 = por %p166, %p167
      %s170 = sadd.s32 %s169, 1
      %p173 = scmp.eq.s32.totalorder %s25, 1
      %p174 = scmp.ne.s32.totalorder %s169, %s171
      %p175 = scmp.eq.s32.totalorder %s25, 0
      %p176 = por %p174, %p175
      %p177 = scmp.ne.s32.totalorder %s169, %s171
      %p178 = scmp.eq.s32.totalorder %s30, 1
      %p179 = por %p177, %p178
      %p180 = scmp.ne.s32.totalorder %s171, %s172
      %p181 = scmp.eq.s32.totalorder %s30, 0
      %p182 = por %p180, %p181
      %p183 = scmp.ne.s32.totalorder %s171, %s172
      %p184 = scmp.eq.s32.totalorder %s31, 1
      %p185 = por %p183, %p184
      %p187 = scmp.ne.s32.totalorder %s172, %s186
      %p188 = scmp.eq.s32.totalorder %s31, 0
      %p189 = por %p187, %p188
      %s191 = sadd.s32 %s190, 1
      %p194 = scmp.eq.s32.totalorder %s25, 1
      %p195 = scmp.ne.s32.totalorder %s190, %s192
      %p196 = scmp.eq.s32.totalorder %s25, 0
      %p197 = por %p195, %p196
      %p198 = scmp.ne.s32.totalorder %s190, %s192
      %p199 = scmp.eq.s32.totalorder %s30, 1
      %p200 = por %p198, %p199
      %p201 = scmp.ne.s32.totalorder %s192, %s193
      %p202 = scmp.eq.s32.totalorder %s30, 0
      %p203 = por %p201, %p202
      %p204 = scmp.ne.s32.totalorder %s192, %s193
      %p205 = scmp.eq.s32.totalorder %s31, 1
      %p206 = por %p204, %p205
      %p208 = scmp.ne.s32.totalorder %s193, %s207
      %p209 = scmp.eq.s32.totalorder %s31, 0
      %p210 = por %p208, %p209
      %s212 = sadd.s32 %s211, 1
      %p215 = scmp.eq.s32.totalorder %s25, 1
      %p216 = scmp.ne.s32.totalorder %s211, %s213
      %p217 = scmp.eq.s32.totalorder %s25, 0
      %p218 = por %p216, %p217
      %p219 = scmp.ne.s32.totalorder %s211, %s213
      %p220 = scmp.eq.s32.totalorder %s30, 1
      %p221 = por %p219, %p220
      %p222 = scmp.ne.s32.totalorder %s213, %s214
      %p223 = scmp.eq.s32.totalorder %s30, 0
      %p224 = por %p222, %p223
      %p225 = scmp.ne.s32.totalorder %s213, %s214
      %p226 = scmp.eq.s32.totalorder %s31, 1
      %p227 = por %p225, %p226
      %p229 = scmp.ne.s32.totalorder %s214, %s228
      %p230 = scmp.eq.s32.totalorder %s31, 0
      %p231 = por %p229, %p230
      %s233 = sadd.s32 %s232, 1
      %p236 = scmp.eq.s32.totalorder %s25, 1
      %p237 = scmp.ne.s32.totalorder %s232, %s234
      %p238 = scmp.eq.s32.totalorder %s25, 0
      %p239 = por %p237, %p238
      %p240 = scmp.ne.s32.totalorder %s232, %s234
      %p241 = scmp.eq.s32.totalorder %s30, 1
      %p242 = por %p240, %p241
      %p243 = scmp.ne.s32.totalorder %s234, %s235
      %p244 = scmp.eq.s32.totalorder %s30, 0
      %p245 = por %p243, %p244
      %p246 = scmp.ne.s32.totalorder %s234, %s235
      %p247 = scmp.eq.s32.totalorder %s31, 1
      %p248 = por %p246, %p247
      %p250 = scmp.ne.s32.totalorder %s235, %s249
      %p251 = scmp.eq.s32.totalorder %s31, 0
      %p252 = por %p250, %p251
      %s254 = sadd.s32 %s253, 1
      %p257 = scmp.eq.s32.totalorder %s25, 1
      %p258 = scmp.ne.s32.totalorder %s253, %s255
      %p259 = scmp.eq.s32.totalorder %s25, 0
      %p260 = por %p258, %p259
      %p261 = scmp.ne.s32.totalorder %s253, %s255
      %p262 = scmp.eq.s32.totalorder %s30, 1
      %p263 = por %p261, %p262
      %p264 = scmp.ne.s32.totalorder %s255, %s256
      %p265 = scmp.eq.s32.totalorder %s30, 0
      %p266 = por %p264, %p265
      %p267 = scmp.ne.s32.totalorder %s255, %s256
      %p268 = scmp.eq.s32.totalorder %s31, 1
      %p269 = por %p267, %p268
      %p271 = scmp.ne.s32.totalorder %s256, %s270
      %p272 = scmp.eq.s32.totalorder %s31, 0
      %p273 = por %p271, %p272
      %s275 = sadd.s32 %s274, 1
      %p278 = scmp.eq.s32.totalorder %s25, 1
      %p279 = scmp.ne.s32.totalorder %s274, %s276
      %p280 = scmp.eq.s32.totalorder %s25, 0
      %p281 = por %p279, %p280
      %p282 = scmp.ne.s32.totalorder %s274, %s276
      %p283 = scmp.eq.s32.totalorder %s30, 1
      %p284 = por %p282, %p283
      %p285 = scmp.ne.s32.totalorder %s276, %s277
      %p286 = scmp.eq.s32.totalorder %s30, 0
      %p287 = por %p285, %p286
      %p288 = scmp.ne.s32.totalorder %s276, %s277
      %p289 = scmp.eq.s32.totalorder %s31, 1
      %p290 = por %p288, %p289
      %p292 = scmp.ne.s32.totalorder %s277, %s291
      %p293 = scmp.eq.s32.totalorder %s31, 0
      %p294 = por %p292, %p293
      %s296 = sadd.s32 %s295, 1
      %p299 = scmp.eq.s32.totalorder %s25, 1
      %p300 = scmp.ne.s32.totalorder %s295, %s297
      %p301 = scmp.eq.s32.totalorder %s25, 0
      %p302 = por %p300, %p301
      %p303 = scmp.ne.s32.totalorder %s295, %s297
      %p304 = scmp.eq.s32.totalorder %s30, 1
      %p305 = por %p303, %p304
      %p306 = scmp.ne.s32.totalorder %s297, %s298
      %p307 = scmp.eq.s32.totalorder %s30, 0
      %p308 = por %p306, %p307
      %p309 = scmp.ne.s32.totalorder %s297, %s298
      %p310 = scmp.eq.s32.totalorder %s31, 1
      %p311 = por %p309, %p310
      %p313 = scmp.ne.s32.totalorder %s298, %s312
      %p314 = scmp.eq.s32.totalorder %s31, 0
      %p315 = por %p313, %p314
      %s317 = sadd.s32 %s316, 1
      %p320 = scmp.eq.s32.totalorder %s25, 1
      %p321 = scmp.ne.s32.totalorder %s316, %s318
      %p322 = scmp.eq.s32.totalorder %s25, 0
      %p323 = por %p321, %p322
      %p324 = scmp.ne.s32.totalorder %s316, %s318
      %p325 = scmp.eq.s32.totalorder %s30, 1
      %p326 = por %p324, %p325
      %p327 = scmp.ne.s32.totalorder %s318, %s319
      %p328 = scmp.eq.s32.totalorder %s30, 0
      %p329 = por %p327, %p328
      %p330 = scmp.ne.s32.totalorder %s318, %s319
      %p331 = scmp.eq.s32.totalorder %s31, 1
      %p332 = por %p330, %p331
      %p334 = scmp.ne.s32.totalorder %s319, %s333
      %p335 = scmp.eq.s32.totalorder %s31, 0
      %p336 = por %p334, %p335
      %s338 = sadd.s32 %s337, 1
      %p341 = scmp.eq.s32.totalorder %s25, 1
      %p342 = scmp.ne.s32.totalorder %s337, %s339
      %p343 = scmp.eq.s32.totalorder %s25, 0
      %p344 = por %p342, %p343
      %p345 = scmp.ne.s32.totalorder %s337, %s339
      %p346 = scmp.eq.s32.totalorder %s30, 1
      %p347 = por %p345, %p346
      %p348 = scmp.ne.s32.totalorder %s339, %s340
      %p349 = scmp.eq.s32.totalorder %s30, 0
      %p350 = por %p348, %p349
      %p351 = scmp.ne.s32.totalorder %s339, %s340
      %p352 = scmp.eq.s32.totalorder %s31, 1
      %p353 = por %p351, %p352
      %p355 = scmp.ne.s32.totalorder %s340, %s354
      %p356 = scmp.eq.s32.totalorder %s31, 0
      %p357 = por %p355, %p356
      %s359 = sadd.s32 %s358, 1
      %p362 = scmp.eq.s32.totalorder %s25, 1
      %p363 = scmp.ne.s32.totalorder %s358, %s360
      %p364 = scmp.eq.s32.totalorder %s25, 0
      %p365 = por %p363, %p364
      %p366 = scmp.ne.s32.totalorder %s358, %s360
      %p367 = scmp.eq.s32.totalorder %s30, 1
      %p368 = por %p366, %p367
      %p369 = scmp.ne.s32.totalorder %s360, %s361
      %p370 = scmp.eq.s32.totalorder %s30, 0
      %p371 = por %p369, %p370
      %p372 = scmp.ne.s32.totalorder %s360, %s361
      %p373 = scmp.eq.s32.totalorder %s31, 1
      %p374 = por %p372, %p373
      %p376 = scmp.ne.s32.totalorder %s361, %s375
      %p377 = scmp.eq.s32.totalorder %s31, 0
      %p378 = por %p376, %p377
      %s379 = ssub.s32 %s25, %s32
      %p380 = scmp.eq.s32.totalorder %s379, 0
      %s382 = sadd.s32 %s381, 1
      %s383 = scalar_select %p380, %s381, %s382
      %p386 = pneg %p380
      %p387 = scmp.eq.s32.totalorder %s25, 1
      %p388 = por %p386, %p387
      %p389 = scmp.ne.s32.totalorder %s381, %s384
      %p390 = scmp.eq.s32.totalorder %s25, 0
      %p391 = por %p389, %p390
      %p392 = scmp.ne.s32.totalorder %s381, %s384
      %p393 = scmp.eq.s32.totalorder %s30, 1
      %p394 = por %p392, %p393
      %p395 = scmp.ne.s32.totalorder %s384, %s385
      %p396 = scmp.eq.s32.totalorder %s30, 0
      %p397 = por %p395, %p396
      %p398 = scmp.ne.s32.totalorder %s384, %s385
      %p399 = scmp.eq.s32.totalorder %s31, 1
      %p400 = por %p398, %p399
      %p402 = scmp.ne.s32.totalorder %s385, %s401
      %p403 = scmp.eq.s32.totalorder %s31, 0
      %p404 = por %p402, %p403
      %p405 = scmp.le.s32.totalorder 1, %s25
      %p406 = scmp.lt.s32.totalorder %s25, 3
      %p407 = pnand %p405, %p406
      %p408 = pneg %p407
      // Predicated region
      $region9: #{bert_model_forward.2} parent=5 // pred_check
        _
      $region10: #{bert_model_forward.2} parent=5 // pred_check_branch
        %410 = sbr.rel (%p407) target = $region12
      $region11: #{bert_model_forward.2} parent=5 // pred_region
        %s411 = ssub.s32 %s25, 1
        // Predicated region
        $region13: #{bert_model_forward.2} parent=11 // pred_check
          %p412 = pneg %p98
        $region14: #{bert_model_forward.2} parent=11 // pred_check_branch
          %414 = sbr.rel (%p412) target = $region16
        $region15: #{bert_model_forward.2} parent=11 // pred_region
          _
        $region16: #{bert_model_forward.2} parent=11 // pred_fallthru
          _
        // Predicated region
        $region17: #{bert_model_forward.2} parent=11 // pred_check
          %p415 = pneg %p119
        $region18: #{bert_model_forward.2} parent=11 // pred_check_branch
          %417 = sbr.rel (%p415) target = $region20
        $region19: #{bert_model_forward.2} parent=11 // pred_region
          _
        $region20: #{bert_model_forward.2} parent=11 // pred_fallthru
          _
        // Predicated region
        $region21: #{bert_model_forward.2} parent=11 // pred_check
          %p418 = pneg %p140
        $region22: #{bert_model_forward.2} parent=11 // pred_check_branch
          %420 = sbr.rel (%p418) target = $region24
        $region23: #{bert_model_forward.2} parent=11 // pred_region
          _
        $region24: #{bert_model_forward.2} parent=11 // pred_fallthru
          _
        // Predicated region
        $region25: #{bert_model_forward.2} parent=11 // pred_check
          %p421 = pneg %p161
        $region26: #{bert_model_forward.2} parent=11 // pred_check_branch
          %423 = sbr.rel (%p421) target = $region28
        $region27: #{bert_model_forward.2} parent=11 // pred_region
          _
        $region28: #{bert_model_forward.2} parent=11 // pred_fallthru
          _
        // Predicated region
        $region29: #{bert_model_forward.2} parent=11 // pred_check
          %p424 = pneg %p182
        $region30: #{bert_model_forward.2} parent=11 // pred_check_branch
          %426 = sbr.rel (%p424) target = $region32
        $region31: #{bert_model_forward.2} parent=11 // pred_region
          _
        $region32: #{bert_model_forward.2} parent=11 // pred_fallthru
          _
        // Predicated region
        $region33: #{bert_model_forward.2} parent=11 // pred_check
          %p427 = pneg %p203
        $region34: #{bert_model_forward.2} parent=11 // pred_check_branch
          %429 = sbr.rel (%p427) target = $region36
        $region35: #{bert_model_forward.2} parent=11 // pred_region
          _
        $region36: #{bert_model_forward.2} parent=11 // pred_fallthru
          _
        // Predicated region
        $region37: #{bert_model_forward.2} parent=11 // pred_check
          %p430 = pneg %p224
        $region38: #{bert_model_forward.2} parent=11 // pred_check_branch
          %432 = sbr.rel (%p430) target = $region40
        $region39: #{bert_model_forward.2} parent=11 // pred_region
          _
        $region40: #{bert_model_forward.2} parent=11 // pred_fallthru
          _
        // Predicated region
        $region41: #{bert_model_forward.2} parent=11 // pred_check
          %p433 = pneg %p245
        $region42: #{bert_model_forward.2} parent=11 // pred_check_branch
          %435 = sbr.rel (%p433) target = $region44
        $region43: #{bert_model_forward.2} parent=11 // pred_region
          _
        $region44: #{bert_model_forward.2} parent=11 // pred_fallthru
          _
        // Predicated region
        $region45: #{bert_model_forward.2} parent=11 // pred_check
          %p436 = pneg %p266
        $region46: #{bert_model_forward.2} parent=11 // pred_check_branch
          %438 = sbr.rel (%p436) target = $region48
        $region47: #{bert_model_forward.2} parent=11 // pred_region
          _
        $region48: #{bert_model_forward.2} parent=11 // pred_fallthru
          _
        // Predicated region
        $region49: #{bert_model_forward.2} parent=11 // pred_check
          %p439 = pneg %p287
        $region50: #{bert_model_forward.2} parent=11 // pred_check_branch
          %441 = sbr.rel (%p439) target = $region52
        $region51: #{bert_model_forward.2} parent=11 // pred_region
          _
        $region52: #{bert_model_forward.2} parent=11 // pred_fallthru
          _
        // Predicated region
        $region53: #{bert_model_forward.2} parent=11 // pred_check
          %p442 = pneg %p308
        $region54: #{bert_model_forward.2} parent=11 // pred_check_branch
          %444 = sbr.rel (%p442) target = $region56
        $region55: #{bert_model_forward.2} parent=11 // pred_region
          _
        $region56: #{bert_model_forward.2} parent=11 // pred_fallthru
          _
        // Predicated region
        $region57: #{bert_model_forward.2} parent=11 // pred_check
          %p445 = pneg %p329
        $region58: #{bert_model_forward.2} parent=11 // pred_check_branch
          %447 = sbr.rel (%p445) target = $region60
        $region59: #{bert_model_forward.2} parent=11 // pred_region
          _
        $region60: #{bert_model_forward.2} parent=11 // pred_fallthru
          _
        // Predicated region
        $region61: #{bert_model_forward.2} parent=11 // pred_check
          %p448 = pneg %p350
        $region62: #{bert_model_forward.2} parent=11 // pred_check_branch
          %450 = sbr.rel (%p448) target = $region64
        $region63: #{bert_model_forward.2} parent=11 // pred_region
          _
        $region64: #{bert_model_forward.2} parent=11 // pred_fallthru
          _
        // Predicated region
        $region65: #{bert_model_forward.2} parent=11 // pred_check
          %p451 = pneg %p371
        $region66: #{bert_model_forward.2} parent=11 // pred_check_branch
          %453 = sbr.rel (%p451) target = $region68
        $region67: #{bert_model_forward.2} parent=11 // pred_region
          _
        $region68: #{bert_model_forward.2} parent=11 // pred_fallthru
          _
      $region12: #{bert_model_forward.2} parent=5 // pred_fallthru
        _
      %p454 = scmp.lt.s32.totalorder %s25, 2
      // Predicated region
      $region69: #{bert_model_forward.2} parent=5 // pred_check
        %p455 = pneg %p454
      $region70: #{bert_model_forward.2} parent=5 // pred_check_branch
        %457 = sbr.rel (%p455) target = $region72
      $region71: #{bert_model_forward.2} parent=5 // pred_region
        // Predicated region
        $region73: #{bert_model_forward.2} parent=71 // pred_check
          %p458 = pneg %p45
        $region74: #{bert_model_forward.2} parent=71 // pred_check_branch
          %460 = sbr.rel (%p458) target = $region76
        $region75: #{bert_model_forward.2} parent=71 // pred_region
          %p461 = scmp.lt.s32.totalorder %s25, 1
          %s462 = scalar_select %p461, %s25, 1
          %s463 = smul.addr %s462, 4
          %s464 = scalar_lea.vmem %s0, %s463
        $region76: #{bert_model_forward.2} parent=71 // pred_fallthru
          _
        // Predicated region
        $region77: #{bert_model_forward.2} parent=71 // pred_check
          %p465 = pneg %p71
        $region78: #{bert_model_forward.2} parent=71 // pred_check_branch
          %467 = sbr.rel (%p465) target = $region80
        $region79: #{bert_model_forward.2} parent=71 // pred_region
          %p468 = scmp.lt.s32.totalorder %s25, 1
          %s469 = scalar_select %p468, %s25, 1
          %s470 = scalar_lea.vmem %s1, %s469
        $region80: #{bert_model_forward.2} parent=71 // pred_fallthru
          _
      $region72: #{bert_model_forward.2} parent=5 // pred_fallthru
        _
      %p471 = scmp.le.s32.totalorder 1, %s25
      %p472 = scmp.lt.s32.totalorder %s25, 3
      %p473 = pnand %p471, %p472
      %p474 = pneg %p473
      // Predicated region
      $region81: #{bert_model_forward.2} parent=5 // pred_check
        _
      $region82: #{bert_model_forward.2} parent=5 // pred_check_branch
        %476 = sbr.rel (%p473) target = $region84
      $region83: #{bert_model_forward.2} parent=5 // pred_region
        %s477 = ssub.s32 %s25, 1
        %p478 = scmp.lt.s32.totalorder %s30, 1
        %s479 = scalar_select %p478, %s30, 1
        %s480 = smul.addr %s479, 4
        %s481 = scalar_lea.vmem %s0, %s480
        %p482 = pneg %p51
        %p483 = pneg %p48
        %p484 = scmp.lt.s32.totalorder %s30, 1
        %s485 = scalar_select %p484, %s30, 1
        %s486 = scalar_lea.vmem %s1, %s485
        %p487 = pneg %p77
        %p488 = pneg %p74
        %p489 = pneg %p98
        %p490 = pneg %p95
        %p491 = pneg %p119
        %p492 = pneg %p116
        %p493 = pneg %p140
        %p494 = pneg %p137
        %p495 = pneg %p161
        %p496 = pneg %p158
        %p497 = pneg %p182
        %p498 = pneg %p179
        %p499 = pneg %p203
        %p500 = pneg %p200
        %p501 = pneg %p224
        %p502 = pneg %p221
        %p503 = pneg %p245
        %p504 = pneg %p242
        %p505 = pneg %p266
        %p506 = pneg %p263
        %p507 = pneg %p287
        %p508 = pneg %p284
        %p509 = pneg %p308
        %p510 = pneg %p305
        %p511 = pneg %p329
        %p512 = pneg %p326
        %p513 = pneg %p350
        %p514 = pneg %p347
        %p515 = pneg %p371
        %p516 = pneg %p368
        %p517 = pneg %p397
        %p518 = pneg %p394
        %s519 = sand.u32 %s384, 1
        %s520 = scalar_lea.sflag [#allocation4], %s519
        %s521 = sand.u32 %s384, 1
        %s522 = scalar_lea.vmem [#allocation3], %s521
        %p523 = scmp.lt.s32.totalorder %s30, 1
        %s524 = scalar_select %p523, %s30, 1
        %s525 = smul.addr %s524, 4
        %s526 = scalar_lea.vmem %s0, %s525
        %p527 = scmp.lt.s32.totalorder %s30, 1
        %s528 = scalar_select %p527, %s30, 1
        %s529 = scalar_lea.vmem %s1, %s528
        %v531 = vld [vmem:[%s526] sm:$0xf]
        %v532 = vunpack.c.l.bf16 %v531
        %vm533 = vcmask 261120
        %v534 = vsel %vm533, %v532, 0.0
        %535 = vadd.xlane.f32.xlu0 %v534
        %v536 = vpop.xlane.xlu0 %535
        %v537 = vrcp.pop 32.0
        %v538 = vmul.f32 %v536, %v537
        %v539 = vsub.f32 %v532, %v538
        %v540 = vmul.f32 %v539, %v539
        %v541 = vsel %vm533, %v540, 0.0
        %542 = vadd.xlane.f32.xlu0 %v541
        %v543 = vpop.xlane.xlu0 %542
        %v544 = vmul.f32 %v543, %v537
        %v545 = vadd.f32 %v544, 1e-12
        %v546 = vrsqrt.pop %v545
        %v547 = vmul.f32 %v539, %v546
        %v548 = vld [vmem:[%s2] sm:$0x1]
        %v550 = vlaneseq
        %v551 = vshrl.u32 %v550, 7
        %v552 = vsub.s32 0, %v551
        %v553 = vrot.slane %v548, %v552
        %v555 = vmul.f32 %v547, %v553
        %v556 = vld [vmem:[%s3] sm:$0x1]
        %v558 = vlaneseq
        %v559 = vshrl.u32 %v558, 7
        %v560 = vsub.s32 0, %v559
        %v561 = vrot.slane %v556, %v560
        %v563 = vadd.f32 %v555, %v561
        %v564 = vpack.c.bf16 %v563, %v563
        %v565 = vld [vmem:[%s4] sm:$0xf]
        %v566 = vld [vmem:[%s4 + $0x4] sm:$0xf]
        %v567 = vld [vmem:[%s4 + $0x8] sm:$0xf]
        %v568 = vld [vmem:[%s4 + $0xc] sm:$0xf]
        %v569 = vld [vmem:[%s5] sm:$0x1]
        %v571 = vlaneseq
        %v572 = vshrl.u32 %v571, 7
        %v573 = vsub.s32 0, %v572
        %v574 = vrot.slane %v569, %v573
        %v580 = vunpack.c.l.b16 %v565
        %v581 = vunpack.c.l.b16 %v566
        %v582 = vunpack.c.l.b16 %v567
        %v583 = vunpack.c.l.b16 %v568
        %v584 = vpack.c.b16 %v581, %v580
        %v585 = vpack.c.b16 %v583, %v582
        %v589 = vsel %vm533, %v564, 0
        %591 = vmatprep.subr.bf16.mxu0 0
        %592 = vmatpush1.bf16.msra.mxu0 %v584
        %593 = vmatprep.subr.bf16.mxu0 0
        %594 = vmatpush1.bf16.msra.mxu0 %v585
        %595 = vmatprep.subr.bf16.mxu0 0
        %596 = vmatpush1.bf16.msra.mxu0 0
        %597 = vmatprep.subr.bf16.mxu0 0
        %598 = vmatpush1.bf16.msra.mxu0 0
        %599 = vmatprep.subr.bf16.mxu0 0
        %600 = vmatpush1.bf16.msra.mxu0 0
        %601 = vmatprep.subr.bf16.mxu0 0
        %602 = vmatpush1.bf16.msra.mxu0 0
        %603 = vmatprep.subr.bf16.mxu0 0
        %604 = vmatpush1.bf16.msra.mxu0 0
        %605 = vmatprep.subr.bf16.mxu0 0
        %606 = vmatpush1.bf16.msra.mxu0 0
        %607 = vmatprep.subr.bf16.mxu0 0
        %608 = vmatpush1.bf16.msra.mxu0 0
        %609 = vmatprep.subr.bf16.mxu0 0
        %610 = vmatpush1.bf16.msra.mxu0 0
        %611 = vmatprep.subr.bf16.mxu0 0
        %612 = vmatpush1.bf16.msra.mxu0 0
        %613 = vmatprep.subr.bf16.mxu0 0
        %614 = vmatpush1.bf16.msra.mxu0 0
        %615 = vmatprep.subr.bf16.mxu0 0
        %616 = vmatpush1.bf16.msra.mxu0 0
        %617 = vmatprep.subr.bf16.mxu0 0
        %618 = vmatpush1.bf16.msra.mxu0 0
        %619 = vmatprep.subr.bf16.mxu0 0
        %620 = vmatpush1.bf16.msra.mxu0 0
        %621 = vmatprep.subr.bf16.mxu0 0
        %622 = vmatpush1.bf16.msra.mxu0 0
        %623 = vmatprep.mubr.bf16.mxu0 0
        %624 = vmatmul.mubr.bf16.gmra.mrb[0].mxu0 %v589
        %v625 = vpop.f32.mrb[0].mxu0
        %v626 = vadd.f32 %v574, %v625
        %v627 = vpop.f32.mrb[0].mxu0
        %v628 = vpop.f32.mrb[0].mxu0
        %v629 = vpop.f32.mrb[0].mxu0
        %630 = vdwg.mxu0
        %v631 = vpack.c.bf16 %v626, %v626
        %v632 = vld [vmem:[%s529] sm:$0x1]
        %634 = vrot.lane.b32.xlu0 %v631, 96
        %v635 = vpop.permute.xlu0 %634
        %vm636 = vcmask 64512
        %v638 = vsel %vm636, %v631, 0
        %v641 = vsel %vm636, %v635, 0
        %643 = vmatprep.subr.bf16.mxu0 0
        %644 = vmatpush1.bf16.xpose.msra.mxu0 %v641
        %645 = vmatprep.subr.bf16.mxu0 0
        %646 = vmatpush1.bf16.xpose.msra.mxu0 0
        %647 = vmatprep.subr.bf16.mxu0 0
        %648 = vmatpush1.bf16.xpose.msra.mxu0 0
        %649 = vmatprep.subr.bf16.mxu0 0
        %650 = vmatpush1.bf16.xpose.msra.mxu0 0
        %651 = vmatprep.subr.bf16.mxu0 0
        %652 = vmatpush1.bf16.xpose.msra.mxu0 0
        %653 = vmatprep.subr.bf16.mxu0 0
        %654 = vmatpush1.bf16.xpose.msra.mxu0 0
        %655 = vmatprep.subr.bf16.mxu0 0
        %656 = vmatpush1.bf16.xpose.msra.mxu0 0
        %657 = vmatprep.subr.bf16.mxu0 0
        %658 = vmatpush1.bf16.xpose.msra.mxu0 0
        %659 = vmatprep.subr.bf16.mxu0 0
        %660 = vmatpush1.bf16.xpose.msra.mxu0 0
        %661 = vmatprep.subr.bf16.mxu0 0
        %662 = vmatpush1.bf16.xpose.msra.mxu0 0
        %663 = vmatprep.subr.bf16.mxu0 0
        %664 = vmatpush1.bf16.xpose.msra.mxu0 0
        %665 = vmatprep.subr.bf16.mxu0 0
        %666 = vmatpush1.bf16.xpose.msra.mxu0 0
        %667 = vmatprep.subr.bf16.mxu0 0
        %668 = vmatpush1.bf16.xpose.msra.mxu0 0
        %669 = vmatprep.subr.bf16.mxu0 0
        %670 = vmatpush1.bf16.xpose.msra.mxu0 0
        %671 = vmatprep.subr.bf16.mxu0 0
        %672 = vmatpush1.bf16.xpose.msra.mxu0 0
        %673 = vmatprep.subr.bf16.mxu0 0
        %674 = vmatpush1.bf16.xpose.msra.mxu0 0
        %675 = vmatprep.mubr.bf16.mxu0 0
        %676 = vmatmul.mubr.bf16.gmra.mrb[0].mxu0 %v638
        %v677 = vpop.f32.mrb[0].mxu0
        %v678 = vadd.f32 0.0, %v677
        %v679 = vpop.f32.mrb[0].mxu0
        %v680 = vpop.f32.mrb[0].mxu0
        %v681 = vpop.f32.mrb[0].mxu0
        %682 = vdwg.mxu0
        %v683 = vmul.f32 %v678, 0.35355338
        %v685 = vlaneseq
        %v686 = vshrl.u32 %v685, 7
        %v687 = vsub.s32 0, %v686
        %v688 = vrot.slane %v632, %v687
        %v690 = vadd.f32 %v683, %v688
        %v691 = vsel %vm636, %v690, -inf
        %692 = vmax.xlane.f32.xlu0 %v691
        %v693 = vpop.xlane.xlu0 %692
        %v694 = vsub.f32 %v690, %v693
        %v695 = vmul.f32 %v694, 1.442695
        %v696 = vpow.pop %v695
        %v697 = vsel %vm636, %v696, 0.0
        %698 = vadd.xlane.f32.xlu0 %v697
        %v699 = vpop.xlane.xlu0 %698
        %v700 = vrcp.pop %v699
        %v701 = vmul.f32 %v696, %v700
        %v702 = vpack.c.bf16 %v701, %v701
        %703 = vrot.lane.b32.xlu0 %v631, 64
        %v704 = vpop.permute.xlu0 %703
        %v706 = vsel %vm636, %v702, 0
        %vm708 = vcmask 1043456
        %v710 = vsel %vm708, %v704, 0
        %712 = vmatprep.subr.bf16.mxu0 0
        %713 = vmatpush1.bf16.msra.mxu0 %v710
        %714 = vmatprep.subr.bf16.mxu0 0
        %715 = vmatpush1.bf16.msra.mxu0 0
        %716 = vmatprep.subr.bf16.mxu0 0
        %717 = vmatpush1.bf16.msra.mxu0 0
        %718 = vmatprep.subr.bf16.mxu0 0
        %719 = vmatpush1.bf16.msra.mxu0 0
        %720 = vmatprep.subr.bf16.mxu0 0
        %721 = vmatpush1.bf16.msra.mxu0 0
        %722 = vmatprep.subr.bf16.mxu0 0
        %723 = vmatpush1.bf16.msra.mxu0 0
        %724 = vmatprep.subr.bf16.mxu0 0
        %725 = vmatpush1.bf16.msra.mxu0 0
        %726 = vmatprep.subr.bf16.mxu0 0
        %727 = vmatpush1.bf16.msra.mxu0 0
        %728 = vmatprep.subr.bf16.mxu0 0
        %729 = vmatpush1.bf16.msra.mxu0 0
        %730 = vmatprep.subr.bf16.mxu0 0
        %731 = vmatpush1.bf16.msra.mxu0 0
        %732 = vmatprep.subr.bf16.mxu0 0
        %733 = vmatpush1.bf16.msra.mxu0 0
        %734 = vmatprep.subr.bf16.mxu0 0
        %735 = vmatpush1.bf16.msra.mxu0 0
        %736 = vmatprep.subr.bf16.mxu0 0
        %737 = vmatpush1.bf16.msra.mxu0 0
        %738 = vmatprep.subr.bf16.mxu0 0
        %739 = vmatpush1.bf16.msra.mxu0 0
        %740 = vmatprep.subr.bf16.mxu0 0
        %741 = vmatpush1.bf16.msra.mxu0 0
        %742 = vmatprep.subr.bf16.mxu0 0
        %743 = vmatpush1.bf16.msra.mxu0 0
        %744 = vmatprep.mubr.bf16.mxu0 0
        %745 = vmatmul.mubr.bf16.gmra.mrb[0].mxu0 %v706
        %v746 = vpop.f32.mrb[0].mxu0
        %v747 = vadd.f32 0.0, %v746
        %v748 = vpop.f32.mrb[0].mxu0
        %v749 = vpop.f32.mrb[0].mxu0
        %v750 = vpop.f32.mrb[0].mxu0
        %751 = vdwg.mxu0
        %752 = vst.msk [vmem:[#allocation2] sm:$0xff] %vm636, %v747
        %753 = vrot.lane.b32.xlu0 %v631, 120
        %v754 = vpop.permute.xlu0 %753
        %755 = vrot.lane.b32.xlu0 %v631, 88
        %v756 = vpop.permute.xlu0 %755
        %v758 = vsel %vm636, %v754, 0
        %v761 = vsel %vm636, %v756, 0
        %763 = vmatprep.subr.bf16.mxu0 0
        %764 = vmatpush1.bf16.xpose.msra.mxu0 %v761
        %765 = vmatprep.subr.bf16.mxu0 0
        %766 = vmatpush1.bf16.xpose.msra.mxu0 0
        %767 = vmatprep.subr.bf16.mxu0 0
        %768 = vmatpush1.bf16.xpose.msra.mxu0 0
        %769 = vmatprep.subr.bf16.mxu0 0
        %770 = vmatpush1.bf16.xpose.msra.mxu0 0
        %771 = vmatprep.subr.bf16.mxu0 0
        %772 = vmatpush1.bf16.xpose.msra.mxu0 0
        %773 = vmatprep.subr.bf16.mxu0 0
        %774 = vmatpush1.bf16.xpose.msra.mxu0 0
        %775 = vmatprep.subr.bf16.mxu0 0
        %776 = vmatpush1.bf16.xpose.msra.mxu0 0
        %777 = vmatprep.subr.bf16.mxu0 0
        %778 = vmatpush1.bf16.xpose.msra.mxu0 0
        %779 = vmatprep.subr.bf16.mxu0 0
        %780 = vmatpush1.bf16.xpose.msra.mxu0 0
        %781 = vmatprep.subr.bf16.mxu0 0
        %782 = vmatpush1.bf16.xpose.msra.mxu0 0
        %783 = vmatprep.subr.bf16.mxu0 0
        %784 = vmatpush1.bf16.xpose.msra.mxu0 0
        %785 = vmatprep.subr.bf16.mxu0 0
        %786 = vmatpush1.bf16.xpose.msra.mxu0 0
        %787 = vmatprep.subr.bf16.mxu0 0
        %788 = vmatpush1.bf16.xpose.msra.mxu0 0
        %789 = vmatprep.subr.bf16.mxu0 0
        %790 = vmatpush1.bf16.xpose.msra.mxu0 0
        %791 = vmatprep.subr.bf16.mxu0 0
        %792 = vmatpush1.bf16.xpose.msra.mxu0 0
        %793 = vmatprep.subr.bf16.mxu0 0
        %794 = vmatpush1.bf16.xpose.msra.mxu0 0
        %795 = vmatprep.mubr.bf16.mxu0 0
        %796 = vmatmul.mubr.bf16.gmra.mrb[0].mxu0 %v758
        %v797 = vpop.f32.mrb[0].mxu0
        %v798 = vadd.f32 0.0, %v797
        %v799 = vpop.f32.mrb[0].mxu0
        %v800 = vpop.f32.mrb[0].mxu0
        %v801 = vpop.f32.mrb[0].mxu0
        %802 = vdwg.mxu0
        %v803 = vmul.f32 %v798, 0.35355338
        %v804 = vadd.f32 %v803, %v688
        %v805 = vsel %vm636, %v804, -inf
        %806 = vmax.xlane.f32.xlu0 %v805
        %v807 = vpop.xlane.xlu0 %806
        %v808 = vsub.f32 %v804, %v807
        %v809 = vmul.f32 %v808, 1.442695
        %v810 = vpow.pop %v809
        %v811 = vsel %vm636, %v810, 0.0
        %812 = vadd.xlane.f32.xlu0 %v811
        %v813 = vpop.xlane.xlu0 %812
        %v814 = vrcp.pop %v813
        %v815 = vmul.f32 %v810, %v814
        %v816 = vpack.c.bf16 %v815, %v815
        %817 = vrot.lane.b32.xlu0 %v631, 56
        %v818 = vpop.permute.xlu0 %817
        %v820 = vsel %vm636, %v816, 0
        %v823 = vsel %vm708, %v818, 0
        %825 = vmatprep.subr.bf16.mxu0 0
        %826 = vmatpush1.bf16.msra.mxu0 %v823
        %827 = vmatprep.subr.bf16.mxu0 0
        %828 = vmatpush1.bf16.msra.mxu0 0
        %829 = vmatprep.subr.bf16.mxu0 0
        %830 = vmatpush1.bf16.msra.mxu0 0
        %831 = vmatprep.subr.bf16.mxu0 0
        %832 = vmatpush1.bf16.msra.mxu0 0
        %833 = vmatprep.subr.bf16.mxu0 0
        %834 = vmatpush1.bf16.msra.mxu0 0
        %835 = vmatprep.subr.bf16.mxu0 0
        %836 = vmatpush1.bf16.msra.mxu0 0
        %837 = vmatprep.subr.bf16.mxu0 0
        %838 = vmatpush1.bf16.msra.mxu0 0
        %839 = vmatprep.subr.bf16.mxu0 0
        %840 = vmatpush1.bf16.msra.mxu0 0
        %841 = vmatprep.subr.bf16.mxu0 0
        %842 = vmatpush1.bf16.msra.mxu0 0
        %843 = vmatprep.subr.bf16.mxu0 0
        %844 = vmatpush1.bf16.msra.mxu0 0
        %845 = vmatprep.subr.bf16.mxu0 0
        %846 = vmatpush1.bf16.msra.mxu0 0
        %847 = vmatprep.subr.bf16.mxu0 0
        %848 = vmatpush1.bf16.msra.mxu0 0
        %849 = vmatprep.subr.bf16.mxu0 0
        %850 = vmatpush1.bf16.msra.mxu0 0
        %851 = vmatprep.subr.bf16.mxu0 0
        %852 = vmatpush1.bf16.msra.mxu0 0
        %853 = vmatprep.subr.bf16.mxu0 0
        %854 = vmatpush1.bf16.msra.mxu0 0
        %855 = vmatprep.subr.bf16.mxu0 0
        %856 = vmatpush1.bf16.msra.mxu0 0
        %857 = vmatprep.mubr.bf16.mxu0 0
        %858 = vmatmul.mubr.bf16.gmra.mrb[0].mxu0 %v820
        %v859 = vpop.f32.mrb[0].mxu0
        %v860 = vadd.f32 0.0, %v859
        %v861 = vpop.f32.mrb[0].mxu0
        %v862 = vpop.f32.mrb[0].mxu0
        %v863 = vpop.f32.mrb[0].mxu0
        %864 = vdwg.mxu0
        %866 = vrot.lane.b32.xlu0 %v860, 8
        %v867 = vpop.permute.xlu0 %866
        %vm869 = vcmask 130112
        %870 = vst.msk [vmem:[#allocation2] sm:$0xff] %vm869, %v867
        %871 = vrot.lane.b32.xlu0 %v631, 112
        %v872 = vpop.permute.xlu0 %871
        %873 = vrot.lane.b32.xlu0 %v631, 80
        %v874 = vpop.permute.xlu0 %873
        %v876 = vsel %vm636, %v872, 0
        %v879 = vsel %vm636, %v874, 0
        %881 = vmatprep.subr.bf16.mxu0 0
        %882 = vmatpush1.bf16.xpose.msra.mxu0 %v879
        %883 = vmatprep.subr.bf16.mxu0 0
        %884 = vmatpush1.bf16.xpose.msra.mxu0 0
        %885 = vmatprep.subr.bf16.mxu0 0
        %886 = vmatpush1.bf16.xpose.msra.mxu0 0
        %887 = vmatprep.subr.bf16.mxu0 0
        %888 = vmatpush1.bf16.xpose.msra.mxu0 0
        %889 = vmatprep.subr.bf16.mxu0 0
        %890 = vmatpush1.bf16.xpose.msra.mxu0 0
        %891 = vmatprep.subr.bf16.mxu0 0
        %892 = vmatpush1.bf16.xpose.msra.mxu0 0
        %893 = vmatprep.subr.bf16.mxu0 0
        %894 = vmatpush1.bf16.xpose.msra.mxu0 0
        %895 = vmatprep.subr.bf16.mxu0 0
        %896 = vmatpush1.bf16.xpose.msra.mxu0 0
        %897 = vmatprep.subr.bf16.mxu0 0
        %898 = vmatpush1.bf16.xpose.msra.mxu0 0
        %899 = vmatprep.subr.bf16.mxu0 0
        %900 = vmatpush1.bf16.xpose.msra.mxu0 0
        %901 = vmatprep.subr.bf16.mxu0 0
        %902 = vmatpush1.bf16.xpose.msra.mxu0 0
        %903 = vmatprep.subr.bf16.mxu0 0
        %904 = vmatpush1.bf16.xpose.msra.mxu0 0
        %905 = vmatprep.subr.bf16.mxu0 0
        %906 = vmatpush1.bf16.xpose.msra.mxu0 0
        %907 = vmatprep.subr.bf16.mxu0 0
        %908 = vmatpush1.bf16.xpose.msra.mxu0 0
        %909 = vmatprep.subr.bf16.mxu0 0
        %910 = vmatpush1.bf16.xpose.msra.mxu0 0
        %911 = vmatprep.subr.bf16.mxu0 0
        %912 = vmatpush1.bf16.xpose.msra.mxu0 0
        %913 = vmatprep.mubr.bf16.mxu0 0
        %914 = vmatmul.mubr.bf16.gmra.mrb[0].mxu0 %v876
        %v915 = vpop.f32.mrb[0].mxu0
        %v916 = vadd.f32 0.0, %v915
        %v917 = vpop.f32.mrb[0].mxu0
        %v918 = vpop.f32.mrb[0].mxu0
        %v919 = vpop.f32.mrb[0].mxu0
        %920 = vdwg.mxu0
        %v921 = vmul.f32 %v916, 0.35355338
        %v922 = vadd.f32 %v921, %v688
        %v923 = vsel %vm636, %v922, -inf
        %924 = vmax.xlane.f32.xlu0 %v923
        %v925 = vpop.xlane.xlu0 %924
        %v926 = vsub.f32 %v922, %v925
        %v927 = vmul.f32 %v926, 1.442695
        %v928 = vpow.pop %v927
        %v929 = vsel %vm636, %v928, 0.0
        %930 = vadd.xlane.f32.xlu0 %v929
        %v931 = vpop.xlane.xlu0 %930
        %v932 = vrcp.pop %v931
        %v933 = vmul.f32 %v928, %v932
        %v934 = vpack.c.bf16 %v933, %v933
        %935 = vrot.lane.b32.xlu0 %v631, 48
        %v936 = vpop.permute.xlu0 %935
        %v938 = vsel %vm636, %v934, 0
        %v941 = vsel %vm708, %v936, 0
        %943 = vmatprep.subr.bf16.mxu0 0
        %944 = vmatpush1.bf16.msra.mxu0 %v941
        %945 = vmatprep.subr.bf16.mxu0 0
        %946 = vmatpush1.bf16.msra.mxu0 0
        %947 = vmatprep.subr.bf16.mxu0 0
        %948 = vmatpush1.bf16.msra.mxu0 0
        %949 = vmatprep.subr.bf16.mxu0 0
        %950 = vmatpush1.bf16.msra.mxu0 0
        %951 = vmatprep.subr.bf16.mxu0 0
        %952 = vmatpush1.bf16.msra.mxu0 0
        %953 = vmatprep.subr.bf16.mxu0 0
        %954 = vmatpush1.bf16.msra.mxu0 0
        %955 = vmatprep.subr.bf16.mxu0 0
        %956 = vmatpush1.bf16.msra.mxu0 0
        %957 = vmatprep.subr.bf16.mxu0 0
        %958 = vmatpush1.bf16.msra.mxu0 0
        %959 = vmatprep.subr.bf16.mxu0 0
        %960 = vmatpush1.bf16.msra.mxu0 0
        %961 = vmatprep.subr.bf16.mxu0 0
        %962 = vmatpush1.bf16.msra.mxu0 0
        %963 = vmatprep.subr.bf16.mxu0 0
        %964 = vmatpush1.bf16.msra.mxu0 0
        %965 = vmatprep.subr.bf16.mxu0 0
        %966 = vmatpush1.bf16.msra.mxu0 0
        %967 = vmatprep.subr.bf16.mxu0 0
        %968 = vmatpush1.bf16.msra.mxu0 0
        %969 = vmatprep.subr.bf16.mxu0 0
        %970 = vmatpush1.bf16.msra.mxu0 0
        %971 = vmatprep.subr.bf16.mxu0 0
        %972 = vmatpush1.bf16.msra.mxu0 0
        %973 = vmatprep.subr.bf16.mxu0 0
        %974 = vmatpush1.bf16.msra.mxu0 0
        %975 = vmatprep.mubr.bf16.mxu0 0
        %976 = vmatmul.mubr.bf16.gmra.mrb[0].mxu0 %v938
        %v977 = vpop.f32.mrb[0].mxu0
        %v978 = vadd.f32 0.0, %v977
        %v979 = vpop.f32.mrb[0].mxu0
        %v980 = vpop.f32.mrb[0].mxu0
        %v981 = vpop.f32.mrb[0].mxu0
        %982 = vdwg.mxu0
        %984 = vrot.lane.b32.xlu0 %v978, 16
        %v985 = vpop.permute.xlu0 %984
        %vm987 = vcmask 195712
        %988 = vst.msk [vmem:[#allocation2] sm:$0xff] %vm987, %v985
        %989 = vrot.lane.b32.xlu0 %v631, 104
        %v990 = vpop.permute.xlu0 %989
        %991 = vrot.lane.b32.xlu0 %v631, 72
        %v992 = vpop.permute.xlu0 %991
        %v994 = vsel %vm636, %v990, 0
        %v997 = vsel %vm636, %v992, 0
        %999 = vmatprep.subr.bf16.mxu0 0
        %1000 = vmatpush1.bf16.xpose.msra.mxu0 %v997
        %1001 = vmatprep.subr.bf16.mxu0 0
        %1002 = vmatpush1.bf16.xpose.msra.mxu0 0
        %1003 = vmatprep.subr.bf16.mxu0 0
        %1004 = vmatpush1.bf16.xpose.msra.mxu0 0
        %1005 = vmatprep.subr.bf16.mxu0 0
        %1006 = vmatpush1.bf16.xpose.msra.mxu0 0
        %1007 = vmatprep.subr.bf16.mxu0 0
        %1008 = vmatpush1.bf16.xpose.msra.mxu0 0
        %1009 = vmatprep.subr.bf16.mxu0 0
        %1010 = vmatpush1.bf16.xpose.msra.mxu0 0
        %1011 = vmatprep.subr.bf16.mxu0 0
        %1012 = vmatpush1.bf16.xpose.msra.mxu0 0
        %1013 = vmatprep.subr.bf16.mxu0 0
        %1014 = vmatpush1.bf16.xpose.msra.mxu0 0
        %1015 = vmatprep.subr.bf16.mxu0 0
        %1016 = vmatpush1.bf16.xpose.msra.mxu0 0
        %1017 = vmatprep.subr.bf16.mxu0 0
        %1018 = vmatpush1.bf16.xpose.msra.mxu0 0
        %1019 = vmatprep.subr.bf16.mxu0 0
        %1020 = vmatpush1.bf16.xpose.msra.mxu0 0
        %1021 = vmatprep.subr.bf16.mxu0 0
        %1022 = vmatpush1.bf16.xpose.msra.mxu0 0
        %1023 = vmatprep.subr.bf16.mxu0 0
        %1024 = vmatpush1.bf16.xpose.msra.mxu0 0
        %1025 = vmatprep.subr.bf16.mxu0 0
        %1026 = vmatpush1.bf16.xpose.msra.mxu0 0
        %1027 = vmatprep.subr.bf16.mxu0 0
        %1028 = vmatpush1.bf16.xpose.msra.mxu0 0
        %1029 = vmatprep.subr.bf16.mxu0 0
        %1030 = vmatpush1.bf16.xpose.msra.mxu0 0
        %1031 = vmatprep.mubr.bf16.mxu0 0
        %1032 = vmatmul.mubr.bf16.gmra.mrb[0].mxu0 %v994
        %v1033 = vpop.f32.mrb[0].mxu0
        %v1034 = vadd.f32 0.0, %v1033
        %v1035 = vpop.f32.mrb[0].mxu0
        %v1036 = vpop.f32.mrb[0].mxu0
        %v1037 = vpop.f32.mrb[0].mxu0
        %1038 = vdwg.mxu0
        %v1039 = vmul.f32 %v1034, 0.35355338
        %v1040 = vadd.f32 %v1039, %v688
        %v1041 = vsel %vm636, %v1040, -inf
        %1042 = vmax.xlane.f32.xlu0 %v1041
        %v1043 = vpop.xlane.xlu0 %1042
        %v1044 = vsub.f32 %v1040, %v1043
        %v1045 = vmul.f32 %v1044, 1.442695
        %v1046 = vpow.pop %v1045
        %v1047 = vsel %vm636, %v1046, 0.0
        %1048 = vadd.xlane.f32.xlu0 %v1047
        %v1049 = vpop.xlane.xlu0 %1048
        %v1050 = vrcp.pop %v1049
        %v1051 = vmul.f32 %v1046, %v1050
        %v1052 = vpack.c.bf16 %v1051, %v1051
        %1053 = vrot.lane.b32.xlu0 %v631, 40
        %v1054 = vpop.permute.xlu0 %1053
        %v1056 = vsel %vm636, %v1052, 0
        %v1059 = vsel %vm708, %v1054, 0
        %1061 = vmatprep.subr.bf16.mxu0 0
        %1062 = vmatpush1.bf16.msra.mxu0 %v1059
        %1063 = vmatprep.subr.bf16.mxu0 0
        %1064 = vmatpush1.bf16.msra.mxu0 0
        %1065 = vmatprep.subr.bf16.mxu0 0
        %1066 = vmatpush1.bf16.msra.mxu0 0
        %1067 = vmatprep.subr.bf16.mxu0 0
        %1068 = vmatpush1.bf16.msra.mxu0 0
        %1069 = vmatprep.subr.bf16.mxu0 0
        %1070 = vmatpush1.bf16.msra.mxu0 0
        %1071 = vmatprep.subr.bf16.mxu0 0
        %1072 = vmatpush1.bf16.msra.mxu0 0
        %1073 = vmatprep.subr.bf16.mxu0 0
        %1074 = vmatpush1.bf16.msra.mxu0 0
        %1075 = vmatprep.subr.bf16.mxu0 0
        %1076 = vmatpush1.bf16.msra.mxu0 0
        %1077 = vmatprep.subr.bf16.mxu0 0
        %1078 = vmatpush1.bf16.msra.mxu0 0
        %1079 = vmatprep.subr.bf16.mxu0 0
        %1080 = vmatpush1.bf16.msra.mxu0 0
        %1081 = vmatprep.subr.bf16.mxu0 0
        %1082 = vmatpush1.bf16.msra.mxu0 0
        %1083 = vmatprep.subr.bf16.mxu0 0
        %1084 = vmatpush1.bf16.msra.mxu0 0
        %1085 = vmatprep.subr.bf16.mxu0 0
        %1086 = vmatpush1.bf16.msra.mxu0 0
        %1087 = vmatprep.subr.bf16.mxu0 0
        %1088 = vmatpush1.bf16.msra.mxu0 0
        %1089 = vmatprep.subr.bf16.mxu0 0
        %1090 = vmatpush1.bf16.msra.mxu0 0
        %1091 = vmatprep.subr.bf16.mxu0 0
        %1092 = vmatpush1.bf16.msra.mxu0 0
        %1093 = vmatprep.mubr.bf16.mxu0 0
        %1094 = vmatmul.mubr.bf16.gmra.mrb[0].mxu0 %v1056
        %v1095 = vpop.f32.mrb[0].mxu0
        %v1096 = vadd.f32 0.0, %v1095
        %v1097 = vpop.f32.mrb[0].mxu0
        %v1098 = vpop.f32.mrb[0].mxu0
        %v1099 = vpop.f32.mrb[0].mxu0
        %1100 = vdwg.mxu0
        %1102 = vrot.lane.b32.xlu0 %v1096, 24
        %v1103 = vpop.permute.xlu0 %1102
        %vm1105 = vcmask 261312
        %1106 = vst.msk [vmem:[#allocation2] sm:$0xff] %vm1105, %v1103
        %v1107 = vld [vmem:[#allocation2] sm:$0xff]
        %v1108 = vpack.c.bf16 %v1107, %v1107
        %v1109 = vld [vmem:[%s6] sm:$0xf]
        %v1110 = vld [vmem:[%s6 + $0x4] sm:$0xf]
        %v1111 = vld [vmem:[%s6 + $0x8] sm:$0xf]
        %v1112 = vld [vmem:[%s6 + $0xc] sm:$0xf]
        %v1113 = vld [vmem:[%s7] sm:$0x1]
        %v1115 = vlaneseq
        %v1116 = vshrl.u32 %v1115, 7
        %v1117 = vsub.s32 0, %v1116
        %v1118 = vrot.slane %v1113, %v1117
        %v1124 = vunpack.c.l.b16 %v1109
        %v1125 = vunpack.c.l.b16 %v1110
        %v1126 = vunpack.c.l.b16 %v1111
        %v1127 = vunpack.c.l.b16 %v1112
        %v1128 = vpack.c.b16 %v1125, %v1124
        %v1129 = vpack.c.b16 %v1127, %v1126
        %v1133 = vsel %vm533, %v1108, 0
        %1135 = vmatprep.subr.bf16.mxu0 0
        %1136 = vmatpush1.bf16.msra.mxu0 %v1128
        %1137 = vmatprep.subr.bf16.mxu0 0
        %1138 = vmatpush1.bf16.msra.mxu0 %v1129
        %1139 = vmatprep.subr.bf16.mxu0 0
        %1140 = vmatpush1.bf16.msra.mxu0 0
        %1141 = vmatprep.subr.bf16.mxu0 0
        %1142 = vmatpush1.bf16.msra.mxu0 0
        %1143 = vmatprep.subr.bf16.mxu0 0
        %1144 = vmatpush1.bf16.msra.mxu0 0
        %1145 = vmatprep.subr.bf16.mxu0 0
        %1146 = vmatpush1.bf16.msra.mxu0 0
        %1147 = vmatprep.subr.bf16.mxu0 0
        %1148 = vmatpush1.bf16.msra.mxu0 0
        %1149 = vmatprep.subr.bf16.mxu0 0
        %1150 = vmatpush1.bf16.msra.mxu0 0
        %1151 = vmatprep.subr.bf16.mxu0 0
        %1152 = vmatpush1.bf16.msra.mxu0 0
        %1153 = vmatprep.subr.bf16.mxu0 0
        %1154 = vmatpush1.bf16.msra.mxu0 0
        %1155 = vmatprep.subr.bf16.mxu0 0
        %1156 = vmatpush1.bf16.msra.mxu0 0
        %1157 = vmatprep.subr.bf16.mxu0 0
        %1158 = vmatpush1.bf16.msra.mxu0 0
        %1159 = vmatprep.subr.bf16.mxu0 0
        %1160 = vmatpush1.bf16.msra.mxu0 0
        %1161 = vmatprep.subr.bf16.mxu0 0
        %1162 = vmatpush1.bf16.msra.mxu0 0
        %1163 = vmatprep.subr.bf16.mxu0 0
        %1164 = vmatpush1.bf16.msra.mxu0 0
        %1165 = vmatprep.subr.bf16.mxu0 0
        %1166 = vmatpush1.bf16.msra.mxu0 0
        %1167 = vmatprep.mubr.bf16.mxu0 0
        %1168 = vmatmul.mubr.bf16.gmra.mrb[0].mxu0 %v1133
        %v1169 = vpop.f32.mrb[0].mxu0
        %v1170 = vadd.f32 %v1118, %v1169
        %v1171 = vpop.f32.mrb[0].mxu0
        %v1172 = vpop.f32.mrb[0].mxu0
        %v1173 = vpop.f32.mrb[0].mxu0
        %1174 = vdwg.mxu0
        %v1175 = vadd.f32 %v563, %v1170
        %v1176 = vsel %vm533, %v1175, 0.0
        %1177 = vadd.xlane.f32.xlu0 %v1176
        %v1178 = vpop.xlane.xlu0 %1177
        %v1179 = vmul.f32 %v1178, %v537
        %v1180 = vsub.f32 %v1175, %v1179
        %v1181 = vmul.f32 %v1180, %v1180
        %v1182 = vsel %vm533, %v1181, 0.0
        %1183 = vadd.xlane.f32.xlu0 %v1182
        %v1184 = vpop.xlane.xlu0 %1183
        %v1185 = vmul.f32 %v1184, %v537
        %v1186 = vadd.f32 %v1185, 1e-12
        %v1187 = vrsqrt.pop %v1186
        %v1188 = vmul.f32 %v1180, %v1187
        %v1189 = vld [vmem:[%s8] sm:$0x1]
        %v1191 = vlaneseq
        %v1192 = vshrl.u32 %v1191, 7
        %v1193 = vsub.s32 0, %v1192
        %v1194 = vrot.slane %v1189, %v1193
        %v1196 = vmul.f32 %v1188, %v1194
        %v1197 = vld [vmem:[%s9] sm:$0x1]
        %v1199 = vlaneseq
        %v1200 = vshrl.u32 %v1199, 7
        %v1201 = vsub.s32 0, %v1200
        %v1202 = vrot.slane %v1197, %v1201
        %v1204 = vadd.f32 %v1196, %v1202
        %v1205 = vpack.c.bf16 %v1204, %v1204
        %v1206 = vld [vmem:[%s10] sm:$0xf]
        %v1207 = vld [vmem:[%s10 + $0x4] sm:$0xf]
        %v1208 = vld [vmem:[%s10 + $0x8] sm:$0xf]
        %v1209 = vld [vmem:[%s10 + $0xc] sm:$0xf]
        %v1210 = vld [vmem:[%s11] sm:$0x1]
        %v1212 = vlaneseq
        %v1213 = vshrl.u32 %v1212, 7
        %v1214 = vsub.s32 0, %v1213
        %v1215 = vrot.slane %v1210, %v1214
        %v1221 = vunpack.c.l.b16 %v1206
        %v1222 = vunpack.c.l.b16 %v1207
        %v1223 = vunpack.c.l.b16 %v1208
        %v1224 = vunpack.c.l.b16 %v1209
        %v1225 = vpack.c.b16 %v1222, %v1221
        %v1226 = vpack.c.b16 %v1224, %v1223
        %v1230 = vsel %vm533, %v1205, 0
        %1232 = vmatprep.subr.bf16.mxu0 0
        %1233 = vmatpush1.bf16.msra.mxu0 %v1225
        %1234 = vmatprep.subr.bf16.mxu0 0
        %1235 = vmatpush1.bf16.msra.mxu0 %v1226
        %1236 = vmatprep.subr.bf16.mxu0 0
        %1237 = vmatpush1.bf16.msra.mxu0 0
        %1238 = vmatprep.subr.bf16.mxu0 0
        %1239 = vmatpush1.bf16.msra.mxu0 0
        %1240 = vmatprep.subr.bf16.mxu0 0
        %1241 = vmatpush1.bf16.msra.mxu0 0
        %1242 = vmatprep.subr.bf16.mxu0 0
        %1243 = vmatpush1.bf16.msra.mxu0 0
        %1244 = vmatprep.subr.bf16.mxu0 0
        %1245 = vmatpush1.bf16.msra.mxu0 0
        %1246 = vmatprep.subr.bf16.mxu0 0
        %1247 = vmatpush1.bf16.msra.mxu0 0
        %1248 = vmatprep.subr.bf16.mxu0 0
        %1249 = vmatpush1.bf16.msra.mxu0 0
        %1250 = vmatprep.subr.bf16.mxu0 0
        %1251 = vmatpush1.bf16.msra.mxu0 0
        %1252 = vmatprep.subr.bf16.mxu0 0
        %1253 = vmatpush1.bf16.msra.mxu0 0
        %1254 = vmatprep.subr.bf16.mxu0 0
        %1255 = vmatpush1.bf16.msra.mxu0 0
        %1256 = vmatprep.subr.bf16.mxu0 0
        %1257 = vmatpush1.bf16.msra.mxu0 0
        %1258 = vmatprep.subr.bf16.mxu0 0
        %1259 = vmatpush1.bf16.msra.mxu0 0
        %1260 = vmatprep.subr.bf16.mxu0 0
        %1261 = vmatpush1.bf16.msra.mxu0 0
        %1262 = vmatprep.subr.bf16.mxu0 0
        %1263 = vmatpush1.bf16.msra.mxu0 0
        %1264 = vmatprep.mubr.bf16.mxu0 0
        %1265 = vmatmul.mubr.bf16.gmra.mrb[0].mxu0 %v1230
        %v1266 = vpop.f32.mrb[0].mxu0
        %v1267 = vadd.f32 %v1215, %v1266
        %v1268 = vpop.f32.mrb[0].mxu0
        %v1269 = vpop.f32.mrb[0].mxu0
        %v1270 = vpop.f32.mrb[0].mxu0
        %1271 = vdwg.mxu0
        %v1272 = vmul.f32 %v1267, %v1267
        %v1273 = vmul.f32 %v1267, %v1272
        %v1274 = vmul.f32 %v1273, 0.044715
        %v1275 = vadd.f32 %v1267, %v1274
        %v1276 = vmul.f32 %v1275, 0.7978846
        %v1277 = vtanh.pop %v1276
        %v1278 = vadd.f32 %v1277, 1.0
        %v1279 = vmul.f32 %v1278, 0.5
        %v1280 = vmul.f32 %v1267, %v1279
        %v1281 = vpack.c.bf16 %v1280, %v1280
        %v1282 = vld [vmem:[%s12] sm:$0xf]
        %v1283 = vld [vmem:[%s12 + $0x4] sm:$0xf]
        %v1284 = vld [vmem:[%s12 + $0x8] sm:$0xf]
        %v1285 = vld [vmem:[%s12 + $0xc] sm:$0xf]
        %v1286 = vld [vmem:[%s12 + $0x10] sm:$0xf]
        %v1287 = vld [vmem:[%s12 + $0x14] sm:$0xf]
        %v1288 = vld [vmem:[%s12 + $0x18] sm:$0xf]
        %v1289 = vld [vmem:[%s12 + $0x1c] sm:$0xf]
        %v1290 = vld [vmem:[%s13] sm:$0x1]
        %v1292 = vlaneseq
        %v1293 = vshrl.u32 %v1292, 7
        %v1294 = vsub.s32 0, %v1293
        %v1295 = vrot.slane %v1290, %v1294
        %v1305 = vunpack.c.l.b16 %v1282
        %v1306 = vunpack.c.l.b16 %v1283
        %v1307 = vunpack.c.l.b16 %v1284
        %v1308 = vunpack.c.l.b16 %v1285
        %v1309 = vunpack.c.l.b16 %v1286
        %v1310 = vunpack.c.l.b16 %v1287
        %v1311 = vunpack.c.l.b16 %v1288
        %v1312 = vunpack.c.l.b16 %v1289
        %v1313 = vpack.c.b16 %v1306, %v1305
        %v1314 = vpack.c.b16 %v1308, %v1307
        %v1315 = vpack.c.b16 %v1310, %v1309
        %v1316 = vpack.c.b16 %v1312, %v1311
        %vm1321 = vcmask 523264
        %v1323 = vsel %vm1321, %v1281, 0
        %1325 = vmatprep.subr.bf16.mxu0 0
        %1326 = vmatpush1.bf16.msra.mxu0 %v1313
        %1327 = vmatprep.subr.bf16.mxu0 0
        %1328 = vmatpush1.bf16.msra.mxu0 %v1314
        %1329 = vmatprep.subr.bf16.mxu0 0
        %1330 = vmatpush1.bf16.msra.mxu0 %v1315
        %1331 = vmatprep.subr.bf16.mxu0 0
        %1332 = vmatpush1.bf16.msra.mxu0 %v1316
        %1333 = vmatprep.subr.bf16.mxu0 0
        %1334 = vmatpush1.bf16.msra.mxu0 0
        %1335 = vmatprep.subr.bf16.mxu0 0
        %1336 = vmatpush1.bf16.msra.mxu0 0
        %1337 = vmatprep.subr.bf16.mxu0 0
        %1338 = vmatpush1.bf16.msra.mxu0 0
        %1339 = vmatprep.subr.bf16.mxu0 0
        %1340 = vmatpush1.bf16.msra.mxu0 0
        %1341 = vmatprep.subr.bf16.mxu0 0
        %1342 = vmatpush1.bf16.msra.mxu0 0
        %1343 = vmatprep.subr.bf16.mxu0 0
        %1344 = vmatpush1.bf16.msra.mxu0 0
        %1345 = vmatprep.subr.bf16.mxu0 0
        %1346 = vmatpush1.bf16.msra.mxu0 0
        %1347 = vmatprep.subr.bf16.mxu0 0
        %1348 = vmatpush1.bf16.msra.mxu0 0
        %1349 = vmatprep.subr.bf16.mxu0 0
        %1350 = vmatpush1.bf16.msra.mxu0 0
        %1351 = vmatprep.subr.bf16.mxu0 0
        %1352 = vmatpush1.bf16.msra.mxu0 0
        %1353 = vmatprep.subr.bf16.mxu0 0
        %1354 = vmatpush1.bf16.msra.mxu0 0
        %1355 = vmatprep.subr.bf16.mxu0 0
        %1356 = vmatpush1.bf16.msra.mxu0 0
        %1357 = vmatprep.mubr.bf16.mxu0 0
        %1358 = vmatmul.mubr.bf16.gmra.mrb[0].mxu0 %v1323
        %v1359 = vpop.f32.mrb[0].mxu0
        %v1360 = vadd.f32 %v1295, %v1359
        %v1361 = vpop.f32.mrb[0].mxu0
        %v1362 = vpop.f32.mrb[0].mxu0
        %v1363 = vpop.f32.mrb[0].mxu0
        %1364 = vdwg.mxu0
        %v1365 = vadd.f32 %v1204, %v1360
        %v1366 = vsel %vm533, %v1365, 0.0
        %1367 = vadd.xlane.f32.xlu0 %v1366
        %v1368 = vpop.xlane.xlu0 %1367
        %v1369 = vmul.f32 %v1368, %v537
        %v1370 = vsub.f32 %v1365, %v1369
        %v1371 = vmul.f32 %v1370, %v1370
        %v1372 = vsel %vm533, %v1371, 0.0
        %1373 = vadd.xlane.f32.xlu0 %v1372
        %v1374 = vpop.xlane.xlu0 %1373
        %v1375 = vmul.f32 %v1374, %v537
        %v1376 = vadd.f32 %v1375, 1e-12
        %v1377 = vrsqrt.pop %v1376
        %v1378 = vmul.f32 %v1370, %v1377
        %v1379 = vld [vmem:[%s14] sm:$0x1]
        %v1381 = vlaneseq
        %v1382 = vshrl.u32 %v1381, 7
        %v1383 = vsub.s32 0, %v1382
        %v1384 = vrot.slane %v1379, %v1383
        %v1386 = vmul.f32 %v1378, %v1384
        %v1387 = vld [vmem:[%s15] sm:$0x1]
        %v1389 = vlaneseq
        %v1390 = vshrl.u32 %v1389, 7
        %v1391 = vsub.s32 0, %v1390
        %v1392 = vrot.slane %v1387, %v1391
        %v1394 = vadd.f32 %v1386, %v1392
        %v1395 = vsel %vm533, %v1394, 0.0
        %v1396 = vrot.slane %v1395, 4
        %v1397 = vadd.f32 %v1395, %v1396
        %v1398 = vrot.slane %v1397, 2
        %v1399 = vadd.f32 %v1397, %v1398
        %v1400 = vrot.slane %v1399, 1
        %v1401 = vadd.f32 %v1399, %v1400
        %v1402 = vrcp.pop 8.0
        %v1403 = vmul.f32 %v1401, %v1402
        %vm1404 = vcmask 253952
        %1405 = vst.msk [vmem:[%s522] sm:$0x1] %vm1404, %v1403
        %s1406 = sand.u32 %s384, 1
        %s1407 = scalar_lea.sflag [#allocation4], %s1406
        %s1408 = sand.u32 %s384, 1
        %s1409 = scalar_lea.vmem [#allocation3], %s1408
        // Predicated region
        $region85: #{bert_model_forward.2} parent=83 // pred_check
          %p1410 = pneg %p394
        $region86: #{bert_model_forward.2} parent=83 // pred_check_branch
          %1412 = sbr.rel (%p1410) target = $region88
        $region87: #{bert_model_forward.2} parent=83 // pred_region
          %s1414 = ssub.s32 16, 16
          %1415 = vsyncadd %s1407, %s1414
          %s1416 = smul.addr %s30, 16
          %s1417 = scalar_lea.hbm %s16, %s1416
          %s1419 = sshll.u32 %s1409, 4
          %s1420 = int_to_ptr.vmem [resolvable:$true] %s1419
          %1422 = dma.vmem_to_hbm [thread:$0]  %s1420, 16, %s1417, %s1407
        $region88: #{bert_model_forward.2} parent=83 // pred_fallthru
          _
      $region84: #{bert_model_forward.2} parent=5 // pred_fallthru
        _
      %p1423 = scmp.le.s32.totalorder 2, %s25
      // Predicated region
      $region89: #{bert_model_forward.2} parent=5 // pred_check
        %p1424 = pneg %p1423
      $region90: #{bert_model_forward.2} parent=5 // pred_check_branch
        %1426 = sbr.rel (%p1424) target = $region92
      $region91: #{bert_model_forward.2} parent=5 // pred_region
        %s1427 = ssub.s32 %s25, 2
        // Predicated region
        $region93: #{bert_model_forward.2} parent=91 // pred_check
          %p1428 = pneg %p400
        $region94: #{bert_model_forward.2} parent=91 // pred_check_branch
          %1430 = sbr.rel (%p1428) target = $region96
        $region95: #{bert_model_forward.2} parent=91 // pred_region
          %s1431 = sand.u32 %s385, 1
          %s1432 = scalar_lea.sflag [#allocation4], %s1431
          %s1433 = sand.u32 %s385, 1
          %s1434 = scalar_lea.vmem [#allocation3], %s1433
          %1435 = dma.done %s1432, 16
        $region96: #{bert_model_forward.2} parent=91 // pred_fallthru
          _
      $region92: #{bert_model_forward.2} parent=5 // pred_fallthru
        _
    $region6: #{bert_model_forward.2} parent=1 // loop_footer
      %s29 = sadd.s32 1, %s25
    $region7: #{bert_model_forward.2} parent=1 // loop_footer_branch
      %24 = sbr.rel target = $region3
    $region8: #{bert_model_forward.2} parent=1 // loop_exit
      _
    %1436 = vsyncpa [#allocation4], 1
    %s1437 = scalar_lea.sflag [#allocation4], 1
    %1438 = vsyncpa %s1437, 1

// kernel: bert_model_forward.3
$region0: #{bert_model_forward.3}
  #allocation0 [shape = 'u32[]', space=smem, size = 0x4, offset = 0x4, fixed_abs, tag = 'smem constant byte address 0x4 - core index']
  #allocation1 [shape = 'u32[144,128]{1,0:T(1,128)}', space=vmem, size = 0x12000, scoped, tag = 'internal scratch']
  #allocation2 [shape = 'f32[64,32]{1,0:T(8,128)}', space=vmem, size = 0x8000, scoped, tag = 'scratch operand']
  %s0 = inlined_call_operand.vmem [shape: bf16[8,8,32], index: 0, kind: input, shape index: {}]
  %s1 = inlined_call_operand.vmem [shape: bf16[32,96], index: 1, kind: input, shape index: {}]
  %s2 = inlined_call_operand.vmem [shape: f32[1,96], index: 2, kind: input, shape index: {}]
  %s3 = inlined_call_operand.vmem [shape: bf16[32,32], index: 3, kind: input, shape index: {}]
  %s4 = inlined_call_operand.vmem [shape: f32[1,32], index: 4, kind: input, shape index: {}]
  %s5 = inlined_call_operand.vmem [shape: bf16[32,16], index: 5, kind: input, shape index: {}]
  %s6 = inlined_call_operand.vmem [shape: f32[1,16], index: 6, kind: input, shape index: {}]
  %s7 = inlined_call_operand.vmem [shape: f32[1,16], index: 7, kind: input, shape index: {}]
  %s8 = inlined_call_operand.hbm [shape: f32[8,32], index: 8, kind: output, shape index: {}]
  %s9 = sld [smem:[#allocation0]]
  $region42: #{bert_model_forward.3} parent=0
    _
  %s11 = ssub.s32 1, %s9
  %s12 = scalar_select 0, %s11, %s9
  $region1: #{bert_model_forward.3} parent=0
    #allocation3 [shape = 'u8[4096]{0}', space=vmem, size = 0x1000, scoped, tag = 'output window, operand 0, single buffered']
    #allocation4 [shape = 's32[1]{0}', space=sflag, size = 0x4, scoped, tag = 'scoped memory for bert_model_forward.3']
    %13 = vsyncpa [#allocation4], 0
    // Predicated region
    $region2: #{bert_model_forward.3} parent=1 // pred_check
      _
    $region3: #{bert_model_forward.3} parent=1 // pred_check_branch
      %15 = sbr.rel (0) target = $region5
    $region4: #{bert_model_forward.3} parent=1 // pred_region
      _
    $region5: #{bert_model_forward.3} parent=1 // pred_fallthru
      _
    // Predicated region
    $region6: #{bert_model_forward.3} parent=1 // pred_check
      _
    $region7: #{bert_model_forward.3} parent=1 // pred_check_branch
      %17 = sbr.rel (0) target = $region9
    $region8: #{bert_model_forward.3} parent=1 // pred_region
      _
    $region9: #{bert_model_forward.3} parent=1 // pred_fallthru
      _
    // Predicated region
    $region10: #{bert_model_forward.3} parent=1 // pred_check
      _
    $region11: #{bert_model_forward.3} parent=1 // pred_check_branch
      %19 = sbr.rel (0) target = $region13
    $region12: #{bert_model_forward.3} parent=1 // pred_region
      _
    $region13: #{bert_model_forward.3} parent=1 // pred_fallthru
      _
    // Predicated region
    $region14: #{bert_model_forward.3} parent=1 // pred_check
      _
    $region15: #{bert_model_forward.3} parent=1 // pred_check_branch
      %21 = sbr.rel (0) target = $region17
    $region16: #{bert_model_forward.3} parent=1 // pred_region
      _
    $region17: #{bert_model_forward.3} parent=1 // pred_fallthru
      _
    // Predicated region
    $region18: #{bert_model_forward.3} parent=1 // pred_check
      _
    $region19: #{bert_model_forward.3} parent=1 // pred_check_branch
      %23 = sbr.rel (0) target = $region21
    $region20: #{bert_model_forward.3} parent=1 // pred_region
      _
    $region21: #{bert_model_forward.3} parent=1 // pred_fallthru
      _
    // Predicated region
    $region22: #{bert_model_forward.3} parent=1 // pred_check
      _
    $region23: #{bert_model_forward.3} parent=1 // pred_check_branch
      %25 = sbr.rel (0) target = $region25
    $region24: #{bert_model_forward.3} parent=1 // pred_region
      _
    $region25: #{bert_model_forward.3} parent=1 // pred_fallthru
      _
    // Predicated region
    $region26: #{bert_model_forward.3} parent=1 // pred_check
      _
    $region27: #{bert_model_forward.3} parent=1 // pred_check_branch
      %27 = sbr.rel (0) target = $region29
    $region28: #{bert_model_forward.3} parent=1 // pred_region
      _
    $region29: #{bert_model_forward.3} parent=1 // pred_fallthru
      _
    // Predicated region
    $region30: #{bert_model_forward.3} parent=1 // pred_check
      _
    $region31: #{bert_model_forward.3} parent=1 // pred_check_branch
      %29 = sbr.rel (0) target = $region33
    $region32: #{bert_model_forward.3} parent=1 // pred_region
      _
    $region33: #{bert_model_forward.3} parent=1 // pred_fallthru
      _
    %v31 = vld [vmem:[%s0] sm:$0xf]
    %v32 = vld [vmem:[%s0 + $0x4] sm:$0xf]
    %v33 = vld [vmem:[%s0 + $0x8] sm:$0xf]
    %v34 = vld [vmem:[%s0 + $0xc] sm:$0xf]
    %v35 = vld [vmem:[%s0 + $0x10] sm:$0xf]
    %v36 = vld [vmem:[%s0 + $0x14] sm:$0xf]
    %v37 = vld [vmem:[%s0 + $0x18] sm:$0xf]
    %v38 = vld [vmem:[%s0 + $0x1c] sm:$0xf]
    %v39 = vld [vmem:[%s1] sm:$0xf]
    %v40 = vld [vmem:[%s1 + $0x4] sm:$0xf]
    %v41 = vld [vmem:[%s1 + $0x8] sm:$0xf]
    %v42 = vld [vmem:[%s1 + $0xc] sm:$0xf]
    %v43 = vld [vmem:[%s2] sm:$0x1]
    %v45 = vlaneseq
    %v46 = vshrl.u32 %v45, 7
    %v47 = vsub.s32 0, %v46
    %v48 = vrot.slane %v43, %v47
    %v58 = vunpack.c.l.b16 %v31
    %v59 = vunpack.c.l.b16 %v32
    %v60 = vunpack.c.l.b16 %v33
    %v61 = vunpack.c.l.b16 %v34
    %v62 = vunpack.c.l.b16 %v35
    %v63 = vunpack.c.l.b16 %v36
    %v64 = vunpack.c.l.b16 %v37
    %v65 = vunpack.c.l.b16 %v38
    %v66 = vpack.c.b16 %v59, %v58
    %v67 = vpack.c.b16 %v61, %v60
    %v68 = vpack.c.b16 %v63, %v62
    %v69 = vpack.c.b16 %v65, %v64
    %v74 = vunpack.c.l.b16 %v39
    %v75 = vunpack.c.l.b16 %v40
    %v76 = vunpack.c.l.b16 %v41
    %v77 = vunpack.c.l.b16 %v42
    %v78 = vpack.c.b16 %v75, %v74
    %v79 = vpack.c.b16 %v77, %v76
    %vm82 = vcmask 261120
    %v84 = vsel %vm82, %v66, 0
    %v87 = vsel %vm82, %v67, 0
    %v90 = vsel %vm82, %v68, 0
    %v93 = vsel %vm82, %v69, 0
    %95 = vmatprep.subr.bf16.mxu0 0
    %96 = vmatpush1.bf16.msra.mxu0 %v78
    %97 = vmatprep.subr.bf16.mxu0 0
    %98 = vmatpush1.bf16.msra.mxu0 %v79
    %99 = vmatprep.subr.bf16.mxu0 0
    %100 = vmatpush1.bf16.msra.mxu0 0
    %101 = vmatprep.subr.bf16.mxu0 0
    %102 = vmatpush1.bf16.msra.mxu0 0
    %103 = vmatprep.subr.bf16.mxu0 0
    %104 = vmatpush1.bf16.msra.mxu0 0
    %105 = vmatprep.subr.bf16.mxu0 0
    %106 = vmatpush1.bf16.msra.mxu0 0
    %107 = vmatprep.subr.bf16.mxu0 0
    %108 = vmatpush1.bf16.msra.mxu0 0
    %109 = vmatprep.subr.bf16.mxu0 0
    %110 = vmatpush1.bf16.msra.mxu0 0
    %111 = vmatprep.subr.bf16.mxu0 0
    %112 = vmatpush1.bf16.msra.mxu0 0
    %113 = vmatprep.subr.bf16.mxu0 0
    %114 = vmatpush1.bf16.msra.mxu0 0
    %115 = vmatprep.subr.bf16.mxu0 0
    %116 = vmatpush1.bf16.msra.mxu0 0
    %117 = vmatprep.subr.bf16.mxu0 0
    %118 = vmatpush1.bf16.msra.mxu0 0
    %119 = vmatprep.subr.bf16.mxu0 0
    %120 = vmatpush1.bf16.msra.mxu0 0
    %121 = vmatprep.subr.bf16.mxu0 0
    %122 = vmatpush1.bf16.msra.mxu0 0
    %123 = vmatprep.subr.bf16.mxu0 0
    %124 = vmatpush1.bf16.msra.mxu0 0
    %125 = vmatprep.subr.bf16.mxu0 0
    %126 = vmatpush1.bf16.msra.mxu0 0
    %127 = vmatprep.mubr.bf16.mxu0 0
    %128 = vmatmul.mubr.bf16.gmra.mrb[0].mxu0 %v84
    %v129 = vpop.f32.mrb[0].mxu0
    %v130 = vadd.f32 %v48, %v129
    %v131 = vpop.f32.mrb[0].mxu0
    %v132 = vpop.f32.mrb[0].mxu0
    %v133 = vadd.f32 %v48, %v132
    %v134 = vpop.f32.mrb[0].mxu0
    %135 = vmatprep.mubr.bf16.mxu0 0
    %136 = vmatmul.mubr.bf16.gmra.mrb[0].mxu0 %v87
    %v137 = vpop.f32.mrb[0].mxu0
    %v138 = vadd.f32 %v48, %v137
    %v139 = vpop.f32.mrb[0].mxu0
    %v140 = vpop.f32.mrb[0].mxu0
    %v141 = vadd.f32 %v48, %v140
    %v142 = vpop.f32.mrb[0].mxu0
    %143 = vmatprep.mubr.bf16.mxu0 0
    %144 = vmatmul.mubr.bf16.gmra.mrb[0].mxu0 %v90
    %v145 = vpop.f32.mrb[0].mxu0
    %v146 = vadd.f32 %v48, %v145
    %v147 = vpop.f32.mrb[0].mxu0
    %v148 = vpop.f32.mrb[0].mxu0
    %v149 = vadd.f32 %v48, %v148
    %v150 = vpop.f32.mrb[0].mxu0
    %151 = vmatprep.mubr.bf16.mxu0 0
    %152 = vmatmul.mubr.bf16.gmra.mrb[0].mxu0 %v93
    %v153 = vpop.f32.mrb[0].mxu0
    %v154 = vadd.f32 %v48, %v153
    %v155 = vpop.f32.mrb[0].mxu0
    %v156 = vpop.f32.mrb[0].mxu0
    %v157 = vadd.f32 %v48, %v156
    %v158 = vpop.f32.mrb[0].mxu0
    %159 = vdwg.mxu0
    %v160 = vpack.c.bf16 %v133, %v130
    %v161 = vpack.c.bf16 %v141, %v138
    %v162 = vpack.c.bf16 %v149, %v146
    %v163 = vpack.c.bf16 %v157, %v154
    %v168 = vunpack.c.l.b16 %v160
    %v169 = vunpack.c.h.b16 %v160
    %v170 = vunpack.c.l.b16 %v161
    %v171 = vunpack.c.h.b16 %v161
    %v172 = vunpack.c.l.b16 %v162
    %v173 = vunpack.c.h.b16 %v162
    %v174 = vunpack.c.l.b16 %v163
    %v175 = vunpack.c.h.b16 %v163
    %v176 = vpack.c.b16 %v168, %v168
    %v177 = vpack.c.b16 %v169, %v169
    %v178 = vpack.c.b16 %v170, %v170
    %v179 = vpack.c.b16 %v171, %v171
    %v180 = vpack.c.b16 %v172, %v172
    %v181 = vpack.c.b16 %v173, %v173
    %v182 = vpack.c.b16 %v174, %v174
    %v183 = vpack.c.b16 %v175, %v175
    %184 = vrot.lane.b32.xlu0 %v176, 96
    %v185 = vpop.permute.xlu0 %184
    %vm186 = vcmask 64512
    %v188 = vsel %vm186, %v176, 0
    %v191 = vsel %vm186, %v185, 0
    %193 = vmatprep.subr.bf16.mxu0 0
    %194 = vmatpush1.bf16.xpose.msra.mxu0 %v191
    %195 = vmatprep.subr.bf16.mxu0 0
    %196 = vmatpush1.bf16.xpose.msra.mxu0 0
    %197 = vmatprep.subr.bf16.mxu0 0
    %198 = vmatpush1.bf16.xpose.msra.mxu0 0
    %199 = vmatprep.subr.bf16.mxu0 0
    %200 = vmatpush1.bf16.xpose.msra.mxu0 0
    %201 = vmatprep.subr.bf16.mxu0 0
    %202 = vmatpush1.bf16.xpose.msra.mxu0 0
    %203 = vmatprep.subr.bf16.mxu0 0
    %204 = vmatpush1.bf16.xpose.msra.mxu0 0
    %205 = vmatprep.subr.bf16.mxu0 0
    %206 = vmatpush1.bf16.xpose.msra.mxu0 0
    %207 = vmatprep.subr.bf16.mxu0 0
    %208 = vmatpush1.bf16.xpose.msra.mxu0 0
    %209 = vmatprep.subr.bf16.mxu0 0
    %210 = vmatpush1.bf16.xpose.msra.mxu0 0
    %211 = vmatprep.subr.bf16.mxu0 0
    %212 = vmatpush1.bf16.xpose.msra.mxu0 0
    %213 = vmatprep.subr.bf16.mxu0 0
    %214 = vmatpush1.bf16.xpose.msra.mxu0 0
    %215 = vmatprep.subr.bf16.mxu0 0
    %216 = vmatpush1.bf16.xpose.msra.mxu0 0
    %217 = vmatprep.subr.bf16.mxu0 0
    %218 = vmatpush1.bf16.xpose.msra.mxu0 0
    %219 = vmatprep.subr.bf16.mxu0 0
    %220 = vmatpush1.bf16.xpose.msra.mxu0 0
    %221 = vmatprep.subr.bf16.mxu0 0
    %222 = vmatpush1.bf16.xpose.msra.mxu0 0
    %223 = vmatprep.subr.bf16.mxu0 0
    %224 = vmatpush1.bf16.xpose.msra.mxu0 0
    %225 = vmatprep.mubr.bf16.mxu0 0
    %226 = vmatmul.mubr.bf16.gmra.mrb[0].mxu0 %v188
    %v227 = vpop.f32.mrb[0].mxu0
    %v228 = vadd.f32 0.0, %v227
    %v229 = vpop.f32.mrb[0].mxu0
    %v230 = vpop.f32.mrb[0].mxu0
    %v231 = vpop.f32.mrb[0].mxu0
    %232 = vdwg.mxu0
    %233 = vrot.lane.b32.xlu0 %v177, 96
    %v234 = vpop.permute.xlu0 %233
    %v236 = vsel %vm186, %v177, 0
    %v239 = vsel %vm186, %v234, 0
    %241 = vmatprep.subr.bf16.mxu0 0
    %242 = vmatpush1.bf16.xpose.msra.mxu0 %v239
    %243 = vmatprep.subr.bf16.mxu0 0
    %244 = vmatpush1.bf16.xpose.msra.mxu0 0
    %245 = vmatprep.subr.bf16.mxu0 0
    %246 = vmatpush1.bf16.xpose.msra.mxu0 0
    %247 = vmatprep.subr.bf16.mxu0 0
    %248 = vmatpush1.bf16.xpose.msra.mxu0 0
    %249 = vmatprep.subr.bf16.mxu0 0
    %250 = vmatpush1.bf16.xpose.msra.mxu0 0
    %251 = vmatprep.subr.bf16.mxu0 0
    %252 = vmatpush1.bf16.xpose.msra.mxu0 0
    %253 = vmatprep.subr.bf16.mxu0 0
    %254 = vmatpush1.bf16.xpose.msra.mxu0 0
    %255 = vmatprep.subr.bf16.mxu0 0
    %256 = vmatpush1.bf16.xpose.msra.mxu0 0
    %257 = vmatprep.subr.bf16.mxu0 0
    %258 = vmatpush1.bf16.xpose.msra.mxu0 0
    %259 = vmatprep.subr.bf16.mxu0 0
    %260 = vmatpush1.bf16.xpose.msra.mxu0 0
    %261 = vmatprep.subr.bf16.mxu0 0
    %262 = vmatpush1.bf16.xpose.msra.mxu0 0
    %263 = vmatprep.subr.bf16.mxu0 0
    %264 = vmatpush1.bf16.xpose.msra.mxu0 0
    %265 = vmatprep.subr.bf16.mxu0 0
    %266 = vmatpush1.bf16.xpose.msra.mxu0 0
    %267 = vmatprep.subr.bf16.mxu0 0
    %268 = vmatpush1.bf16.xpose.msra.mxu0 0
    %269 = vmatprep.subr.bf16.mxu0 0
    %270 = vmatpush1.bf16.xpose.msra.mxu0 0
    %271 = vmatprep.subr.bf16.mxu0 0
    %272 = vmatpush1.bf16.xpose.msra.mxu0 0
    %273 = vmatprep.mubr.bf16.mxu0 0
    %274 = vmatmul.mubr.bf16.gmra.mrb[0].mxu0 %v236
    %v275 = vpop.f32.mrb[0].mxu0
    %v276 = vadd.f32 0.0, %v275
    %v277 = vpop.f32.mrb[0].mxu0
    %v278 = vpop.f32.mrb[0].mxu0
    %v279 = vpop.f32.mrb[0].mxu0
    %280 = vdwg.mxu0
    %281 = vrot.lane.b32.xlu0 %v178, 96
    %v282 = vpop.permute.xlu0 %281
    %v284 = vsel %vm186, %v178, 0
    %v287 = vsel %vm186, %v282, 0
    %289 = vmatprep.subr.bf16.mxu0 0
    %290 = vmatpush1.bf16.xpose.msra.mxu0 %v287
    %291 = vmatprep.subr.bf16.mxu0 0
    %292 = vmatpush1.bf16.xpose.msra.mxu0 0
    %293 = vmatprep.subr.bf16.mxu0 0
    %294 = vmatpush1.bf16.xpose.msra.mxu0 0
    %295 = vmatprep.subr.bf16.mxu0 0
    %296 = vmatpush1.bf16.xpose.msra.mxu0 0
    %297 = vmatprep.subr.bf16.mxu0 0
    %298 = vmatpush1.bf16.xpose.msra.mxu0 0
    %299 = vmatprep.subr.bf16.mxu0 0
    %300 = vmatpush1.bf16.xpose.msra.mxu0 0
    %301 = vmatprep.subr.bf16.mxu0 0
    %302 = vmatpush1.bf16.xpose.msra.mxu0 0
    %303 = vmatprep.subr.bf16.mxu0 0
    %304 = vmatpush1.bf16.xpose.msra.mxu0 0
    %305 = vmatprep.subr.bf16.mxu0 0
    %306 = vmatpush1.bf16.xpose.msra.mxu0 0
    %307 = vmatprep.subr.bf16.mxu0 0
    %308 = vmatpush1.bf16.xpose.msra.mxu0 0
    %309 = vmatprep.subr.bf16.mxu0 0
    %310 = vmatpush1.bf16.xpose.msra.mxu0 0
    %311 = vmatprep.subr.bf16.mxu0 0
    %312 = vmatpush1.bf16.xpose.msra.mxu0 0
    %313 = vmatprep.subr.bf16.mxu0 0
    %314 = vmatpush1.bf16.xpose.msra.mxu0 0
    %315 = vmatprep.subr.bf16.mxu0 0
    %316 = vmatpush1.bf16.xpose.msra.mxu0 0
    %317 = vmatprep.subr.bf16.mxu0 0
    %318 = vmatpush1.bf16.xpose.msra.mxu0 0
    %319 = vmatprep.subr.bf16.mxu0 0
    %320 = vmatpush1.bf16.xpose.msra.mxu0 0
    %321 = vmatprep.mubr.bf16.mxu0 0
    %322 = vmatmul.mubr.bf16.gmra.mrb[0].mxu0 %v284
    %v323 = vpop.f32.mrb[0].mxu0
    %v324 = vadd.f32 0.0, %v323
    %v325 = vpop.f32.mrb[0].mxu0
    %v326 = vpop.f32.mrb[0].mxu0
    %v327 = vpop.f32.mrb[0].mxu0
    %328 = vdwg.mxu0
    %329 = vrot.lane.b32.xlu0 %v179, 96
    %v330 = vpop.permute.xlu0 %329
    %v332 = vsel %vm186, %v179, 0
    %v335 = vsel %vm186, %v330, 0
    %337 = vmatprep.subr.bf16.mxu0 0
    %338 = vmatpush1.bf16.xpose.msra.mxu0 %v335
    %339 = vmatprep.subr.bf16.mxu0 0
    %340 = vmatpush1.bf16.xpose.msra.mxu0 0
    %341 = vmatprep.subr.bf16.mxu0 0
    %342 = vmatpush1.bf16.xpose.msra.mxu0 0
    %343 = vmatprep.subr.bf16.mxu0 0
    %344 = vmatpush1.bf16.xpose.msra.mxu0 0
    %345 = vmatprep.subr.bf16.mxu0 0
    %346 = vmatpush1.bf16.xpose.msra.mxu0 0
    %347 = vmatprep.subr.bf16.mxu0 0
    %348 = vmatpush1.bf16.xpose.msra.mxu0 0
    %349 = vmatprep.subr.bf16.mxu0 0
    %350 = vmatpush1.bf16.xpose.msra.mxu0 0
    %351 = vmatprep.subr.bf16.mxu0 0
    %352 = vmatpush1.bf16.xpose.msra.mxu0 0
    %353 = vmatprep.subr.bf16.mxu0 0
    %354 = vmatpush1.bf16.xpose.msra.mxu0 0
    %355 = vmatprep.subr.bf16.mxu0 0
    %356 = vmatpush1.bf16.xpose.msra.mxu0 0
    %357 = vmatprep.subr.bf16.mxu0 0
    %358 = vmatpush1.bf16.xpose.msra.mxu0 0
    %359 = vmatprep.subr.bf16.mxu0 0
    %360 = vmatpush1.bf16.xpose.msra.mxu0 0
    %361 = vmatprep.subr.bf16.mxu0 0
    %362 = vmatpush1.bf16.xpose.msra.mxu0 0
    %363 = vmatprep.subr.bf16.mxu0 0
    %364 = vmatpush1.bf16.xpose.msra.mxu0 0
    %365 = vmatprep.subr.bf16.mxu0 0
    %366 = vmatpush1.bf16.xpose.msra.mxu0 0
    %367 = vmatprep.subr.bf16.mxu0 0
    %368 = vmatpush1.bf16.xpose.msra.mxu0 0
    %369 = vmatprep.mubr.bf16.mxu0 0
    %370 = vmatmul.mubr.bf16.gmra.mrb[0].mxu0 %v332
    %v371 = vpop.f32.mrb[0].mxu0
    %v372 = vadd.f32 0.0, %v371
    %v373 = vpop.f32.mrb[0].mxu0
    %v374 = vpop.f32.mrb[0].mxu0
    %v375 = vpop.f32.mrb[0].mxu0
    %376 = vdwg.mxu0
    %377 = vrot.lane.b32.xlu0 %v180, 96
    %v378 = vpop.permute.xlu0 %377
    %v380 = vsel %vm186, %v180, 0
    %v383 = vsel %vm186, %v378, 0
    %385 = vmatprep.subr.bf16.mxu0 0
    %386 = vmatpush1.bf16.xpose.msra.mxu0 %v383
    %387 = vmatprep.subr.bf16.mxu0 0
    %388 = vmatpush1.bf16.xpose.msra.mxu0 0
    %389 = vmatprep.subr.bf16.mxu0 0
    %390 = vmatpush1.bf16.xpose.msra.mxu0 0
    %391 = vmatprep.subr.bf16.mxu0 0
    %392 = vmatpush1.bf16.xpose.msra.mxu0 0
    %393 = vmatprep.subr.bf16.mxu0 0
    %394 = vmatpush1.bf16.xpose.msra.mxu0 0
    %395 = vmatprep.subr.bf16.mxu0 0
    %396 = vmatpush1.bf16.xpose.msra.mxu0 0
    %397 = vmatprep.subr.bf16.mxu0 0
    %398 = vmatpush1.bf16.xpose.msra.mxu0 0
    %399 = vmatprep.subr.bf16.mxu0 0
    %400 = vmatpush1.bf16.xpose.msra.mxu0 0
    %401 = vmatprep.subr.bf16.mxu0 0
    %402 = vmatpush1.bf16.xpose.msra.mxu0 0
    %403 = vmatprep.subr.bf16.mxu0 0
    %404 = vmatpush1.bf16.xpose.msra.mxu0 0
    %405 = vmatprep.subr.bf16.mxu0 0
    %406 = vmatpush1.bf16.xpose.msra.mxu0 0
    %407 = vmatprep.subr.bf16.mxu0 0
    %408 = vmatpush1.bf16.xpose.msra.mxu0 0
    %409 = vmatprep.subr.bf16.mxu0 0
    %410 = vmatpush1.bf16.xpose.msra.mxu0 0
    %411 = vmatprep.subr.bf16.mxu0 0
    %412 = vmatpush1.bf16.xpose.msra.mxu0 0
    %413 = vmatprep.subr.bf16.mxu0 0
    %414 = vmatpush1.bf16.xpose.msra.mxu0 0
    %415 = vmatprep.subr.bf16.mxu0 0
    %416 = vmatpush1.bf16.xpose.msra.mxu0 0
    %417 = vmatprep.mubr.bf16.mxu0 0
    %418 = vmatmul.mubr.bf16.gmra.mrb[0].mxu0 %v380
    %v419 = vpop.f32.mrb[0].mxu0
    %v420 = vadd.f32 0.0, %v419
    %v421 = vpop.f32.mrb[0].mxu0
    %v422 = vpop.f32.mrb[0].mxu0
    %v423 = vpop.f32.mrb[0].mxu0
    %424 = vdwg.mxu0
    %425 = vrot.lane.b32.xlu0 %v181, 96
    %v426 = vpop.permute.xlu0 %425
    %v428 = vsel %vm186, %v181, 0
    %v431 = vsel %vm186, %v426, 0
    %433 = vmatprep.subr.bf16.mxu0 0
    %434 = vmatpush1.bf16.xpose.msra.mxu0 %v431
    %435 = vmatprep.subr.bf16.mxu0 0
    %436 = vmatpush1.bf16.xpose.msra.mxu0 0
    %437 = vmatprep.subr.bf16.mxu0 0
    %438 = vmatpush1.bf16.xpose.msra.mxu0 0
    %439 = vmatprep.subr.bf16.mxu0 0
    %440 = vmatpush1.bf16.xpose.msra.mxu0 0
    %441 = vmatprep.subr.bf16.mxu0 0
    %442 = vmatpush1.bf16.xpose.msra.mxu0 0
    %443 = vmatprep.subr.bf16.mxu0 0
    %444 = vmatpush1.bf16.xpose.msra.mxu0 0
    %445 = vmatprep.subr.bf16.mxu0 0
    %446 = vmatpush1.bf16.xpose.msra.mxu0 0
    %447 = vmatprep.subr.bf16.mxu0 0
    %448 = vmatpush1.bf16.xpose.msra.mxu0 0
    %449 = vmatprep.subr.bf16.mxu0 0
    %450 = vmatpush1.bf16.xpose.msra.mxu0 0
    %451 = vmatprep.subr.bf16.mxu0 0
    %452 = vmatpush1.bf16.xpose.msra.mxu0 0
    %453 = vmatprep.subr.bf16.mxu0 0
    %454 = vmatpush1.bf16.xpose.msra.mxu0 0
    %455 = vmatprep.subr.bf16.mxu0 0
    %456 = vmatpush1.bf16.xpose.msra.mxu0 0
    %457 = vmatprep.subr.bf16.mxu0 0
    %458 = vmatpush1.bf16.xpose.msra.mxu0 0
    %459 = vmatprep.subr.bf16.mxu0 0
    %460 = vmatpush1.bf16.xpose.msra.mxu0 0
    %461 = vmatprep.subr.bf16.mxu0 0
    %462 = vmatpush1.bf16.xpose.msra.mxu0 0
    %463 = vmatprep.subr.bf16.mxu0 0
    %464 = vmatpush1.bf16.xpose.msra.mxu0 0
    %465 = vmatprep.mubr.bf16.mxu0 0
    %466 = vmatmul.mubr.bf16.gmra.mrb[0].mxu0 %v428
    %v467 = vpop.f32.mrb[0].mxu0
    %v468 = vadd.f32 0.0, %v467
    %v469 = vpop.f32.mrb[0].mxu0
    %v470 = vpop.f32.mrb[0].mxu0
    %v471 = vpop.f32.mrb[0].mxu0
    %472 = vdwg.mxu0
    %473 = vrot.lane.b32.xlu0 %v182, 96
    %v474 = vpop.permute.xlu0 %473
    %v476 = vsel %vm186, %v182, 0
    %v479 = vsel %vm186, %v474, 0
    %481 = vmatprep.subr.bf16.mxu0 0
    %482 = vmatpush1.bf16.xpose.msra.mxu0 %v479
    %483 = vmatprep.subr.bf16.mxu0 0
    %484 = vmatpush1.bf16.xpose.msra.mxu0 0
    %485 = vmatprep.subr.bf16.mxu0 0
    %486 = vmatpush1.bf16.xpose.msra.mxu0 0
    %487 = vmatprep.subr.bf16.mxu0 0
    %488 = vmatpush1.bf16.xpose.msra.mxu0 0
    %489 = vmatprep.subr.bf16.mxu0 0
    %490 = vmatpush1.bf16.xpose.msra.mxu0 0
    %491 = vmatprep.subr.bf16.mxu0 0
    %492 = vmatpush1.bf16.xpose.msra.mxu0 0
    %493 = vmatprep.subr.bf16.mxu0 0
    %494 = vmatpush1.bf16.xpose.msra.mxu0 0
    %495 = vmatprep.subr.bf16.mxu0 0
    %496 = vmatpush1.bf16.xpose.msra.mxu0 0
    %497 = vmatprep.subr.bf16.mxu0 0
    %498 = vmatpush1.bf16.xpose.msra.mxu0 0
    %499 = vmatprep.subr.bf16.mxu0 0
    %500 = vmatpush1.bf16.xpose.msra.mxu0 0
    %501 = vmatprep.subr.bf16.mxu0 0
    %502 = vmatpush1.bf16.xpose.msra.mxu0 0
    %503 = vmatprep.subr.bf16.mxu0 0
    %504 = vmatpush1.bf16.xpose.msra.mxu0 0
    %505 = vmatprep.subr.bf16.mxu0 0
    %506 = vmatpush1.bf16.xpose.msra.mxu0 0
    %507 = vmatprep.subr.bf16.mxu0 0
    %508 = vmatpush1.bf16.xpose.msra.mxu0 0
    %509 = vmatprep.subr.bf16.mxu0 0
    %510 = vmatpush1.bf16.xpose.msra.mxu0 0
    %511 = vmatprep.subr.bf16.mxu0 0
    %512 = vmatpush1.bf16.xpose.msra.mxu0 0
    %513 = vmatprep.mubr.bf16.mxu0 0
    %514 = vmatmul.mubr.bf16.gmra.mrb[0].mxu0 %v476
    %v515 = vpop.f32.mrb[0].mxu0
    %v516 = vadd.f32 0.0, %v515
    %v517 = vpop.f32.mrb[0].mxu0
    %v518 = vpop.f32.mrb[0].mxu0
    %v519 = vpop.f32.mrb[0].mxu0
    %520 = vdwg.mxu0
    %521 = vrot.lane.b32.xlu0 %v183, 96
    %v522 = vpop.permute.xlu0 %521
    %v524 = vsel %vm186, %v183, 0
    %v527 = vsel %vm186, %v522, 0
    %529 = vmatprep.subr.bf16.mxu0 0
    %530 = vmatpush1.bf16.xpose.msra.mxu0 %v527
    %531 = vmatprep.subr.bf16.mxu0 0
    %532 = vmatpush1.bf16.xpose.msra.mxu0 0
    %533 = vmatprep.subr.bf16.mxu0 0
    %534 = vmatpush1.bf16.xpose.msra.mxu0 0
    %535 = vmatprep.subr.bf16.mxu0 0
    %536 = vmatpush1.bf16.xpose.msra.mxu0 0
    %537 = vmatprep.subr.bf16.mxu0 0
    %538 = vmatpush1.bf16.xpose.msra.mxu0 0
    %539 = vmatprep.subr.bf16.mxu0 0
    %540 = vmatpush1.bf16.xpose.msra.mxu0 0
    %541 = vmatprep.subr.bf16.mxu0 0
    %542 = vmatpush1.bf16.xpose.msra.mxu0 0
    %543 = vmatprep.subr.bf16.mxu0 0
    %544 = vmatpush1.bf16.xpose.msra.mxu0 0
    %545 = vmatprep.subr.bf16.mxu0 0
    %546 = vmatpush1.bf16.xpose.msra.mxu0 0
    %547 = vmatprep.subr.bf16.mxu0 0
    %548 = vmatpush1.bf16.xpose.msra.mxu0 0
    %549 = vmatprep.subr.bf16.mxu0 0
    %550 = vmatpush1.bf16.xpose.msra.mxu0 0
    %551 = vmatprep.subr.bf16.mxu0 0
    %552 = vmatpush1.bf16.xpose.msra.mxu0 0
    %553 = vmatprep.subr.bf16.mxu0 0
    %554 = vmatpush1.bf16.xpose.msra.mxu0 0
    %555 = vmatprep.subr.bf16.mxu0 0
    %556 = vmatpush1.bf16.xpose.msra.mxu0 0
    %557 = vmatprep.subr.bf16.mxu0 0
    %558 = vmatpush1.bf16.xpose.msra.mxu0 0
    %559 = vmatprep.subr.bf16.mxu0 0
    %560 = vmatpush1.bf16.xpose.msra.mxu0 0
    %561 = vmatprep.mubr.bf16.mxu0 0
    %562 = vmatmul.mubr.bf16.gmra.mrb[0].mxu0 %v524
    %v563 = vpop.f32.mrb[0].mxu0
    %v564 = vadd.f32 0.0, %v563
    %v565 = vpop.f32.mrb[0].mxu0
    %v566 = vpop.f32.mrb[0].mxu0
    %v567 = vpop.f32.mrb[0].mxu0
    %568 = vdwg.mxu0
    %v569 = vmul.f32 %v228, 0.35355338
    %v570 = vmul.f32 %v276, 0.35355338
    %v571 = vmul.f32 %v324, 0.35355338
    %v572 = vmul.f32 %v372, 0.35355338
    %v573 = vmul.f32 %v420, 0.35355338
    %v574 = vmul.f32 %v468, 0.35355338
    %v575 = vmul.f32 %v516, 0.35355338
    %v576 = vmul.f32 %v564, 0.35355338
    %v577 = vsel %vm186, %v569, -inf
    %578 = vmax.xlane.f32.xlu0 %v577
    %v579 = vpop.xlane.xlu0 %578
    %v580 = vsel %vm186, %v570, -inf
    %581 = vmax.xlane.f32.xlu0 %v580
    %v582 = vpop.xlane.xlu0 %581
    %v583 = vsel %vm186, %v571, -inf
    %584 = vmax.xlane.f32.xlu0 %v583
    %v585 = vpop.xlane.xlu0 %584
    %v586 = vsel %vm186, %v572, -inf
    %587 = vmax.xlane.f32.xlu0 %v586
    %v588 = vpop.xlane.xlu0 %587
    %v589 = vsel %vm186, %v573, -inf
    %590 = vmax.xlane.f32.xlu0 %v589
    %v591 = vpop.xlane.xlu0 %590
    %v592 = vsel %vm186, %v574, -inf
    %593 = vmax.xlane.f32.xlu0 %v592
    %v594 = vpop.xlane.xlu0 %593
    %v595 = vsel %vm186, %v575, -inf
    %596 = vmax.xlane.f32.xlu0 %v595
    %v597 = vpop.xlane.xlu0 %596
    %v598 = vsel %vm186, %v576, -inf
    %599 = vmax.xlane.f32.xlu0 %v598
    %v600 = vpop.xlane.xlu0 %599
    %v601 = vsub.f32 %v569, %v579
    %v602 = vsub.f32 %v570, %v582
    %v603 = vsub.f32 %v571, %v585
    %v604 = vsub.f32 %v572, %v588
    %v605 = vsub.f32 %v573, %v591
    %v606 = vsub.f32 %v574, %v594
    %v607 = vsub.f32 %v575, %v597
    %v608 = vsub.f32 %v576, %v600
    %v609 = vmul.f32 %v601, 1.442695
    %v610 = vpow.pop %v609
    %v611 = vmul.f32 %v602, 1.442695
    %v612 = vpow.pop %v611
    %v613 = vmul.f32 %v603, 1.442695
    %v614 = vpow.pop %v613
    %v615 = vmul.f32 %v604, 1.442695
    %v616 = vpow.pop %v615
    %v617 = vmul.f32 %v605, 1.442695
    %v618 = vpow.pop %v617
    %v619 = vmul.f32 %v606, 1.442695
    %v620 = vpow.pop %v619
    %v621 = vmul.f32 %v607, 1.442695
    %v622 = vpow.pop %v621
    %v623 = vmul.f32 %v608, 1.442695
    %v624 = vpow.pop %v623
    %v625 = vsel %vm186, %v610, 0.0
    %626 = vadd.xlane.f32.xlu0 %v625
    %v627 = vpop.xlane.xlu0 %626
    %v628 = vsel %vm186, %v612, 0.0
    %629 = vadd.xlane.f32.xlu0 %v628
    %v630 = vpop.xlane.xlu0 %629
    %v631 = vsel %vm186, %v614, 0.0
    %632 = vadd.xlane.f32.xlu0 %v631
    %v633 = vpop.xlane.xlu0 %632
    %v634 = vsel %vm186, %v616, 0.0
    %635 = vadd.xlane.f32.xlu0 %v634
    %v636 = vpop.xlane.xlu0 %635
    %v637 = vsel %vm186, %v618, 0.0
    %638 = vadd.xlane.f32.xlu0 %v637
    %v639 = vpop.xlane.xlu0 %638
    %v640 = vsel %vm186, %v620, 0.0
    %641 = vadd.xlane.f32.xlu0 %v640
    %v642 = vpop.xlane.xlu0 %641
    %v643 = vsel %vm186, %v622, 0.0
    %644 = vadd.xlane.f32.xlu0 %v643
    %v645 = vpop.xlane.xlu0 %644
    %v646 = vsel %vm186, %v624, 0.0
    %647 = vadd.xlane.f32.xlu0 %v646
    %v648 = vpop.xlane.xlu0 %647
    %v649 = vrcp.pop %v627
    %v650 = vrcp.pop %v630
    %v651 = vrcp.pop %v633
    %v652 = vrcp.pop %v636
    %v653 = vrcp.pop %v639
    %v654 = vrcp.pop %v642
    %v655 = vrcp.pop %v645
    %v656 = vrcp.pop %v648
    %v657 = vmul.f32 %v610, %v649
    %v658 = vmul.f32 %v612, %v650
    %v659 = vmul.f32 %v614, %v651
    %v660 = vmul.f32 %v616, %v652
    %v661 = vmul.f32 %v618, %v653
    %v662 = vmul.f32 %v620, %v654
    %v663 = vmul.f32 %v622, %v655
    %v664 = vmul.f32 %v624, %v656
    %v665 = vpack.c.bf16 %v657, %v657
    %v666 = vpack.c.bf16 %v658, %v658
    %v667 = vpack.c.bf16 %v659, %v659
    %v668 = vpack.c.bf16 %v660, %v660
    %v669 = vpack.c.bf16 %v661, %v661
    %v670 = vpack.c.bf16 %v662, %v662
    %v671 = vpack.c.bf16 %v663, %v663
    %v672 = vpack.c.bf16 %v664, %v664
    %673 = vrot.lane.b32.xlu0 %v176, 64
    %v674 = vpop.permute.xlu0 %673
    %v676 = vsel %vm186, %v665, 0
    %vm678 = vcmask 1043456
    %v680 = vsel %vm678, %v674, 0
    %682 = vmatprep.subr.bf16.mxu0 0
    %683 = vmatpush1.bf16.msra.mxu0 %v680
    %684 = vmatprep.subr.bf16.mxu0 0
    %685 = vmatpush1.bf16.msra.mxu0 0
    %686 = vmatprep.subr.bf16.mxu0 0
    %687 = vmatpush1.bf16.msra.mxu0 0
    %688 = vmatprep.subr.bf16.mxu0 0
    %689 = vmatpush1.bf16.msra.mxu0 0
    %690 = vmatprep.subr.bf16.mxu0 0
    %691 = vmatpush1.bf16.msra.mxu0 0
    %692 = vmatprep.subr.bf16.mxu0 0
    %693 = vmatpush1.bf16.msra.mxu0 0
    %694 = vmatprep.subr.bf16.mxu0 0
    %695 = vmatpush1.bf16.msra.mxu0 0
    %696 = vmatprep.subr.bf16.mxu0 0
    %697 = vmatpush1.bf16.msra.mxu0 0
    %698 = vmatprep.subr.bf16.mxu0 0
    %699 = vmatpush1.bf16.msra.mxu0 0
    %700 = vmatprep.subr.bf16.mxu0 0
    %701 = vmatpush1.bf16.msra.mxu0 0
    %702 = vmatprep.subr.bf16.mxu0 0
    %703 = vmatpush1.bf16.msra.mxu0 0
    %704 = vmatprep.subr.bf16.mxu0 0
    %705 = vmatpush1.bf16.msra.mxu0 0
    %706 = vmatprep.subr.bf16.mxu0 0
    %707 = vmatpush1.bf16.msra.mxu0 0
    %708 = vmatprep.subr.bf16.mxu0 0
    %709 = vmatpush1.bf16.msra.mxu0 0
    %710 = vmatprep.subr.bf16.mxu0 0
    %711 = vmatpush1.bf16.msra.mxu0 0
    %712 = vmatprep.subr.bf16.mxu0 0
    %713 = vmatpush1.bf16.msra.mxu0 0
    %714 = vmatprep.mubr.bf16.mxu0 0
    %715 = vmatmul.mubr.bf16.gmra.mrb[0].mxu0 %v676
    %v716 = vpop.f32.mrb[0].mxu0
    %v717 = vadd.f32 0.0, %v716
    %v718 = vpop.f32.mrb[0].mxu0
    %v719 = vpop.f32.mrb[0].mxu0
    %v720 = vpop.f32.mrb[0].mxu0
    %721 = vdwg.mxu0
    %722 = vrot.lane.b32.xlu0 %v177, 64
    %v723 = vpop.permute.xlu0 %722
    %v725 = vsel %vm186, %v666, 0
    %v728 = vsel %vm678, %v723, 0
    %730 = vmatprep.subr.bf16.mxu0 0
    %731 = vmatpush1.bf16.msra.mxu0 %v728
    %732 = vmatprep.subr.bf16.mxu0 0
    %733 = vmatpush1.bf16.msra.mxu0 0
    %734 = vmatprep.subr.bf16.mxu0 0
    %735 = vmatpush1.bf16.msra.mxu0 0
    %736 = vmatprep.subr.bf16.mxu0 0
    %737 = vmatpush1.bf16.msra.mxu0 0
    %738 = vmatprep.subr.bf16.mxu0 0
    %739 = vmatpush1.bf16.msra.mxu0 0
    %740 = vmatprep.subr.bf16.mxu0 0
    %741 = vmatpush1.bf16.msra.mxu0 0
    %742 = vmatprep.subr.bf16.mxu0 0
    %743 = vmatpush1.bf16.msra.mxu0 0
    %744 = vmatprep.subr.bf16.mxu0 0
    %745 = vmatpush1.bf16.msra.mxu0 0
    %746 = vmatprep.subr.bf16.mxu0 0
    %747 = vmatpush1.bf16.msra.mxu0 0
    %748 = vmatprep.subr.bf16.mxu0 0
    %749 = vmatpush1.bf16.msra.mxu0 0
    %750 = vmatprep.subr.bf16.mxu0 0
    %751 = vmatpush1.bf16.msra.mxu0 0
    %752 = vmatprep.subr.bf16.mxu0 0
    %753 = vmatpush1.bf16.msra.mxu0 0
    %754 = vmatprep.subr.bf16.mxu0 0
    %755 = vmatpush1.bf16.msra.mxu0 0
    %756 = vmatprep.subr.bf16.mxu0 0
    %757 = vmatpush1.bf16.msra.mxu0 0
    %758 = vmatprep.subr.bf16.mxu0 0
    %759 = vmatpush1.bf16.msra.mxu0 0
    %760 = vmatprep.subr.bf16.mxu0 0
    %761 = vmatpush1.bf16.msra.mxu0 0
    %762 = vmatprep.mubr.bf16.mxu0 0
    %763 = vmatmul.mubr.bf16.gmra.mrb[0].mxu0 %v725
    %v764 = vpop.f32.mrb[0].mxu0
    %v765 = vadd.f32 0.0, %v764
    %v766 = vpop.f32.mrb[0].mxu0
    %v767 = vpop.f32.mrb[0].mxu0
    %v768 = vpop.f32.mrb[0].mxu0
    %769 = vdwg.mxu0
    %770 = vrot.lane.b32.xlu0 %v178, 64
    %v771 = vpop.permute.xlu0 %770
    %v773 = vsel %vm186, %v667, 0
    %v776 = vsel %vm678, %v771, 0
    %778 = vmatprep.subr.bf16.mxu0 0
    %779 = vmatpush1.bf16.msra.mxu0 %v776
    %780 = vmatprep.subr.bf16.mxu0 0
    %781 = vmatpush1.bf16.msra.mxu0 0
    %782 = vmatprep.subr.bf16.mxu0 0
    %783 = vmatpush1.bf16.msra.mxu0 0
    %784 = vmatprep.subr.bf16.mxu0 0
    %785 = vmatpush1.bf16.msra.mxu0 0
    %786 = vmatprep.subr.bf16.mxu0 0
    %787 = vmatpush1.bf16.msra.mxu0 0
    %788 = vmatprep.subr.bf16.mxu0 0
    %789 = vmatpush1.bf16.msra.mxu0 0
    %790 = vmatprep.subr.bf16.mxu0 0
    %791 = vmatpush1.bf16.msra.mxu0 0
    %792 = vmatprep.subr.bf16.mxu0 0
    %793 = vmatpush1.bf16.msra.mxu0 0
    %794 = vmatprep.subr.bf16.mxu0 0
    %795 = vmatpush1.bf16.msra.mxu0 0
    %796 = vmatprep.subr.bf16.mxu0 0
    %797 = vmatpush1.bf16.msra.mxu0 0
    %798 = vmatprep.subr.bf16.mxu0 0
    %799 = vmatpush1.bf16.msra.mxu0 0
    %800 = vmatprep.subr.bf16.mxu0 0
    %801 = vmatpush1.bf16.msra.mxu0 0
    %802 = vmatprep.subr.bf16.mxu0 0
    %803 = vmatpush1.bf16.msra.mxu0 0
    %804 = vmatprep.subr.bf16.mxu0 0
    %805 = vmatpush1.bf16.msra.mxu0 0
    %806 = vmatprep.subr.bf16.mxu0 0
    %807 = vmatpush1.bf16.msra.mxu0 0
    %808 = vmatprep.subr.bf16.mxu0 0
    %809 = vmatpush1.bf16.msra.mxu0 0
    %810 = vmatprep.mubr.bf16.mxu0 0
    %811 = vmatmul.mubr.bf16.gmra.mrb[0].mxu0 %v773
    %v812 = vpop.f32.mrb[0].mxu0
    %v813 = vadd.f32 0.0, %v812
    %v814 = vpop.f32.mrb[0].mxu0
    %v815 = vpop.f32.mrb[0].mxu0
    %v816 = vpop.f32.mrb[0].mxu0
    %817 = vdwg.mxu0
    %818 = vrot.lane.b32.xlu0 %v179, 64
    %v819 = vpop.permute.xlu0 %818
    %v821 = vsel %vm186, %v668, 0
    %v824 = vsel %vm678, %v819, 0
    %826 = vmatprep.subr.bf16.mxu0 0
    %827 = vmatpush1.bf16.msra.mxu0 %v824
    %828 = vmatprep.subr.bf16.mxu0 0
    %829 = vmatpush1.bf16.msra.mxu0 0
    %830 = vmatprep.subr.bf16.mxu0 0
    %831 = vmatpush1.bf16.msra.mxu0 0
    %832 = vmatprep.subr.bf16.mxu0 0
    %833 = vmatpush1.bf16.msra.mxu0 0
    %834 = vmatprep.subr.bf16.mxu0 0
    %835 = vmatpush1.bf16.msra.mxu0 0
    %836 = vmatprep.subr.bf16.mxu0 0
    %837 = vmatpush1.bf16.msra.mxu0 0
    %838 = vmatprep.subr.bf16.mxu0 0
    %839 = vmatpush1.bf16.msra.mxu0 0
    %840 = vmatprep.subr.bf16.mxu0 0
    %841 = vmatpush1.bf16.msra.mxu0 0
    %842 = vmatprep.subr.bf16.mxu0 0
    %843 = vmatpush1.bf16.msra.mxu0 0
    %844 = vmatprep.subr.bf16.mxu0 0
    %845 = vmatpush1.bf16.msra.mxu0 0
    %846 = vmatprep.subr.bf16.mxu0 0
    %847 = vmatpush1.bf16.msra.mxu0 0
    %848 = vmatprep.subr.bf16.mxu0 0
    %849 = vmatpush1.bf16.msra.mxu0 0
    %850 = vmatprep.subr.bf16.mxu0 0
    %851 = vmatpush1.bf16.msra.mxu0 0
    %852 = vmatprep.subr.bf16.mxu0 0
    %853 = vmatpush1.bf16.msra.mxu0 0
    %854 = vmatprep.subr.bf16.mxu0 0
    %855 = vmatpush1.bf16.msra.mxu0 0
    %856 = vmatprep.subr.bf16.mxu0 0
    %857 = vmatpush1.bf16.msra.mxu0 0
    %858 = vmatprep.mubr.bf16.mxu0 0
    %859 = vmatmul.mubr.bf16.gmra.mrb[0].mxu0 %v821
    %v860 = vpop.f32.mrb[0].mxu0
    %v861 = vadd.f32 0.0, %v860
    %v862 = vpop.f32.mrb[0].mxu0
    %v863 = vpop.f32.mrb[0].mxu0
    %v864 = vpop.f32.mrb[0].mxu0
    %865 = vdwg.mxu0
    %866 = vrot.lane.b32.xlu0 %v180, 64
    %v867 = vpop.permute.xlu0 %866
    %v869 = vsel %vm186, %v669, 0
    %v872 = vsel %vm678, %v867, 0
    %874 = vmatprep.subr.bf16.mxu0 0
    %875 = vmatpush1.bf16.msra.mxu0 %v872
    %876 = vmatprep.subr.bf16.mxu0 0
    %877 = vmatpush1.bf16.msra.mxu0 0
    %878 = vmatprep.subr.bf16.mxu0 0
    %879 = vmatpush1.bf16.msra.mxu0 0
    %880 = vmatprep.subr.bf16.mxu0 0
    %881 = vmatpush1.bf16.msra.mxu0 0
    %882 = vmatprep.subr.bf16.mxu0 0
    %883 = vmatpush1.bf16.msra.mxu0 0
    %884 = vmatprep.subr.bf16.mxu0 0
    %885 = vmatpush1.bf16.msra.mxu0 0
    %886 = vmatprep.subr.bf16.mxu0 0
    %887 = vmatpush1.bf16.msra.mxu0 0
    %888 = vmatprep.subr.bf16.mxu0 0
    %889 = vmatpush1.bf16.msra.mxu0 0
    %890 = vmatprep.subr.bf16.mxu0 0
    %891 = vmatpush1.bf16.msra.mxu0 0
    %892 = vmatprep.subr.bf16.mxu0 0
    %893 = vmatpush1.bf16.msra.mxu0 0
    %894 = vmatprep.subr.bf16.mxu0 0
    %895 = vmatpush1.bf16.msra.mxu0 0
    %896 = vmatprep.subr.bf16.mxu0 0
    %897 = vmatpush1.bf16.msra.mxu0 0
    %898 = vmatprep.subr.bf16.mxu0 0
    %899 = vmatpush1.bf16.msra.mxu0 0
    %900 = vmatprep.subr.bf16.mxu0 0
    %901 = vmatpush1.bf16.msra.mxu0 0
    %902 = vmatprep.subr.bf16.mxu0 0
    %903 = vmatpush1.bf16.msra.mxu0 0
    %904 = vmatprep.subr.bf16.mxu0 0
    %905 = vmatpush1.bf16.msra.mxu0 0
    %906 = vmatprep.mubr.bf16.mxu0 0
    %907 = vmatmul.mubr.bf16.gmra.mrb[0].mxu0 %v869
    %v908 = vpop.f32.mrb[0].mxu0
    %v909 = vadd.f32 0.0, %v908
    %v910 = vpop.f32.mrb[0].mxu0
    %v911 = vpop.f32.mrb[0].mxu0
    %v912 = vpop.f32.mrb[0].mxu0
    %913 = vdwg.mxu0
    %914 = vrot.lane.b32.xlu0 %v181, 64
    %v915 = vpop.permute.xlu0 %914
    %v917 = vsel %vm186, %v670, 0
    %v920 = vsel %vm678, %v915, 0
    %922 = vmatprep.subr.bf16.mxu0 0
    %923 = vmatpush1.bf16.msra.mxu0 %v920
    %924 = vmatprep.subr.bf16.mxu0 0
    %925 = vmatpush1.bf16.msra.mxu0 0
    %926 = vmatprep.subr.bf16.mxu0 0
    %927 = vmatpush1.bf16.msra.mxu0 0
    %928 = vmatprep.subr.bf16.mxu0 0
    %929 = vmatpush1.bf16.msra.mxu0 0
    %930 = vmatprep.subr.bf16.mxu0 0
    %931 = vmatpush1.bf16.msra.mxu0 0
    %932 = vmatprep.subr.bf16.mxu0 0
    %933 = vmatpush1.bf16.msra.mxu0 0
    %934 = vmatprep.subr.bf16.mxu0 0
    %935 = vmatpush1.bf16.msra.mxu0 0
    %936 = vmatprep.subr.bf16.mxu0 0
    %937 = vmatpush1.bf16.msra.mxu0 0
    %938 = vmatprep.subr.bf16.mxu0 0
    %939 = vmatpush1.bf16.msra.mxu0 0
    %940 = vmatprep.subr.bf16.mxu0 0
    %941 = vmatpush1.bf16.msra.mxu0 0
    %942 = vmatprep.subr.bf16.mxu0 0
    %943 = vmatpush1.bf16.msra.mxu0 0
    %944 = vmatprep.subr.bf16.mxu0 0
    %945 = vmatpush1.bf16.msra.mxu0 0
    %946 = vmatprep.subr.bf16.mxu0 0
    %947 = vmatpush1.bf16.msra.mxu0 0
    %948 = vmatprep.subr.bf16.mxu0 0
    %949 = vmatpush1.bf16.msra.mxu0 0
    %950 = vmatprep.subr.bf16.mxu0 0
    %951 = vmatpush1.bf16.msra.mxu0 0
    %952 = vmatprep.subr.bf16.mxu0 0
    %953 = vmatpush1.bf16.msra.mxu0 0
    %954 = vmatprep.mubr.bf16.mxu0 0
    %955 = vmatmul.mubr.bf16.gmra.mrb[0].mxu0 %v917
    %v956 = vpop.f32.mrb[0].mxu0
    %v957 = vadd.f32 0.0, %v956
    %v958 = vpop.f32.mrb[0].mxu0
    %v959 = vpop.f32.mrb[0].mxu0
    %v960 = vpop.f32.mrb[0].mxu0
    %961 = vdwg.mxu0
    %962 = vrot.lane.b32.xlu0 %v182, 64
    %v963 = vpop.permute.xlu0 %962
    %v965 = vsel %vm186, %v671, 0
    %v968 = vsel %vm678, %v963, 0
    %970 = vmatprep.subr.bf16.mxu0 0
    %971 = vmatpush1.bf16.msra.mxu0 %v968
    %972 = vmatprep.subr.bf16.mxu0 0
    %973 = vmatpush1.bf16.msra.mxu0 0
    %974 = vmatprep.subr.bf16.mxu0 0
    %975 = vmatpush1.bf16.msra.mxu0 0
    %976 = vmatprep.subr.bf16.mxu0 0
    %977 = vmatpush1.bf16.msra.mxu0 0
    %978 = vmatprep.subr.bf16.mxu0 0
    %979 = vmatpush1.bf16.msra.mxu0 0
    %980 = vmatprep.subr.bf16.mxu0 0
    %981 = vmatpush1.bf16.msra.mxu0 0
    %982 = vmatprep.subr.bf16.mxu0 0
    %983 = vmatpush1.bf16.msra.mxu0 0
    %984 = vmatprep.subr.bf16.mxu0 0
    %985 = vmatpush1.bf16.msra.mxu0 0
    %986 = vmatprep.subr.bf16.mxu0 0
    %987 = vmatpush1.bf16.msra.mxu0 0
    %988 = vmatprep.subr.bf16.mxu0 0
    %989 = vmatpush1.bf16.msra.mxu0 0
    %990 = vmatprep.subr.bf16.mxu0 0
    %991 = vmatpush1.bf16.msra.mxu0 0
    %992 = vmatprep.subr.bf16.mxu0 0
    %993 = vmatpush1.bf16.msra.mxu0 0
    %994 = vmatprep.subr.bf16.mxu0 0
    %995 = vmatpush1.bf16.msra.mxu0 0
    %996 = vmatprep.subr.bf16.mxu0 0
    %997 = vmatpush1.bf16.msra.mxu0 0
    %998 = vmatprep.subr.bf16.mxu0 0
    %999 = vmatpush1.bf16.msra.mxu0 0
    %1000 = vmatprep.subr.bf16.mxu0 0
    %1001 = vmatpush1.bf16.msra.mxu0 0
    %1002 = vmatprep.mubr.bf16.mxu0 0
    %1003 = vmatmul.mubr.bf16.gmra.mrb[0].mxu0 %v965
    %v1004 = vpop.f32.mrb[0].mxu0
    %v1005 = vadd.f32 0.0, %v1004
    %v1006 = vpop.f32.mrb[0].mxu0
    %v1007 = vpop.f32.mrb[0].mxu0
    %v1008 = vpop.f32.mrb[0].mxu0
    %1009 = vdwg.mxu0
    %1010 = vrot.lane.b32.xlu0 %v183, 64
    %v1011 = vpop.permute.xlu0 %1010
    %v1013 = vsel %vm186, %v672, 0
    %v1016 = vsel %vm678, %v1011, 0
    %1018 = vmatprep.subr.bf16.mxu0 0
    %1019 = vmatpush1.bf16.msra.mxu0 %v1016
    %1020 = vmatprep.subr.bf16.mxu0 0
    %1021 = vmatpush1.bf16.msra.mxu0 0
    %1022 = vmatprep.subr.bf16.mxu0 0
    %1023 = vmatpush1.bf16.msra.mxu0 0
    %1024 = vmatprep.subr.bf16.mxu0 0
    %1025 = vmatpush1.bf16.msra.mxu0 0
    %1026 = vmatprep.subr.bf16.mxu0 0
    %1027 = vmatpush1.bf16.msra.mxu0 0
    %1028 = vmatprep.subr.bf16.mxu0 0
    %1029 = vmatpush1.bf16.msra.mxu0 0
    %1030 = vmatprep.subr.bf16.mxu0 0
    %1031 = vmatpush1.bf16.msra.mxu0 0
    %1032 = vmatprep.subr.bf16.mxu0 0
    %1033 = vmatpush1.bf16.msra.mxu0 0
    %1034 = vmatprep.subr.bf16.mxu0 0
    %1035 = vmatpush1.bf16.msra.mxu0 0
    %1036 = vmatprep.subr.bf16.mxu0 0
    %1037 = vmatpush1.bf16.msra.mxu0 0
    %1038 = vmatprep.subr.bf16.mxu0 0
    %1039 = vmatpush1.bf16.msra.mxu0 0
    %1040 = vmatprep.subr.bf16.mxu0 0
    %1041 = vmatpush1.bf16.msra.mxu0 0
    %1042 = vmatprep.subr.bf16.mxu0 0
    %1043 = vmatpush1.bf16.msra.mxu0 0
    %1044 = vmatprep.subr.bf16.mxu0 0
    %1045 = vmatpush1.bf16.msra.mxu0 0
    %1046 = vmatprep.subr.bf16.mxu0 0
    %1047 = vmatpush1.bf16.msra.mxu0 0
    %1048 = vmatprep.subr.bf16.mxu0 0
    %1049 = vmatpush1.bf16.msra.mxu0 0
    %1050 = vmatprep.mubr.bf16.mxu0 0
    %1051 = vmatmul.mubr.bf16.gmra.mrb[0].mxu0 %v1013
    %v1052 = vpop.f32.mrb[0].mxu0
    %v1053 = vadd.f32 0.0, %v1052
    %v1054 = vpop.f32.mrb[0].mxu0
    %v1055 = vpop.f32.mrb[0].mxu0
    %v1056 = vpop.f32.mrb[0].mxu0
    %1057 = vdwg.mxu0
    %1058 = vst.msk [vmem:[#allocation2] sm:$0xff] %vm186, %v717
    %1059 = vst.msk [vmem:[#allocation2 + $0x8] sm:$0xff] %vm186, %v765
    %1060 = vst.msk [vmem:[#allocation2 + $0x10] sm:$0xff] %vm186, %v813
    %1061 = vst.msk [vmem:[#allocation2 + $0x18] sm:$0xff] %vm186, %v861
    %1062 = vst.msk [vmem:[#allocation2 + $0x20] sm:$0xff] %vm186, %v909
    %1063 = vst.msk [vmem:[#allocation2 + $0x28] sm:$0xff] %vm186, %v957
    %1064 = vst.msk [vmem:[#allocation2 + $0x30] sm:$0xff] %vm186, %v1005
    %1065 = vst.msk [vmem:[#allocation2 + $0x38] sm:$0xff] %vm186, %v1053
    %1066 = vrot.lane.b32.xlu0 %v176, 120
    %v1067 = vpop.permute.xlu0 %1066
    %1068 = vrot.lane.b32.xlu0 %v176, 88
    %v1069 = vpop.permute.xlu0 %1068
    %v1071 = vsel %vm186, %v1067, 0
    %v1074 = vsel %vm186, %v1069, 0
    %1076 = vmatprep.subr.bf16.mxu0 0
    %1077 = vmatpush1.bf16.xpose.msra.mxu0 %v1074
    %1078 = vmatprep.subr.bf16.mxu0 0
    %1079 = vmatpush1.bf16.xpose.msra.mxu0 0
    %1080 = vmatprep.subr.bf16.mxu0 0
    %1081 = vmatpush1.bf16.xpose.msra.mxu0 0
    %1082 = vmatprep.subr.bf16.mxu0 0
    %1083 = vmatpush1.bf16.xpose.msra.mxu0 0
    %1084 = vmatprep.subr.bf16.mxu0 0
    %1085 = vmatpush1.bf16.xpose.msra.mxu0 0
    %1086 = vmatprep.subr.bf16.mxu0 0
    %1087 = vmatpush1.bf16.xpose.msra.mxu0 0
    %1088 = vmatprep.subr.bf16.mxu0 0
    %1089 = vmatpush1.bf16.xpose.msra.mxu0 0
    %1090 = vmatprep.subr.bf16.mxu0 0
    %1091 = vmatpush1.bf16.xpose.msra.mxu0 0
    %1092 = vmatprep.subr.bf16.mxu0 0
    %1093 = vmatpush1.bf16.xpose.msra.mxu0 0
    %1094 = vmatprep.subr.bf16.mxu0 0
    %1095 = vmatpush1.bf16.xpose.msra.mxu0 0
    %1096 = vmatprep.subr.bf16.mxu0 0
    %1097 = vmatpush1.bf16.xpose.msra.mxu0 0
    %1098 = vmatprep.subr.bf16.mxu0 0
    %1099 = vmatpush1.bf16.xpose.msra.mxu0 0
    %1100 = vmatprep.subr.bf16.mxu0 0
    %1101 = vmatpush1.bf16.xpose.msra.mxu0 0
    %1102 = vmatprep.subr.bf16.mxu0 0
    %1103 = vmatpush1.bf16.xpose.msra.mxu0 0
    %1104 = vmatprep.subr.bf16.mxu0 0
    %1105 = vmatpush1.bf16.xpose.msra.mxu0 0
    %1106 = vmatprep.subr.bf16.mxu0 0
    %1107 = vmatpush1.bf16.xpose.msra.mxu0 0
    %1108 = vmatprep.mubr.bf16.mxu0 0
    %1109 = vmatmul.mubr.bf16.gmra.mrb[0].mxu0 %v1071
    %v1110 = vpop.f32.mrb[0].mxu0
    %v1111 = vadd.f32 0.0, %v1110
    %v1112 = vpop.f32.mrb[0].mxu0
    %v1113 = vpop.f32.mrb[0].mxu0
    %v1114 = vpop.f32.mrb[0].mxu0
    %1115 = vdwg.mxu0
    %1116 = vrot.lane.b32.xlu0 %v177, 120
    %v1117 = vpop.permute.xlu0 %1116
    %1118 = vrot.lane.b32.xlu0 %v177, 88
    %v1119 = vpop.permute.xlu0 %1118
    %v1121 = vsel %vm186, %v1117, 0
    %v1124 = vsel %vm186, %v1119, 0
    %1126 = vmatprep.subr.bf16.mxu0 0
    %1127 = vmatpush1.bf16.xpose.msra.mxu0 %v1124
    %1128 = vmatprep.subr.bf16.mxu0 0
    %1129 = vmatpush1.bf16.xpose.msra.mxu0 0
    %1130 = vmatprep.subr.bf16.mxu0 0
    %1131 = vmatpush1.bf16.xpose.msra.mxu0 0
    %1132 = vmatprep.subr.bf16.mxu0 0
    %1133 = vmatpush1.bf16.xpose.msra.mxu0 0
    %1134 = vmatprep.subr.bf16.mxu0 0
    %1135 = vmatpush1.bf16.xpose.msra.mxu0 0
    %1136 = vmatprep.subr.bf16.mxu0 0
    %1137 = vmatpush1.bf16.xpose.msra.mxu0 0
    %1138 = vmatprep.subr.bf16.mxu0 0
    %1139 = vmatpush1.bf16.xpose.msra.mxu0 0
    %1140 = vmatprep.subr.bf16.mxu0 0
    %1141 = vmatpush1.bf16.xpose.msra.mxu0 0
    %1142 = vmatprep.subr.bf16.mxu0 0
    %1143 = vmatpush1.bf16.xpose.msra.mxu0 0
    %1144 = vmatprep.subr.bf16.mxu0 0
    %1145 = vmatpush1.bf16.xpose.msra.mxu0 0
    %1146 = vmatprep.subr.bf16.mxu0 0
    %1147 = vmatpush1.bf16.xpose.msra.mxu0 0
    %1148 = vmatprep.subr.bf16.mxu0 0
    %1149 = vmatpush1.bf16.xpose.msra.mxu0 0
    %1150 = vmatprep.subr.bf16.mxu0 0
    %1151 = vmatpush1.bf16.xpose.msra.mxu0 0
    %1152 = vmatprep.subr.bf16.mxu0 0
    %1153 = vmatpush1.bf16.xpose.msra.mxu0 0
    %1154 = vmatprep.subr.bf16.mxu0 0
    %1155 = vmatpush1.bf16.xpose.msra.mxu0 0
    %1156 = vmatprep.subr.bf16.mxu0 0
    %1157 = vmatpush1.bf16.xpose.msra.mxu0 0
    %1158 = vmatprep.mubr.bf16.mxu0 0
    %1159 = vmatmul.mubr.bf16.gmra.mrb[0].mxu0 %v1121
    %v1160 = vpop.f32.mrb[0].mxu0
    %v1161 = vadd.f32 0.0, %v1160
    %v1162 = vpop.f32.mrb[0].mxu0
    %v1163 = vpop.f32.mrb[0].mxu0
    %v1164 = vpop.f32.mrb[0].mxu0
    %1165 = vdwg.mxu0
    %1166 = vrot.lane.b32.xlu0 %v178, 120
    %v1167 = vpop.permute.xlu0 %1166
    %1168 = vrot.lane.b32.xlu0 %v178, 88
    %v1169 = vpop.permute.xlu0 %1168
    %v1171 = vsel %vm186, %v1167, 0
    %v1174 = vsel %vm186, %v1169, 0
    %1176 = vmatprep.subr.bf16.mxu0 0
    %1177 = vmatpush1.bf16.xpose.msra.mxu0 %v1174
    %1178 = vmatprep.subr.bf16.mxu0 0
    %1179 = vmatpush1.bf16.xpose.msra.mxu0 0
    %1180 = vmatprep.subr.bf16.mxu0 0
    %1181 = vmatpush1.bf16.xpose.msra.mxu0 0
    %1182 = vmatprep.subr.bf16.mxu0 0
    %1183 = vmatpush1.bf16.xpose.msra.mxu0 0
    %1184 = vmatprep.subr.bf16.mxu0 0
    %1185 = vmatpush1.bf16.xpose.msra.mxu0 0
    %1186 = vmatprep.subr.bf16.mxu0 0
    %1187 = vmatpush1.bf16.xpose.msra.mxu0 0
    %1188 = vmatprep.subr.bf16.mxu0 0
    %1189 = vmatpush1.bf16.xpose.msra.mxu0 0
    %1190 = vmatprep.subr.bf16.mxu0 0
    %1191 = vmatpush1.bf16.xpose.msra.mxu0 0
    %1192 = vmatprep.subr.bf16.mxu0 0
    %1193 = vmatpush1.bf16.xpose.msra.mxu0 0
    %1194 = vmatprep.subr.bf16.mxu0 0
    %1195 = vmatpush1.bf16.xpose.msra.mxu0 0
    %1196 = vmatprep.subr.bf16.mxu0 0
    %1197 = vmatpush1.bf16.xpose.msra.mxu0 0
    %1198 = vmatprep.subr.bf16.mxu0 0
    %1199 = vmatpush1.bf16.xpose.msra.mxu0 0
    %1200 = vmatprep.subr.bf16.mxu0 0
    %1201 = vmatpush1.bf16.xpose.msra.mxu0 0
    %1202 = vmatprep.subr.bf16.mxu0 0
    %1203 = vmatpush1.bf16.xpose.msra.mxu0 0
    %1204 = vmatprep.subr.bf16.mxu0 0
    %1205 = vmatpush1.bf16.xpose.msra.mxu0 0
    %1206 = vmatprep.subr.bf16.mxu0 0
    %1207 = vmatpush1.bf16.xpose.msra.mxu0 0
    %1208 = vmatprep.mubr.bf16.mxu0 0
    %1209 = vmatmul.mubr.bf16.gmra.mrb[0].mxu0 %v1171
    %v1210 = vpop.f32.mrb[0].mxu0
    %v1211 = vadd.f32 0.0, %v1210
    %v1212 = vpop.f32.mrb[0].mxu0
    %v1213 = vpop.f32.mrb[0].mxu0
    %v1214 = vpop.f32.mrb[0].mxu0
    %1215 = vdwg.mxu0
    %1216 = vrot.lane.b32.xlu0 %v179, 120
    %v1217 = vpop.permute.xlu0 %1216
    %1218 = vrot.lane.b32.xlu0 %v179, 88
    %v1219 = vpop.permute.xlu0 %1218
    %v1221 = vsel %vm186, %v1217, 0
    %v1224 = vsel %vm186, %v1219, 0
    %1226 = vmatprep.subr.bf16.mxu0 0
    %1227 = vmatpush1.bf16.xpose.msra.mxu0 %v1224
    %1228 = vmatprep.subr.bf16.mxu0 0
    %1229 = vmatpush1.bf16.xpose.msra.mxu0 0
    %1230 = vmatprep.subr.bf16.mxu0 0
    %1231 = vmatpush1.bf16.xpose.msra.mxu0 0
    %1232 = vmatprep.subr.bf16.mxu0 0
    %1233 = vmatpush1.bf16.xpose.msra.mxu0 0
    %1234 = vmatprep.subr.bf16.mxu0 0
    %1235 = vmatpush1.bf16.xpose.msra.mxu0 0
    %1236 = vmatprep.subr.bf16.mxu0 0
    %1237 = vmatpush1.bf16.xpose.msra.mxu0 0
    %1238 = vmatprep.subr.bf16.mxu0 0
    %1239 = vmatpush1.bf16.xpose.msra.mxu0 0
    %1240 = vmatprep.subr.bf16.mxu0 0
    %1241 = vmatpush1.bf16.xpose.msra.mxu0 0
    %1242 = vmatprep.subr.bf16.mxu0 0
    %1243 = vmatpush1.bf16.xpose.msra.mxu0 0
    %1244 = vmatprep.subr.bf16.mxu0 0
    %1245 = vmatpush1.bf16.xpose.msra.mxu0 0
    %1246 = vmatprep.subr.bf16.mxu0 0
    %1247 = vmatpush1.bf16.xpose.msra.mxu0 0
    %1248 = vmatprep.subr.bf16.mxu0 0
    %1249 = vmatpush1.bf16.xpose.msra.mxu0 0
    %1250 = vmatprep.subr.bf16.mxu0 0
    %1251 = vmatpush1.bf16.xpose.msra.mxu0 0
    %1252 = vmatprep.subr.bf16.mxu0 0
    %1253 = vmatpush1.bf16.xpose.msra.mxu0 0
    %1254 = vmatprep.subr.bf16.mxu0 0
    %1255 = vmatpush1.bf16.xpose.msra.mxu0 0
    %1256 = vmatprep.subr.bf16.mxu0 0
    %1257 = vmatpush1.bf16.xpose.msra.mxu0 0
    %1258 = vmatprep.mubr.bf16.mxu0 0
    %1259 = vmatmul.mubr.bf16.gmra.mrb[0].mxu0 %v1221
    %v1260 = vpop.f32.mrb[0].mxu0
    %v1261 = vadd.f32 0.0, %v1260
    %v1262 = vpop.f32.mrb[0].mxu0
    %v1263 = vpop.f32.mrb[0].mxu0
    %v1264 = vpop.f32.mrb[0].mxu0
    %1265 = vdwg.mxu0
    %1266 = vrot.lane.b32.xlu0 %v180, 120
    %v1267 = vpop.permute.xlu0 %1266
    %1268 = vrot.lane.b32.xlu0 %v180, 88
    %v1269 = vpop.permute.xlu0 %1268
    %v1271 = vsel %vm186, %v1267, 0
    %v1274 = vsel %vm186, %v1269, 0
    %1276 = vmatprep.subr.bf16.mxu0 0
    %1277 = vmatpush1.bf16.xpose.msra.mxu0 %v1274
    %1278 = vmatprep.subr.bf16.mxu0 0
    %1279 = vmatpush1.bf16.xpose.msra.mxu0 0
    %1280 = vmatprep.subr.bf16.mxu0 0
    %1281 = vmatpush1.bf16.xpose.msra.mxu0 0
    %1282 = vmatprep.subr.bf16.mxu0 0
    %1283 = vmatpush1.bf16.xpose.msra.mxu0 0
    %1284 = vmatprep.subr.bf16.mxu0 0
    %1285 = vmatpush1.bf16.xpose.msra.mxu0 0
    %1286 = vmatprep.subr.bf16.mxu0 0
    %1287 = vmatpush1.bf16.xpose.msra.mxu0 0
    %1288 = vmatprep.subr.bf16.mxu0 0
    %1289 = vmatpush1.bf16.xpose.msra.mxu0 0
    %1290 = vmatprep.subr.bf16.mxu0 0
    %1291 = vmatpush1.bf16.xpose.msra.mxu0 0
    %1292 = vmatprep.subr.bf16.mxu0 0
    %1293 = vmatpush1.bf16.xpose.msra.mxu0 0
    %1294 = vmatprep.subr.bf16.mxu0 0
    %1295 = vmatpush1.bf16.xpose.msra.mxu0 0
    %1296 = vmatprep.subr.bf16.mxu0 0
    %1297 = vmatpush1.bf16.xpose.msra.mxu0 0
    %1298 = vmatprep.subr.bf16.mxu0 0
    %1299 = vmatpush1.bf16.xpose.msra.mxu0 0
    %1300 = vmatprep.subr.bf16.mxu0 0
    %1301 = vmatpush1.bf16.xpose.msra.mxu0 0
    %1302 = vmatprep.subr.bf16.mxu0 0
    %1303 = vmatpush1.bf16.xpose.msra.mxu0 0
    %1304 = vmatprep.subr.bf16.mxu0 0
    %1305 = vmatpush1.bf16.xpose.msra.mxu0 0
    %1306 = vmatprep.subr.bf16.mxu0 0
    %1307 = vmatpush1.bf16.xpose.msra.mxu0 0
    %1308 = vmatprep.mubr.bf16.mxu0 0
    %1309 = vmatmul.mubr.bf16.gmra.mrb[0].mxu0 %v1271
    %v1310 = vpop.f32.mrb[0].mxu0
    %v1311 = vadd.f32 0.0, %v1310
    %v1312 = vpop.f32.mrb[0].mxu0
    %v1313 = vpop.f32.mrb[0].mxu0
    %v1314 = vpop.f32.mrb[0].mxu0
    %1315 = vdwg.mxu0
    %1316 = vrot.lane.b32.xlu0 %v181, 120
    %v1317 = vpop.permute.xlu0 %1316
    %1318 = vrot.lane.b32.xlu0 %v181, 88
    %v1319 = vpop.permute.xlu0 %1318
    %v1321 = vsel %vm186, %v1317, 0
    %v1324 = vsel %vm186, %v1319, 0
    %1326 = vmatprep.subr.bf16.mxu0 0
    %1327 = vmatpush1.bf16.xpose.msra.mxu0 %v1324
    %1328 = vmatprep.subr.bf16.mxu0 0
    %1329 = vmatpush1.bf16.xpose.msra.mxu0 0
    %1330 = vmatprep.subr.bf16.mxu0 0
    %1331 = vmatpush1.bf16.xpose.msra.mxu0 0
    %1332 = vmatprep.subr.bf16.mxu0 0
    %1333 = vmatpush1.bf16.xpose.msra.mxu0 0
    %1334 = vmatprep.subr.bf16.mxu0 0
    %1335 = vmatpush1.bf16.xpose.msra.mxu0 0
    %1336 = vmatprep.subr.bf16.mxu0 0
    %1337 = vmatpush1.bf16.xpose.msra.mxu0 0
    %1338 = vmatprep.subr.bf16.mxu0 0
    %1339 = vmatpush1.bf16.xpose.msra.mxu0 0
    %1340 = vmatprep.subr.bf16.mxu0 0
    %1341 = vmatpush1.bf16.xpose.msra.mxu0 0
    %1342 = vmatprep.subr.bf16.mxu0 0
    %1343 = vmatpush1.bf16.xpose.msra.mxu0 0
    %1344 = vmatprep.subr.bf16.mxu0 0
    %1345 = vmatpush1.bf16.xpose.msra.mxu0 0
    %1346 = vmatprep.subr.bf16.mxu0 0
    %1347 = vmatpush1.bf16.xpose.msra.mxu0 0
    %1348 = vmatprep.subr.bf16.mxu0 0
    %1349 = vmatpush1.bf16.xpose.msra.mxu0 0
    %1350 = vmatprep.subr.bf16.mxu0 0
    %1351 = vmatpush1.bf16.xpose.msra.mxu0 0
    %1352 = vmatprep.subr.bf16.mxu0 0
    %1353 = vmatpush1.bf16.xpose.msra.mxu0 0
    %1354 = vmatprep.subr.bf16.mxu0 0
    %1355 = vmatpush1.bf16.xpose.msra.mxu0 0
    %1356 = vmatprep.subr.bf16.mxu0 0
    %1357 = vmatpush1.bf16.xpose.msra.mxu0 0
    %1358 = vmatprep.mubr.bf16.mxu0 0
    %1359 = vmatmul.mubr.bf16.gmra.mrb[0].mxu0 %v1321
    %v1360 = vpop.f32.mrb[0].mxu0
    %v1361 = vadd.f32 0.0, %v1360
    %v1362 = vpop.f32.mrb[0].mxu0
    %v1363 = vpop.f32.mrb[0].mxu0
    %v1364 = vpop.f32.mrb[0].mxu0
    %1365 = vdwg.mxu0
    %1366 = vrot.lane.b32.xlu0 %v182, 120
    %v1367 = vpop.permute.xlu0 %1366
    %1368 = vrot.lane.b32.xlu0 %v182, 88
    %v1369 = vpop.permute.xlu0 %1368
    %v1371 = vsel %vm186, %v1367, 0
    %v1374 = vsel %vm186, %v1369, 0
    %1376 = vmatprep.subr.bf16.mxu0 0
    %1377 = vmatpush1.bf16.xpose.msra.mxu0 %v1374
    %1378 = vmatprep.subr.bf16.mxu0 0
    %1379 = vmatpush1.bf16.xpose.msra.mxu0 0
    %1380 = vmatprep.subr.bf16.mxu0 0
    %1381 = vmatpush1.bf16.xpose.msra.mxu0 0
    %1382 = vmatprep.subr.bf16.mxu0 0
    %1383 = vmatpush1.bf16.xpose.msra.mxu0 0
    %1384 = vmatprep.subr.bf16.mxu0 0
    %1385 = vmatpush1.bf16.xpose.msra.mxu0 0
    %1386 = vmatprep.subr.bf16.mxu0 0
    %1387 = vmatpush1.bf16.xpose.msra.mxu0 0
    %1388 = vmatprep.subr.bf16.mxu0 0
    %1389 = vmatpush1.bf16.xpose.msra.mxu0 0
    %1390 = vmatprep.subr.bf16.mxu0 0
    %1391 = vmatpush1.bf16.xpose.msra.mxu0 0
    %1392 = vmatprep.subr.bf16.mxu0 0
    %1393 = vmatpush1.bf16.xpose.msra.mxu0 0
    %1394 = vmatprep.subr.bf16.mxu0 0
    %1395 = vmatpush1.bf16.xpose.msra.mxu0 0
    %1396 = vmatprep.subr.bf16.mxu0 0
    %1397 = vmatpush1.bf16.xpose.msra.mxu0 0
    %1398 = vmatprep.subr.bf16.mxu0 0
    %1399 = vmatpush1.bf16.xpose.msra.mxu0 0
    %1400 = vmatprep.subr.bf16.mxu0 0
    %1401 = vmatpush1.bf16.xpose.msra.mxu0 0
    %1402 = vmatprep.subr.bf16.mxu0 0
    %1403 = vmatpush1.bf16.xpose.msra.mxu0 0
    %1404 = vmatprep.subr.bf16.mxu0 0
    %1405 = vmatpush1.bf16.xpose.msra.mxu0 0
    %1406 = vmatprep.subr.bf16.mxu0 0
    %1407 = vmatpush1.bf16.xpose.msra.mxu0 0
    %1408 = vmatprep.mubr.bf16.mxu0 0
    %1409 = vmatmul.mubr.bf16.gmra.mrb[0].mxu0 %v1371
    %v1410 = vpop.f32.mrb[0].mxu0
    %v1411 = vadd.f32 0.0, %v1410
    %v1412 = vpop.f32.mrb[0].mxu0
    %v1413 = vpop.f32.mrb[0].mxu0
    %v1414 = vpop.f32.mrb[0].mxu0
    %1415 = vdwg.mxu0
    %1416 = vrot.lane.b32.xlu0 %v183, 120
    %v1417 = vpop.permute.xlu0 %1416
    %1418 = vrot.lane.b32.xlu0 %v183, 88
    %v1419 = vpop.permute.xlu0 %1418
    %v1421 = vsel %vm186, %v1417, 0
    %v1424 = vsel %vm186, %v1419, 0
    %1426 = vmatprep.subr.bf16.mxu0 0
    %1427 = vmatpush1.bf16.xpose.msra.mxu0 %v1424
    %1428 = vmatprep.subr.bf16.mxu0 0
    %1429 = vmatpush1.bf16.xpose.msra.mxu0 0
    %1430 = vmatprep.subr.bf16.mxu0 0
    %1431 = vmatpush1.bf16.xpose.msra.mxu0 0
    %1432 = vmatprep.subr.bf16.mxu0 0
    %1433 = vmatpush1.bf16.xpose.msra.mxu0 0
    %1434 = vmatprep.subr.bf16.mxu0 0
    %1435 = vmatpush1.bf16.xpose.msra.mxu0 0
    %1436 = vmatprep.subr.bf16.mxu0 0
    %1437 = vmatpush1.bf16.xpose.msra.mxu0 0
    %1438 = vmatprep.subr.bf16.mxu0 0
    %1439 = vmatpush1.bf16.xpose.msra.mxu0 0
    %1440 = vmatprep.subr.bf16.mxu0 0
    %1441 = vmatpush1.bf16.xpose.msra.mxu0 0
    %1442 = vmatprep.subr.bf16.mxu0 0
    %1443 = vmatpush1.bf16.xpose.msra.mxu0 0
    %1444 = vmatprep.subr.bf16.mxu0 0
    %1445 = vmatpush1.bf16.xpose.msra.mxu0 0
    %1446 = vmatprep.subr.bf16.mxu0 0
    %1447 = vmatpush1.bf16.xpose.msra.mxu0 0
    %1448 = vmatprep.subr.bf16.mxu0 0
    %1449 = vmatpush1.bf16.xpose.msra.mxu0 0
    %1450 = vmatprep.subr.bf16.mxu0 0
    %1451 = vmatpush1.bf16.xpose.msra.mxu0 0
    %1452 = vmatprep.subr.bf16.mxu0 0
    %1453 = vmatpush1.bf16.xpose.msra.mxu0 0
    %1454 = vmatprep.subr.bf16.mxu0 0
    %1455 = vmatpush1.bf16.xpose.msra.mxu0 0
    %1456 = vmatprep.subr.bf16.mxu0 0
    %1457 = vmatpush1.bf16.xpose.msra.mxu0 0
    %1458 = vmatprep.mubr.bf16.mxu0 0
    %1459 = vmatmul.mubr.bf16.gmra.mrb[0].mxu0 %v1421
    %v1460 = vpop.f32.mrb[0].mxu0
    %v1461 = vadd.f32 0.0, %v1460
    %v1462 = vpop.f32.mrb[0].mxu0
    %v1463 = vpop.f32.mrb[0].mxu0
    %v1464 = vpop.f32.mrb[0].mxu0
    %1465 = vdwg.mxu0
    %v1466 = vmul.f32 %v1111, 0.35355338
    %v1467 = vmul.f32 %v1161, 0.35355338
    %v1468 = vmul.f32 %v1211, 0.35355338
    %v1469 = vmul.f32 %v1261, 0.35355338
    %v1470 = vmul.f32 %v1311, 0.35355338
    %v1471 = vmul.f32 %v1361, 0.35355338
    %v1472 = vmul.f32 %v1411, 0.35355338
    %v1473 = vmul.f32 %v1461, 0.35355338
    %v1474 = vsel %vm186, %v1466, -inf
    %1475 = vmax.xlane.f32.xlu0 %v1474
    %v1476 = vpop.xlane.xlu0 %1475
    %v1477 = vsel %vm186, %v1467, -inf
    %1478 = vmax.xlane.f32.xlu0 %v1477
    %v1479 = vpop.xlane.xlu0 %1478
    %v1480 = vsel %vm186, %v1468, -inf
    %1481 = vmax.xlane.f32.xlu0 %v1480
    %v1482 = vpop.xlane.xlu0 %1481
    %v1483 = vsel %vm186, %v1469, -inf
    %1484 = vmax.xlane.f32.xlu0 %v1483
    %v1485 = vpop.xlane.xlu0 %1484
    %v1486 = vsel %vm186, %v1470, -inf
    %1487 = vmax.xlane.f32.xlu0 %v1486
    %v1488 = vpop.xlane.xlu0 %1487
    %v1489 = vsel %vm186, %v1471, -inf
    %1490 = vmax.xlane.f32.xlu0 %v1489
    %v1491 = vpop.xlane.xlu0 %1490
    %v1492 = vsel %vm186, %v1472, -inf
    %1493 = vmax.xlane.f32.xlu0 %v1492
    %v1494 = vpop.xlane.xlu0 %1493
    %v1495 = vsel %vm186, %v1473, -inf
    %1496 = vmax.xlane.f32.xlu0 %v1495
    %v1497 = vpop.xlane.xlu0 %1496
    %v1498 = vsub.f32 %v1466, %v1476
    %v1499 = vsub.f32 %v1467, %v1479
    %v1500 = vsub.f32 %v1468, %v1482
    %v1501 = vsub.f32 %v1469, %v1485
    %v1502 = vsub.f32 %v1470, %v1488
    %v1503 = vsub.f32 %v1471, %v1491
    %v1504 = vsub.f32 %v1472, %v1494
    %v1505 = vsub.f32 %v1473, %v1497
    %v1506 = vmul.f32 %v1498, 1.442695
    %v1507 = vpow.pop %v1506
    %v1508 = vmul.f32 %v1499, 1.442695
    %v1509 = vpow.pop %v1508
    %v1510 = vmul.f32 %v1500, 1.442695
    %v1511 = vpow.pop %v1510
    %v1512 = vmul.f32 %v1501, 1.442695
    %v1513 = vpow.pop %v1512
    %v1514 = vmul.f32 %v1502, 1.442695
    %v1515 = vpow.pop %v1514
    %v1516 = vmul.f32 %v1503, 1.442695
    %v1517 = vpow.pop %v1516
    %v1518 = vmul.f32 %v1504, 1.442695
    %v1519 = vpow.pop %v1518
    %v1520 = vmul.f32 %v1505, 1.442695
    %v1521 = vpow.pop %v1520
    %v1522 = vsel %vm186, %v1507, 0.0
    %1523 = vadd.xlane.f32.xlu0 %v1522
    %v1524 = vpop.xlane.xlu0 %1523
    %v1525 = vsel %vm186, %v1509, 0.0
    %1526 = vadd.xlane.f32.xlu0 %v1525
    %v1527 = vpop.xlane.xlu0 %1526
    %v1528 = vsel %vm186, %v1511, 0.0
    %1529 = vadd.xlane.f32.xlu0 %v1528
    %v1530 = vpop.xlane.xlu0 %1529
    %v1531 = vsel %vm186, %v1513, 0.0
    %1532 = vadd.xlane.f32.xlu0 %v1531
    %v1533 = vpop.xlane.xlu0 %1532
    %v1534 = vsel %vm186, %v1515, 0.0
    %1535 = vadd.xlane.f32.xlu0 %v1534
    %v1536 = vpop.xlane.xlu0 %1535
    %v1537 = vsel %vm186, %v1517, 0.0
    %1538 = vadd.xlane.f32.xlu0 %v1537
    %v1539 = vpop.xlane.xlu0 %1538
    %v1540 = vsel %vm186, %v1519, 0.0
    %1541 = vadd.xlane.f32.xlu0 %v1540
    %v1542 = vpop.xlane.xlu0 %1541
    %v1543 = vsel %vm186, %v1521, 0.0
    %1544 = vadd.xlane.f32.xlu0 %v1543
    %v1545 = vpop.xlane.xlu0 %1544
    %v1546 = vrcp.pop %v1524
    %v1547 = vrcp.pop %v1527
    %v1548 = vrcp.pop %v1530
    %v1549 = vrcp.pop %v1533
    %v1550 = vrcp.pop %v1536
    %v1551 = vrcp.pop %v1539
    %v1552 = vrcp.pop %v1542
    %v1553 = vrcp.pop %v1545
    %v1554 = vmul.f32 %v1507, %v1546
    %v1555 = vmul.f32 %v1509, %v1547
    %v1556 = vmul.f32 %v1511, %v1548
    %v1557 = vmul.f32 %v1513, %v1549
    %v1558 = vmul.f32 %v1515, %v1550
    %v1559 = vmul.f32 %v1517, %v1551
    %v1560 = vmul.f32 %v1519, %v1552
    %v1561 = vmul.f32 %v1521, %v1553
    %v1562 = vpack.c.bf16 %v1554, %v1554
    %v1563 = vpack.c.bf16 %v1555, %v1555
    %v1564 = vpack.c.bf16 %v1556, %v1556
    %v1565 = vpack.c.bf16 %v1557, %v1557
    %v1566 = vpack.c.bf16 %v1558, %v1558
    %v1567 = vpack.c.bf16 %v1559, %v1559
    %v1568 = vpack.c.bf16 %v1560, %v1560
    %v1569 = vpack.c.bf16 %v1561, %v1561
    %1570 = vrot.lane.b32.xlu0 %v176, 56
    %v1571 = vpop.permute.xlu0 %1570
    %v1573 = vsel %vm186, %v1562, 0
    %v1576 = vsel %vm678, %v1571, 0
    %1578 = vmatprep.subr.bf16.mxu0 0
    %1579 = vmatpush1.bf16.msra.mxu0 %v1576
    %1580 = vmatprep.subr.bf16.mxu0 0
    %1581 = vmatpush1.bf16.msra.mxu0 0
    %1582 = vmatprep.subr.bf16.mxu0 0
    %1583 = vmatpush1.bf16.msra.mxu0 0
    %1584 = vmatprep.subr.bf16.mxu0 0
    %1585 = vmatpush1.bf16.msra.mxu0 0
    %1586 = vmatprep.subr.bf16.mxu0 0
    %1587 = vmatpush1.bf16.msra.mxu0 0
    %1588 = vmatprep.subr.bf16.mxu0 0
    %1589 = vmatpush1.bf16.msra.mxu0 0
    %1590 = vmatprep.subr.bf16.mxu0 0
    %1591 = vmatpush1.bf16.msra.mxu0 0
    %1592 = vmatprep.subr.bf16.mxu0 0
    %1593 = vmatpush1.bf16.msra.mxu0 0
    %1594 = vmatprep.subr.bf16.mxu0 0
    %1595 = vmatpush1.bf16.msra.mxu0 0
    %1596 = vmatprep.subr.bf16.mxu0 0
    %1597 = vmatpush1.bf16.msra.mxu0 0
    %1598 = vmatprep.subr.bf16.mxu0 0
    %1599 = vmatpush1.bf16.msra.mxu0 0
    %1600 = vmatprep.subr.bf16.mxu0 0
    %1601 = vmatpush1.bf16.msra.mxu0 0
    %1602 = vmatprep.subr.bf16.mxu0 0
    %1603 = vmatpush1.bf16.msra.mxu0 0
    %1604 = vmatprep.subr.bf16.mxu0 0
    %1605 = vmatpush1.bf16.msra.mxu0 0
    %1606 = vmatprep.subr.bf16.mxu0 0
    %1607 = vmatpush1.bf16.msra.mxu0 0
    %1608 = vmatprep.subr.bf16.mxu0 0
    %1609 = vmatpush1.bf16.msra.mxu0 0
    %1610 = vmatprep.mubr.bf16.mxu0 0
    %1611 = vmatmul.mubr.bf16.gmra.mrb[0].mxu0 %v1573
    %v1612 = vpop.f32.mrb[0].mxu0
    %v1613 = vadd.f32 0.0, %v1612
    %v1614 = vpop.f32.mrb[0].mxu0
    %v1615 = vpop.f32.mrb[0].mxu0
    %v1616 = vpop.f32.mrb[0].mxu0
    %1617 = vdwg.mxu0
    %1618 = vrot.lane.b32.xlu0 %v177, 56
    %v1619 = vpop.permute.xlu0 %1618
    %v1621 = vsel %vm186, %v1563, 0
    %v1624 = vsel %vm678, %v1619, 0
    %1626 = vmatprep.subr.bf16.mxu0 0
    %1627 = vmatpush1.bf16.msra.mxu0 %v1624
    %1628 = vmatprep.subr.bf16.mxu0 0
    %1629 = vmatpush1.bf16.msra.mxu0 0
    %1630 = vmatprep.subr.bf16.mxu0 0
    %1631 = vmatpush1.bf16.msra.mxu0 0
    %1632 = vmatprep.subr.bf16.mxu0 0
    %1633 = vmatpush1.bf16.msra.mxu0 0
    %1634 = vmatprep.subr.bf16.mxu0 0
    %1635 = vmatpush1.bf16.msra.mxu0 0
    %1636 = vmatprep.subr.bf16.mxu0 0
    %1637 = vmatpush1.bf16.msra.mxu0 0
    %1638 = vmatprep.subr.bf16.mxu0 0
    %1639 = vmatpush1.bf16.msra.mxu0 0
    %1640 = vmatprep.subr.bf16.mxu0 0
    %1641 = vmatpush1.bf16.msra.mxu0 0
    %1642 = vmatprep.subr.bf16.mxu0 0
    %1643 = vmatpush1.bf16.msra.mxu0 0
    %1644 = vmatprep.subr.bf16.mxu0 0
    %1645 = vmatpush1.bf16.msra.mxu0 0
    %1646 = vmatprep.subr.bf16.mxu0 0
    %1647 = vmatpush1.bf16.msra.mxu0 0
    %1648 = vmatprep.subr.bf16.mxu0 0
    %1649 = vmatpush1.bf16.msra.mxu0 0
    %1650 = vmatprep.subr.bf16.mxu0 0
    %1651 = vmatpush1.bf16.msra.mxu0 0
    %1652 = vmatprep.subr.bf16.mxu0 0
    %1653 = vmatpush1.bf16.msra.mxu0 0
    %1654 = vmatprep.subr.bf16.mxu0 0
    %1655 = vmatpush1.bf16.msra.mxu0 0
    %1656 = vmatprep.subr.bf16.mxu0 0
    %1657 = vmatpush1.bf16.msra.mxu0 0
    %1658 = vmatprep.mubr.bf16.mxu0 0
    %1659 = vmatmul.mubr.bf16.gmra.mrb[0].mxu0 %v1621
    %v1660 = vpop.f32.mrb[0].mxu0
    %v1661 = vadd.f32 0.0, %v1660
    %v1662 = vpop.f32.mrb[0].mxu0
    %v1663 = vpop.f32.mrb[0].mxu0
    %v1664 = vpop.f32.mrb[0].mxu0
    %1665 = vdwg.mxu0
    %1666 = vrot.lane.b32.xlu0 %v178, 56
    %v1667 = vpop.permute.xlu0 %1666
    %v1669 = vsel %vm186, %v1564, 0
    %v1672 = vsel %vm678, %v1667, 0
    %1674 = vmatprep.subr.bf16.mxu0 0
    %1675 = vmatpush1.bf16.msra.mxu0 %v1672
    %1676 = vmatprep.subr.bf16.mxu0 0
    %1677 = vmatpush1.bf16.msra.mxu0 0
    %1678 = vmatprep.subr.bf16.mxu0 0
    %1679 = vmatpush1.bf16.msra.mxu0 0
    %1680 = vmatprep.subr.bf16.mxu0 0
    %1681 = vmatpush1.bf16.msra.mxu0 0
    %1682 = vmatprep.subr.bf16.mxu0 0
    %1683 = vmatpush1.bf16.msra.mxu0 0
    %1684 = vmatprep.subr.bf16.mxu0 0
    %1685 = vmatpush1.bf16.msra.mxu0 0
    %1686 = vmatprep.subr.bf16.mxu0 0
    %1687 = vmatpush1.bf16.msra.mxu0 0
    %1688 = vmatprep.subr.bf16.mxu0 0
    %1689 = vmatpush1.bf16.msra.mxu0 0
    %1690 = vmatprep.subr.bf16.mxu0 0
    %1691 = vmatpush1.bf16.msra.mxu0 0
    %1692 = vmatprep.subr.bf16.mxu0 0
    %1693 = vmatpush1.bf16.msra.mxu0 0
    %1694 = vmatprep.subr.bf16.mxu0 0
    %1695 = vmatpush1.bf16.msra.mxu0 0
    %1696 = vmatprep.subr.bf16.mxu0 0
    %1697 = vmatpush1.bf16.msra.mxu0 0
    %1698 = vmatprep.subr.bf16.mxu0 0
    %1699 = vmatpush1.bf16.msra.mxu0 0
    %1700 = vmatprep.subr.bf16.mxu0 0
    %1701 = vmatpush1.bf16.msra.mxu0 0
    %1702 = vmatprep.subr.bf16.mxu0 0
    %1703 = vmatpush1.bf16.msra.mxu0 0
    %1704 = vmatprep.subr.bf16.mxu0 0
    %1705 = vmatpush1.bf16.msra.mxu0 0
    %1706 = vmatprep.mubr.bf16.mxu0 0
    %1707 = vmatmul.mubr.bf16.gmra.mrb[0].mxu0 %v1669
    %v1708 = vpop.f32.mrb[0].mxu0
    %v1709 = vadd.f32 0.0, %v1708
    %v1710 = vpop.f32.mrb[0].mxu0
    %v1711 = vpop.f32.mrb[0].mxu0
    %v1712 = vpop.f32.mrb[0].mxu0
    %1713 = vdwg.mxu0
    %1714 = vrot.lane.b32.xlu0 %v179, 56
    %v1715 = vpop.permute.xlu0 %1714
    %v1717 = vsel %vm186, %v1565, 0
    %v1720 = vsel %vm678, %v1715, 0
    %1722 = vmatprep.subr.bf16.mxu0 0
    %1723 = vmatpush1.bf16.msra.mxu0 %v1720
    %1724 = vmatprep.subr.bf16.mxu0 0
    %1725 = vmatpush1.bf16.msra.mxu0 0
    %1726 = vmatprep.subr.bf16.mxu0 0
    %1727 = vmatpush1.bf16.msra.mxu0 0
    %1728 = vmatprep.subr.bf16.mxu0 0
    %1729 = vmatpush1.bf16.msra.mxu0 0
    %1730 = vmatprep.subr.bf16.mxu0 0
    %1731 = vmatpush1.bf16.msra.mxu0 0
    %1732 = vmatprep.subr.bf16.mxu0 0
    %1733 = vmatpush1.bf16.msra.mxu0 0
    %1734 = vmatprep.subr.bf16.mxu0 0
    %1735 = vmatpush1.bf16.msra.mxu0 0
    %1736 = vmatprep.subr.bf16.mxu0 0
    %1737 = vmatpush1.bf16.msra.mxu0 0
    %1738 = vmatprep.subr.bf16.mxu0 0
    %1739 = vmatpush1.bf16.msra.mxu0 0
    %1740 = vmatprep.subr.bf16.mxu0 0
    %1741 = vmatpush1.bf16.msra.mxu0 0
    %1742 = vmatprep.subr.bf16.mxu0 0
    %1743 = vmatpush1.bf16.msra.mxu0 0
    %1744 = vmatprep.subr.bf16.mxu0 0
    %1745 = vmatpush1.bf16.msra.mxu0 0
    %1746 = vmatprep.subr.bf16.mxu0 0
    %1747 = vmatpush1.bf16.msra.mxu0 0
    %1748 = vmatprep.subr.bf16.mxu0 0
    %1749 = vmatpush1.bf16.msra.mxu0 0
    %1750 = vmatprep.subr.bf16.mxu0 0
    %1751 = vmatpush1.bf16.msra.mxu0 0
    %1752 = vmatprep.subr.bf16.mxu0 0
    %1753 = vmatpush1.bf16.msra.mxu0 0
    %1754 = vmatprep.mubr.bf16.mxu0 0
    %1755 = vmatmul.mubr.bf16.gmra.mrb[0].mxu0 %v1717
    %v1756 = vpop.f32.mrb[0].mxu0
    %v1757 = vadd.f32 0.0, %v1756
    %v1758 = vpop.f32.mrb[0].mxu0
    %v1759 = vpop.f32.mrb[0].mxu0
    %v1760 = vpop.f32.mrb[0].mxu0
    %1761 = vdwg.mxu0
    %1762 = vrot.lane.b32.xlu0 %v180, 56
    %v1763 = vpop.permute.xlu0 %1762
    %v1765 = vsel %vm186, %v1566, 0
    %v1768 = vsel %vm678, %v1763, 0
    %1770 = vmatprep.subr.bf16.mxu0 0
    %1771 = vmatpush1.bf16.msra.mxu0 %v1768
    %1772 = vmatprep.subr.bf16.mxu0 0
    %1773 = vmatpush1.bf16.msra.mxu0 0
    %1774 = vmatprep.subr.bf16.mxu0 0
    %1775 = vmatpush1.bf16.msra.mxu0 0
    %1776 = vmatprep.subr.bf16.mxu0 0
    %1777 = vmatpush1.bf16.msra.mxu0 0
    %1778 = vmatprep.subr.bf16.mxu0 0
    %1779 = vmatpush1.bf16.msra.mxu0 0
    %1780 = vmatprep.subr.bf16.mxu0 0
    %1781 = vmatpush1.bf16.msra.mxu0 0
    %1782 = vmatprep.subr.bf16.mxu0 0
    %1783 = vmatpush1.bf16.msra.mxu0 0
    %1784 = vmatprep.subr.bf16.mxu0 0
    %1785 = vmatpush1.bf16.msra.mxu0 0
    %1786 = vmatprep.subr.bf16.mxu0 0
    %1787 = vmatpush1.bf16.msra.mxu0 0
    %1788 = vmatprep.subr.bf16.mxu0 0
    %1789 = vmatpush1.bf16.msra.mxu0 0
    %1790 = vmatprep.subr.bf16.mxu0 0
    %1791 = vmatpush1.bf16.msra.mxu0 0
    %1792 = vmatprep.subr.bf16.mxu0 0
    %1793 = vmatpush1.bf16.msra.mxu0 0
    %1794 = vmatprep.subr.bf16.mxu0 0
    %1795 = vmatpush1.bf16.msra.mxu0 0
    %1796 = vmatprep.subr.bf16.mxu0 0
    %1797 = vmatpush1.bf16.msra.mxu0 0
    %1798 = vmatprep.subr.bf16.mxu0 0
    %1799 = vmatpush1.bf16.msra.mxu0 0
    %1800 = vmatprep.subr.bf16.mxu0 0
    %1801 = vmatpush1.bf16.msra.mxu0 0
    %1802 = vmatprep.mubr.bf16.mxu0 0
    %1803 = vmatmul.mubr.bf16.gmra.mrb[0].mxu0 %v1765
    %v1804 = vpop.f32.mrb[0].mxu0
    %v1805 = vadd.f32 0.0, %v1804
    %v1806 = vpop.f32.mrb[0].mxu0
    %v1807 = vpop.f32.mrb[0].mxu0
    %v1808 = vpop.f32.mrb[0].mxu0
    %1809 = vdwg.mxu0
    %1810 = vrot.lane.b32.xlu0 %v181, 56
    %v1811 = vpop.permute.xlu0 %1810
    %v1813 = vsel %vm186, %v1567, 0
    %v1816 = vsel %vm678, %v1811, 0
    %1818 = vmatprep.subr.bf16.mxu0 0
    %1819 = vmatpush1.bf16.msra.mxu0 %v1816
    %1820 = vmatprep.subr.bf16.mxu0 0
    %1821 = vmatpush1.bf16.msra.mxu0 0
    %1822 = vmatprep.subr.bf16.mxu0 0
    %1823 = vmatpush1.bf16.msra.mxu0 0
    %1824 = vmatprep.subr.bf16.mxu0 0
    %1825 = vmatpush1.bf16.msra.mxu0 0
    %1826 = vmatprep.subr.bf16.mxu0 0
    %1827 = vmatpush1.bf16.msra.mxu0 0
    %1828 = vmatprep.subr.bf16.mxu0 0
    %1829 = vmatpush1.bf16.msra.mxu0 0
    %1830 = vmatprep.subr.bf16.mxu0 0
    %1831 = vmatpush1.bf16.msra.mxu0 0
    %1832 = vmatprep.subr.bf16.mxu0 0
    %1833 = vmatpush1.bf16.msra.mxu0 0
    %1834 = vmatprep.subr.bf16.mxu0 0
    %1835 = vmatpush1.bf16.msra.mxu0 0
    %1836 = vmatprep.subr.bf16.mxu0 0
    %1837 = vmatpush1.bf16.msra.mxu0 0
    %1838 = vmatprep.subr.bf16.mxu0 0
    %1839 = vmatpush1.bf16.msra.mxu0 0
    %1840 = vmatprep.subr.bf16.mxu0 0
    %1841 = vmatpush1.bf16.msra.mxu0 0
    %1842 = vmatprep.subr.bf16.mxu0 0
    %1843 = vmatpush1.bf16.msra.mxu0 0
    %1844 = vmatprep.subr.bf16.mxu0 0
    %1845 = vmatpush1.bf16.msra.mxu0 0
    %1846 = vmatprep.subr.bf16.mxu0 0
    %1847 = vmatpush1.bf16.msra.mxu0 0
    %1848 = vmatprep.subr.bf16.mxu0 0
    %1849 = vmatpush1.bf16.msra.mxu0 0
    %1850 = vmatprep.mubr.bf16.mxu0 0
    %1851 = vmatmul.mubr.bf16.gmra.mrb[0].mxu0 %v1813
    %v1852 = vpop.f32.mrb[0].mxu0
    %v1853 = vadd.f32 0.0, %v1852
    %v1854 = vpop.f32.mrb[0].mxu0
    %v1855 = vpop.f32.mrb[0].mxu0
    %v1856 = vpop.f32.mrb[0].mxu0
    %1857 = vdwg.mxu0
    %1858 = vrot.lane.b32.xlu0 %v182, 56
    %v1859 = vpop.permute.xlu0 %1858
    %v1861 = vsel %vm186, %v1568, 0
    %v1864 = vsel %vm678, %v1859, 0
    %1866 = vmatprep.subr.bf16.mxu0 0
    %1867 = vmatpush1.bf16.msra.mxu0 %v1864
    %1868 = vmatprep.subr.bf16.mxu0 0
    %1869 = vmatpush1.bf16.msra.mxu0 0
    %1870 = vmatprep.subr.bf16.mxu0 0
    %1871 = vmatpush1.bf16.msra.mxu0 0
    %1872 = vmatprep.subr.bf16.mxu0 0
    %1873 = vmatpush1.bf16.msra.mxu0 0
    %1874 = vmatprep.subr.bf16.mxu0 0
    %1875 = vmatpush1.bf16.msra.mxu0 0
    %1876 = vmatprep.subr.bf16.mxu0 0
    %1877 = vmatpush1.bf16.msra.mxu0 0
    %1878 = vmatprep.subr.bf16.mxu0 0
    %1879 = vmatpush1.bf16.msra.mxu0 0
    %1880 = vmatprep.subr.bf16.mxu0 0
    %1881 = vmatpush1.bf16.msra.mxu0 0
    %1882 = vmatprep.subr.bf16.mxu0 0
    %1883 = vmatpush1.bf16.msra.mxu0 0
    %1884 = vmatprep.subr.bf16.mxu0 0
    %1885 = vmatpush1.bf16.msra.mxu0 0
    %1886 = vmatprep.subr.bf16.mxu0 0
    %1887 = vmatpush1.bf16.msra.mxu0 0
    %1888 = vmatprep.subr.bf16.mxu0 0
    %1889 = vmatpush1.bf16.msra.mxu0 0
    %1890 = vmatprep.subr.bf16.mxu0 0
    %1891 = vmatpush1.bf16.msra.mxu0 0
    %1892 = vmatprep.subr.bf16.mxu0 0
    %1893 = vmatpush1.bf16.msra.mxu0 0
    %1894 = vmatprep.subr.bf16.mxu0 0
    %1895 = vmatpush1.bf16.msra.mxu0 0
    %1896 = vmatprep.subr.bf16.mxu0 0
    %1897 = vmatpush1.bf16.msra.mxu0 0
    %1898 = vmatprep.mubr.bf16.mxu0 0
    %1899 = vmatmul.mubr.bf16.gmra.mrb[0].mxu0 %v1861
    %v1900 = vpop.f32.mrb[0].mxu0
    %v1901 = vadd.f32 0.0, %v1900
    %v1902 = vpop.f32.mrb[0].mxu0
    %v1903 = vpop.f32.mrb[0].mxu0
    %v1904 = vpop.f32.mrb[0].mxu0
    %1905 = vdwg.mxu0
    %1906 = vrot.lane.b32.xlu0 %v183, 56
    %v1907 = vpop.permute.xlu0 %1906
    %v1909 = vsel %vm186, %v1569, 0
    %v1912 = vsel %vm678, %v1907, 0
    %1914 = vmatprep.subr.bf16.mxu0 0
    %1915 = vmatpush1.bf16.msra.mxu0 %v1912
    %1916 = vmatprep.subr.bf16.mxu0 0
    %1917 = vmatpush1.bf16.msra.mxu0 0
    %1918 = vmatprep.subr.bf16.mxu0 0
    %1919 = vmatpush1.bf16.msra.mxu0 0
    %1920 = vmatprep.subr.bf16.mxu0 0
    %1921 = vmatpush1.bf16.msra.mxu0 0
    %1922 = vmatprep.subr.bf16.mxu0 0
    %1923 = vmatpush1.bf16.msra.mxu0 0
    %1924 = vmatprep.subr.bf16.mxu0 0
    %1925 = vmatpush1.bf16.msra.mxu0 0
    %1926 = vmatprep.subr.bf16.mxu0 0
    %1927 = vmatpush1.bf16.msra.mxu0 0
    %1928 = vmatprep.subr.bf16.mxu0 0
    %1929 = vmatpush1.bf16.msra.mxu0 0
    %1930 = vmatprep.subr.bf16.mxu0 0
    %1931 = vmatpush1.bf16.msra.mxu0 0
    %1932 = vmatprep.subr.bf16.mxu0 0
    %1933 = vmatpush1.bf16.msra.mxu0 0
    %1934 = vmatprep.subr.bf16.mxu0 0
    %1935 = vmatpush1.bf16.msra.mxu0 0
    %1936 = vmatprep.subr.bf16.mxu0 0
    %1937 = vmatpush1.bf16.msra.mxu0 0
    %1938 = vmatprep.subr.bf16.mxu0 0
    %1939 = vmatpush1.bf16.msra.mxu0 0
    %1940 = vmatprep.subr.bf16.mxu0 0
    %1941 = vmatpush1.bf16.msra.mxu0 0
    %1942 = vmatprep.subr.bf16.mxu0 0
    %1943 = vmatpush1.bf16.msra.mxu0 0
    %1944 = vmatprep.subr.bf16.mxu0 0
    %1945 = vmatpush1.bf16.msra.mxu0 0
    %1946 = vmatprep.mubr.bf16.mxu0 0
    %1947 = vmatmul.mubr.bf16.gmra.mrb[0].mxu0 %v1909
    %v1948 = vpop.f32.mrb[0].mxu0
    %v1949 = vadd.f32 0.0, %v1948
    %v1950 = vpop.f32.mrb[0].mxu0
    %v1951 = vpop.f32.mrb[0].mxu0
    %v1952 = vpop.f32.mrb[0].mxu0
    %1953 = vdwg.mxu0
    %1962 = vrot.lane.b32.xlu0 %v1613, 8
    %v1963 = vpop.permute.xlu0 %1962
    %1964 = vrot.lane.b32.xlu0 %v1661, 8
    %v1965 = vpop.permute.xlu0 %1964
    %1966 = vrot.lane.b32.xlu0 %v1709, 8
    %v1967 = vpop.permute.xlu0 %1966
    %1968 = vrot.lane.b32.xlu0 %v1757, 8
    %v1969 = vpop.permute.xlu0 %1968
    %1970 = vrot.lane.b32.xlu0 %v1805, 8
    %v1971 = vpop.permute.xlu0 %1970
    %1972 = vrot.lane.b32.xlu0 %v1853, 8
    %v1973 = vpop.permute.xlu0 %1972
    %1974 = vrot.lane.b32.xlu0 %v1901, 8
    %v1975 = vpop.permute.xlu0 %1974
    %1976 = vrot.lane.b32.xlu0 %v1949, 8
    %v1977 = vpop.permute.xlu0 %1976
    %vm1986 = vcmask 130112
    %1987 = vst.msk [vmem:[#allocation2] sm:$0xff] %vm1986, %v1963
    %1988 = vst.msk [vmem:[#allocation2 + $0x8] sm:$0xff] %vm1986, %v1965
    %1989 = vst.msk [vmem:[#allocation2 + $0x10] sm:$0xff] %vm1986, %v1967
    %1990 = vst.msk [vmem:[#allocation2 + $0x18] sm:$0xff] %vm1986, %v1969
    %1991 = vst.msk [vmem:[#allocation2 + $0x20] sm:$0xff] %vm1986, %v1971
    %1992 = vst.msk [vmem:[#allocation2 + $0x28] sm:$0xff] %vm1986, %v1973
    %1993 = vst.msk [vmem:[#allocation2 + $0x30] sm:$0xff] %vm1986, %v1975
    %1994 = vst.msk [vmem:[#allocation2 + $0x38] sm:$0xff] %vm1986, %v1977
    %1995 = vrot.lane.b32.xlu0 %v176, 112
    %v1996 = vpop.permute.xlu0 %1995
    %1997 = vrot.lane.b32.xlu0 %v176, 80
    %v1998 = vpop.permute.xlu0 %1997
    %v2000 = vsel %vm186, %v1996, 0
    %v2003 = vsel %vm186, %v1998, 0
    %2005 = vmatprep.subr.bf16.mxu0 0
    %2006 = vmatpush1.bf16.xpose.msra.mxu0 %v2003
    %2007 = vmatprep.subr.bf16.mxu0 0
    %2008 = vmatpush1.bf16.xpose.msra.mxu0 0
    %2009 = vmatprep.subr.bf16.mxu0 0
    %2010 = vmatpush1.bf16.xpose.msra.mxu0 0
    %2011 = vmatprep.subr.bf16.mxu0 0
    %2012 = vmatpush1.bf16.xpose.msra.mxu0 0
    %2013 = vmatprep.subr.bf16.mxu0 0
    %2014 = vmatpush1.bf16.xpose.msra.mxu0 0
    %2015 = vmatprep.subr.bf16.mxu0 0
    %2016 = vmatpush1.bf16.xpose.msra.mxu0 0
    %2017 = vmatprep.subr.bf16.mxu0 0
    %2018 = vmatpush1.bf16.xpose.msra.mxu0 0
    %2019 = vmatprep.subr.bf16.mxu0 0
    %2020 = vmatpush1.bf16.xpose.msra.mxu0 0
    %2021 = vmatprep.subr.bf16.mxu0 0
    %2022 = vmatpush1.bf16.xpose.msra.mxu0 0
    %2023 = vmatprep.subr.bf16.mxu0 0
    %2024 = vmatpush1.bf16.xpose.msra.mxu0 0
    %2025 = vmatprep.subr.bf16.mxu0 0
    %2026 = vmatpush1.bf16.xpose.msra.mxu0 0
    %2027 = vmatprep.subr.bf16.mxu0 0
    %2028 = vmatpush1.bf16.xpose.msra.mxu0 0
    %2029 = vmatprep.subr.bf16.mxu0 0
    %2030 = vmatpush1.bf16.xpose.msra.mxu0 0
    %2031 = vmatprep.subr.bf16.mxu0 0
    %2032 = vmatpush1.bf16.xpose.msra.mxu0 0
    %2033 = vmatprep.subr.bf16.mxu0 0
    %2034 = vmatpush1.bf16.xpose.msra.mxu0 0
    %2035 = vmatprep.subr.bf16.mxu0 0
    %2036 = vmatpush1.bf16.xpose.msra.mxu0 0
    %2037 = vmatprep.mubr.bf16.mxu0 0
    %2038 = vmatmul.mubr.bf16.gmra.mrb[0].mxu0 %v2000
    %v2039 = vpop.f32.mrb[0].mxu0
    %v2040 = vadd.f32 0.0, %v2039
    %v2041 = vpop.f32.mrb[0].mxu0
    %v2042 = vpop.f32.mrb[0].mxu0
    %v2043 = vpop.f32.mrb[0].mxu0
    %2044 = vdwg.mxu0
    %2045 = vrot.lane.b32.xlu0 %v177, 112
    %v2046 = vpop.permute.xlu0 %2045
    %2047 = vrot.lane.b32.xlu0 %v177, 80
    %v2048 = vpop.permute.xlu0 %2047
    %v2050 = vsel %vm186, %v2046, 0
    %v2053 = vsel %vm186, %v2048, 0
    %2055 = vmatprep.subr.bf16.mxu0 0
    %2056 = vmatpush1.bf16.xpose.msra.mxu0 %v2053
    %2057 = vmatprep.subr.bf16.mxu0 0
    %2058 = vmatpush1.bf16.xpose.msra.mxu0 0
    %2059 = vmatprep.subr.bf16.mxu0 0
    %2060 = vmatpush1.bf16.xpose.msra.mxu0 0
    %2061 = vmatprep.subr.bf16.mxu0 0
    %2062 = vmatpush1.bf16.xpose.msra.mxu0 0
    %2063 = vmatprep.subr.bf16.mxu0 0
    %2064 = vmatpush1.bf16.xpose.msra.mxu0 0
    %2065 = vmatprep.subr.bf16.mxu0 0
    %2066 = vmatpush1.bf16.xpose.msra.mxu0 0
    %2067 = vmatprep.subr.bf16.mxu0 0
    %2068 = vmatpush1.bf16.xpose.msra.mxu0 0
    %2069 = vmatprep.subr.bf16.mxu0 0
    %2070 = vmatpush1.bf16.xpose.msra.mxu0 0
    %2071 = vmatprep.subr.bf16.mxu0 0
    %2072 = vmatpush1.bf16.xpose.msra.mxu0 0
    %2073 = vmatprep.subr.bf16.mxu0 0
    %2074 = vmatpush1.bf16.xpose.msra.mxu0 0
    %2075 = vmatprep.subr.bf16.mxu0 0
    %2076 = vmatpush1.bf16.xpose.msra.mxu0 0
    %2077 = vmatprep.subr.bf16.mxu0 0
    %2078 = vmatpush1.bf16.xpose.msra.mxu0 0
    %2079 = vmatprep.subr.bf16.mxu0 0
    %2080 = vmatpush1.bf16.xpose.msra.mxu0 0
    %2081 = vmatprep.subr.bf16.mxu0 0
    %2082 = vmatpush1.bf16.xpose.msra.mxu0 0
    %2083 = vmatprep.subr.bf16.mxu0 0
    %2084 = vmatpush1.bf16.xpose.msra.mxu0 0
    %2085 = vmatprep.subr.bf16.mxu0 0
    %2086 = vmatpush1.bf16.xpose.msra.mxu0 0
    %2087 = vmatprep.mubr.bf16.mxu0 0
    %2088 = vmatmul.mubr.bf16.gmra.mrb[0].mxu0 %v2050
    %v2089 = vpop.f32.mrb[0].mxu0
    %v2090 = vadd.f32 0.0, %v2089
    %v2091 = vpop.f32.mrb[0].mxu0
    %v2092 = vpop.f32.mrb[0].mxu0
    %v2093 = vpop.f32.mrb[0].mxu0
    %2094 = vdwg.mxu0
    %2095 = vrot.lane.b32.xlu0 %v178, 112
    %v2096 = vpop.permute.xlu0 %2095
    %2097 = vrot.lane.b32.xlu0 %v178, 80
    %v2098 = vpop.permute.xlu0 %2097
    %v2100 = vsel %vm186, %v2096, 0
    %v2103 = vsel %vm186, %v2098, 0
    %2105 = vmatprep.subr.bf16.mxu0 0
    %2106 = vmatpush1.bf16.xpose.msra.mxu0 %v2103
    %2107 = vmatprep.subr.bf16.mxu0 0
    %2108 = vmatpush1.bf16.xpose.msra.mxu0 0
    %2109 = vmatprep.subr.bf16.mxu0 0
    %2110 = vmatpush1.bf16.xpose.msra.mxu0 0
    %2111 = vmatprep.subr.bf16.mxu0 0
    %2112 = vmatpush1.bf16.xpose.msra.mxu0 0
    %2113 = vmatprep.subr.bf16.mxu0 0
    %2114 = vmatpush1.bf16.xpose.msra.mxu0 0
    %2115 = vmatprep.subr.bf16.mxu0 0
    %2116 = vmatpush1.bf16.xpose.msra.mxu0 0
    %2117 = vmatprep.subr.bf16.mxu0 0
    %2118 = vmatpush1.bf16.xpose.msra.mxu0 0
    %2119 = vmatprep.subr.bf16.mxu0 0
    %2120 = vmatpush1.bf16.xpose.msra.mxu0 0
    %2121 = vmatprep.subr.bf16.mxu0 0
    %2122 = vmatpush1.bf16.xpose.msra.mxu0 0
    %2123 = vmatprep.subr.bf16.mxu0 0
    %2124 = vmatpush1.bf16.xpose.msra.mxu0 0
    %2125 = vmatprep.subr.bf16.mxu0 0
    %2126 = vmatpush1.bf16.xpose.msra.mxu0 0
    %2127 = vmatprep.subr.bf16.mxu0 0
    %2128 = vmatpush1.bf16.xpose.msra.mxu0 0
    %2129 = vmatprep.subr.bf16.mxu0 0
    %2130 = vmatpush1.bf16.xpose.msra.mxu0 0
    %2131 = vmatprep.subr.bf16.mxu0 0
    %2132 = vmatpush1.bf16.xpose.msra.mxu0 0
    %2133 = vmatprep.subr.bf16.mxu0 0
    %2134 = vmatpush1.bf16.xpose.msra.mxu0 0
    %2135 = vmatprep.subr.bf16.mxu0 0
    %2136 = vmatpush1.bf16.xpose.msra.mxu0 0
    %2137 = vmatprep.mubr.bf16.mxu0 0
    %2138 = vmatmul.mubr.bf16.gmra.mrb[0].mxu0 %v2100
    %v2139 = vpop.f32.mrb[0].mxu0
    %v2140 = vadd.f32 0.0, %v2139
    %v2141 = vpop.f32.mrb[0].mxu0
    %v2142 = vpop.f32.mrb[0].mxu0
    %v2143 = vpop.f32.mrb[0].mxu0
    %2144 = vdwg.mxu0
    %2145 = vrot.lane.b32.xlu0 %v179, 112
    %v2146 = vpop.permute.xlu0 %2145
    %2147 = vrot.lane.b32.xlu0 %v179, 80
    %v2148 = vpop.permute.xlu0 %2147
    %v2150 = vsel %vm186, %v2146, 0
    %v2153 = vsel %vm186, %v2148, 0
    %2155 = vmatprep.subr.bf16.mxu0 0
    %2156 = vmatpush1.bf16.xpose.msra.mxu0 %v2153
    %2157 = vmatprep.subr.bf16.mxu0 0
    %2158 = vmatpush1.bf16.xpose.msra.mxu0 0
    %2159 = vmatprep.subr.bf16.mxu0 0
    %2160 = vmatpush1.bf16.xpose.msra.mxu0 0
    %2161 = vmatprep.subr.bf16.mxu0 0
    %2162 = vmatpush1.bf16.xpose.msra.mxu0 0
    %2163 = vmatprep.subr.bf16.mxu0 0
    %2164 = vmatpush1.bf16.xpose.msra.mxu0 0
    %2165 = vmatprep.subr.bf16.mxu0 0
    %2166 = vmatpush1.bf16.xpose.msra.mxu0 0
    %2167 = vmatprep.subr.bf16.mxu0 0
    %2168 = vmatpush1.bf16.xpose.msra.mxu0 0
    %2169 = vmatprep.subr.bf16.mxu0 0
    %2170 = vmatpush1.bf16.xpose.msra.mxu0 0
    %2171 = vmatprep.subr.bf16.mxu0 0
    %2172 = vmatpush1.bf16.xpose.msra.mxu0 0
    %2173 = vmatprep.subr.bf16.mxu0 0
    %2174 = vmatpush1.bf16.xpose.msra.mxu0 0
    %2175 = vmatprep.subr.bf16.mxu0 0
    %2176 = vmatpush1.bf16.xpose.msra.mxu0 0
    %2177 = vmatprep.subr.bf16.mxu0 0
    %2178 = vmatpush1.bf16.xpose.msra.mxu0 0
    %2179 = vmatprep.subr.bf16.mxu0 0
    %2180 = vmatpush1.bf16.xpose.msra.mxu0 0
    %2181 = vmatprep.subr.bf16.mxu0 0
    %2182 = vmatpush1.bf16.xpose.msra.mxu0 0
    %2183 = vmatprep.subr.bf16.mxu0 0
    %2184 = vmatpush1.bf16.xpose.msra.mxu0 0
    %2185 = vmatprep.subr.bf16.mxu0 0
    %2186 = vmatpush1.bf16.xpose.msra.mxu0 0
    %2187 = vmatprep.mubr.bf16.mxu0 0
    %2188 = vmatmul.mubr.bf16.gmra.mrb[0].mxu0 %v2150
    %v2189 = vpop.f32.mrb[0].mxu0
    %v2190 = vadd.f32 0.0, %v2189
    %v2191 = vpop.f32.mrb[0].mxu0
    %v2192 = vpop.f32.mrb[0].mxu0
    %v2193 = vpop.f32.mrb[0].mxu0
    %2194 = vdwg.mxu0
    %2195 = vrot.lane.b32.xlu0 %v180, 112
    %v2196 = vpop.permute.xlu0 %2195
    %2197 = vrot.lane.b32.xlu0 %v180, 80
    %v2198 = vpop.permute.xlu0 %2197
    %v2200 = vsel %vm186, %v2196, 0
    %v2203 = vsel %vm186, %v2198, 0
    %2205 = vmatprep.subr.bf16.mxu0 0
    %2206 = vmatpush1.bf16.xpose.msra.mxu0 %v2203
    %2207 = vmatprep.subr.bf16.mxu0 0
    %2208 = vmatpush1.bf16.xpose.msra.mxu0 0
    %2209 = vmatprep.subr.bf16.mxu0 0
    %2210 = vmatpush1.bf16.xpose.msra.mxu0 0
    %2211 = vmatprep.subr.bf16.mxu0 0
    %2212 = vmatpush1.bf16.xpose.msra.mxu0 0
    %2213 = vmatprep.subr.bf16.mxu0 0
    %2214 = vmatpush1.bf16.xpose.msra.mxu0 0
    %2215 = vmatprep.subr.bf16.mxu0 0
    %2216 = vmatpush1.bf16.xpose.msra.mxu0 0
    %2217 = vmatprep.subr.bf16.mxu0 0
    %2218 = vmatpush1.bf16.xpose.msra.mxu0 0
    %2219 = vmatprep.subr.bf16.mxu0 0
    %2220 = vmatpush1.bf16.xpose.msra.mxu0 0
    %2221 = vmatprep.subr.bf16.mxu0 0
    %2222 = vmatpush1.bf16.xpose.msra.mxu0 0
    %2223 = vmatprep.subr.bf16.mxu0 0
    %2224 = vmatpush1.bf16.xpose.msra.mxu0 0
    %2225 = vmatprep.subr.bf16.mxu0 0
    %2226 = vmatpush1.bf16.xpose.msra.mxu0 0
    %2227 = vmatprep.subr.bf16.mxu0 0
    %2228 = vmatpush1.bf16.xpose.msra.mxu0 0
    %2229 = vmatprep.subr.bf16.mxu0 0
    %2230 = vmatpush1.bf16.xpose.msra.mxu0 0
    %2231 = vmatprep.subr.bf16.mxu0 0
    %2232 = vmatpush1.bf16.xpose.msra.mxu0 0
    %2233 = vmatprep.subr.bf16.mxu0 0
    %2234 = vmatpush1.bf16.xpose.msra.mxu0 0
    %2235 = vmatprep.subr.bf16.mxu0 0
    %2236 = vmatpush1.bf16.xpose.msra.mxu0 0
    %2237 = vmatprep.mubr.bf16.mxu0 0
    %2238 = vmatmul.mubr.bf16.gmra.mrb[0].mxu0 %v2200
    %v2239 = vpop.f32.mrb[0].mxu0
    %v2240 = vadd.f32 0.0, %v2239
    %v2241 = vpop.f32.mrb[0].mxu0
    %v2242 = vpop.f32.mrb[0].mxu0
    %v2243 = vpop.f32.mrb[0].mxu0
    %2244 = vdwg.mxu0
    %2245 = vrot.lane.b32.xlu0 %v181, 112
    %v2246 = vpop.permute.xlu0 %2245
    %2247 = vrot.lane.b32.xlu0 %v181, 80
    %v2248 = vpop.permute.xlu0 %2247
    %v2250 = vsel %vm186, %v2246, 0
    %v2253 = vsel %vm186, %v2248, 0
    %2255 = vmatprep.subr.bf16.mxu0 0
    %2256 = vmatpush1.bf16.xpose.msra.mxu0 %v2253
    %2257 = vmatprep.subr.bf16.mxu0 0
    %2258 = vmatpush1.bf16.xpose.msra.mxu0 0
    %2259 = vmatprep.subr.bf16.mxu0 0
    %2260 = vmatpush1.bf16.xpose.msra.mxu0 0
    %2261 = vmatprep.subr.bf16.mxu0 0
    %2262 = vmatpush1.bf16.xpose.msra.mxu0 0
    %2263 = vmatprep.subr.bf16.mxu0 0
    %2264 = vmatpush1.bf16.xpose.msra.mxu0 0
    %2265 = vmatprep.subr.bf16.mxu0 0
    %2266 = vmatpush1.bf16.xpose.msra.mxu0 0
    %2267 = vmatprep.subr.bf16.mxu0 0
    %2268 = vmatpush1.bf16.xpose.msra.mxu0 0
    %2269 = vmatprep.subr.bf16.mxu0 0
    %2270 = vmatpush1.bf16.xpose.msra.mxu0 0
    %2271 = vmatprep.subr.bf16.mxu0 0
    %2272 = vmatpush1.bf16.xpose.msra.mxu0 0
    %2273 = vmatprep.subr.bf16.mxu0 0
    %2274 = vmatpush1.bf16.xpose.msra.mxu0 0
    %2275 = vmatprep.subr.bf16.mxu0 0
    %2276 = vmatpush1.bf16.xpose.msra.mxu0 0
    %2277 = vmatprep.subr.bf16.mxu0 0
    %2278 = vmatpush1.bf16.xpose.msra.mxu0 0
    %2279 = vmatprep.subr.bf16.mxu0 0
    %2280 = vmatpush1.bf16.xpose.msra.mxu0 0
    %2281 = vmatprep.subr.bf16.mxu0 0
    %2282 = vmatpush1.bf16.xpose.msra.mxu0 0
    %2283 = vmatprep.subr.bf16.mxu0 0
    %2284 = vmatpush1.bf16.xpose.msra.mxu0 0
    %2285 = vmatprep.subr.bf16.mxu0 0
    %2286 = vmatpush1.bf16.xpose.msra.mxu0 0
    %2287 = vmatprep.mubr.bf16.mxu0 0
    %2288 = vmatmul.mubr.bf16.gmra.mrb[0].mxu0 %v2250
    %v2289 = vpop.f32.mrb[0].mxu0
    %v2290 = vadd.f32 0.0, %v2289
    %v2291 = vpop.f32.mrb[0].mxu0
    %v2292 = vpop.f32.mrb[0].mxu0
    %v2293 = vpop.f32.mrb[0].mxu0
    %2294 = vdwg.mxu0
    %2295 = vrot.lane.b32.xlu0 %v182, 112
    %v2296 = vpop.permute.xlu0 %2295
    %2297 = vrot.lane.b32.xlu0 %v182, 80
    %v2298 = vpop.permute.xlu0 %2297
    %v2300 = vsel %vm186, %v2296, 0
    %v2303 = vsel %vm186, %v2298, 0
    %2305 = vmatprep.subr.bf16.mxu0 0
    %2306 = vmatpush1.bf16.xpose.msra.mxu0 %v2303
    %2307 = vmatprep.subr.bf16.mxu0 0
    %2308 = vmatpush1.bf16.xpose.msra.mxu0 0
    %2309 = vmatprep.subr.bf16.mxu0 0
    %2310 = vmatpush1.bf16.xpose.msra.mxu0 0
    %2311 = vmatprep.subr.bf16.mxu0 0
    %2312 = vmatpush1.bf16.xpose.msra.mxu0 0
    %2313 = vmatprep.subr.bf16.mxu0 0
    %2314 = vmatpush1.bf16.xpose.msra.mxu0 0
    %2315 = vmatprep.subr.bf16.mxu0 0
    %2316 = vmatpush1.bf16.xpose.msra.mxu0 0
    %2317 = vmatprep.subr.bf16.mxu0 0
    %2318 = vmatpush1.bf16.xpose.msra.mxu0 0
    %2319 = vmatprep.subr.bf16.mxu0 0
    %2320 = vmatpush1.bf16.xpose.msra.mxu0 0
    %2321 = vmatprep.subr.bf16.mxu0 0
    %2322 = vmatpush1.bf16.xpose.msra.mxu0 0
    %2323 = vmatprep.subr.bf16.mxu0 0
    %2324 = vmatpush1.bf16.xpose.msra.mxu0 0
    %2325 = vmatprep.subr.bf16.mxu0 0
    %2326 = vmatpush1.bf16.xpose.msra.mxu0 0
    %2327 = vmatprep.subr.bf16.mxu0 0
    %2328 = vmatpush1.bf16.xpose.msra.mxu0 0
    %2329 = vmatprep.subr.bf16.mxu0 0
    %2330 = vmatpush1.bf16.xpose.msra.mxu0 0
    %2331 = vmatprep.subr.bf16.mxu0 0
    %2332 = vmatpush1.bf16.xpose.msra.mxu0 0
    %2333 = vmatprep.subr.bf16.mxu0 0
    %2334 = vmatpush1.bf16.xpose.msra.mxu0 0
    %2335 = vmatprep.subr.bf16.mxu0 0
    %2336 = vmatpush1.bf16.xpose.msra.mxu0 0
    %2337 = vmatprep.mubr.bf16.mxu0 0
    %2338 = vmatmul.mubr.bf16.gmra.mrb[0].mxu0 %v2300
    %v2339 = vpop.f32.mrb[0].mxu0
    %v2340 = vadd.f32 0.0, %v2339
    %v2341 = vpop.f32.mrb[0].mxu0
    %v2342 = vpop.f32.mrb[0].mxu0
    %v2343 = vpop.f32.mrb[0].mxu0
    %2344 = vdwg.mxu0
    %2345 = vrot.lane.b32.xlu0 %v183, 112
    %v2346 = vpop.permute.xlu0 %2345
    %2347 = vrot.lane.b32.xlu0 %v183, 80
    %v2348 = vpop.permute.xlu0 %2347
    %v2350 = vsel %vm186, %v2346, 0
    %v2353 = vsel %vm186, %v2348, 0
    %2355 = vmatprep.subr.bf16.mxu0 0
    %2356 = vmatpush1.bf16.xpose.msra.mxu0 %v2353
    %2357 = vmatprep.subr.bf16.mxu0 0
    %2358 = vmatpush1.bf16.xpose.msra.mxu0 0
    %2359 = vmatprep.subr.bf16.mxu0 0
    %2360 = vmatpush1.bf16.xpose.msra.mxu0 0
    %2361 = vmatprep.subr.bf16.mxu0 0
    %2362 = vmatpush1.bf16.xpose.msra.mxu0 0
    %2363 = vmatprep.subr.bf16.mxu0 0
    %2364 = vmatpush1.bf16.xpose.msra.mxu0 0
    %2365 = vmatprep.subr.bf16.mxu0 0
    %2366 = vmatpush1.bf16.xpose.msra.mxu0 0
    %2367 = vmatprep.subr.bf16.mxu0 0
    %2368 = vmatpush1.bf16.xpose.msra.mxu0 0
    %2369 = vmatprep.subr.bf16.mxu0 0
    %2370 = vmatpush1.bf16.xpose.msra.mxu0 0
    %2371 = vmatprep.subr.bf16.mxu0 0
    %2372 = vmatpush1.bf16.xpose.msra.mxu0 0
    %2373 = vmatprep.subr.bf16.mxu0 0
    %2374 = vmatpush1.bf16.xpose.msra.mxu0 0
    %2375 = vmatprep.subr.bf16.mxu0 0
    %2376 = vmatpush1.bf16.xpose.msra.mxu0 0
    %2377 = vmatprep.subr.bf16.mxu0 0
    %2378 = vmatpush1.bf16.xpose.msra.mxu0 0
    %2379 = vmatprep.subr.bf16.mxu0 0
    %2380 = vmatpush1.bf16.xpose.msra.mxu0 0
    %2381 = vmatprep.subr.bf16.mxu0 0
    %2382 = vmatpush1.bf16.xpose.msra.mxu0 0
    %2383 = vmatprep.subr.bf16.mxu0 0
    %2384 = vmatpush1.bf16.xpose.msra.mxu0 0
    %2385 = vmatprep.subr.bf16.mxu0 0
    %2386 = vmatpush1.bf16.xpose.msra.mxu0 0
    %2387 = vmatprep.mubr.bf16.mxu0 0
    %2388 = vmatmul.mubr.bf16.gmra.mrb[0].mxu0 %v2350
    %v2389 = vpop.f32.mrb[0].mxu0
    %v2390 = vadd.f32 0.0, %v2389
    %v2391 = vpop.f32.mrb[0].mxu0
    %v2392 = vpop.f32.mrb[0].mxu0
    %v2393 = vpop.f32.mrb[0].mxu0
    %2394 = vdwg.mxu0
    %v2395 = vmul.f32 %v2040, 0.35355338
    %v2396 = vmul.f32 %v2090, 0.35355338
    %v2397 = vmul.f32 %v2140, 0.35355338
    %v2398 = vmul.f32 %v2190, 0.35355338
    %v2399 = vmul.f32 %v2240, 0.35355338
    %v2400 = vmul.f32 %v2290, 0.35355338
    %v2401 = vmul.f32 %v2340, 0.35355338
    %v2402 = vmul.f32 %v2390, 0.35355338
    %v2403 = vsel %vm186, %v2395, -inf
    %2404 = vmax.xlane.f32.xlu0 %v2403
    %v2405 = vpop.xlane.xlu0 %2404
    %v2406 = vsel %vm186, %v2396, -inf
    %2407 = vmax.xlane.f32.xlu0 %v2406
    %v2408 = vpop.xlane.xlu0 %2407
    %v2409 = vsel %vm186, %v2397, -inf
    %2410 = vmax.xlane.f32.xlu0 %v2409
    %v2411 = vpop.xlane.xlu0 %2410
    %v2412 = vsel %vm186, %v2398, -inf
    %2413 = vmax.xlane.f32.xlu0 %v2412
    %v2414 = vpop.xlane.xlu0 %2413
    %v2415 = vsel %vm186, %v2399, -inf
    %2416 = vmax.xlane.f32.xlu0 %v2415
    %v2417 = vpop.xlane.xlu0 %2416
    %v2418 = vsel %vm186, %v2400, -inf
    %2419 = vmax.xlane.f32.xlu0 %v2418
    %v2420 = vpop.xlane.xlu0 %2419
    %v2421 = vsel %vm186, %v2401, -inf
    %2422 = vmax.xlane.f32.xlu0 %v2421
    %v2423 = vpop.xlane.xlu0 %2422
    %v2424 = vsel %vm186, %v2402, -inf
    %2425 = vmax.xlane.f32.xlu0 %v2424
    %v2426 = vpop.xlane.xlu0 %2425
    %v2427 = vsub.f32 %v2395, %v2405
    %v2428 = vsub.f32 %v2396, %v2408
    %v2429 = vsub.f32 %v2397, %v2411
    %v2430 = vsub.f32 %v2398, %v2414
    %v2431 = vsub.f32 %v2399, %v2417
    %v2432 = vsub.f32 %v2400, %v2420
    %v2433 = vsub.f32 %v2401, %v2423
    %v2434 = vsub.f32 %v2402, %v2426
    %v2435 = vmul.f32 %v2427, 1.442695
    %v2436 = vpow.pop %v2435
    %v2437 = vmul.f32 %v2428, 1.442695
    %v2438 = vpow.pop %v2437
    %v2439 = vmul.f32 %v2429, 1.442695
    %v2440 = vpow.pop %v2439
    %v2441 = vmul.f32 %v2430, 1.442695
    %v2442 = vpow.pop %v2441
    %v2443 = vmul.f32 %v2431, 1.442695
    %v2444 = vpow.pop %v2443
    %v2445 = vmul.f32 %v2432, 1.442695
    %v2446 = vpow.pop %v2445
    %v2447 = vmul.f32 %v2433, 1.442695
    %v2448 = vpow.pop %v2447
    %v2449 = vmul.f32 %v2434, 1.442695
    %v2450 = vpow.pop %v2449
    %v2451 = vsel %vm186, %v2436, 0.0
    %2452 = vadd.xlane.f32.xlu0 %v2451
    %v2453 = vpop.xlane.xlu0 %2452
    %v2454 = vsel %vm186, %v2438, 0.0
    %2455 = vadd.xlane.f32.xlu0 %v2454
    %v2456 = vpop.xlane.xlu0 %2455
    %v2457 = vsel %vm186, %v2440, 0.0
    %2458 = vadd.xlane.f32.xlu0 %v2457
    %v2459 = vpop.xlane.xlu0 %2458
    %v2460 = vsel %vm186, %v2442, 0.0
    %2461 = vadd.xlane.f32.xlu0 %v2460
    %v2462 = vpop.xlane.xlu0 %2461
    %v2463 = vsel %vm186, %v2444, 0.0
    %2464 = vadd.xlane.f32.xlu0 %v2463
    %v2465 = vpop.xlane.xlu0 %2464
    %v2466 = vsel %vm186, %v2446, 0.0
    %2467 = vadd.xlane.f32.xlu0 %v2466
    %v2468 = vpop.xlane.xlu0 %2467
    %v2469 = vsel %vm186, %v2448, 0.0
    %2470 = vadd.xlane.f32.xlu0 %v2469
    %v2471 = vpop.xlane.xlu0 %2470
    %v2472 = vsel %vm186, %v2450, 0.0
    %2473 = vadd.xlane.f32.xlu0 %v2472
    %v2474 = vpop.xlane.xlu0 %2473
    %v2475 = vrcp.pop %v2453
    %v2476 = vrcp.pop %v2456
    %v2477 = vrcp.pop %v2459
    %v2478 = vrcp.pop %v2462
    %v2479 = vrcp.pop %v2465
    %v2480 = vrcp.pop %v2468
    %v2481 = vrcp.pop %v2471
    %v2482 = vrcp.pop %v2474
    %v2483 = vmul.f32 %v2436, %v2475
    %v2484 = vmul.f32 %v2438, %v2476
    %v2485 = vmul.f32 %v2440, %v2477
    %v2486 = vmul.f32 %v2442, %v2478
    %v2487 = vmul.f32 %v2444, %v2479
    %v2488 = vmul.f32 %v2446, %v2480
    %v2489 = vmul.f32 %v2448, %v2481
    %v2490 = vmul.f32 %v2450, %v2482
    %v2491 = vpack.c.bf16 %v2483, %v2483
    %v2492 = vpack.c.bf16 %v2484, %v2484
    %v2493 = vpack.c.bf16 %v2485, %v2485
    %v2494 = vpack.c.bf16 %v2486, %v2486
    %v2495 = vpack.c.bf16 %v2487, %v2487
    %v2496 = vpack.c.bf16 %v2488, %v2488
    %v2497 = vpack.c.bf16 %v2489, %v2489
    %v2498 = vpack.c.bf16 %v2490, %v2490
    %2499 = vrot.lane.b32.xlu0 %v176, 48
    %v2500 = vpop.permute.xlu0 %2499
    %v2502 = vsel %vm186, %v2491, 0
    %v2505 = vsel %vm678, %v2500, 0
    %2507 = vmatprep.subr.bf16.mxu0 0
    %2508 = vmatpush1.bf16.msra.mxu0 %v2505
    %2509 = vmatprep.subr.bf16.mxu0 0
    %2510 = vmatpush1.bf16.msra.mxu0 0
    %2511 = vmatprep.subr.bf16.mxu0 0
    %2512 = vmatpush1.bf16.msra.mxu0 0
    %2513 = vmatprep.subr.bf16.mxu0 0
    %2514 = vmatpush1.bf16.msra.mxu0 0
    %2515 = vmatprep.subr.bf16.mxu0 0
    %2516 = vmatpush1.bf16.msra.mxu0 0
    %2517 = vmatprep.subr.bf16.mxu0 0
    %2518 = vmatpush1.bf16.msra.mxu0 0
    %2519 = vmatprep.subr.bf16.mxu0 0
    %2520 = vmatpush1.bf16.msra.mxu0 0
    %2521 = vmatprep.subr.bf16.mxu0 0
    %2522 = vmatpush1.bf16.msra.mxu0 0
    %2523 = vmatprep.subr.bf16.mxu0 0
    %2524 = vmatpush1.bf16.msra.mxu0 0
    %2525 = vmatprep.subr.bf16.mxu0 0
    %2526 = vmatpush1.bf16.msra.mxu0 0
    %2527 = vmatprep.subr.bf16.mxu0 0
    %2528 = vmatpush1.bf16.msra.mxu0 0
    %2529 = vmatprep.subr.bf16.mxu0 0
    %2530 = vmatpush1.bf16.msra.mxu0 0
    %2531 = vmatprep.subr.bf16.mxu0 0
    %2532 = vmatpush1.bf16.msra.mxu0 0
    %2533 = vmatprep.subr.bf16.mxu0 0
    %2534 = vmatpush1.bf16.msra.mxu0 0
    %2535 = vmatprep.subr.bf16.mxu0 0
    %2536 = vmatpush1.bf16.msra.mxu0 0
    %2537 = vmatprep.subr.bf16.mxu0 0
    %2538 = vmatpush1.bf16.msra.mxu0 0
    %2539 = vmatprep.mubr.bf16.mxu0 0
    %2540 = vmatmul.mubr.bf16.gmra.mrb[0].mxu0 %v2502
    %v2541 = vpop.f32.mrb[0].mxu0
    %v2542 = vadd.f32 0.0, %v2541
    %v2543 = vpop.f32.mrb[0].mxu0
    %v2544 = vpop.f32.mrb[0].mxu0
    %v2545 = vpop.f32.mrb[0].mxu0
    %2546 = vdwg.mxu0
    %2547 = vrot.lane.b32.xlu0 %v177, 48
    %v2548 = vpop.permute.xlu0 %2547
    %v2550 = vsel %vm186, %v2492, 0
    %v2553 = vsel %vm678, %v2548, 0
    %2555 = vmatprep.subr.bf16.mxu0 0
    %2556 = vmatpush1.bf16.msra.mxu0 %v2553
    %2557 = vmatprep.subr.bf16.mxu0 0
    %2558 = vmatpush1.bf16.msra.mxu0 0
    %2559 = vmatprep.subr.bf16.mxu0 0
    %2560 = vmatpush1.bf16.msra.mxu0 0
    %2561 = vmatprep.subr.bf16.mxu0 0
    %2562 = vmatpush1.bf16.msra.mxu0 0
    %2563 = vmatprep.subr.bf16.mxu0 0
    %2564 = vmatpush1.bf16.msra.mxu0 0
    %2565 = vmatprep.subr.bf16.mxu0 0
    %2566 = vmatpush1.bf16.msra.mxu0 0
    %2567 = vmatprep.subr.bf16.mxu0 0
    %2568 = vmatpush1.bf16.msra.mxu0 0
    %2569 = vmatprep.subr.bf16.mxu0 0
    %2570 = vmatpush1.bf16.msra.mxu0 0
    %2571 = vmatprep.subr.bf16.mxu0 0
    %2572 = vmatpush1.bf16.msra.mxu0 0
    %2573 = vmatprep.subr.bf16.mxu0 0
    %2574 = vmatpush1.bf16.msra.mxu0 0
    %2575 = vmatprep.subr.bf16.mxu0 0
    %2576 = vmatpush1.bf16.msra.mxu0 0
    %2577 = vmatprep.subr.bf16.mxu0 0
    %2578 = vmatpush1.bf16.msra.mxu0 0
    %2579 = vmatprep.subr.bf16.mxu0 0
    %2580 = vmatpush1.bf16.msra.mxu0 0
    %2581 = vmatprep.subr.bf16.mxu0 0
    %2582 = vmatpush1.bf16.msra.mxu0 0
    %2583 = vmatprep.subr.bf16.mxu0 0
    %2584 = vmatpush1.bf16.msra.mxu0 0
    %2585 = vmatprep.subr.bf16.mxu0 0
    %2586 = vmatpush1.bf16.msra.mxu0 0
    %2587 = vmatprep.mubr.bf16.mxu0 0
    %2588 = vmatmul.mubr.bf16.gmra.mrb[0].mxu0 %v2550
    %v2589 = vpop.f32.mrb[0].mxu0
    %v2590 = vadd.f32 0.0, %v2589
    %v2591 = vpop.f32.mrb[0].mxu0
    %v2592 = vpop.f32.mrb[0].mxu0
    %v2593 = vpop.f32.mrb[0].mxu0
    %2594 = vdwg.mxu0
    %2595 = vrot.lane.b32.xlu0 %v178, 48
    %v2596 = vpop.permute.xlu0 %2595
    %v2598 = vsel %vm186, %v2493, 0
    %v2601 = vsel %vm678, %v2596, 0
    %2603 = vmatprep.subr.bf16.mxu0 0
    %2604 = vmatpush1.bf16.msra.mxu0 %v2601
    %2605 = vmatprep.subr.bf16.mxu0 0
    %2606 = vmatpush1.bf16.msra.mxu0 0
    %2607 = vmatprep.subr.bf16.mxu0 0
    %2608 = vmatpush1.bf16.msra.mxu0 0
    %2609 = vmatprep.subr.bf16.mxu0 0
    %2610 = vmatpush1.bf16.msra.mxu0 0
    %2611 = vmatprep.subr.bf16.mxu0 0
    %2612 = vmatpush1.bf16.msra.mxu0 0
    %2613 = vmatprep.subr.bf16.mxu0 0
    %2614 = vmatpush1.bf16.msra.mxu0 0
    %2615 = vmatprep.subr.bf16.mxu0 0
    %2616 = vmatpush1.bf16.msra.mxu0 0
    %2617 = vmatprep.subr.bf16.mxu0 0
    %2618 = vmatpush1.bf16.msra.mxu0 0
    %2619 = vmatprep.subr.bf16.mxu0 0
    %2620 = vmatpush1.bf16.msra.mxu0 0
    %2621 = vmatprep.subr.bf16.mxu0 0
    %2622 = vmatpush1.bf16.msra.mxu0 0
    %2623 = vmatprep.subr.bf16.mxu0 0
    %2624 = vmatpush1.bf16.msra.mxu0 0
    %2625 = vmatprep.subr.bf16.mxu0 0
    %2626 = vmatpush1.bf16.msra.mxu0 0
    %2627 = vmatprep.subr.bf16.mxu0 0
    %2628 = vmatpush1.bf16.msra.mxu0 0
    %2629 = vmatprep.subr.bf16.mxu0 0
    %2630 = vmatpush1.bf16.msra.mxu0 0
    %2631 = vmatprep.subr.bf16.mxu0 0
    %2632 = vmatpush1.bf16.msra.mxu0 0
    %2633 = vmatprep.subr.bf16.mxu0 0
    %2634 = vmatpush1.bf16.msra.mxu0 0
    %2635 = vmatprep.mubr.bf16.mxu0 0
    %2636 = vmatmul.mubr.bf16.gmra.mrb[0].mxu0 %v2598
    %v2637 = vpop.f32.mrb[0].mxu0
    %v2638 = vadd.f32 0.0, %v2637
    %v2639 = vpop.f32.mrb[0].mxu0
    %v2640 = vpop.f32.mrb[0].mxu0
    %v2641 = vpop.f32.mrb[0].mxu0
    %2642 = vdwg.mxu0
    %2643 = vrot.lane.b32.xlu0 %v179, 48
    %v2644 = vpop.permute.xlu0 %2643
    %v2646 = vsel %vm186, %v2494, 0
    %v2649 = vsel %vm678, %v2644, 0
    %2651 = vmatprep.subr.bf16.mxu0 0
    %2652 = vmatpush1.bf16.msra.mxu0 %v2649
    %2653 = vmatprep.subr.bf16.mxu0 0
    %2654 = vmatpush1.bf16.msra.mxu0 0
    %2655 = vmatprep.subr.bf16.mxu0 0
    %2656 = vmatpush1.bf16.msra.mxu0 0
    %2657 = vmatprep.subr.bf16.mxu0 0
    %2658 = vmatpush1.bf16.msra.mxu0 0
    %2659 = vmatprep.subr.bf16.mxu0 0
    %2660 = vmatpush1.bf16.msra.mxu0 0
    %2661 = vmatprep.subr.bf16.mxu0 0
    %2662 = vmatpush1.bf16.msra.mxu0 0
    %2663 = vmatprep.subr.bf16.mxu0 0
    %2664 = vmatpush1.bf16.msra.mxu0 0
    %2665 = vmatprep.subr.bf16.mxu0 0
    %2666 = vmatpush1.bf16.msra.mxu0 0
    %2667 = vmatprep.subr.bf16.mxu0 0
    %2668 = vmatpush1.bf16.msra.mxu0 0
    %2669 = vmatprep.subr.bf16.mxu0 0
    %2670 = vmatpush1.bf16.msra.mxu0 0
    %2671 = vmatprep.subr.bf16.mxu0 0
    %2672 = vmatpush1.bf16.msra.mxu0 0
    %2673 = vmatprep.subr.bf16.mxu0 0
    %2674 = vmatpush1.bf16.msra.mxu0 0
    %2675 = vmatprep.subr.bf16.mxu0 0
    %2676 = vmatpush1.bf16.msra.mxu0 0
    %2677 = vmatprep.subr.bf16.mxu0 0
    %2678 = vmatpush1.bf16.msra.mxu0 0
    %2679 = vmatprep.subr.bf16.mxu0 0
    %2680 = vmatpush1.bf16.msra.mxu0 0
    %2681 = vmatprep.subr.bf16.mxu0 0
    %2682 = vmatpush1.bf16.msra.mxu0 0
    %2683 = vmatprep.mubr.bf16.mxu0 0
    %2684 = vmatmul.mubr.bf16.gmra.mrb[0].mxu0 %v2646
    %v2685 = vpop.f32.mrb[0].mxu0
    %v2686 = vadd.f32 0.0, %v2685
    %v2687 = vpop.f32.mrb[0].mxu0
    %v2688 = vpop.f32.mrb[0].mxu0
    %v2689 = vpop.f32.mrb[0].mxu0
    %2690 = vdwg.mxu0
    %2691 = vrot.lane.b32.xlu0 %v180, 48
    %v2692 = vpop.permute.xlu0 %2691
    %v2694 = vsel %vm186, %v2495, 0
    %v2697 = vsel %vm678, %v2692, 0
    %2699 = vmatprep.subr.bf16.mxu0 0
    %2700 = vmatpush1.bf16.msra.mxu0 %v2697
    %2701 = vmatprep.subr.bf16.mxu0 0
    %2702 = vmatpush1.bf16.msra.mxu0 0
    %2703 = vmatprep.subr.bf16.mxu0 0
    %2704 = vmatpush1.bf16.msra.mxu0 0
    %2705 = vmatprep.subr.bf16.mxu0 0
    %2706 = vmatpush1.bf16.msra.mxu0 0
    %2707 = vmatprep.subr.bf16.mxu0 0
    %2708 = vmatpush1.bf16.msra.mxu0 0
    %2709 = vmatprep.subr.bf16.mxu0 0
    %2710 = vmatpush1.bf16.msra.mxu0 0
    %2711 = vmatprep.subr.bf16.mxu0 0
    %2712 = vmatpush1.bf16.msra.mxu0 0
    %2713 = vmatprep.subr.bf16.mxu0 0
    %2714 = vmatpush1.bf16.msra.mxu0 0
    %2715 = vmatprep.subr.bf16.mxu0 0
    %2716 = vmatpush1.bf16.msra.mxu0 0
    %2717 = vmatprep.subr.bf16.mxu0 0
    %2718 = vmatpush1.bf16.msra.mxu0 0
    %2719 = vmatprep.subr.bf16.mxu0 0
    %2720 = vmatpush1.bf16.msra.mxu0 0
    %2721 = vmatprep.subr.bf16.mxu0 0
    %2722 = vmatpush1.bf16.msra.mxu0 0
    %2723 = vmatprep.subr.bf16.mxu0 0
    %2724 = vmatpush1.bf16.msra.mxu0 0
    %2725 = vmatprep.subr.bf16.mxu0 0
    %2726 = vmatpush1.bf16.msra.mxu0 0
    %2727 = vmatprep.subr.bf16.mxu0 0
    %2728 = vmatpush1.bf16.msra.mxu0 0
    %2729 = vmatprep.subr.bf16.mxu0 0
    %2730 = vmatpush1.bf16.msra.mxu0 0
    %2731 = vmatprep.mubr.bf16.mxu0 0
    %2732 = vmatmul.mubr.bf16.gmra.mrb[0].mxu0 %v2694
    %v2733 = vpop.f32.mrb[0].mxu0
    %v2734 = vadd.f32 0.0, %v2733
    %v2735 = vpop.f32.mrb[0].mxu0
    %v2736 = vpop.f32.mrb[0].mxu0
    %v2737 = vpop.f32.mrb[0].mxu0
    %2738 = vdwg.mxu0
    %2739 = vrot.lane.b32.xlu0 %v181, 48
    %v2740 = vpop.permute.xlu0 %2739
    %v2742 = vsel %vm186, %v2496, 0
    %v2745 = vsel %vm678, %v2740, 0
    %2747 = vmatprep.subr.bf16.mxu0 0
    %2748 = vmatpush1.bf16.msra.mxu0 %v2745
    %2749 = vmatprep.subr.bf16.mxu0 0
    %2750 = vmatpush1.bf16.msra.mxu0 0
    %2751 = vmatprep.subr.bf16.mxu0 0
    %2752 = vmatpush1.bf16.msra.mxu0 0
    %2753 = vmatprep.subr.bf16.mxu0 0
    %2754 = vmatpush1.bf16.msra.mxu0 0
    %2755 = vmatprep.subr.bf16.mxu0 0
    %2756 = vmatpush1.bf16.msra.mxu0 0
    %2757 = vmatprep.subr.bf16.mxu0 0
    %2758 = vmatpush1.bf16.msra.mxu0 0
    %2759 = vmatprep.subr.bf16.mxu0 0
    %2760 = vmatpush1.bf16.msra.mxu0 0
    %2761 = vmatprep.subr.bf16.mxu0 0
    %2762 = vmatpush1.bf16.msra.mxu0 0
    %2763 = vmatprep.subr.bf16.mxu0 0
    %2764 = vmatpush1.bf16.msra.mxu0 0
    %2765 = vmatprep.subr.bf16.mxu0 0
    %2766 = vmatpush1.bf16.msra.mxu0 0
    %2767 = vmatprep.subr.bf16.mxu0 0
    %2768 = vmatpush1.bf16.msra.mxu0 0
    %2769 = vmatprep.subr.bf16.mxu0 0
    %2770 = vmatpush1.bf16.msra.mxu0 0
    %2771 = vmatprep.subr.bf16.mxu0 0
    %2772 = vmatpush1.bf16.msra.mxu0 0
    %2773 = vmatprep.subr.bf16.mxu0 0
    %2774 = vmatpush1.bf16.msra.mxu0 0
    %2775 = vmatprep.subr.bf16.mxu0 0
    %2776 = vmatpush1.bf16.msra.mxu0 0
    %2777 = vmatprep.subr.bf16.mxu0 0
    %2778 = vmatpush1.bf16.msra.mxu0 0
    %2779 = vmatprep.mubr.bf16.mxu0 0
    %2780 = vmatmul.mubr.bf16.gmra.mrb[0].mxu0 %v2742
    %v2781 = vpop.f32.mrb[0].mxu0
    %v2782 = vadd.f32 0.0, %v2781
    %v2783 = vpop.f32.mrb[0].mxu0
    %v2784 = vpop.f32.mrb[0].mxu0
    %v2785 = vpop.f32.mrb[0].mxu0
    %2786 = vdwg.mxu0
    %2787 = vrot.lane.b32.xlu0 %v182, 48
    %v2788 = vpop.permute.xlu0 %2787
    %v2790 = vsel %vm186, %v2497, 0
    %v2793 = vsel %vm678, %v2788, 0
    %2795 = vmatprep.subr.bf16.mxu0 0
    %2796 = vmatpush1.bf16.msra.mxu0 %v2793
    %2797 = vmatprep.subr.bf16.mxu0 0
    %2798 = vmatpush1.bf16.msra.mxu0 0
    %2799 = vmatprep.subr.bf16.mxu0 0
    %2800 = vmatpush1.bf16.msra.mxu0 0
    %2801 = vmatprep.subr.bf16.mxu0 0
    %2802 = vmatpush1.bf16.msra.mxu0 0
    %2803 = vmatprep.subr.bf16.mxu0 0
    %2804 = vmatpush1.bf16.msra.mxu0 0
    %2805 = vmatprep.subr.bf16.mxu0 0
    %2806 = vmatpush1.bf16.msra.mxu0 0
    %2807 = vmatprep.subr.bf16.mxu0 0
    %2808 = vmatpush1.bf16.msra.mxu0 0
    %2809 = vmatprep.subr.bf16.mxu0 0
    %2810 = vmatpush1.bf16.msra.mxu0 0
    %2811 = vmatprep.subr.bf16.mxu0 0
    %2812 = vmatpush1.bf16.msra.mxu0 0
    %2813 = vmatprep.subr.bf16.mxu0 0
    %2814 = vmatpush1.bf16.msra.mxu0 0
    %2815 = vmatprep.subr.bf16.mxu0 0
    %2816 = vmatpush1.bf16.msra.mxu0 0
    %2817 = vmatprep.subr.bf16.mxu0 0
    %2818 = vmatpush1.bf16.msra.mxu0 0
    %2819 = vmatprep.subr.bf16.mxu0 0
    %2820 = vmatpush1.bf16.msra.mxu0 0
    %2821 = vmatprep.subr.bf16.mxu0 0
    %2822 = vmatpush1.bf16.msra.mxu0 0
    %2823 = vmatprep.subr.bf16.mxu0 0
    %2824 = vmatpush1.bf16.msra.mxu0 0
    %2825 = vmatprep.subr.bf16.mxu0 0
    %2826 = vmatpush1.bf16.msra.mxu0 0
    %2827 = vmatprep.mubr.bf16.mxu0 0
    %2828 = vmatmul.mubr.bf16.gmra.mrb[0].mxu0 %v2790
    %v2829 = vpop.f32.mrb[0].mxu0
    %v2830 = vadd.f32 0.0, %v2829
    %v2831 = vpop.f32.mrb[0].mxu0
    %v2832 = vpop.f32.mrb[0].mxu0
    %v2833 = vpop.f32.mrb[0].mxu0
    %2834 = vdwg.mxu0
    %2835 = vrot.lane.b32.xlu0 %v183, 48
    %v2836 = vpop.permute.xlu0 %2835
    %v2838 = vsel %vm186, %v2498, 0
    %v2841 = vsel %vm678, %v2836, 0
    %2843 = vmatprep.subr.bf16.mxu0 0
    %2844 = vmatpush1.bf16.msra.mxu0 %v2841
    %2845 = vmatprep.subr.bf16.mxu0 0
    %2846 = vmatpush1.bf16.msra.mxu0 0
    %2847 = vmatprep.subr.bf16.mxu0 0
    %2848 = vmatpush1.bf16.msra.mxu0 0
    %2849 = vmatprep.subr.bf16.mxu0 0
    %2850 = vmatpush1.bf16.msra.mxu0 0
    %2851 = vmatprep.subr.bf16.mxu0 0
    %2852 = vmatpush1.bf16.msra.mxu0 0
    %2853 = vmatprep.subr.bf16.mxu0 0
    %2854 = vmatpush1.bf16.msra.mxu0 0
    %2855 = vmatprep.subr.bf16.mxu0 0
    %2856 = vmatpush1.bf16.msra.mxu0 0
    %2857 = vmatprep.subr.bf16.mxu0 0
    %2858 = vmatpush1.bf16.msra.mxu0 0
    %2859 = vmatprep.subr.bf16.mxu0 0
    %2860 = vmatpush1.bf16.msra.mxu0 0
    %2861 = vmatprep.subr.bf16.mxu0 0
    %2862 = vmatpush1.bf16.msra.mxu0 0
    %2863 = vmatprep.subr.bf16.mxu0 0
    %2864 = vmatpush1.bf16.msra.mxu0 0
    %2865 = vmatprep.subr.bf16.mxu0 0
    %2866 = vmatpush1.bf16.msra.mxu0 0
    %2867 = vmatprep.subr.bf16.mxu0 0
    %2868 = vmatpush1.bf16.msra.mxu0 0
    %2869 = vmatprep.subr.bf16.mxu0 0
    %2870 = vmatpush1.bf16.msra.mxu0 0
    %2871 = vmatprep.subr.bf16.mxu0 0
    %2872 = vmatpush1.bf16.msra.mxu0 0
    %2873 = vmatprep.subr.bf16.mxu0 0
    %2874 = vmatpush1.bf16.msra.mxu0 0
    %2875 = vmatprep.mubr.bf16.mxu0 0
    %2876 = vmatmul.mubr.bf16.gmra.mrb[0].mxu0 %v2838
    %v2877 = vpop.f32.mrb[0].mxu0
    %v2878 = vadd.f32 0.0, %v2877
    %v2879 = vpop.f32.mrb[0].mxu0
    %v2880 = vpop.f32.mrb[0].mxu0
    %v2881 = vpop.f32.mrb[0].mxu0
    %2882 = vdwg.mxu0
    %2891 = vrot.lane.b32.xlu0 %v2542, 16
    %v2892 = vpop.permute.xlu0 %2891
    %2893 = vrot.lane.b32.xlu0 %v2590, 16
    %v2894 = vpop.permute.xlu0 %2893
    %2895 = vrot.lane.b32.xlu0 %v2638, 16
    %v2896 = vpop.permute.xlu0 %2895
    %2897 = vrot.lane.b32.xlu0 %v2686, 16
    %v2898 = vpop.permute.xlu0 %2897
    %2899 = vrot.lane.b32.xlu0 %v2734, 16
    %v2900 = vpop.permute.xlu0 %2899
    %2901 = vrot.lane.b32.xlu0 %v2782, 16
    %v2902 = vpop.permute.xlu0 %2901
    %2903 = vrot.lane.b32.xlu0 %v2830, 16
    %v2904 = vpop.permute.xlu0 %2903
    %2905 = vrot.lane.b32.xlu0 %v2878, 16
    %v2906 = vpop.permute.xlu0 %2905
    %vm2915 = vcmask 195712
    %2916 = vst.msk [vmem:[#allocation2] sm:$0xff] %vm2915, %v2892
    %2917 = vst.msk [vmem:[#allocation2 + $0x8] sm:$0xff] %vm2915, %v2894
    %2918 = vst.msk [vmem:[#allocation2 + $0x10] sm:$0xff] %vm2915, %v2896
    %2919 = vst.msk [vmem:[#allocation2 + $0x18] sm:$0xff] %vm2915, %v2898
    %2920 = vst.msk [vmem:[#allocation2 + $0x20] sm:$0xff] %vm2915, %v2900
    %2921 = vst.msk [vmem:[#allocation2 + $0x28] sm:$0xff] %vm2915, %v2902
    %2922 = vst.msk [vmem:[#allocation2 + $0x30] sm:$0xff] %vm2915, %v2904
    %2923 = vst.msk [vmem:[#allocation2 + $0x38] sm:$0xff] %vm2915, %v2906
    %2924 = vrot.lane.b32.xlu0 %v176, 104
    %v2925 = vpop.permute.xlu0 %2924
    %2926 = vrot.lane.b32.xlu0 %v176, 72
    %v2927 = vpop.permute.xlu0 %2926
    %v2929 = vsel %vm186, %v2925, 0
    %v2932 = vsel %vm186, %v2927, 0
    %2934 = vmatprep.subr.bf16.mxu0 0
    %2935 = vmatpush1.bf16.xpose.msra.mxu0 %v2932
    %2936 = vmatprep.subr.bf16.mxu0 0
    %2937 = vmatpush1.bf16.xpose.msra.mxu0 0
    %2938 = vmatprep.subr.bf16.mxu0 0
    %2939 = vmatpush1.bf16.xpose.msra.mxu0 0
    %2940 = vmatprep.subr.bf16.mxu0 0
    %2941 = vmatpush1.bf16.xpose.msra.mxu0 0
    %2942 = vmatprep.subr.bf16.mxu0 0
    %2943 = vmatpush1.bf16.xpose.msra.mxu0 0
    %2944 = vmatprep.subr.bf16.mxu0 0
    %2945 = vmatpush1.bf16.xpose.msra.mxu0 0
    %2946 = vmatprep.subr.bf16.mxu0 0
    %2947 = vmatpush1.bf16.xpose.msra.mxu0 0
    %2948 = vmatprep.subr.bf16.mxu0 0
    %2949 = vmatpush1.bf16.xpose.msra.mxu0 0
    %2950 = vmatprep.subr.bf16.mxu0 0
    %2951 = vmatpush1.bf16.xpose.msra.mxu0 0
    %2952 = vmatprep.subr.bf16.mxu0 0
    %2953 = vmatpush1.bf16.xpose.msra.mxu0 0
    %2954 = vmatprep.subr.bf16.mxu0 0
    %2955 = vmatpush1.bf16.xpose.msra.mxu0 0
    %2956 = vmatprep.subr.bf16.mxu0 0
    %2957 = vmatpush1.bf16.xpose.msra.mxu0 0
    %2958 = vmatprep.subr.bf16.mxu0 0
    %2959 = vmatpush1.bf16.xpose.msra.mxu0 0
    %2960 = vmatprep.subr.bf16.mxu0 0
    %2961 = vmatpush1.bf16.xpose.msra.mxu0 0
    %2962 = vmatprep.subr.bf16.mxu0 0
    %2963 = vmatpush1.bf16.xpose.msra.mxu0 0
    %2964 = vmatprep.subr.bf16.mxu0 0
    %2965 = vmatpush1.bf16.xpose.msra.mxu0 0
    %2966 = vmatprep.mubr.bf16.mxu0 0
    %2967 = vmatmul.mubr.bf16.gmra.mrb[0].mxu0 %v2929
    %v2968 = vpop.f32.mrb[0].mxu0
    %v2969 = vadd.f32 0.0, %v2968
    %v2970 = vpop.f32.mrb[0].mxu0
    %v2971 = vpop.f32.mrb[0].mxu0
    %v2972 = vpop.f32.mrb[0].mxu0
    %2973 = vdwg.mxu0
    %2974 = vrot.lane.b32.xlu0 %v177, 104
    %v2975 = vpop.permute.xlu0 %2974
    %2976 = vrot.lane.b32.xlu0 %v177, 72
    %v2977 = vpop.permute.xlu0 %2976
    %v2979 = vsel %vm186, %v2975, 0
    %v2982 = vsel %vm186, %v2977, 0
    %2984 = vmatprep.subr.bf16.mxu0 0
    %2985 = vmatpush1.bf16.xpose.msra.mxu0 %v2982
    %2986 = vmatprep.subr.bf16.mxu0 0
    %2987 = vmatpush1.bf16.xpose.msra.mxu0 0
    %2988 = vmatprep.subr.bf16.mxu0 0
    %2989 = vmatpush1.bf16.xpose.msra.mxu0 0
    %2990 = vmatprep.subr.bf16.mxu0 0
    %2991 = vmatpush1.bf16.xpose.msra.mxu0 0
    %2992 = vmatprep.subr.bf16.mxu0 0
    %2993 = vmatpush1.bf16.xpose.msra.mxu0 0
    %2994 = vmatprep.subr.bf16.mxu0 0
    %2995 = vmatpush1.bf16.xpose.msra.mxu0 0
    %2996 = vmatprep.subr.bf16.mxu0 0
    %2997 = vmatpush1.bf16.xpose.msra.mxu0 0
    %2998 = vmatprep.subr.bf16.mxu0 0
    %2999 = vmatpush1.bf16.xpose.msra.mxu0 0
    %3000 = vmatprep.subr.bf16.mxu0 0
    %3001 = vmatpush1.bf16.xpose.msra.mxu0 0
    %3002 = vmatprep.subr.bf16.mxu0 0
    %3003 = vmatpush1.bf16.xpose.msra.mxu0 0
    %3004 = vmatprep.subr.bf16.mxu0 0
    %3005 = vmatpush1.bf16.xpose.msra.mxu0 0
    %3006 = vmatprep.subr.bf16.mxu0 0
    %3007 = vmatpush1.bf16.xpose.msra.mxu0 0
    %3008 = vmatprep.subr.bf16.mxu0 0
    %3009 = vmatpush1.bf16.xpose.msra.mxu0 0
    %3010 = vmatprep.subr.bf16.mxu0 0
    %3011 = vmatpush1.bf16.xpose.msra.mxu0 0
    %3012 = vmatprep.subr.bf16.mxu0 0
    %3013 = vmatpush1.bf16.xpose.msra.mxu0 0
    %3014 = vmatprep.subr.bf16.mxu0 0
    %3015 = vmatpush1.bf16.xpose.msra.mxu0 0
    %3016 = vmatprep.mubr.bf16.mxu0 0
    %3017 = vmatmul.mubr.bf16.gmra.mrb[0].mxu0 %v2979
    %v3018 = vpop.f32.mrb[0].mxu0
    %v3019 = vadd.f32 0.0, %v3018
    %v3020 = vpop.f32.mrb[0].mxu0
    %v3021 = vpop.f32.mrb[0].mxu0
    %v3022 = vpop.f32.mrb[0].mxu0
    %3023 = vdwg.mxu0
    %3024 = vrot.lane.b32.xlu0 %v178, 104
    %v3025 = vpop.permute.xlu0 %3024
    %3026 = vrot.lane.b32.xlu0 %v178, 72
    %v3027 = vpop.permute.xlu0 %3026
    %v3029 = vsel %vm186, %v3025, 0
    %v3032 = vsel %vm186, %v3027, 0
    %3034 = vmatprep.subr.bf16.mxu0 0
    %3035 = vmatpush1.bf16.xpose.msra.mxu0 %v3032
    %3036 = vmatprep.subr.bf16.mxu0 0
    %3037 = vmatpush1.bf16.xpose.msra.mxu0 0
    %3038 = vmatprep.subr.bf16.mxu0 0
    %3039 = vmatpush1.bf16.xpose.msra.mxu0 0
    %3040 = vmatprep.subr.bf16.mxu0 0
    %3041 = vmatpush1.bf16.xpose.msra.mxu0 0
    %3042 = vmatprep.subr.bf16.mxu0 0
    %3043 = vmatpush1.bf16.xpose.msra.mxu0 0
    %3044 = vmatprep.subr.bf16.mxu0 0
    %3045 = vmatpush1.bf16.xpose.msra.mxu0 0
    %3046 = vmatprep.subr.bf16.mxu0 0
    %3047 = vmatpush1.bf16.xpose.msra.mxu0 0
    %3048 = vmatprep.subr.bf16.mxu0 0
    %3049 = vmatpush1.bf16.xpose.msra.mxu0 0
    %3050 = vmatprep.subr.bf16.mxu0 0
    %3051 = vmatpush1.bf16.xpose.msra.mxu0 0
    %3052 = vmatprep.subr.bf16.mxu0 0
    %3053 = vmatpush1.bf16.xpose.msra.mxu0 0
    %3054 = vmatprep.subr.bf16.mxu0 0
    %3055 = vmatpush1.bf16.xpose.msra.mxu0 0
    %3056 = vmatprep.subr.bf16.mxu0 0
    %3057 = vmatpush1.bf16.xpose.msra.mxu0 0
    %3058 = vmatprep.subr.bf16.mxu0 0
    %3059 = vmatpush1.bf16.xpose.msra.mxu0 0
    %3060 = vmatprep.subr.bf16.mxu0 0
    %3061 = vmatpush1.bf16.xpose.msra.mxu0 0
    %3062 = vmatprep.subr.bf16.mxu0 0
    %3063 = vmatpush1.bf16.xpose.msra.mxu0 0
    %3064 = vmatprep.subr.bf16.mxu0 0
    %3065 = vmatpush1.bf16.xpose.msra.mxu0 0
    %3066 = vmatprep.mubr.bf16.mxu0 0
    %3067 = vmatmul.mubr.bf16.gmra.mrb[0].mxu0 %v3029
    %v3068 = vpop.f32.mrb[0].mxu0
    %v3069 = vadd.f32 0.0, %v3068
    %v3070 = vpop.f32.mrb[0].mxu0
    %v3071 = vpop.f32.mrb[0].mxu0
    %v3072 = vpop.f32.mrb[0].mxu0
    %3073 = vdwg.mxu0
    %3074 = vrot.lane.b32.xlu0 %v179, 104
    %v3075 = vpop.permute.xlu0 %3074
    %3076 = vrot.lane.b32.xlu0 %v179, 72
    %v3077 = vpop.permute.xlu0 %3076
    %v3079 = vsel %vm186, %v3075, 0
    %v3082 = vsel %vm186, %v3077, 0
    %3084 = vmatprep.subr.bf16.mxu0 0
    %3085 = vmatpush1.bf16.xpose.msra.mxu0 %v3082
    %3086 = vmatprep.subr.bf16.mxu0 0
    %3087 = vmatpush1.bf16.xpose.msra.mxu0 0
    %3088 = vmatprep.subr.bf16.mxu0 0
    %3089 = vmatpush1.bf16.xpose.msra.mxu0 0
    %3090 = vmatprep.subr.bf16.mxu0 0
    %3091 = vmatpush1.bf16.xpose.msra.mxu0 0
    %3092 = vmatprep.subr.bf16.mxu0 0
    %3093 = vmatpush1.bf16.xpose.msra.mxu0 0
    %3094 = vmatprep.subr.bf16.mxu0 0
    %3095 = vmatpush1.bf16.xpose.msra.mxu0 0
    %3096 = vmatprep.subr.bf16.mxu0 0
    %3097 = vmatpush1.bf16.xpose.msra.mxu0 0
    %3098 = vmatprep.subr.bf16.mxu0 0
    %3099 = vmatpush1.bf16.xpose.msra.mxu0 0
    %3100 = vmatprep.subr.bf16.mxu0 0
    %3101 = vmatpush1.bf16.xpose.msra.mxu0 0
    %3102 = vmatprep.subr.bf16.mxu0 0
    %3103 = vmatpush1.bf16.xpose.msra.mxu0 0
    %3104 = vmatprep.subr.bf16.mxu0 0
    %3105 = vmatpush1.bf16.xpose.msra.mxu0 0
    %3106 = vmatprep.subr.bf16.mxu0 0
    %3107 = vmatpush1.bf16.xpose.msra.mxu0 0
    %3108 = vmatprep.subr.bf16.mxu0 0
    %3109 = vmatpush1.bf16.xpose.msra.mxu0 0
    %3110 = vmatprep.subr.bf16.mxu0 0
    %3111 = vmatpush1.bf16.xpose.msra.mxu0 0
    %3112 = vmatprep.subr.bf16.mxu0 0
    %3113 = vmatpush1.bf16.xpose.msra.mxu0 0
    %3114 = vmatprep.subr.bf16.mxu0 0
    %3115 = vmatpush1.bf16.xpose.msra.mxu0 0
    %3116 = vmatprep.mubr.bf16.mxu0 0
    %3117 = vmatmul.mubr.bf16.gmra.mrb[0].mxu0 %v3079
    %v3118 = vpop.f32.mrb[0].mxu0
    %v3119 = vadd.f32 0.0, %v3118
    %v3120 = vpop.f32.mrb[0].mxu0
    %v3121 = vpop.f32.mrb[0].mxu0
    %v3122 = vpop.f32.mrb[0].mxu0
    %3123 = vdwg.mxu0
    %3124 = vrot.lane.b32.xlu0 %v180, 104
    %v3125 = vpop.permute.xlu0 %3124
    %3126 = vrot.lane.b32.xlu0 %v180, 72
    %v3127 = vpop.permute.xlu0 %3126
    %v3129 = vsel %vm186, %v3125, 0
    %v3132 = vsel %vm186, %v3127, 0
    %3134 = vmatprep.subr.bf16.mxu0 0
    %3135 = vmatpush1.bf16.xpose.msra.mxu0 %v3132
    %3136 = vmatprep.subr.bf16.mxu0 0
    %3137 = vmatpush1.bf16.xpose.msra.mxu0 0
    %3138 = vmatprep.subr.bf16.mxu0 0
    %3139 = vmatpush1.bf16.xpose.msra.mxu0 0
    %3140 = vmatprep.subr.bf16.mxu0 0
    %3141 = vmatpush1.bf16.xpose.msra.mxu0 0
    %3142 = vmatprep.subr.bf16.mxu0 0
    %3143 = vmatpush1.bf16.xpose.msra.mxu0 0
    %3144 = vmatprep.subr.bf16.mxu0 0
    %3145 = vmatpush1.bf16.xpose.msra.mxu0 0
    %3146 = vmatprep.subr.bf16.mxu0 0
    %3147 = vmatpush1.bf16.xpose.msra.mxu0 0
    %3148 = vmatprep.subr.bf16.mxu0 0
    %3149 = vmatpush1.bf16.xpose.msra.mxu0 0
    %3150 = vmatprep.subr.bf16.mxu0 0
    %3151 = vmatpush1.bf16.xpose.msra.mxu0 0
    %3152 = vmatprep.subr.bf16.mxu0 0
    %3153 = vmatpush1.bf16.xpose.msra.mxu0 0
    %3154 = vmatprep.subr.bf16.mxu0 0
    %3155 = vmatpush1.bf16.xpose.msra.mxu0 0
    %3156 = vmatprep.subr.bf16.mxu0 0
    %3157 = vmatpush1.bf16.xpose.msra.mxu0 0
    %3158 = vmatprep.subr.bf16.mxu0 0
    %3159 = vmatpush1.bf16.xpose.msra.mxu0 0
    %3160 = vmatprep.subr.bf16.mxu0 0
    %3161 = vmatpush1.bf16.xpose.msra.mxu0 0
    %3162 = vmatprep.subr.bf16.mxu0 0
    %3163 = vmatpush1.bf16.xpose.msra.mxu0 0
    %3164 = vmatprep.subr.bf16.mxu0 0
    %3165 = vmatpush1.bf16.xpose.msra.mxu0 0
    %3166 = vmatprep.mubr.bf16.mxu0 0
    %3167 = vmatmul.mubr.bf16.gmra.mrb[0].mxu0 %v3129
    %v3168 = vpop.f32.mrb[0].mxu0
    %v3169 = vadd.f32 0.0, %v3168
    %v3170 = vpop.f32.mrb[0].mxu0
    %v3171 = vpop.f32.mrb[0].mxu0
    %v3172 = vpop.f32.mrb[0].mxu0
    %3173 = vdwg.mxu0
    %3174 = vrot.lane.b32.xlu0 %v181, 104
    %v3175 = vpop.permute.xlu0 %3174
    %3176 = vrot.lane.b32.xlu0 %v181, 72
    %v3177 = vpop.permute.xlu0 %3176
    %v3179 = vsel %vm186, %v3175, 0
    %v3182 = vsel %vm186, %v3177, 0
    %3184 = vmatprep.subr.bf16.mxu0 0
    %3185 = vmatpush1.bf16.xpose.msra.mxu0 %v3182
    %3186 = vmatprep.subr.bf16.mxu0 0
    %3187 = vmatpush1.bf16.xpose.msra.mxu0 0
    %3188 = vmatprep.subr.bf16.mxu0 0
    %3189 = vmatpush1.bf16.xpose.msra.mxu0 0
    %3190 = vmatprep.subr.bf16.mxu0 0
    %3191 = vmatpush1.bf16.xpose.msra.mxu0 0
    %3192 = vmatprep.subr.bf16.mxu0 0
    %3193 = vmatpush1.bf16.xpose.msra.mxu0 0
    %3194 = vmatprep.subr.bf16.mxu0 0
    %3195 = vmatpush1.bf16.xpose.msra.mxu0 0
    %3196 = vmatprep.subr.bf16.mxu0 0
    %3197 = vmatpush1.bf16.xpose.msra.mxu0 0
    %3198 = vmatprep.subr.bf16.mxu0 0
    %3199 = vmatpush1.bf16.xpose.msra.mxu0 0
    %3200 = vmatprep.subr.bf16.mxu0 0
    %3201 = vmatpush1.bf16.xpose.msra.mxu0 0
    %3202 = vmatprep.subr.bf16.mxu0 0
    %3203 = vmatpush1.bf16.xpose.msra.mxu0 0
    %3204 = vmatprep.subr.bf16.mxu0 0
    %3205 = vmatpush1.bf16.xpose.msra.mxu0 0
    %3206 = vmatprep.subr.bf16.mxu0 0
    %3207 = vmatpush1.bf16.xpose.msra.mxu0 0
    %3208 = vmatprep.subr.bf16.mxu0 0
    %3209 = vmatpush1.bf16.xpose.msra.mxu0 0
    %3210 = vmatprep.subr.bf16.mxu0 0
    %3211 = vmatpush1.bf16.xpose.msra.mxu0 0
    %3212 = vmatprep.subr.bf16.mxu0 0
    %3213 = vmatpush1.bf16.xpose.msra.mxu0 0
    %3214 = vmatprep.subr.bf16.mxu0 0
    %3215 = vmatpush1.bf16.xpose.msra.mxu0 0
    %3216 = vmatprep.mubr.bf16.mxu0 0
    %3217 = vmatmul.mubr.bf16.gmra.mrb[0].mxu0 %v3179
    %v3218 = vpop.f32.mrb[0].mxu0
    %v3219 = vadd.f32 0.0, %v3218
    %v3220 = vpop.f32.mrb[0].mxu0
    %v3221 = vpop.f32.mrb[0].mxu0
    %v3222 = vpop.f32.mrb[0].mxu0
    %3223 = vdwg.mxu0
    %3224 = vrot.lane.b32.xlu0 %v182, 104
    %v3225 = vpop.permute.xlu0 %3224
    %3226 = vrot.lane.b32.xlu0 %v182, 72
    %v3227 = vpop.permute.xlu0 %3226
    %v3229 = vsel %vm186, %v3225, 0
    %v3232 = vsel %vm186, %v3227, 0
    %3234 = vmatprep.subr.bf16.mxu0 0
    %3235 = vmatpush1.bf16.xpose.msra.mxu0 %v3232
    %3236 = vmatprep.subr.bf16.mxu0 0
    %3237 = vmatpush1.bf16.xpose.msra.mxu0 0
    %3238 = vmatprep.subr.bf16.mxu0 0
    %3239 = vmatpush1.bf16.xpose.msra.mxu0 0
    %3240 = vmatprep.subr.bf16.mxu0 0
    %3241 = vmatpush1.bf16.xpose.msra.mxu0 0
    %3242 = vmatprep.subr.bf16.mxu0 0
    %3243 = vmatpush1.bf16.xpose.msra.mxu0 0
    %3244 = vmatprep.subr.bf16.mxu0 0
    %3245 = vmatpush1.bf16.xpose.msra.mxu0 0
    %3246 = vmatprep.subr.bf16.mxu0 0
    %3247 = vmatpush1.bf16.xpose.msra.mxu0 0
    %3248 = vmatprep.subr.bf16.mxu0 0
    %3249 = vmatpush1.bf16.xpose.msra.mxu0 0
    %3250 = vmatprep.subr.bf16.mxu0 0
    %3251 = vmatpush1.bf16.xpose.msra.mxu0 0
    %3252 = vmatprep.subr.bf16.mxu0 0
    %3253 = vmatpush1.bf16.xpose.msra.mxu0 0
    %3254 = vmatprep.subr.bf16.mxu0 0
    %3255 = vmatpush1.bf16.xpose.msra.mxu0 0
    %3256 = vmatprep.subr.bf16.mxu0 0
    %3257 = vmatpush1.bf16.xpose.msra.mxu0 0
    %3258 = vmatprep.subr.bf16.mxu0 0
    %3259 = vmatpush1.bf16.xpose.msra.mxu0 0
    %3260 = vmatprep.subr.bf16.mxu0 0
    %3261 = vmatpush1.bf16.xpose.msra.mxu0 0
    %3262 = vmatprep.subr.bf16.mxu0 0
    %3263 = vmatpush1.bf16.xpose.msra.mxu0 0
    %3264 = vmatprep.subr.bf16.mxu0 0
    %3265 = vmatpush1.bf16.xpose.msra.mxu0 0
    %3266 = vmatprep.mubr.bf16.mxu0 0
    %3267 = vmatmul.mubr.bf16.gmra.mrb[0].mxu0 %v3229
    %v3268 = vpop.f32.mrb[0].mxu0
    %v3269 = vadd.f32 0.0, %v3268
    %v3270 = vpop.f32.mrb[0].mxu0
    %v3271 = vpop.f32.mrb[0].mxu0
    %v3272 = vpop.f32.mrb[0].mxu0
    %3273 = vdwg.mxu0
    %3274 = vrot.lane.b32.xlu0 %v183, 104
    %v3275 = vpop.permute.xlu0 %3274
    %3276 = vrot.lane.b32.xlu0 %v183, 72
    %v3277 = vpop.permute.xlu0 %3276
    %v3279 = vsel %vm186, %v3275, 0
    %v3282 = vsel %vm186, %v3277, 0
    %3284 = vmatprep.subr.bf16.mxu0 0
    %3285 = vmatpush1.bf16.xpose.msra.mxu0 %v3282
    %3286 = vmatprep.subr.bf16.mxu0 0
    %3287 = vmatpush1.bf16.xpose.msra.mxu0 0
    %3288 = vmatprep.subr.bf16.mxu0 0
    %3289 = vmatpush1.bf16.xpose.msra.mxu0 0
    %3290 = vmatprep.subr.bf16.mxu0 0
    %3291 = vmatpush1.bf16.xpose.msra.mxu0 0
    %3292 = vmatprep.subr.bf16.mxu0 0
    %3293 = vmatpush1.bf16.xpose.msra.mxu0 0
    %3294 = vmatprep.subr.bf16.mxu0 0
    %3295 = vmatpush1.bf16.xpose.msra.mxu0 0
    %3296 = vmatprep.subr.bf16.mxu0 0
    %3297 = vmatpush1.bf16.xpose.msra.mxu0 0
    %3298 = vmatprep.subr.bf16.mxu0 0
    %3299 = vmatpush1.bf16.xpose.msra.mxu0 0
    %3300 = vmatprep.subr.bf16.mxu0 0
    %3301 = vmatpush1.bf16.xpose.msra.mxu0 0
    %3302 = vmatprep.subr.bf16.mxu0 0
    %3303 = vmatpush1.bf16.xpose.msra.mxu0 0
    %3304 = vmatprep.subr.bf16.mxu0 0
    %3305 = vmatpush1.bf16.xpose.msra.mxu0 0
    %3306 = vmatprep.subr.bf16.mxu0 0
    %3307 = vmatpush1.bf16.xpose.msra.mxu0 0
    %3308 = vmatprep.subr.bf16.mxu0 0
    %3309 = vmatpush1.bf16.xpose.msra.mxu0 0
    %3310 = vmatprep.subr.bf16.mxu0 0
    %3311 = vmatpush1.bf16.xpose.msra.mxu0 0
    %3312 = vmatprep.subr.bf16.mxu0 0
    %3313 = vmatpush1.bf16.xpose.msra.mxu0 0
    %3314 = vmatprep.subr.bf16.mxu0 0
    %3315 = vmatpush1.bf16.xpose.msra.mxu0 0
    %3316 = vmatprep.mubr.bf16.mxu0 0
    %3317 = vmatmul.mubr.bf16.gmra.mrb[0].mxu0 %v3279
    %v3318 = vpop.f32.mrb[0].mxu0
    %v3319 = vadd.f32 0.0, %v3318
    %v3320 = vpop.f32.mrb[0].mxu0
    %v3321 = vpop.f32.mrb[0].mxu0
    %v3322 = vpop.f32.mrb[0].mxu0
    %3323 = vdwg.mxu0
    %v3324 = vmul.f32 %v2969, 0.35355338
    %v3325 = vmul.f32 %v3019, 0.35355338
    %v3326 = vmul.f32 %v3069, 0.35355338
    %v3327 = vmul.f32 %v3119, 0.35355338
    %v3328 = vmul.f32 %v3169, 0.35355338
    %v3329 = vmul.f32 %v3219, 0.35355338
    %v3330 = vmul.f32 %v3269, 0.35355338
    %v3331 = vmul.f32 %v3319, 0.35355338
    %v3332 = vsel %vm186, %v3324, -inf
    %3333 = vmax.xlane.f32.xlu0 %v3332
    %v3334 = vpop.xlane.xlu0 %3333
    %v3335 = vsel %vm186, %v3325, -inf
    %3336 = vmax.xlane.f32.xlu0 %v3335
    %v3337 = vpop.xlane.xlu0 %3336
    %v3338 = vsel %vm186, %v3326, -inf
    %3339 = vmax.xlane.f32.xlu0 %v3338
    %v3340 = vpop.xlane.xlu0 %3339
    %v3341 = vsel %vm186, %v3327, -inf
    %3342 = vmax.xlane.f32.xlu0 %v3341
    %v3343 = vpop.xlane.xlu0 %3342
    %v3344 = vsel %vm186, %v3328, -inf
    %3345 = vmax.xlane.f32.xlu0 %v3344
    %v3346 = vpop.xlane.xlu0 %3345
    %v3347 = vsel %vm186, %v3329, -inf
    %3348 = vmax.xlane.f32.xlu0 %v3347
    %v3349 = vpop.xlane.xlu0 %3348
    %v3350 = vsel %vm186, %v3330, -inf
    %3351 = vmax.xlane.f32.xlu0 %v3350
    %v3352 = vpop.xlane.xlu0 %3351
    %v3353 = vsel %vm186, %v3331, -inf
    %3354 = vmax.xlane.f32.xlu0 %v3353
    %v3355 = vpop.xlane.xlu0 %3354
    %v3356 = vsub.f32 %v3324, %v3334
    %v3357 = vsub.f32 %v3325, %v3337
    %v3358 = vsub.f32 %v3326, %v3340
    %v3359 = vsub.f32 %v3327, %v3343
    %v3360 = vsub.f32 %v3328, %v3346
    %v3361 = vsub.f32 %v3329, %v3349
    %v3362 = vsub.f32 %v3330, %v3352
    %v3363 = vsub.f32 %v3331, %v3355
    %v3364 = vmul.f32 %v3356, 1.442695
    %v3365 = vpow.pop %v3364
    %v3366 = vmul.f32 %v3357, 1.442695
    %v3367 = vpow.pop %v3366
    %v3368 = vmul.f32 %v3358, 1.442695
    %v3369 = vpow.pop %v3368
    %v3370 = vmul.f32 %v3359, 1.442695
    %v3371 = vpow.pop %v3370
    %v3372 = vmul.f32 %v3360, 1.442695
    %v3373 = vpow.pop %v3372
    %v3374 = vmul.f32 %v3361, 1.442695
    %v3375 = vpow.pop %v3374
    %v3376 = vmul.f32 %v3362, 1.442695
    %v3377 = vpow.pop %v3376
    %v3378 = vmul.f32 %v3363, 1.442695
    %v3379 = vpow.pop %v3378
    %v3380 = vsel %vm186, %v3365, 0.0
    %3381 = vadd.xlane.f32.xlu0 %v3380
    %v3382 = vpop.xlane.xlu0 %3381
    %v3383 = vsel %vm186, %v3367, 0.0
    %3384 = vadd.xlane.f32.xlu0 %v3383
    %v3385 = vpop.xlane.xlu0 %3384
    %v3386 = vsel %vm186, %v3369, 0.0
    %3387 = vadd.xlane.f32.xlu0 %v3386
    %v3388 = vpop.xlane.xlu0 %3387
    %v3389 = vsel %vm186, %v3371, 0.0
    %3390 = vadd.xlane.f32.xlu0 %v3389
    %v3391 = vpop.xlane.xlu0 %3390
    %v3392 = vsel %vm186, %v3373, 0.0
    %3393 = vadd.xlane.f32.xlu0 %v3392
    %v3394 = vpop.xlane.xlu0 %3393
    %v3395 = vsel %vm186, %v3375, 0.0
    %3396 = vadd.xlane.f32.xlu0 %v3395
    %v3397 = vpop.xlane.xlu0 %3396
    %v3398 = vsel %vm186, %v3377, 0.0
    %3399 = vadd.xlane.f32.xlu0 %v3398
    %v3400 = vpop.xlane.xlu0 %3399
    %v3401 = vsel %vm186, %v3379, 0.0
    %3402 = vadd.xlane.f32.xlu0 %v3401
    %v3403 = vpop.xlane.xlu0 %3402
    %v3404 = vrcp.pop %v3382
    %v3405 = vrcp.pop %v3385
    %v3406 = vrcp.pop %v3388
    %v3407 = vrcp.pop %v3391
    %v3408 = vrcp.pop %v3394
    %v3409 = vrcp.pop %v3397
    %v3410 = vrcp.pop %v3400
    %v3411 = vrcp.pop %v3403
    %v3412 = vmul.f32 %v3365, %v3404
    %v3413 = vmul.f32 %v3367, %v3405
    %v3414 = vmul.f32 %v3369, %v3406
    %v3415 = vmul.f32 %v3371, %v3407
    %v3416 = vmul.f32 %v3373, %v3408
    %v3417 = vmul.f32 %v3375, %v3409
    %v3418 = vmul.f32 %v3377, %v3410
    %v3419 = vmul.f32 %v3379, %v3411
    %v3420 = vpack.c.bf16 %v3412, %v3412
    %v3421 = vpack.c.bf16 %v3413, %v3413
    %v3422 = vpack.c.bf16 %v3414, %v3414
    %v3423 = vpack.c.bf16 %v3415, %v3415
    %v3424 = vpack.c.bf16 %v3416, %v3416
    %v3425 = vpack.c.bf16 %v3417, %v3417
    %v3426 = vpack.c.bf16 %v3418, %v3418
    %v3427 = vpack.c.bf16 %v3419, %v3419
    %3428 = vrot.lane.b32.xlu0 %v176, 40
    %v3429 = vpop.permute.xlu0 %3428
    %v3431 = vsel %vm186, %v3420, 0
    %v3434 = vsel %vm678, %v3429, 0
    %3436 = vmatprep.subr.bf16.mxu0 0
    %3437 = vmatpush1.bf16.msra.mxu0 %v3434
    %3438 = vmatprep.subr.bf16.mxu0 0
    %3439 = vmatpush1.bf16.msra.mxu0 0
    %3440 = vmatprep.subr.bf16.mxu0 0
    %3441 = vmatpush1.bf16.msra.mxu0 0
    %3442 = vmatprep.subr.bf16.mxu0 0
    %3443 = vmatpush1.bf16.msra.mxu0 0
    %3444 = vmatprep.subr.bf16.mxu0 0
    %3445 = vmatpush1.bf16.msra.mxu0 0
    %3446 = vmatprep.subr.bf16.mxu0 0
    %3447 = vmatpush1.bf16.msra.mxu0 0
    %3448 = vmatprep.subr.bf16.mxu0 0
    %3449 = vmatpush1.bf16.msra.mxu0 0
    %3450 = vmatprep.subr.bf16.mxu0 0
    %3451 = vmatpush1.bf16.msra.mxu0 0
    %3452 = vmatprep.subr.bf16.mxu0 0
    %3453 = vmatpush1.bf16.msra.mxu0 0
    %3454 = vmatprep.subr.bf16.mxu0 0
    %3455 = vmatpush1.bf16.msra.mxu0 0
    %3456 = vmatprep.subr.bf16.mxu0 0
    %3457 = vmatpush1.bf16.msra.mxu0 0
    %3458 = vmatprep.subr.bf16.mxu0 0
    %3459 = vmatpush1.bf16.msra.mxu0 0
    %3460 = vmatprep.subr.bf16.mxu0 0
    %3461 = vmatpush1.bf16.msra.mxu0 0
    %3462 = vmatprep.subr.bf16.mxu0 0
    %3463 = vmatpush1.bf16.msra.mxu0 0
    %3464 = vmatprep.subr.bf16.mxu0 0
    %3465 = vmatpush1.bf16.msra.mxu0 0
    %3466 = vmatprep.subr.bf16.mxu0 0
    %3467 = vmatpush1.bf16.msra.mxu0 0
    %3468 = vmatprep.mubr.bf16.mxu0 0
    %3469 = vmatmul.mubr.bf16.gmra.mrb[0].mxu0 %v3431
    %v3470 = vpop.f32.mrb[0].mxu0
    %v3471 = vadd.f32 0.0, %v3470
    %v3472 = vpop.f32.mrb[0].mxu0
    %v3473 = vpop.f32.mrb[0].mxu0
    %v3474 = vpop.f32.mrb[0].mxu0
    %3475 = vdwg.mxu0
    %3476 = vrot.lane.b32.xlu0 %v177, 40
    %v3477 = vpop.permute.xlu0 %3476
    %v3479 = vsel %vm186, %v3421, 0
    %v3482 = vsel %vm678, %v3477, 0
    %3484 = vmatprep.subr.bf16.mxu0 0
    %3485 = vmatpush1.bf16.msra.mxu0 %v3482
    %3486 = vmatprep.subr.bf16.mxu0 0
    %3487 = vmatpush1.bf16.msra.mxu0 0
    %3488 = vmatprep.subr.bf16.mxu0 0
    %3489 = vmatpush1.bf16.msra.mxu0 0
    %3490 = vmatprep.subr.bf16.mxu0 0
    %3491 = vmatpush1.bf16.msra.mxu0 0
    %3492 = vmatprep.subr.bf16.mxu0 0
    %3493 = vmatpush1.bf16.msra.mxu0 0
    %3494 = vmatprep.subr.bf16.mxu0 0
    %3495 = vmatpush1.bf16.msra.mxu0 0
    %3496 = vmatprep.subr.bf16.mxu0 0
    %3497 = vmatpush1.bf16.msra.mxu0 0
    %3498 = vmatprep.subr.bf16.mxu0 0
    %3499 = vmatpush1.bf16.msra.mxu0 0
    %3500 = vmatprep.subr.bf16.mxu0 0
    %3501 = vmatpush1.bf16.msra.mxu0 0
    %3502 = vmatprep.subr.bf16.mxu0 0
    %3503 = vmatpush1.bf16.msra.mxu0 0
    %3504 = vmatprep.subr.bf16.mxu0 0
    %3505 = vmatpush1.bf16.msra.mxu0 0
    %3506 = vmatprep.subr.bf16.mxu0 0
    %3507 = vmatpush1.bf16.msra.mxu0 0
    %3508 = vmatprep.subr.bf16.mxu0 0
    %3509 = vmatpush1.bf16.msra.mxu0 0
    %3510 = vmatprep.subr.bf16.mxu0 0
    %3511 = vmatpush1.bf16.msra.mxu0 0
    %3512 = vmatprep.subr.bf16.mxu0 0
    %3513 = vmatpush1.bf16.msra.mxu0 0
    %3514 = vmatprep.subr.bf16.mxu0 0
    %3515 = vmatpush1.bf16.msra.mxu0 0
    %3516 = vmatprep.mubr.bf16.mxu0 0
    %3517 = vmatmul.mubr.bf16.gmra.mrb[0].mxu0 %v3479
    %v3518 = vpop.f32.mrb[0].mxu0
    %v3519 = vadd.f32 0.0, %v3518
    %v3520 = vpop.f32.mrb[0].mxu0
    %v3521 = vpop.f32.mrb[0].mxu0
    %v3522 = vpop.f32.mrb[0].mxu0
    %3523 = vdwg.mxu0
    %3524 = vrot.lane.b32.xlu0 %v178, 40
    %v3525 = vpop.permute.xlu0 %3524
    %v3527 = vsel %vm186, %v3422, 0
    %v3530 = vsel %vm678, %v3525, 0
    %3532 = vmatprep.subr.bf16.mxu0 0
    %3533 = vmatpush1.bf16.msra.mxu0 %v3530
    %3534 = vmatprep.subr.bf16.mxu0 0
    %3535 = vmatpush1.bf16.msra.mxu0 0
    %3536 = vmatprep.subr.bf16.mxu0 0
    %3537 = vmatpush1.bf16.msra.mxu0 0
    %3538 = vmatprep.subr.bf16.mxu0 0
    %3539 = vmatpush1.bf16.msra.mxu0 0
    %3540 = vmatprep.subr.bf16.mxu0 0
    %3541 = vmatpush1.bf16.msra.mxu0 0
    %3542 = vmatprep.subr.bf16.mxu0 0
    %3543 = vmatpush1.bf16.msra.mxu0 0
    %3544 = vmatprep.subr.bf16.mxu0 0
    %3545 = vmatpush1.bf16.msra.mxu0 0
    %3546 = vmatprep.subr.bf16.mxu0 0
    %3547 = vmatpush1.bf16.msra.mxu0 0
    %3548 = vmatprep.subr.bf16.mxu0 0
    %3549 = vmatpush1.bf16.msra.mxu0 0
    %3550 = vmatprep.subr.bf16.mxu0 0
    %3551 = vmatpush1.bf16.msra.mxu0 0
    %3552 = vmatprep.subr.bf16.mxu0 0
    %3553 = vmatpush1.bf16.msra.mxu0 0
    %3554 = vmatprep.subr.bf16.mxu0 0
    %3555 = vmatpush1.bf16.msra.mxu0 0
    %3556 = vmatprep.subr.bf16.mxu0 0
    %3557 = vmatpush1.bf16.msra.mxu0 0
    %3558 = vmatprep.subr.bf16.mxu0 0
    %3559 = vmatpush1.bf16.msra.mxu0 0
    %3560 = vmatprep.subr.bf16.mxu0 0
    %3561 = vmatpush1.bf16.msra.mxu0 0
    %3562 = vmatprep.subr.bf16.mxu0 0
    %3563 = vmatpush1.bf16.msra.mxu0 0
    %3564 = vmatprep.mubr.bf16.mxu0 0
    %3565 = vmatmul.mubr.bf16.gmra.mrb[0].mxu0 %v3527
    %v3566 = vpop.f32.mrb[0].mxu0
    %v3567 = vadd.f32 0.0, %v3566
    %v3568 = vpop.f32.mrb[0].mxu0
    %v3569 = vpop.f32.mrb[0].mxu0
    %v3570 = vpop.f32.mrb[0].mxu0
    %3571 = vdwg.mxu0
    %3572 = vrot.lane.b32.xlu0 %v179, 40
    %v3573 = vpop.permute.xlu0 %3572
    %v3575 = vsel %vm186, %v3423, 0
    %v3578 = vsel %vm678, %v3573, 0
    %3580 = vmatprep.subr.bf16.mxu0 0
    %3581 = vmatpush1.bf16.msra.mxu0 %v3578
    %3582 = vmatprep.subr.bf16.mxu0 0
    %3583 = vmatpush1.bf16.msra.mxu0 0
    %3584 = vmatprep.subr.bf16.mxu0 0
    %3585 = vmatpush1.bf16.msra.mxu0 0
    %3586 = vmatprep.subr.bf16.mxu0 0
    %3587 = vmatpush1.bf16.msra.mxu0 0
    %3588 = vmatprep.subr.bf16.mxu0 0
    %3589 = vmatpush1.bf16.msra.mxu0 0
    %3590 = vmatprep.subr.bf16.mxu0 0
    %3591 = vmatpush1.bf16.msra.mxu0 0
    %3592 = vmatprep.subr.bf16.mxu0 0
    %3593 = vmatpush1.bf16.msra.mxu0 0
    %3594 = vmatprep.subr.bf16.mxu0 0
    %3595 = vmatpush1.bf16.msra.mxu0 0
    %3596 = vmatprep.subr.bf16.mxu0 0
    %3597 = vmatpush1.bf16.msra.mxu0 0
    %3598 = vmatprep.subr.bf16.mxu0 0
    %3599 = vmatpush1.bf16.msra.mxu0 0
    %3600 = vmatprep.subr.bf16.mxu0 0
    %3601 = vmatpush1.bf16.msra.mxu0 0
    %3602 = vmatprep.subr.bf16.mxu0 0
    %3603 = vmatpush1.bf16.msra.mxu0 0
    %3604 = vmatprep.subr.bf16.mxu0 0
    %3605 = vmatpush1.bf16.msra.mxu0 0
    %3606 = vmatprep.subr.bf16.mxu0 0
    %3607 = vmatpush1.bf16.msra.mxu0 0
    %3608 = vmatprep.subr.bf16.mxu0 0
    %3609 = vmatpush1.bf16.msra.mxu0 0
    %3610 = vmatprep.subr.bf16.mxu0 0
    %3611 = vmatpush1.bf16.msra.mxu0 0
    %3612 = vmatprep.mubr.bf16.mxu0 0
    %3613 = vmatmul.mubr.bf16.gmra.mrb[0].mxu0 %v3575
    %v3614 = vpop.f32.mrb[0].mxu0
    %v3615 = vadd.f32 0.0, %v3614
    %v3616 = vpop.f32.mrb[0].mxu0
    %v3617 = vpop.f32.mrb[0].mxu0
    %v3618 = vpop.f32.mrb[0].mxu0
    %3619 = vdwg.mxu0
    %3620 = vrot.lane.b32.xlu0 %v180, 40
    %v3621 = vpop.permute.xlu0 %3620
    %v3623 = vsel %vm186, %v3424, 0
    %v3626 = vsel %vm678, %v3621, 0
    %3628 = vmatprep.subr.bf16.mxu0 0
    %3629 = vmatpush1.bf16.msra.mxu0 %v3626
    %3630 = vmatprep.subr.bf16.mxu0 0
    %3631 = vmatpush1.bf16.msra.mxu0 0
    %3632 = vmatprep.subr.bf16.mxu0 0
    %3633 = vmatpush1.bf16.msra.mxu0 0
    %3634 = vmatprep.subr.bf16.mxu0 0
    %3635 = vmatpush1.bf16.msra.mxu0 0
    %3636 = vmatprep.subr.bf16.mxu0 0
    %3637 = vmatpush1.bf16.msra.mxu0 0
    %3638 = vmatprep.subr.bf16.mxu0 0
    %3639 = vmatpush1.bf16.msra.mxu0 0
    %3640 = vmatprep.subr.bf16.mxu0 0
    %3641 = vmatpush1.bf16.msra.mxu0 0
    %3642 = vmatprep.subr.bf16.mxu0 0
    %3643 = vmatpush1.bf16.msra.mxu0 0
    %3644 = vmatprep.subr.bf16.mxu0 0
    %3645 = vmatpush1.bf16.msra.mxu0 0
    %3646 = vmatprep.subr.bf16.mxu0 0
    %3647 = vmatpush1.bf16.msra.mxu0 0
    %3648 = vmatprep.subr.bf16.mxu0 0
    %3649 = vmatpush1.bf16.msra.mxu0 0
    %3650 = vmatprep.subr.bf16.mxu0 0
    %3651 = vmatpush1.bf16.msra.mxu0 0
    %3652 = vmatprep.subr.bf16.mxu0 0
    %3653 = vmatpush1.bf16.msra.mxu0 0
    %3654 = vmatprep.subr.bf16.mxu0 0
    %3655 = vmatpush1.bf16.msra.mxu0 0
    %3656 = vmatprep.subr.bf16.mxu0 0
    %3657 = vmatpush1.bf16.msra.mxu0 0
    %3658 = vmatprep.subr.bf16.mxu0 0
    %3659 = vmatpush1.bf16.msra.mxu0 0
    %3660 = vmatprep.mubr.bf16.mxu0 0
    %3661 = vmatmul.mubr.bf16.gmra.mrb[0].mxu0 %v3623
    %v3662 = vpop.f32.mrb[0].mxu0
    %v3663 = vadd.f32 0.0, %v3662
    %v3664 = vpop.f32.mrb[0].mxu0
    %v3665 = vpop.f32.mrb[0].mxu0
    %v3666 = vpop.f32.mrb[0].mxu0
    %3667 = vdwg.mxu0
    %3668 = vrot.lane.b32.xlu0 %v181, 40
    %v3669 = vpop.permute.xlu0 %3668
    %v3671 = vsel %vm186, %v3425, 0
    %v3674 = vsel %vm678, %v3669, 0
    %3676 = vmatprep.subr.bf16.mxu0 0
    %3677 = vmatpush1.bf16.msra.mxu0 %v3674
    %3678 = vmatprep.subr.bf16.mxu0 0
    %3679 = vmatpush1.bf16.msra.mxu0 0
    %3680 = vmatprep.subr.bf16.mxu0 0
    %3681 = vmatpush1.bf16.msra.mxu0 0
    %3682 = vmatprep.subr.bf16.mxu0 0
    %3683 = vmatpush1.bf16.msra.mxu0 0
    %3684 = vmatprep.subr.bf16.mxu0 0
    %3685 = vmatpush1.bf16.msra.mxu0 0
    %3686 = vmatprep.subr.bf16.mxu0 0
    %3687 = vmatpush1.bf16.msra.mxu0 0
    %3688 = vmatprep.subr.bf16.mxu0 0
    %3689 = vmatpush1.bf16.msra.mxu0 0
    %3690 = vmatprep.subr.bf16.mxu0 0
    %3691 = vmatpush1.bf16.msra.mxu0 0
    %3692 = vmatprep.subr.bf16.mxu0 0
    %3693 = vmatpush1.bf16.msra.mxu0 0
    %3694 = vmatprep.subr.bf16.mxu0 0
    %3695 = vmatpush1.bf16.msra.mxu0 0
    %3696 = vmatprep.subr.bf16.mxu0 0
    %3697 = vmatpush1.bf16.msra.mxu0 0
    %3698 = vmatprep.subr.bf16.mxu0 0
    %3699 = vmatpush1.bf16.msra.mxu0 0
    %3700 = vmatprep.subr.bf16.mxu0 0
    %3701 = vmatpush1.bf16.msra.mxu0 0
    %3702 = vmatprep.subr.bf16.mxu0 0
    %3703 = vmatpush1.bf16.msra.mxu0 0
    %3704 = vmatprep.subr.bf16.mxu0 0
    %3705 = vmatpush1.bf16.msra.mxu0 0
    %3706 = vmatprep.subr.bf16.mxu0 0
    %3707 = vmatpush1.bf16.msra.mxu0 0
    %3708 = vmatprep.mubr.bf16.mxu0 0
    %3709 = vmatmul.mubr.bf16.gmra.mrb[0].mxu0 %v3671
    %v3710 = vpop.f32.mrb[0].mxu0
    %v3711 = vadd.f32 0.0, %v3710
    %v3712 = vpop.f32.mrb[0].mxu0
    %v3713 = vpop.f32.mrb[0].mxu0
    %v3714 = vpop.f32.mrb[0].mxu0
    %3715 = vdwg.mxu0
    %3716 = vrot.lane.b32.xlu0 %v182, 40
    %v3717 = vpop.permute.xlu0 %3716
    %v3719 = vsel %vm186, %v3426, 0
    %v3722 = vsel %vm678, %v3717, 0
    %3724 = vmatprep.subr.bf16.mxu0 0
    %3725 = vmatpush1.bf16.msra.mxu0 %v3722
    %3726 = vmatprep.subr.bf16.mxu0 0
    %3727 = vmatpush1.bf16.msra.mxu0 0
    %3728 = vmatprep.subr.bf16.mxu0 0
    %3729 = vmatpush1.bf16.msra.mxu0 0
    %3730 = vmatprep.subr.bf16.mxu0 0
    %3731 = vmatpush1.bf16.msra.mxu0 0
    %3732 = vmatprep.subr.bf16.mxu0 0
    %3733 = vmatpush1.bf16.msra.mxu0 0
    %3734 = vmatprep.subr.bf16.mxu0 0
    %3735 = vmatpush1.bf16.msra.mxu0 0
    %3736 = vmatprep.subr.bf16.mxu0 0
    %3737 = vmatpush1.bf16.msra.mxu0 0
    %3738 = vmatprep.subr.bf16.mxu0 0
    %3739 = vmatpush1.bf16.msra.mxu0 0
    %3740 = vmatprep.subr.bf16.mxu0 0
    %3741 = vmatpush1.bf16.msra.mxu0 0
    %3742 = vmatprep.subr.bf16.mxu0 0
    %3743 = vmatpush1.bf16.msra.mxu0 0
    %3744 = vmatprep.subr.bf16.mxu0 0
    %3745 = vmatpush1.bf16.msra.mxu0 0
    %3746 = vmatprep.subr.bf16.mxu0 0
    %3747 = vmatpush1.bf16.msra.mxu0 0
    %3748 = vmatprep.subr.bf16.mxu0 0
    %3749 = vmatpush1.bf16.msra.mxu0 0
    %3750 = vmatprep.subr.bf16.mxu0 0
    %3751 = vmatpush1.bf16.msra.mxu0 0
    %3752 = vmatprep.subr.bf16.mxu0 0
    %3753 = vmatpush1.bf16.msra.mxu0 0
    %3754 = vmatprep.subr.bf16.mxu0 0
    %3755 = vmatpush1.bf16.msra.mxu0 0
    %3756 = vmatprep.mubr.bf16.mxu0 0
    %3757 = vmatmul.mubr.bf16.gmra.mrb[0].mxu0 %v3719
    %v3758 = vpop.f32.mrb[0].mxu0
    %v3759 = vadd.f32 0.0, %v3758
    %v3760 = vpop.f32.mrb[0].mxu0
    %v3761 = vpop.f32.mrb[0].mxu0
    %v3762 = vpop.f32.mrb[0].mxu0
    %3763 = vdwg.mxu0
    %3764 = vrot.lane.b32.xlu0 %v183, 40
    %v3765 = vpop.permute.xlu0 %3764
    %v3767 = vsel %vm186, %v3427, 0
    %v3770 = vsel %vm678, %v3765, 0
    %3772 = vmatprep.subr.bf16.mxu0 0
    %3773 = vmatpush1.bf16.msra.mxu0 %v3770
    %3774 = vmatprep.subr.bf16.mxu0 0
    %3775 = vmatpush1.bf16.msra.mxu0 0
    %3776 = vmatprep.subr.bf16.mxu0 0
    %3777 = vmatpush1.bf16.msra.mxu0 0
    %3778 = vmatprep.subr.bf16.mxu0 0
    %3779 = vmatpush1.bf16.msra.mxu0 0
    %3780 = vmatprep.subr.bf16.mxu0 0
    %3781 = vmatpush1.bf16.msra.mxu0 0
    %3782 = vmatprep.subr.bf16.mxu0 0
    %3783 = vmatpush1.bf16.msra.mxu0 0
    %3784 = vmatprep.subr.bf16.mxu0 0
    %3785 = vmatpush1.bf16.msra.mxu0 0
    %3786 = vmatprep.subr.bf16.mxu0 0
    %3787 = vmatpush1.bf16.msra.mxu0 0
    %3788 = vmatprep.subr.bf16.mxu0 0
    %3789 = vmatpush1.bf16.msra.mxu0 0
    %3790 = vmatprep.subr.bf16.mxu0 0
    %3791 = vmatpush1.bf16.msra.mxu0 0
    %3792 = vmatprep.subr.bf16.mxu0 0
    %3793 = vmatpush1.bf16.msra.mxu0 0
    %3794 = vmatprep.subr.bf16.mxu0 0
    %3795 = vmatpush1.bf16.msra.mxu0 0
    %3796 = vmatprep.subr.bf16.mxu0 0
    %3797 = vmatpush1.bf16.msra.mxu0 0
    %3798 = vmatprep.subr.bf16.mxu0 0
    %3799 = vmatpush1.bf16.msra.mxu0 0
    %3800 = vmatprep.subr.bf16.mxu0 0
    %3801 = vmatpush1.bf16.msra.mxu0 0
    %3802 = vmatprep.subr.bf16.mxu0 0
    %3803 = vmatpush1.bf16.msra.mxu0 0
    %3804 = vmatprep.mubr.bf16.mxu0 0
    %3805 = vmatmul.mubr.bf16.gmra.mrb[0].mxu0 %v3767
    %v3806 = vpop.f32.mrb[0].mxu0
    %v3807 = vadd.f32 0.0, %v3806
    %v3808 = vpop.f32.mrb[0].mxu0
    %v3809 = vpop.f32.mrb[0].mxu0
    %v3810 = vpop.f32.mrb[0].mxu0
    %3811 = vdwg.mxu0
    %3820 = vrot.lane.b32.xlu0 %v3471, 24
    %v3821 = vpop.permute.xlu0 %3820
    %3822 = vrot.lane.b32.xlu0 %v3519, 24
    %v3823 = vpop.permute.xlu0 %3822
    %3824 = vrot.lane.b32.xlu0 %v3567, 24
    %v3825 = vpop.permute.xlu0 %3824
    %3826 = vrot.lane.b32.xlu0 %v3615, 24
    %v3827 = vpop.permute.xlu0 %3826
    %3828 = vrot.lane.b32.xlu0 %v3663, 24
    %v3829 = vpop.permute.xlu0 %3828
    %3830 = vrot.lane.b32.xlu0 %v3711, 24
    %v3831 = vpop.permute.xlu0 %3830
    %3832 = vrot.lane.b32.xlu0 %v3759, 24
    %v3833 = vpop.permute.xlu0 %3832
    %3834 = vrot.lane.b32.xlu0 %v3807, 24
    %v3835 = vpop.permute.xlu0 %3834
    %vm3844 = vcmask 261312
    %3845 = vst.msk [vmem:[#allocation2] sm:$0xff] %vm3844, %v3821
    %3846 = vst.msk [vmem:[#allocation2 + $0x8] sm:$0xff] %vm3844, %v3823
    %3847 = vst.msk [vmem:[#allocation2 + $0x10] sm:$0xff] %vm3844, %v3825
    %3848 = vst.msk [vmem:[#allocation2 + $0x18] sm:$0xff] %vm3844, %v3827
    %3849 = vst.msk [vmem:[#allocation2 + $0x20] sm:$0xff] %vm3844, %v3829
    %3850 = vst.msk [vmem:[#allocation2 + $0x28] sm:$0xff] %vm3844, %v3831
    %3851 = vst.msk [vmem:[#allocation2 + $0x30] sm:$0xff] %vm3844, %v3833
    %3852 = vst.msk [vmem:[#allocation2 + $0x38] sm:$0xff] %vm3844, %v3835
    %v3853 = vld [vmem:[#allocation2] sm:$0xff]
    %v3854 = vld [vmem:[#allocation2 + $0x8] sm:$0xff]
    %v3855 = vld [vmem:[#allocation2 + $0x10] sm:$0xff]
    %v3856 = vld [vmem:[#allocation2 + $0x18] sm:$0xff]
    %v3857 = vld [vmem:[#allocation2 + $0x20] sm:$0xff]
    %v3858 = vld [vmem:[#allocation2 + $0x28] sm:$0xff]
    %v3859 = vld [vmem:[#allocation2 + $0x30] sm:$0xff]
    %v3860 = vld [vmem:[#allocation2 + $0x38] sm:$0xff]
    %v3861 = vpack.c.bf16 %v3854, %v3853
    %v3862 = vpack.c.bf16 %v3856, %v3855
    %v3863 = vpack.c.bf16 %v3858, %v3857
    %v3864 = vpack.c.bf16 %v3860, %v3859
    %v3865 = vld [vmem:[%s3] sm:$0xf]
    %v3866 = vld [vmem:[%s3 + $0x4] sm:$0xf]
    %v3867 = vld [vmem:[%s3 + $0x8] sm:$0xf]
    %v3868 = vld [vmem:[%s3 + $0xc] sm:$0xf]
    %v3869 = vld [vmem:[%s4] sm:$0x1]
    %v3871 = vlaneseq
    %v3872 = vshrl.u32 %v3871, 7
    %v3873 = vsub.s32 0, %v3872
    %v3874 = vrot.slane %v3869, %v3873
    %v3880 = vunpack.c.l.b16 %v3865
    %v3881 = vunpack.c.l.b16 %v3866
    %v3882 = vunpack.c.l.b16 %v3867
    %v3883 = vunpack.c.l.b16 %v3868
    %v3884 = vpack.c.b16 %v3881, %v3880
    %v3885 = vpack.c.b16 %v3883, %v3882
    %v3889 = vsel %vm82, %v3861, 0
    %v3892 = vsel %vm82, %v3862, 0
    %v3895 = vsel %vm82, %v3863, 0
    %v3898 = vsel %vm82, %v3864, 0
    %3900 = vmatprep.subr.bf16.mxu0 0
    %3901 = vmatpush1.bf16.msra.mxu0 %v3884
    %3902 = vmatprep.subr.bf16.mxu0 0
    %3903 = vmatpush1.bf16.msra.mxu0 %v3885
    %3904 = vmatprep.subr.bf16.mxu0 0
    %3905 = vmatpush1.bf16.msra.mxu0 0
    %3906 = vmatprep.subr.bf16.mxu0 0
    %3907 = vmatpush1.bf16.msra.mxu0 0
    %3908 = vmatprep.subr.bf16.mxu0 0
    %3909 = vmatpush1.bf16.msra.mxu0 0
    %3910 = vmatprep.subr.bf16.mxu0 0
    %3911 = vmatpush1.bf16.msra.mxu0 0
    %3912 = vmatprep.subr.bf16.mxu0 0
    %3913 = vmatpush1.bf16.msra.mxu0 0
    %3914 = vmatprep.subr.bf16.mxu0 0
    %3915 = vmatpush1.bf16.msra.mxu0 0
    %3916 = vmatprep.subr.bf16.mxu0 0
    %3917 = vmatpush1.bf16.msra.mxu0 0
    %3918 = vmatprep.subr.bf16.mxu0 0
    %3919 = vmatpush1.bf16.msra.mxu0 0
    %3920 = vmatprep.subr.bf16.mxu0 0
    %3921 = vmatpush1.bf16.msra.mxu0 0
    %3922 = vmatprep.subr.bf16.mxu0 0
    %3923 = vmatpush1.bf16.msra.mxu0 0
    %3924 = vmatprep.subr.bf16.mxu0 0
    %3925 = vmatpush1.bf16.msra.mxu0 0
    %3926 = vmatprep.subr.bf16.mxu0 0
    %3927 = vmatpush1.bf16.msra.mxu0 0
    %3928 = vmatprep.subr.bf16.mxu0 0
    %3929 = vmatpush1.bf16.msra.mxu0 0
    %3930 = vmatprep.subr.bf16.mxu0 0
    %3931 = vmatpush1.bf16.msra.mxu0 0
    %3932 = vmatprep.mubr.bf16.mxu0 0
    %3933 = vmatmul.mubr.bf16.gmra.mrb[0].mxu0 %v3889
    %v3934 = vpop.f32.mrb[0].mxu0
    %v3935 = vadd.f32 %v3874, %v3934
    %v3936 = vpop.f32.mrb[0].mxu0
    %v3937 = vpop.f32.mrb[0].mxu0
    %v3938 = vadd.f32 %v3874, %v3937
    %v3939 = vpop.f32.mrb[0].mxu0
    %3940 = vmatprep.mubr.bf16.mxu0 0
    %3941 = vmatmul.mubr.bf16.gmra.mrb[0].mxu0 %v3892
    %v3942 = vpop.f32.mrb[0].mxu0
    %v3943 = vadd.f32 %v3874, %v3942
    %v3944 = vpop.f32.mrb[0].mxu0
    %v3945 = vpop.f32.mrb[0].mxu0
    %v3946 = vadd.f32 %v3874, %v3945
    %v3947 = vpop.f32.mrb[0].mxu0
    %3948 = vmatprep.mubr.bf16.mxu0 0
    %3949 = vmatmul.mubr.bf16.gmra.mrb[0].mxu0 %v3895
    %v3950 = vpop.f32.mrb[0].mxu0
    %v3951 = vadd.f32 %v3874, %v3950
    %v3952 = vpop.f32.mrb[0].mxu0
    %v3953 = vpop.f32.mrb[0].mxu0
    %v3954 = vadd.f32 %v3874, %v3953
    %v3955 = vpop.f32.mrb[0].mxu0
    %3956 = vmatprep.mubr.bf16.mxu0 0
    %3957 = vmatmul.mubr.bf16.gmra.mrb[0].mxu0 %v3898
    %v3958 = vpop.f32.mrb[0].mxu0
    %v3959 = vadd.f32 %v3874, %v3958
    %v3960 = vpop.f32.mrb[0].mxu0
    %v3961 = vpop.f32.mrb[0].mxu0
    %v3962 = vadd.f32 %v3874, %v3961
    %v3963 = vpop.f32.mrb[0].mxu0
    %3964 = vdwg.mxu0
    %v3965 = vpack.c.bf16 %v3938, %v3935
    %v3966 = vpack.c.bf16 %v3946, %v3943
    %v3967 = vpack.c.bf16 %v3954, %v3951
    %v3968 = vpack.c.bf16 %v3962, %v3959
    %v3969 = vld [vmem:[%s5] sm:$0xf]
    %v3970 = vld [vmem:[%s5 + $0x4] sm:$0xf]
    %v3971 = vld [vmem:[%s5 + $0x8] sm:$0xf]
    %v3972 = vld [vmem:[%s5 + $0xc] sm:$0xf]
    %v3973 = vld [vmem:[%s6] sm:$0x1]
    %v3975 = vlaneseq
    %v3976 = vshrl.u32 %v3975, 7
    %v3977 = vsub.s32 0, %v3976
    %v3978 = vrot.slane %v3973, %v3977
    %v3984 = vunpack.c.l.b16 %v3969
    %v3985 = vunpack.c.l.b16 %v3970
    %v3986 = vunpack.c.l.b16 %v3971
    %v3987 = vunpack.c.l.b16 %v3972
    %v3988 = vpack.c.b16 %v3985, %v3984
    %v3989 = vpack.c.b16 %v3987, %v3986
    %v3993 = vsel %vm82, %v3965, 0
    %v3996 = vsel %vm82, %v3966, 0
    %v3999 = vsel %vm82, %v3967, 0
    %v4002 = vsel %vm82, %v3968, 0
    %4004 = vmatprep.subr.bf16.mxu0 0
    %4005 = vmatpush1.bf16.msra.mxu0 %v3988
    %4006 = vmatprep.subr.bf16.mxu0 0
    %4007 = vmatpush1.bf16.msra.mxu0 %v3989
    %4008 = vmatprep.subr.bf16.mxu0 0
    %4009 = vmatpush1.bf16.msra.mxu0 0
    %4010 = vmatprep.subr.bf16.mxu0 0
    %4011 = vmatpush1.bf16.msra.mxu0 0
    %4012 = vmatprep.subr.bf16.mxu0 0
    %4013 = vmatpush1.bf16.msra.mxu0 0
    %4014 = vmatprep.subr.bf16.mxu0 0
    %4015 = vmatpush1.bf16.msra.mxu0 0
    %4016 = vmatprep.subr.bf16.mxu0 0
    %4017 = vmatpush1.bf16.msra.mxu0 0
    %4018 = vmatprep.subr.bf16.mxu0 0
    %4019 = vmatpush1.bf16.msra.mxu0 0
    %4020 = vmatprep.subr.bf16.mxu0 0
    %4021 = vmatpush1.bf16.msra.mxu0 0
    %4022 = vmatprep.subr.bf16.mxu0 0
    %4023 = vmatpush1.bf16.msra.mxu0 0
    %4024 = vmatprep.subr.bf16.mxu0 0
    %4025 = vmatpush1.bf16.msra.mxu0 0
    %4026 = vmatprep.subr.bf16.mxu0 0
    %4027 = vmatpush1.bf16.msra.mxu0 0
    %4028 = vmatprep.subr.bf16.mxu0 0
    %4029 = vmatpush1.bf16.msra.mxu0 0
    %4030 = vmatprep.subr.bf16.mxu0 0
    %4031 = vmatpush1.bf16.msra.mxu0 0
    %4032 = vmatprep.subr.bf16.mxu0 0
    %4033 = vmatpush1.bf16.msra.mxu0 0
    %4034 = vmatprep.subr.bf16.mxu0 0
    %4035 = vmatpush1.bf16.msra.mxu0 0
    %4036 = vmatprep.mubr.bf16.mxu0 0
    %4037 = vmatmul.mubr.bf16.gmra.mrb[0].mxu0 %v3993
    %v4038 = vpop.f32.mrb[0].mxu0
    %v4039 = vadd.f32 %v3978, %v4038
    %v4040 = vpop.f32.mrb[0].mxu0
    %v4041 = vpop.f32.mrb[0].mxu0
    %v4042 = vadd.f32 %v3978, %v4041
    %v4043 = vpop.f32.mrb[0].mxu0
    %4044 = vmatprep.mubr.bf16.mxu0 0
    %4045 = vmatmul.mubr.bf16.gmra.mrb[0].mxu0 %v3996
    %v4046 = vpop.f32.mrb[0].mxu0
    %v4047 = vadd.f32 %v3978, %v4046
    %v4048 = vpop.f32.mrb[0].mxu0
    %v4049 = vpop.f32.mrb[0].mxu0
    %v4050 = vadd.f32 %v3978, %v4049
    %v4051 = vpop.f32.mrb[0].mxu0
    %4052 = vmatprep.mubr.bf16.mxu0 0
    %4053 = vmatmul.mubr.bf16.gmra.mrb[0].mxu0 %v3999
    %v4054 = vpop.f32.mrb[0].mxu0
    %v4055 = vadd.f32 %v3978, %v4054
    %v4056 = vpop.f32.mrb[0].mxu0
    %v4057 = vpop.f32.mrb[0].mxu0
    %v4058 = vadd.f32 %v3978, %v4057
    %v4059 = vpop.f32.mrb[0].mxu0
    %4060 = vmatprep.mubr.bf16.mxu0 0
    %4061 = vmatmul.mubr.bf16.gmra.mrb[0].mxu0 %v4002
    %v4062 = vpop.f32.mrb[0].mxu0
    %v4063 = vadd.f32 %v3978, %v4062
    %v4064 = vpop.f32.mrb[0].mxu0
    %v4065 = vpop.f32.mrb[0].mxu0
    %v4066 = vadd.f32 %v3978, %v4065
    %v4067 = vpop.f32.mrb[0].mxu0
    %4068 = vdwg.mxu0
    %v4069 = vtanh.pop %v4039
    %v4070 = vtanh.pop %v4042
    %v4071 = vtanh.pop %v4047
    %v4072 = vtanh.pop %v4050
    %v4073 = vtanh.pop %v4055
    %v4074 = vtanh.pop %v4058
    %v4075 = vtanh.pop %v4063
    %v4076 = vtanh.pop %v4066
    %v4077 = vld [vmem:[%s7] sm:$0x1]
    %v4079 = vlaneseq
    %v4080 = vshrl.u32 %v4079, 7
    %v4081 = vsub.s32 0, %v4080
    %v4082 = vrot.slane %v4077, %v4081
    %v4084 = vmul.f32 %v4069, %v4082
    %v4085 = vmul.f32 %v4070, %v4082
    %v4086 = vmul.f32 %v4071, %v4082
    %v4087 = vmul.f32 %v4072, %v4082
    %v4088 = vmul.f32 %v4073, %v4082
    %v4089 = vmul.f32 %v4074, %v4082
    %v4090 = vmul.f32 %v4075, %v4082
    %v4091 = vmul.f32 %v4076, %v4082
    %vm4092 = vcmask 130048
    %v4093 = vsel %vm4092, %v4084, 0.0
    %4094 = vadd.xlane.f32.xlu0 %v4093
    %v4095 = vpop.xlane.xlu0 %4094
    %v4096 = vsel %vm4092, %v4085, 0.0
    %4097 = vadd.xlane.f32.xlu0 %v4096
    %v4098 = vpop.xlane.xlu0 %4097
    %v4099 = vsel %vm4092, %v4086, 0.0
    %4100 = vadd.xlane.f32.xlu0 %v4099
    %v4101 = vpop.xlane.xlu0 %4100
    %v4102 = vsel %vm4092, %v4087, 0.0
    %4103 = vadd.xlane.f32.xlu0 %v4102
    %v4104 = vpop.xlane.xlu0 %4103
    %v4105 = vsel %vm4092, %v4088, 0.0
    %4106 = vadd.xlane.f32.xlu0 %v4105
    %v4107 = vpop.xlane.xlu0 %4106
    %v4108 = vsel %vm4092, %v4089, 0.0
    %4109 = vadd.xlane.f32.xlu0 %v4108
    %v4110 = vpop.xlane.xlu0 %4109
    %v4111 = vsel %vm4092, %v4090, 0.0
    %4112 = vadd.xlane.f32.xlu0 %v4111
    %v4113 = vpop.xlane.xlu0 %4112
    %v4114 = vsel %vm4092, %v4091, 0.0
    %4115 = vadd.xlane.f32.xlu0 %v4114
    %v4116 = vpop.xlane.xlu0 %4115
    %v4125 = vlaneseq
    %v4126 = vand.u32 %v4125, 127
    %v4127 = vlaneseq
    %v4128 = vshrl.u32 %v4127, 7
    %v4129 = vsub.s32 %v4126, %v4128
    %v4130 = vrot.slane %v4095, %v4129
    %v4131 = vlaneseq
    %v4132 = vshrl.u32 %v4131, 7
    %v4133 = vsub.s32 %v4126, %v4132
    %v4134 = vrot.slane %v4098, %v4133
    %v4135 = vlaneseq
    %v4136 = vshrl.u32 %v4135, 7
    %v4137 = vsub.s32 %v4126, %v4136
    %v4138 = vrot.slane %v4101, %v4137
    %v4139 = vlaneseq
    %v4140 = vshrl.u32 %v4139, 7
    %v4141 = vsub.s32 %v4126, %v4140
    %v4142 = vrot.slane %v4104, %v4141
    %v4143 = vlaneseq
    %v4144 = vshrl.u32 %v4143, 7
    %v4145 = vsub.s32 %v4126, %v4144
    %v4146 = vrot.slane %v4107, %v4145
    %v4147 = vlaneseq
    %v4148 = vshrl.u32 %v4147, 7
    %v4149 = vsub.s32 %v4126, %v4148
    %v4150 = vrot.slane %v4110, %v4149
    %v4151 = vlaneseq
    %v4152 = vshrl.u32 %v4151, 7
    %v4153 = vsub.s32 %v4126, %v4152
    %v4154 = vrot.slane %v4113, %v4153
    %v4155 = vlaneseq
    %v4156 = vshrl.u32 %v4155, 7
    %v4157 = vsub.s32 %v4126, %v4156
    %v4158 = vrot.slane %v4116, %v4157
    %vm4159 = vcmask 1041409
    %v4160 = vsel %vm4159, %v4134, %v4130
    %vm4161 = vcmask 1042434
    %v4162 = vsel %vm4161, %v4138, %v4160
    %vm4163 = vcmask 1043459
    %v4164 = vsel %vm4163, %v4142, %v4162
    %vm4165 = vcmask 1044484
    %v4166 = vsel %vm4165, %v4146, %v4164
    %vm4167 = vcmask 1045509
    %v4168 = vsel %vm4167, %v4150, %v4166
    %vm4169 = vcmask 1046534
    %v4170 = vsel %vm4169, %v4154, %v4168
    %vm4171 = vcmask 1047559
    %v4172 = vsel %vm4171, %v4158, %v4170
    %v4174 = vsel %vm186, %v4172, -inf
    %4175 = vmax.xlane.f32.xlu0 %v4174
    %v4176 = vpop.xlane.xlu0 %4175
    %v4178 = vlaneseq
    %v4179 = vshrl.u32 %v4178, 7
    %v4180 = vsub.s32 0, %v4179
    %v4181 = vrot.slane %v4176, %v4180
    %v4182 = vlaneseq
    %v4183 = vshrl.u32 %v4182, 7
    %v4184 = vsub.s32 1, %v4183
    %v4185 = vrot.slane %v4176, %v4184
    %v4186 = vlaneseq
    %v4187 = vshrl.u32 %v4186, 7
    %v4188 = vsub.s32 2, %v4187
    %v4189 = vrot.slane %v4176, %v4188
    %v4190 = vlaneseq
    %v4191 = vshrl.u32 %v4190, 7
    %v4192 = vsub.s32 3, %v4191
    %v4193 = vrot.slane %v4176, %v4192
    %v4194 = vlaneseq
    %v4195 = vshrl.u32 %v4194, 7
    %v4196 = vsub.s32 4, %v4195
    %v4197 = vrot.slane %v4176, %v4196
    %v4198 = vlaneseq
    %v4199 = vshrl.u32 %v4198, 7
    %v4200 = vsub.s32 5, %v4199
    %v4201 = vrot.slane %v4176, %v4200
    %v4202 = vlaneseq
    %v4203 = vshrl.u32 %v4202, 7
    %v4204 = vsub.s32 6, %v4203
    %v4205 = vrot.slane %v4176, %v4204
    %v4206 = vlaneseq
    %v4207 = vshrl.u32 %v4206, 7
    %v4208 = vsub.s32 7, %v4207
    %v4209 = vrot.slane %v4176, %v4208
    %v4218 = vsub.f32 %v4095, %v4181
    %v4219 = vsub.f32 %v4098, %v4185
    %v4220 = vsub.f32 %v4101, %v4189
    %v4221 = vsub.f32 %v4104, %v4193
    %v4222 = vsub.f32 %v4107, %v4197
    %v4223 = vsub.f32 %v4110, %v4201
    %v4224 = vsub.f32 %v4113, %v4205
    %v4225 = vsub.f32 %v4116, %v4209
    %v4226 = vmul.f32 %v4218, 1.442695
    %v4227 = vpow.pop %v4226
    %v4228 = vmul.f32 %v4219, 1.442695
    %v4229 = vpow.pop %v4228
    %v4230 = vmul.f32 %v4220, 1.442695
    %v4231 = vpow.pop %v4230
    %v4232 = vmul.f32 %v4221, 1.442695
    %v4233 = vpow.pop %v4232
    %v4234 = vmul.f32 %v4222, 1.442695
    %v4235 = vpow.pop %v4234
    %v4236 = vmul.f32 %v4223, 1.442695
    %v4237 = vpow.pop %v4236
    %v4238 = vmul.f32 %v4224, 1.442695
    %v4239 = vpow.pop %v4238
    %v4240 = vmul.f32 %v4225, 1.442695
    %v4241 = vpow.pop %v4240
    %4250 = vset.pattern.permute.xlu0 0
    %4251 = vperm.xlu0 %4250, %v4227
    %v4252 = vpop.permute.xlu0 %4251
    %4253 = vset.pattern.permute.xlu0 0
    %4254 = vperm.xlu0 %4253, %v4229
    %v4255 = vpop.permute.xlu0 %4254
    %4256 = vset.pattern.permute.xlu0 0
    %4257 = vperm.xlu0 %4256, %v4231
    %v4258 = vpop.permute.xlu0 %4257
    %4259 = vset.pattern.permute.xlu0 0
    %4260 = vperm.xlu0 %4259, %v4233
    %v4261 = vpop.permute.xlu0 %4260
    %4262 = vset.pattern.permute.xlu0 0
    %4263 = vperm.xlu0 %4262, %v4235
    %v4264 = vpop.permute.xlu0 %4263
    %4265 = vset.pattern.permute.xlu0 0
    %4266 = vperm.xlu0 %4265, %v4237
    %v4267 = vpop.permute.xlu0 %4266
    %4268 = vset.pattern.permute.xlu0 0
    %4269 = vperm.xlu0 %4268, %v4239
    %v4270 = vpop.permute.xlu0 %4269
    %4271 = vset.pattern.permute.xlu0 0
    %4272 = vperm.xlu0 %4271, %v4241
    %v4273 = vpop.permute.xlu0 %4272
    %v4274 = vlaneseq
    %v4275 = vshrl.u32 %v4274, 7
    %v4276 = vsub.s32 %v4126, %v4275
    %v4277 = vrot.slane %v4252, %v4276
    %v4278 = vlaneseq
    %v4279 = vshrl.u32 %v4278, 7
    %v4280 = vsub.s32 %v4126, %v4279
    %v4281 = vrot.slane %v4255, %v4280
    %v4282 = vlaneseq
    %v4283 = vshrl.u32 %v4282, 7
    %v4284 = vsub.s32 %v4126, %v4283
    %v4285 = vrot.slane %v4258, %v4284
    %v4286 = vlaneseq
    %v4287 = vshrl.u32 %v4286, 7
    %v4288 = vsub.s32 %v4126, %v4287
    %v4289 = vrot.slane %v4261, %v4288
    %v4290 = vlaneseq
    %v4291 = vshrl.u32 %v4290, 7
    %v4292 = vsub.s32 %v4126, %v4291
    %v4293 = vrot.slane %v4264, %v4292
    %v4294 = vlaneseq
    %v4295 = vshrl.u32 %v4294, 7
    %v4296 = vsub.s32 %v4126, %v4295
    %v4297 = vrot.slane %v4267, %v4296
    %v4298 = vlaneseq
    %v4299 = vshrl.u32 %v4298, 7
    %v4300 = vsub.s32 %v4126, %v4299
    %v4301 = vrot.slane %v4270, %v4300
    %v4302 = vlaneseq
    %v4303 = vshrl.u32 %v4302, 7
    %v4304 = vsub.s32 %v4126, %v4303
    %v4305 = vrot.slane %v4273, %v4304
    %v4306 = vsel %vm4159, %v4281, %v4277
    %v4307 = vsel %vm4161, %v4285, %v4306
    %v4308 = vsel %vm4163, %v4289, %v4307
    %v4309 = vsel %vm4165, %v4293, %v4308
    %v4310 = vsel %vm4167, %v4297, %v4309
    %v4311 = vsel %vm4169, %v4301, %v4310
    %v4312 = vsel %vm4171, %v4305, %v4311
    %v4314 = vsel %vm186, %v4312, 0.0
    %4315 = vadd.xlane.f32.xlu0 %v4314
    %v4316 = vpop.xlane.xlu0 %4315
    %v4317 = vrcp.pop %v4316
    %v4319 = vlaneseq
    %v4320 = vshrl.u32 %v4319, 7
    %v4321 = vsub.s32 0, %v4320
    %v4322 = vrot.slane %v4317, %v4321
    %v4323 = vlaneseq
    %v4324 = vshrl.u32 %v4323, 7
    %v4325 = vsub.s32 1, %v4324
    %v4326 = vrot.slane %v4317, %v4325
    %v4327 = vlaneseq
    %v4328 = vshrl.u32 %v4327, 7
    %v4329 = vsub.s32 2, %v4328
    %v4330 = vrot.slane %v4317, %v4329
    %v4331 = vlaneseq
    %v4332 = vshrl.u32 %v4331, 7
    %v4333 = vsub.s32 3, %v4332
    %v4334 = vrot.slane %v4317, %v4333
    %v4335 = vlaneseq
    %v4336 = vshrl.u32 %v4335, 7
    %v4337 = vsub.s32 4, %v4336
    %v4338 = vrot.slane %v4317, %v4337
    %v4339 = vlaneseq
    %v4340 = vshrl.u32 %v4339, 7
    %v4341 = vsub.s32 5, %v4340
    %v4342 = vrot.slane %v4317, %v4341
    %v4343 = vlaneseq
    %v4344 = vshrl.u32 %v4343, 7
    %v4345 = vsub.s32 6, %v4344
    %v4346 = vrot.slane %v4317, %v4345
    %v4347 = vlaneseq
    %v4348 = vshrl.u32 %v4347, 7
    %v4349 = vsub.s32 7, %v4348
    %v4350 = vrot.slane %v4317, %v4349
    %v4359 = vmul.f32 %v4227, %v4322
    %v4360 = vmul.f32 %v4229, %v4326
    %v4361 = vmul.f32 %v4231, %v4330
    %v4362 = vmul.f32 %v4233, %v4334
    %v4363 = vmul.f32 %v4235, %v4338
    %v4364 = vmul.f32 %v4237, %v4342
    %v4365 = vmul.f32 %v4239, %v4346
    %v4366 = vmul.f32 %v4241, %v4350
    %4368 = vset.pattern.permute.xlu0 0
    %4369 = vperm.xlu0 %4368, %v4359
    %v4370 = vpop.permute.xlu0 %4369
    %4373 = vset.pattern.permute.xlu0 0
    %4374 = vperm.xlu0 %4373, %v4360
    %v4375 = vpop.permute.xlu0 %4374
    %4378 = vset.pattern.permute.xlu0 0
    %4379 = vperm.xlu0 %4378, %v4361
    %v4380 = vpop.permute.xlu0 %4379
    %4383 = vset.pattern.permute.xlu0 0
    %4384 = vperm.xlu0 %4383, %v4362
    %v4385 = vpop.permute.xlu0 %4384
    %4388 = vset.pattern.permute.xlu0 0
    %4389 = vperm.xlu0 %4388, %v4363
    %v4390 = vpop.permute.xlu0 %4389
    %4393 = vset.pattern.permute.xlu0 0
    %4394 = vperm.xlu0 %4393, %v4364
    %v4395 = vpop.permute.xlu0 %4394
    %4398 = vset.pattern.permute.xlu0 0
    %4399 = vperm.xlu0 %4398, %v4365
    %v4400 = vpop.permute.xlu0 %4399
    %4403 = vset.pattern.permute.xlu0 0
    %4404 = vperm.xlu0 %4403, %v4366
    %v4405 = vpop.permute.xlu0 %4404
    %v4407 = vmul.f32 %v4370, %v3935
    %v4408 = vmul.f32 %v4375, %v3938
    %v4409 = vmul.f32 %v4380, %v3943
    %v4410 = vmul.f32 %v4385, %v3946
    %v4411 = vmul.f32 %v4390, %v3951
    %v4412 = vmul.f32 %v4395, %v3954
    %v4413 = vmul.f32 %v4400, %v3959
    %v4414 = vmul.f32 %v4405, %v3962
    %v4415 = vsel %vm82, %v4407, 0.0
    %v4416 = vrot.slane %v4415, 4
    %v4417 = vadd.f32 %v4415, %v4416
    %v4418 = vrot.slane %v4417, 2
    %v4419 = vadd.f32 %v4417, %v4418
    %v4420 = vrot.slane %v4419, 1
    %v4421 = vadd.f32 %v4419, %v4420
    %v4422 = vsel %vm82, %v4408, 0.0
    %v4423 = vrot.slane %v4422, 4
    %v4424 = vadd.f32 %v4422, %v4423
    %v4425 = vrot.slane %v4424, 2
    %v4426 = vadd.f32 %v4424, %v4425
    %v4427 = vrot.slane %v4426, 1
    %v4428 = vadd.f32 %v4426, %v4427
    %v4429 = vsel %vm82, %v4409, 0.0
    %v4430 = vrot.slane %v4429, 4
    %v4431 = vadd.f32 %v4429, %v4430
    %v4432 = vrot.slane %v4431, 2
    %v4433 = vadd.f32 %v4431, %v4432
    %v4434 = vrot.slane %v4433, 1
    %v4435 = vadd.f32 %v4433, %v4434
    %v4436 = vsel %vm82, %v4410, 0.0
    %v4437 = vrot.slane %v4436, 4
    %v4438 = vadd.f32 %v4436, %v4437
    %v4439 = vrot.slane %v4438, 2
    %v4440 = vadd.f32 %v4438, %v4439
    %v4441 = vrot.slane %v4440, 1
    %v4442 = vadd.f32 %v4440, %v4441
    %v4443 = vsel %vm82, %v4411, 0.0
    %v4444 = vrot.slane %v4443, 4
    %v4445 = vadd.f32 %v4443, %v4444
    %v4446 = vrot.slane %v4445, 2
    %v4447 = vadd.f32 %v4445, %v4446
    %v4448 = vrot.slane %v4447, 1
    %v4449 = vadd.f32 %v4447, %v4448
    %v4450 = vsel %vm82, %v4412, 0.0
    %v4451 = vrot.slane %v4450, 4
    %v4452 = vadd.f32 %v4450, %v4451
    %v4453 = vrot.slane %v4452, 2
    %v4454 = vadd.f32 %v4452, %v4453
    %v4455 = vrot.slane %v4454, 1
    %v4456 = vadd.f32 %v4454, %v4455
    %v4457 = vsel %vm82, %v4413, 0.0
    %v4458 = vrot.slane %v4457, 4
    %v4459 = vadd.f32 %v4457, %v4458
    %v4460 = vrot.slane %v4459, 2
    %v4461 = vadd.f32 %v4459, %v4460
    %v4462 = vrot.slane %v4461, 1
    %v4463 = vadd.f32 %v4461, %v4462
    %v4464 = vsel %vm82, %v4414, 0.0
    %v4465 = vrot.slane %v4464, 4
    %v4466 = vadd.f32 %v4464, %v4465
    %v4467 = vrot.slane %v4466, 2
    %v4468 = vadd.f32 %v4466, %v4467
    %v4469 = vrot.slane %v4468, 1
    %v4470 = vadd.f32 %v4468, %v4469
    %v4479 = vsel %vm4159, %v4428, %v4421
    %v4480 = vsel %vm4161, %v4435, %v4479
    %v4481 = vsel %vm4163, %v4442, %v4480
    %v4482 = vsel %vm4165, %v4449, %v4481
    %v4483 = vsel %vm4167, %v4456, %v4482
    %v4484 = vsel %vm4169, %v4463, %v4483
    %v4485 = vsel %vm4171, %v4470, %v4484
    %4487 = vst.msk [vmem:[#allocation3] sm:$0xff] %vm82, %v4485
    // Predicated region
    $region34: #{bert_model_forward.3} parent=1 // pred_check
      _
    $region35: #{bert_model_forward.3} parent=1 // pred_check_branch
      %4489 = sbr.rel (0) target = $region37
    $region36: #{bert_model_forward.3} parent=1 // pred_region
      %s4491 = ssub.s32 128, 128
      %4492 = vsyncadd [#allocation4], %s4491
      %s4494 = sshll.u32 [#allocation3], 4
      %s4495 = int_to_ptr.vmem [resolvable:$true] %s4494
      %4497 = dma.vmem_to_hbm [thread:$0]  %s4495, 128, %s8, [#allocation4]
    $region37: #{bert_model_forward.3} parent=1 // pred_fallthru
      _
    // Predicated region
    $region38: #{bert_model_forward.3} parent=1 // pred_check
      _
    $region39: #{bert_model_forward.3} parent=1 // pred_check_branch
      %4499 = sbr.rel (0) target = $region41
    $region40: #{bert_model_forward.3} parent=1 // pred_region
      %4500 = dma.done [#allocation4], 128
    $region41: #{bert_model_forward.3} parent=1 // pred_fallthru
      _
    %4501 = vsyncpa [#allocation4], 1

</llo_original>
